<compile_context>
chip_gen: v7x
topology: tpu7x:2x2x1
jax: 0.10.0
libtpu: 0.0.40
codegen_flags: <defaults>
</compile_context>

<pallas_src>
import math

import jax
import jax.numpy as jnp
from jax.experimental import pallas as pl
from jax.experimental.pallas import tpu as pltpu

EPS = 1e-5  # nn.BatchNorm1d default eps


# --------------------------- fused Pallas kernel -----------------------------

def _conv_bn_relu_pool(src_ref, w_ref, b_ref, g_ref, be_ref, z_ref, p_ref,
                       *, pool=4):
    """One M5 block: Conv1d (valid) -> BN (batch stats) -> ReLU -> MaxPool(4).

    src_ref: (B, Lin, chunk)   input, channels (or stride-chunk) on lanes
    w_ref:   (nshift*chunk, Cout)  packed weights; shift k uses rows
             [k*chunk, (k+1)*chunk)
    b/g/be:  (1, Cout)         conv bias / BN gamma / BN beta
    z_ref:   (B*Lout, Cout)    VMEM scratch holding the RAW conv output
    p_ref:   (B, Lpool, Cout)  pooled block output (input of the next block)
    """
    B, lin, chunk = src_ref.shape
    cout = w_ref.shape[1]
    nshift = w_ref.shape[0] // chunk
    lout = lin - nshift + 1
    lp = p_ref.shape[1]
    inv_n = 1.0 / float(B * lout)

    # ---- conv as a sum of shifted matmuls; single-pass BN statistics ----
    s = jnp.zeros((1, cout), jnp.float32)
    ss = jnp.zeros((1, cout), jnp.float32)
    for b in range(B):                                   # B is small & static
        yb = jnp.dot(src_ref[b, 0:lout, :], w_ref[0:chunk, :],
                     preferred_element_type=jnp.float32)
        for k in range(1, nshift):
            yb = yb + jnp.dot(src_ref[b, k:k + lout, :],
                              w_ref[k * chunk:(k + 1) * chunk, :],
                              preferred_element_type=jnp.float32)
        yb = yb + b_ref[...]                             # conv bias
        s = s + jnp.sum(yb, axis=0, keepdims=True)
        ss = ss + jnp.sum(yb * yb, axis=0, keepdims=True)
        z_ref[b * lout:(b + 1) * lout, :] = yb           # stash raw conv output

    mean = s * inv_n
    var = ss * inv_n - mean * mean                       # biased var (PyTorch BN)
    scale = g_ref[...] * jax.lax.rsqrt(var + EPS)        # (1, Cout)
    shift = be_ref[...] - mean * scale

    # ---- BN + ReLU folded into MaxPool1d(pool) (floor mode) ----
    # pooled[b, t, :] = relu(max_k (scale * y[b, pool*t + k, :] + shift))
    # Trailing (lout % pool) rows are never read -> floor-mode drop.
    for b in range(B):
        base = b * lout
        m = z_ref[pl.ds(base, lp, stride=pool), :] * scale + shift
        for k in range(1, pool):
            m = jnp.maximum(
                m, z_ref[pl.ds(base + k, lp, stride=pool), :] * scale + shift)
        p_ref[b] = jnp.maximum(m, 0.0)


def _m5_kernel(xr_ref,
               w1_ref, b1_ref, g1_ref, be1_ref,
               w2_ref, b2_ref, g2_ref, be2_ref,
               w3_ref, b3_ref, g3_ref, be3_ref,
               w4_ref, b4_ref, g4_ref, be4_ref,
               wfc_ref, bfc_ref,
               o_ref,
               z1_ref, z2_ref, z3_ref, z4_ref,
               p1_ref, p2_ref, p3_ref, p4_ref):
    # 4 fused conv blocks, activations never leave VMEM.
    _conv_bn_relu_pool(xr_ref, w1_ref, b1_ref, g1_ref, be1_ref, z1_ref, p1_ref)
    _conv_bn_relu_pool(p1_ref, w2_ref, b2_ref, g2_ref, be2_ref, z2_ref, p2_ref)
    _conv_bn_relu_pool(p2_ref, w3_ref, b3_ref, g3_ref, be3_ref, z3_ref, p3_ref)
    _conv_bn_relu_pool(p3_ref, w4_ref, b4_ref, g4_ref, be4_ref, z4_ref, p4_ref)

    # head: global average pool over remaining time + Linear + log_softmax
    xm = jnp.mean(p4_ref[...], axis=1)                           # (B, C4)
    logits = jnp.dot(xm, wfc_ref[...],
                     preferred_element_type=jnp.float32) + bfc_ref[...]
    mx = jnp.max(logits, axis=-1, keepdims=True)
    lse = mx + jnp.log(jnp.sum(jnp.exp(logits - mx), axis=-1, keepdims=True))
    o_ref[...] = logits - lse


# --------------------------- wrapper ------------------------------------------

def pack_params(p):
    """One-time weight packing (outside jit): conv weights -> (K*Cin, Cout),
    bias/gamma/beta -> (1, Cout), fc -> (Cin, Cout)."""
    def pack_conv(lyr):
        cout, cin, k = lyr["w"].shape
        return dict(
            w=jnp.transpose(lyr["w"], (2, 1, 0)).reshape(k * cin, cout),
            b=lyr["b"].reshape(1, cout),
            gamma=lyr["gamma"].reshape(1, cout),
            beta=lyr["beta"].reshape(1, cout),
        )
    return dict(
        l1=pack_conv(p["l1"]), l2=pack_conv(p["l2"]),
        l3=pack_conv(p["l3"]), l4=pack_conv(p["l4"]),
        wfc=p["wfc"].T, bfc=p["bfc"].reshape(1, -1),
    )


@jax.jit
def m5_pallas(x_ncl, pp):
    """x_ncl: (B, 1, L) PyTorch-convention input; pp: pack_params() output."""
    B, cin, L = x_ncl.shape
    assert cin == 1 and L % 16 == 0, "M5 config: n_input=1, conv1 stride=16"

    # stride-16 chunking of the time axis (Cin == 1, K=80 == 5 chunks of 16):
    # xr[b, u, j] = x[b, 0, 16*u + j]
    xr = x_ncl.reshape(B, L // 16, 16)

    c1 = pp["l1"]["w"].shape[1]
    c2 = pp["l2"]["w"].shape[1]
    c3 = pp["l3"]["w"].shape[1]
    c4 = pp["l4"]["w"].shape[1]
    nout = pp["wfc"].shape[1]

    # static per-stage lengths (valid conv, floor-mode pool-4)
    l0 = L // 16
    lc1 = l0 - pp["l1"]["w"].shape[0] // 16 + 1; lp1 = lc1 // 4
    lc2 = lp1 - pp["l2"]["w"].shape[0] // c1 + 1; lp2 = lc2 // 4
    lc3 = lp2 - pp["l3"]["w"].shape[0] // c2 + 1; lp3 = lc3 // 4
    lc4 = lp3 - pp["l4"]["w"].shape[0] // c3 + 1; lp4 = lc4 // 4

    out = pl.pallas_call(
        _m5_kernel,
        out_shape=jax.ShapeDtypeStruct((B, nout), jnp.float32),
        scratch_shapes=[
            pltpu.VMEM((B * lc1, c1), jnp.float32),   # raw conv outputs
            pltpu.VMEM((B * lc2, c2), jnp.float32),
            pltpu.VMEM((B * lc3, c3), jnp.float32),
            pltpu.VMEM((B * lc4, c4), jnp.float32),
            pltpu.VMEM((B, lp1, c1), jnp.float32),    # pooled block outputs
            pltpu.VMEM((B, lp2, c2), jnp.float32),
            pltpu.VMEM((B, lp3, c3), jnp.float32),
            pltpu.VMEM((B, lp4, c4), jnp.float32),
        ],
    )(xr,
      pp["l1"]["w"], pp["l1"]["b"], pp["l1"]["gamma"], pp["l1"]["beta"],
      pp["l2"]["w"], pp["l2"]["b"], pp["l2"]["gamma"], pp["l2"]["beta"],
      pp["l3"]["w"], pp["l3"]["b"], pp["l3"]["gamma"], pp["l3"]["beta"],
      pp["l4"]["w"], pp["l4"]["b"], pp["l4"]["gamma"], pp["l4"]["beta"],
      pp["wfc"], pp["bfc"])
    return out.reshape(B, 1, nout)


# --------------------------- pure-JAX reference ------------------------------

def m5_reference(x_ncl, p):
    def conv1d(x, w, b, stride):
        y = jax.lax.conv_general_dilated(
            x, w, window_strides=(stride,), padding="VALID",
            dimension_numbers=("NCH", "OIH", "NCH"))
        return y + b[None, :, None]

    def bn_relu(x, g, be):
        mean = jnp.mean(x, axis=(0, 2), keepdims=True)
        var = jnp.mean((x - mean) ** 2, axis=(0, 2), keepdims=True)
        y = (x - mean) * jax.lax.rsqrt(var + EPS) * g[None, :, None] + be[None, :, None]
        return jnp.maximum(y, 0.0)

    def maxpool(x, k):
        B, C, L = x.shape
        Lp = L // k
        return jnp.max(x[:, :, : Lp * k].reshape(B, C, Lp, k), axis=-1)

    x = x_ncl
    for name, stride in (("l1", 16), ("l2", 1), ("l3", 1), ("l4", 1)):
        lyr = p[name]
        x = maxpool(bn_relu(conv1d(x, lyr["w"], lyr["b"], stride),
                            lyr["gamma"], lyr["beta"]), 4)
    x = jnp.mean(x, axis=-1, keepdims=True)             # avg_pool1d over full length
    x = jnp.transpose(x, (0, 2, 1))                     # (B, 1, C)
    logits = x @ p["wfc"].T + p["bfc"]
    return jax.nn.log_softmax(logits, axis=2)


# --------------------------- params & main -----------------------------------

def init_params(key, n_input=1, n_output=10, n_channel=32):
    def conv_layer(k, cout, cin, ksz):
        k1, k2, k3, k4 = jax.random.split(k, 4)
        bound = 1.0 / math.sqrt(cin * ksz)
        return dict(
            w=jax.random.uniform(k1, (cout, cin, ksz), jnp.float32, -bound, bound),
            b=jax.random.uniform(k2, (cout,), jnp.float32, -bound, bound),
            gamma=1.0 + 0.1 * jax.random.normal(k3, (cout,), jnp.float32),
            beta=0.1 * jax.random.normal(k4, (cout,), jnp.float32),
        )

    ks = jax.random.split(key, 6)
    fb = 1.0 / math.sqrt(2 * n_channel)
    return dict(
        l1=conv_layer(ks[0], n_channel, n_input, 80),
        l2=conv_layer(ks[1], n_channel, n_channel, 3),
        l3=conv_layer(ks[2], 2 * n_channel, n_channel, 3),
        l4=conv_layer(ks[3], 2 * n_channel, 2 * n_channel, 3),
        wfc=jax.random.uniform(ks[4], (n_output, 2 * n_channel), jnp.float32, -fb, fb),
        bfc=jax.random.uniform(ks[5], (n_output,), jnp.float32, -fb, fb),
    )


if __name__ == "__main__":
    key = jax.random.PRNGKey(0)
    kx, kp = jax.random.split(key)
    # (batch, n_input, length): length must survive conv(K=80, stride=16) + 4x pool(4)
    x = jax.random.normal(kx, (2, 1, 8000), jnp.float32)
    params = init_params(kp)
    packed = pack_params(params)          # one-time weight packing, outside jit

    out = m5_pallas(x, packed)
    out = jax.block_until_ready(out)

    ref = m5_reference(x, params)
    assert out.shape == (2, 1, 10), out.shape
    err = float(jnp.max(jnp.abs(out - ref)))
    assert err < 1e-3, f"max abs diff vs reference: {err}"
    print("KERNEL_OK")
</pallas_src>

<mosaic_0001>
module attributes {stable_mosaic.version = 11 : i64} {
  func.func @_m5_kernel(%arg0: memref<2x500x16xf32, #tpu.memory_space<vmem>>, %arg1: memref<80x32xf32, #tpu.memory_space<vmem>>, %arg2: memref<1x32xf32, #tpu.memory_space<vmem>>, %arg3: memref<1x32xf32, #tpu.memory_space<vmem>>, %arg4: memref<1x32xf32, #tpu.memory_space<vmem>>, %arg5: memref<96x32xf32, #tpu.memory_space<vmem>>, %arg6: memref<1x32xf32, #tpu.memory_space<vmem>>, %arg7: memref<1x32xf32, #tpu.memory_space<vmem>>, %arg8: memref<1x32xf32, #tpu.memory_space<vmem>>, %arg9: memref<96x64xf32, #tpu.memory_space<vmem>>, %arg10: memref<1x64xf32, #tpu.memory_space<vmem>>, %arg11: memref<1x64xf32, #tpu.memory_space<vmem>>, %arg12: memref<1x64xf32, #tpu.memory_space<vmem>>, %arg13: memref<192x64xf32, #tpu.memory_space<vmem>>, %arg14: memref<1x64xf32, #tpu.memory_space<vmem>>, %arg15: memref<1x64xf32, #tpu.memory_space<vmem>>, %arg16: memref<1x64xf32, #tpu.memory_space<vmem>>, %arg17: memref<64x10xf32, #tpu.memory_space<vmem>>, %arg18: memref<1x10xf32, #tpu.memory_space<vmem>>, %arg19: memref<2x10xf32, #tpu.memory_space<vmem>>, %arg20: memref<992x32xf32, #tpu.memory_space<vmem>>, %arg21: memref<244x32xf32, #tpu.memory_space<vmem>>, %arg22: memref<56x64xf32, #tpu.memory_space<vmem>>, %arg23: memref<10x64xf32, #tpu.memory_space<vmem>>, %arg24: memref<2x124x32xf32, #tpu.memory_space<vmem>>, %arg25: memref<2x30x32xf32, #tpu.memory_space<vmem>>, %arg26: memref<2x7x64xf32, #tpu.memory_space<vmem>>, %arg27: memref<2x1x64xf32, #tpu.memory_space<vmem>>) attributes {dimension_semantics = [], scalar_prefetch = 0 : i64, scratch_operands = 8 : i64, tpu.core_type = #tpu.core_type<tc>} {
    %cst = arith.constant 0.000000e+00 : f32
    %0 = vector.broadcast %cst : f32 to vector<1x32xf32>
    %cst_0 = arith.constant 0.000000e+00 : f32
    %1 = vector.broadcast %cst_0 : f32 to vector<1x32xf32>
    %c0 = arith.constant 0 : index
    %c0_1 = arith.constant 0 : index
    %c0_2 = arith.constant 0 : index
    %2 = vector.load %arg0[%c0, %c0_1, %c0_2] : memref<2x500x16xf32, #tpu.memory_space<vmem>>, vector<1x496x16xf32>
    %3 = vector.shape_cast %2 : vector<1x496x16xf32> to vector<496x16xf32>
    %c0_3 = arith.constant 0 : index
    %c0_4 = arith.constant 0 : index
    %4 = vector.load %arg1[%c0_3, %c0_4] : memref<80x32xf32, #tpu.memory_space<vmem>>, vector<16x32xf32>
    %cst_5 = arith.constant dense<0.000000e+00> : vector<496x32xf32>
    %5 = tpu.matmul %3, %4, %cst_5 {dimension_numbers = #tpu.dot_dimension_numbers<[1], [0], [0], [1], [0, 0, 1, 1], [], []>} : vector<496x16xf32>, vector<16x32xf32>, vector<496x32xf32> -> vector<496x32xf32>
    %c0_6 = arith.constant 0 : index
    %c1 = arith.constant 1 : index
    %c0_7 = arith.constant 0 : index
    %6 = vector.load %arg0[%c0_6, %c1, %c0_7] : memref<2x500x16xf32, #tpu.memory_space<vmem>>, vector<1x496x16xf32>
    %7 = vector.shape_cast %6 : vector<1x496x16xf32> to vector<496x16xf32>
    %c16 = arith.constant 16 : index
    %c0_8 = arith.constant 0 : index
    %8 = vector.load %arg1[%c16, %c0_8] : memref<80x32xf32, #tpu.memory_space<vmem>>, vector<16x32xf32>
    %cst_9 = arith.constant dense<0.000000e+00> : vector<496x32xf32>
    %9 = tpu.matmul %7, %8, %cst_9 {dimension_numbers = #tpu.dot_dimension_numbers<[1], [0], [0], [1], [0, 0, 1, 1], [], []>} : vector<496x16xf32>, vector<16x32xf32>, vector<496x32xf32> -> vector<496x32xf32>
    %10 = arith.addf %5, %9 : vector<496x32xf32>
    %c0_10 = arith.constant 0 : index
    %c2 = arith.constant 2 : index
    %c0_11 = arith.constant 0 : index
    %11 = vector.load %arg0[%c0_10, %c2, %c0_11] : memref<2x500x16xf32, #tpu.memory_space<vmem>>, vector<1x496x16xf32>
    %12 = vector.shape_cast %11 : vector<1x496x16xf32> to vector<496x16xf32>
    %c32 = arith.constant 32 : index
    %c0_12 = arith.constant 0 : index
    %13 = vector.load %arg1[%c32, %c0_12] : memref<80x32xf32, #tpu.memory_space<vmem>>, vector<16x32xf32>
    %cst_13 = arith.constant dense<0.000000e+00> : vector<496x32xf32>
    %14 = tpu.matmul %12, %13, %cst_13 {dimension_numbers = #tpu.dot_dimension_numbers<[1], [0], [0], [1], [0, 0, 1, 1], [], []>} : vector<496x16xf32>, vector<16x32xf32>, vector<496x32xf32> -> vector<496x32xf32>
    %15 = arith.addf %10, %14 : vector<496x32xf32>
    %c0_14 = arith.constant 0 : index
    %c3 = arith.constant 3 : index
    %c0_15 = arith.constant 0 : index
    %16 = vector.load %arg0[%c0_14, %c3, %c0_15] : memref<2x500x16xf32, #tpu.memory_space<vmem>>, vector<1x496x16xf32>
    %17 = vector.shape_cast %16 : vector<1x496x16xf32> to vector<496x16xf32>
    %c48 = arith.constant 48 : index
    %c0_16 = arith.constant 0 : index
    %18 = vector.load %arg1[%c48, %c0_16] : memref<80x32xf32, #tpu.memory_space<vmem>>, vector<16x32xf32>
    %cst_17 = arith.constant dense<0.000000e+00> : vector<496x32xf32>
    %19 = tpu.matmul %17, %18, %cst_17 {dimension_numbers = #tpu.dot_dimension_numbers<[1], [0], [0], [1], [0, 0, 1, 1], [], []>} : vector<496x16xf32>, vector<16x32xf32>, vector<496x32xf32> -> vector<496x32xf32>
    %20 = arith.addf %15, %19 : vector<496x32xf32>
    %c0_18 = arith.constant 0 : index
    %c4 = arith.constant 4 : index
    %c0_19 = arith.constant 0 : index
    %21 = vector.load %arg0[%c0_18, %c4, %c0_19] : memref<2x500x16xf32, #tpu.memory_space<vmem>>, vector<1x496x16xf32>
    %22 = vector.shape_cast %21 : vector<1x496x16xf32> to vector<496x16xf32>
    %c64 = arith.constant 64 : index
    %c0_20 = arith.constant 0 : index
    %23 = vector.load %arg1[%c64, %c0_20] : memref<80x32xf32, #tpu.memory_space<vmem>>, vector<16x32xf32>
    %cst_21 = arith.constant dense<0.000000e+00> : vector<496x32xf32>
    %24 = tpu.matmul %22, %23, %cst_21 {dimension_numbers = #tpu.dot_dimension_numbers<[1], [0], [0], [1], [0, 0, 1, 1], [], []>} : vector<496x16xf32>, vector<16x32xf32>, vector<496x32xf32> -> vector<496x32xf32>
    %25 = arith.addf %20, %24 : vector<496x32xf32>
    %c0_22 = arith.constant 0 : index
    %c0_23 = arith.constant 0 : index
    %26 = vector.load %arg2[%c0_22, %c0_23] : memref<1x32xf32, #tpu.memory_space<vmem>>, vector<1x32xf32>
    %27 = vector.broadcast %26 : vector<1x32xf32> to vector<496x32xf32>
    %28 = arith.addf %25, %27 : vector<496x32xf32>
    %cst_24 = arith.constant dense<0.000000e+00> : vector<32xf32>
    %29 = vector.multi_reduction <add>, %28, %cst_24 [0] : vector<496x32xf32> to vector<32xf32>
    %30 = vector.shape_cast %29 : vector<32xf32> to vector<1x32xf32>
    %31 = arith.addf %0, %30 : vector<1x32xf32>
    %32 = arith.mulf %28, %28 : vector<496x32xf32>
    %cst_25 = arith.constant dense<0.000000e+00> : vector<32xf32>
    %33 = vector.multi_reduction <add>, %32, %cst_25 [0] : vector<496x32xf32> to vector<32xf32>
    %34 = vector.shape_cast %33 : vector<32xf32> to vector<1x32xf32>
    %35 = arith.addf %1, %34 : vector<1x32xf32>
    %c0_26 = arith.constant 0 : index
    %c0_27 = arith.constant 0 : index
    %36 = vector.load %arg20[%c0_26, %c0_27] : memref<992x32xf32, #tpu.memory_space<vmem>>, vector<496x32xf32>
    tpu.vector_store %arg20[%c0_26, %c0_27], %28 {strides = array<i32>} : memref<992x32xf32, #tpu.memory_space<vmem>>, vector<496x32xf32>,
    %c1_28 = arith.constant 1 : index
    %c0_29 = arith.constant 0 : index
    %c0_30 = arith.constant 0 : index
    %37 = vector.load %arg0[%c1_28, %c0_29, %c0_30] : memref<2x500x16xf32, #tpu.memory_space<vmem>>, vector<1x496x16xf32>
    %38 = vector.shape_cast %37 : vector<1x496x16xf32> to vector<496x16xf32>
    %c0_31 = arith.constant 0 : index
    %c0_32 = arith.constant 0 : index
    %39 = vector.load %arg1[%c0_31, %c0_32] : memref<80x32xf32, #tpu.memory_space<vmem>>, vector<16x32xf32>
    %cst_33 = arith.constant dense<0.000000e+00> : vector<496x32xf32>
    %40 = tpu.matmul %38, %39, %cst_33 {dimension_numbers = #tpu.dot_dimension_numbers<[1], [0], [0], [1], [0, 0, 1, 1], [], []>} : vector<496x16xf32>, vector<16x32xf32>, vector<496x32xf32> -> vector<496x32xf32>
    %c1_34 = arith.constant 1 : index
    %c1_35 = arith.constant 1 : index
    %c0_36 = arith.constant 0 : index
    %41 = vector.load %arg0[%c1_34, %c1_35, %c0_36] : memref<2x500x16xf32, #tpu.memory_space<vmem>>, vector<1x496x16xf32>
    %42 = vector.shape_cast %41 : vector<1x496x16xf32> to vector<496x16xf32>
    %c16_37 = arith.constant 16 : index
    %c0_38 = arith.constant 0 : index
    %43 = vector.load %arg1[%c16_37, %c0_38] : memref<80x32xf32, #tpu.memory_space<vmem>>, vector<16x32xf32>
    %cst_39 = arith.constant dense<0.000000e+00> : vector<496x32xf32>
    %44 = tpu.matmul %42, %43, %cst_39 {dimension_numbers = #tpu.dot_dimension_numbers<[1], [0], [0], [1], [0, 0, 1, 1], [], []>} : vector<496x16xf32>, vector<16x32xf32>, vector<496x32xf32> -> vector<496x32xf32>
    %45 = arith.addf %40, %44 : vector<496x32xf32>
    %c1_40 = arith.constant 1 : index
    %c2_41 = arith.constant 2 : index
    %c0_42 = arith.constant 0 : index
    %46 = vector.load %arg0[%c1_40, %c2_41, %c0_42] : memref<2x500x16xf32, #tpu.memory_space<vmem>>, vector<1x496x16xf32>
    %47 = vector.shape_cast %46 : vector<1x496x16xf32> to vector<496x16xf32>
    %c32_43 = arith.constant 32 : index
    %c0_44 = arith.constant 0 : index
    %48 = vector.load %arg1[%c32_43, %c0_44] : memref<80x32xf32, #tpu.memory_space<vmem>>, vector<16x32xf32>
    %cst_45 = arith.constant dense<0.000000e+00> : vector<496x32xf32>
    %49 = tpu.matmul %47, %48, %cst_45 {dimension_numbers = #tpu.dot_dimension_numbers<[1], [0], [0], [1], [0, 0, 1, 1], [], []>} : vector<496x16xf32>, vector<16x32xf32>, vector<496x32xf32> -> vector<496x32xf32>
    %50 = arith.addf %45, %49 : vector<496x32xf32>
    %c1_46 = arith.constant 1 : index
    %c3_47 = arith.constant 3 : index
    %c0_48 = arith.constant 0 : index
    %51 = vector.load %arg0[%c1_46, %c3_47, %c0_48] : memref<2x500x16xf32, #tpu.memory_space<vmem>>, vector<1x496x16xf32>
    %52 = vector.shape_cast %51 : vector<1x496x16xf32> to vector<496x16xf32>
    %c48_49 = arith.constant 48 : index
    %c0_50 = arith.constant 0 : index
    %53 = vector.load %arg1[%c48_49, %c0_50] : memref<80x32xf32, #tpu.memory_space<vmem>>, vector<16x32xf32>
    %cst_51 = arith.constant dense<0.000000e+00> : vector<496x32xf32>
    %54 = tpu.matmul %52, %53, %cst_51 {dimension_numbers = #tpu.dot_dimension_numbers<[1], [0], [0], [1], [0, 0, 1, 1], [], []>} : vector<496x16xf32>, vector<16x32xf32>, vector<496x32xf32> -> vector<496x32xf32>
    %55 = arith.addf %50, %54 : vector<496x32xf32>
    %c1_52 = arith.constant 1 : index
    %c4_53 = arith.constant 4 : index
    %c0_54 = arith.constant 0 : index
    %56 = vector.load %arg0[%c1_52, %c4_53, %c0_54] : memref<2x500x16xf32, #tpu.memory_space<vmem>>, vector<1x496x16xf32>
    %57 = vector.shape_cast %56 : vector<1x496x16xf32> to vector<496x16xf32>
    %c64_55 = arith.constant 64 : index
    %c0_56 = arith.constant 0 : index
    %58 = vector.load %arg1[%c64_55, %c0_56] : memref<80x32xf32, #tpu.memory_space<vmem>>, vector<16x32xf32>
    %cst_57 = arith.constant dense<0.000000e+00> : vector<496x32xf32>
    %59 = tpu.matmul %57, %58, %cst_57 {dimension_numbers = #tpu.dot_dimension_numbers<[1], [0], [0], [1], [0, 0, 1, 1], [], []>} : vector<496x16xf32>, vector<16x32xf32>, vector<496x32xf32> -> vector<496x32xf32>
    %60 = arith.addf %55, %59 : vector<496x32xf32>
    %c0_58 = arith.constant 0 : index
    %c0_59 = arith.constant 0 : index
    %61 = vector.load %arg2[%c0_58, %c0_59] : memref<1x32xf32, #tpu.memory_space<vmem>>, vector<1x32xf32>
    %62 = vector.broadcast %61 : vector<1x32xf32> to vector<496x32xf32>
    %63 = arith.addf %60, %62 : vector<496x32xf32>
    %cst_60 = arith.constant dense<0.000000e+00> : vector<32xf32>
    %64 = vector.multi_reduction <add>, %63, %cst_60 [0] : vector<496x32xf32> to vector<32xf32>
    %65 = vector.shape_cast %64 : vector<32xf32> to vector<1x32xf32>
    %66 = arith.addf %31, %65 : vector<1x32xf32>
    %67 = arith.mulf %63, %63 : vector<496x32xf32>
    %cst_61 = arith.constant dense<0.000000e+00> : vector<32xf32>
    %68 = vector.multi_reduction <add>, %67, %cst_61 [0] : vector<496x32xf32> to vector<32xf32>
    %69 = vector.shape_cast %68 : vector<32xf32> to vector<1x32xf32>
    %70 = arith.addf %35, %69 : vector<1x32xf32>
    %c496 = arith.constant 496 : index
    %c0_62 = arith.constant 0 : index
    %71 = vector.load %arg20[%c496, %c0_62] : memref<992x32xf32, #tpu.memory_space<vmem>>, vector<496x32xf32>
    tpu.vector_store %arg20[%c496, %c0_62], %63 {strides = array<i32>} : memref<992x32xf32, #tpu.memory_space<vmem>>, vector<496x32xf32>,
    %cst_63 = arith.constant 0.00100806449 : f32
    %72 = vector.broadcast %cst_63 : f32 to vector<1x32xf32>
    %73 = arith.mulf %66, %72 : vector<1x32xf32>
    %cst_64 = arith.constant 0.00100806449 : f32
    %74 = vector.broadcast %cst_64 : f32 to vector<1x32xf32>
    %75 = arith.mulf %70, %74 : vector<1x32xf32>
    %76 = arith.mulf %73, %73 : vector<1x32xf32>
    %77 = arith.subf %75, %76 : vector<1x32xf32>
    %c0_65 = arith.constant 0 : index
    %c0_66 = arith.constant 0 : index
    %78 = vector.load %arg3[%c0_65, %c0_66] : memref<1x32xf32, #tpu.memory_space<vmem>>, vector<1x32xf32>
    %cst_67 = arith.constant 9.99999974E-6 : f32
    %79 = vector.broadcast %cst_67 : f32 to vector<1x32xf32>
    %80 = arith.addf %77, %79 : vector<1x32xf32>
    %81 = math.rsqrt %80 : vector<1x32xf32>
    %82 = arith.mulf %78, %81 : vector<1x32xf32>
    %c0_68 = arith.constant 0 : index
    %c0_69 = arith.constant 0 : index
    %83 = vector.load %arg4[%c0_68, %c0_69] : memref<1x32xf32, #tpu.memory_space<vmem>>, vector<1x32xf32>
    %84 = arith.mulf %73, %82 : vector<1x32xf32>
    %85 = arith.subf %83, %84 : vector<1x32xf32>
    %c0_70 = arith.constant 0 : index
    %c0_71 = arith.constant 0 : index
    %86 = tpu.strided_load %arg20[%c0_70, %c0_71] {strides = array<i32: 4, 1>} : memref<992x32xf32, #tpu.memory_space<vmem>>, vector<124x32xf32>
    %87 = vector.broadcast %82 : vector<1x32xf32> to vector<124x32xf32>
    %88 = arith.mulf %86, %87 : vector<124x32xf32>
    %89 = vector.broadcast %85 : vector<1x32xf32> to vector<124x32xf32>
    %90 = arith.addf %88, %89 : vector<124x32xf32>
    %c1_72 = arith.constant 1 : index
    %c0_73 = arith.constant 0 : index
    %91 = tpu.strided_load %arg20[%c1_72, %c0_73] {strides = array<i32: 4, 1>} : memref<992x32xf32, #tpu.memory_space<vmem>>, vector<124x32xf32>
    %92 = vector.broadcast %82 : vector<1x32xf32> to vector<124x32xf32>
    %93 = arith.mulf %91, %92 : vector<124x32xf32>
    %94 = vector.broadcast %85 : vector<1x32xf32> to vector<124x32xf32>
    %95 = arith.addf %93, %94 : vector<124x32xf32>
    %96 = arith.maximumf %90, %95 : vector<124x32xf32>
    %c2_74 = arith.constant 2 : index
    %c0_75 = arith.constant 0 : index
    %97 = tpu.strided_load %arg20[%c2_74, %c0_75] {strides = array<i32: 4, 1>} : memref<992x32xf32, #tpu.memory_space<vmem>>, vector<124x32xf32>
    %98 = vector.broadcast %82 : vector<1x32xf32> to vector<124x32xf32>
    %99 = arith.mulf %97, %98 : vector<124x32xf32>
    %100 = vector.broadcast %85 : vector<1x32xf32> to vector<124x32xf32>
    %101 = arith.addf %99, %100 : vector<124x32xf32>
    %102 = arith.maximumf %96, %101 : vector<124x32xf32>
    %c3_76 = arith.constant 3 : index
    %c0_77 = arith.constant 0 : index
    %103 = tpu.strided_load %arg20[%c3_76, %c0_77] {strides = array<i32: 4, 1>} : memref<992x32xf32, #tpu.memory_space<vmem>>, vector<124x32xf32>
    %104 = vector.broadcast %82 : vector<1x32xf32> to vector<124x32xf32>
    %105 = arith.mulf %103, %104 : vector<124x32xf32>
    %106 = vector.broadcast %85 : vector<1x32xf32> to vector<124x32xf32>
    %107 = arith.addf %105, %106 : vector<124x32xf32>
    %108 = arith.maximumf %102, %107 : vector<124x32xf32>
    %cst_78 = arith.constant 0.000000e+00 : f32
    %109 = vector.broadcast %cst_78 : f32 to vector<124x32xf32>
    %110 = arith.maximumf %108, %109 : vector<124x32xf32>
    %c0_79 = arith.constant 0 : index
    %c0_80 = arith.constant 0 : index
    %c0_81 = arith.constant 0 : index
    %111 = vector.load %arg24[%c0_79, %c0_80, %c0_81] : memref<2x124x32xf32, #tpu.memory_space<vmem>>, vector<1x124x32xf32>
    %112 = vector.shape_cast %111 : vector<1x124x32xf32> to vector<124x32xf32>
    %113 = vector.shape_cast %110 : vector<124x32xf32> to vector<1x124x32xf32>
    tpu.vector_store %arg24[%c0_79, %c0_80, %c0_81], %113 {strides = array<i32>} : memref<2x124x32xf32, #tpu.memory_space<vmem>>, vector<1x124x32xf32>,
    %c496_82 = arith.constant 496 : index
    %c0_83 = arith.constant 0 : index
    %114 = tpu.strided_load %arg20[%c496_82, %c0_83] {strides = array<i32: 4, 1>} : memref<992x32xf32, #tpu.memory_space<vmem>>, vector<124x32xf32>
    %115 = vector.broadcast %82 : vector<1x32xf32> to vector<124x32xf32>
    %116 = arith.mulf %114, %115 : vector<124x32xf32>
    %117 = vector.broadcast %85 : vector<1x32xf32> to vector<124x32xf32>
    %118 = arith.addf %116, %117 : vector<124x32xf32>
    %c497 = arith.constant 497 : index
    %c0_84 = arith.constant 0 : index
    %119 = tpu.strided_load %arg20[%c497, %c0_84] {strides = array<i32: 4, 1>} : memref<992x32xf32, #tpu.memory_space<vmem>>, vector<124x32xf32>
    %120 = vector.broadcast %82 : vector<1x32xf32> to vector<124x32xf32>
    %121 = arith.mulf %119, %120 : vector<124x32xf32>
    %122 = vector.broadcast %85 : vector<1x32xf32> to vector<124x32xf32>
    %123 = arith.addf %121, %122 : vector<124x32xf32>
    %124 = arith.maximumf %118, %123 : vector<124x32xf32>
    %c498 = arith.constant 498 : index
    %c0_85 = arith.constant 0 : index
    %125 = tpu.strided_load %arg20[%c498, %c0_85] {strides = array<i32: 4, 1>} : memref<992x32xf32, #tpu.memory_space<vmem>>, vector<124x32xf32>
    %126 = vector.broadcast %82 : vector<1x32xf32> to vector<124x32xf32>
    %127 = arith.mulf %125, %126 : vector<124x32xf32>
    %128 = vector.broadcast %85 : vector<1x32xf32> to vector<124x32xf32>
    %129 = arith.addf %127, %128 : vector<124x32xf32>
    %130 = arith.maximumf %124, %129 : vector<124x32xf32>
    %c499 = arith.constant 499 : index
    %c0_86 = arith.constant 0 : index
    %131 = tpu.strided_load %arg20[%c499, %c0_86] {strides = array<i32: 4, 1>} : memref<992x32xf32, #tpu.memory_space<vmem>>, vector<124x32xf32>
    %132 = vector.broadcast %82 : vector<1x32xf32> to vector<124x32xf32>
    %133 = arith.mulf %131, %132 : vector<124x32xf32>
    %134 = vector.broadcast %85 : vector<1x32xf32> to vector<124x32xf32>
    %135 = arith.addf %133, %134 : vector<124x32xf32>
    %136 = arith.maximumf %130, %135 : vector<124x32xf32>
    %cst_87 = arith.constant 0.000000e+00 : f32
    %137 = vector.broadcast %cst_87 : f32 to vector<124x32xf32>
    %138 = arith.maximumf %136, %137 : vector<124x32xf32>
    %c1_88 = arith.constant 1 : index
    %c0_89 = arith.constant 0 : index
    %c0_90 = arith.constant 0 : index
    %139 = vector.load %arg24[%c1_88, %c0_89, %c0_90] : memref<2x124x32xf32, #tpu.memory_space<vmem>>, vector<1x124x32xf32>
    %140 = vector.shape_cast %139 : vector<1x124x32xf32> to vector<124x32xf32>
    %141 = vector.shape_cast %138 : vector<124x32xf32> to vector<1x124x32xf32>
    tpu.vector_store %arg24[%c1_88, %c0_89, %c0_90], %141 {strides = array<i32>} : memref<2x124x32xf32, #tpu.memory_space<vmem>>, vector<1x124x32xf32>,
    %cst_91 = arith.constant 0.000000e+00 : f32
    %142 = vector.broadcast %cst_91 : f32 to vector<1x32xf32>
    %cst_92 = arith.constant 0.000000e+00 : f32
    %143 = vector.broadcast %cst_92 : f32 to vector<1x32xf32>
    %c0_93 = arith.constant 0 : index
    %c0_94 = arith.constant 0 : index
    %c0_95 = arith.constant 0 : index
    %144 = vector.load %arg24[%c0_93, %c0_94, %c0_95] : memref<2x124x32xf32, #tpu.memory_space<vmem>>, vector<1x122x32xf32>
    %145 = vector.shape_cast %144 : vector<1x122x32xf32> to vector<122x32xf32>
    %c0_96 = arith.constant 0 : index
    %c0_97 = arith.constant 0 : index
    %146 = vector.load %arg5[%c0_96, %c0_97] : memref<96x32xf32, #tpu.memory_space<vmem>>, vector<32x32xf32>
    %cst_98 = arith.constant dense<0.000000e+00> : vector<122x32xf32>
    %147 = tpu.matmul %145, %146, %cst_98 {dimension_numbers = #tpu.dot_dimension_numbers<[1], [0], [0], [1], [0, 0, 1, 1], [], []>} : vector<122x32xf32>, vector<32x32xf32>, vector<122x32xf32> -> vector<122x32xf32>
    %c0_99 = arith.constant 0 : index
    %c1_100 = arith.constant 1 : index
    %c0_101 = arith.constant 0 : index
    %148 = vector.load %arg24[%c0_99, %c1_100, %c0_101] : memref<2x124x32xf32, #tpu.memory_space<vmem>>, vector<1x122x32xf32>
    %149 = vector.shape_cast %148 : vector<1x122x32xf32> to vector<122x32xf32>
    %c32_102 = arith.constant 32 : index
    %c0_103 = arith.constant 0 : index
    %150 = vector.load %arg5[%c32_102, %c0_103] : memref<96x32xf32, #tpu.memory_space<vmem>>, vector<32x32xf32>
    %cst_104 = arith.constant dense<0.000000e+00> : vector<122x32xf32>
    %151 = tpu.matmul %149, %150, %cst_104 {dimension_numbers = #tpu.dot_dimension_numbers<[1], [0], [0], [1], [0, 0, 1, 1], [], []>} : vector<122x32xf32>, vector<32x32xf32>, vector<122x32xf32> -> vector<122x32xf32>
    %152 = arith.addf %147, %151 : vector<122x32xf32>
    %c0_105 = arith.constant 0 : index
    %c2_106 = arith.constant 2 : index
    %c0_107 = arith.constant 0 : index
    %153 = vector.load %arg24[%c0_105, %c2_106, %c0_107] : memref<2x124x32xf32, #tpu.memory_space<vmem>>, vector<1x122x32xf32>
    %154 = vector.shape_cast %153 : vector<1x122x32xf32> to vector<122x32xf32>
    %c64_108 = arith.constant 64 : index
    %c0_109 = arith.constant 0 : index
    %155 = vector.load %arg5[%c64_108, %c0_109] : memref<96x32xf32, #tpu.memory_space<vmem>>, vector<32x32xf32>
    %cst_110 = arith.constant dense<0.000000e+00> : vector<122x32xf32>
    %156 = tpu.matmul %154, %155, %cst_110 {dimension_numbers = #tpu.dot_dimension_numbers<[1], [0], [0], [1], [0, 0, 1, 1], [], []>} : vector<122x32xf32>, vector<32x32xf32>, vector<122x32xf32> -> vector<122x32xf32>
    %157 = arith.addf %152, %156 : vector<122x32xf32>
    %c0_111 = arith.constant 0 : index
    %c0_112 = arith.constant 0 : index
    %158 = vector.load %arg6[%c0_111, %c0_112] : memref<1x32xf32, #tpu.memory_space<vmem>>, vector<1x32xf32>
    %159 = vector.broadcast %158 : vector<1x32xf32> to vector<122x32xf32>
    %160 = arith.addf %157, %159 : vector<122x32xf32>
    %cst_113 = arith.constant dense<0.000000e+00> : vector<32xf32>
    %161 = vector.multi_reduction <add>, %160, %cst_113 [0] : vector<122x32xf32> to vector<32xf32>
    %162 = vector.shape_cast %161 : vector<32xf32> to vector<1x32xf32>
    %163 = arith.addf %142, %162 : vector<1x32xf32>
    %164 = arith.mulf %160, %160 : vector<122x32xf32>
    %cst_114 = arith.constant dense<0.000000e+00> : vector<32xf32>
    %165 = vector.multi_reduction <add>, %164, %cst_114 [0] : vector<122x32xf32> to vector<32xf32>
    %166 = vector.shape_cast %165 : vector<32xf32> to vector<1x32xf32>
    %167 = arith.addf %143, %166 : vector<1x32xf32>
    %c0_115 = arith.constant 0 : index
    %c0_116 = arith.constant 0 : index
    %168 = vector.load %arg21[%c0_115, %c0_116] : memref<244x32xf32, #tpu.memory_space<vmem>>, vector<122x32xf32>
    tpu.vector_store %arg21[%c0_115, %c0_116], %160 {strides = array<i32>} : memref<244x32xf32, #tpu.memory_space<vmem>>, vector<122x32xf32>,
    %c1_117 = arith.constant 1 : index
    %c0_118 = arith.constant 0 : index
    %c0_119 = arith.constant 0 : index
    %169 = vector.load %arg24[%c1_117, %c0_118, %c0_119] : memref<2x124x32xf32, #tpu.memory_space<vmem>>, vector<1x122x32xf32>
    %170 = vector.shape_cast %169 : vector<1x122x32xf32> to vector<122x32xf32>
    %c0_120 = arith.constant 0 : index
    %c0_121 = arith.constant 0 : index
    %171 = vector.load %arg5[%c0_120, %c0_121] : memref<96x32xf32, #tpu.memory_space<vmem>>, vector<32x32xf32>
    %cst_122 = arith.constant dense<0.000000e+00> : vector<122x32xf32>
    %172 = tpu.matmul %170, %171, %cst_122 {dimension_numbers = #tpu.dot_dimension_numbers<[1], [0], [0], [1], [0, 0, 1, 1], [], []>} : vector<122x32xf32>, vector<32x32xf32>, vector<122x32xf32> -> vector<122x32xf32>
    %c1_123 = arith.constant 1 : index
    %c1_124 = arith.constant 1 : index
    %c0_125 = arith.constant 0 : index
    %173 = vector.load %arg24[%c1_123, %c1_124, %c0_125] : memref<2x124x32xf32, #tpu.memory_space<vmem>>, vector<1x122x32xf32>
    %174 = vector.shape_cast %173 : vector<1x122x32xf32> to vector<122x32xf32>
    %c32_126 = arith.constant 32 : index
    %c0_127 = arith.constant 0 : index
    %175 = vector.load %arg5[%c32_126, %c0_127] : memref<96x32xf32, #tpu.memory_space<vmem>>, vector<32x32xf32>
    %cst_128 = arith.constant dense<0.000000e+00> : vector<122x32xf32>
    %176 = tpu.matmul %174, %175, %cst_128 {dimension_numbers = #tpu.dot_dimension_numbers<[1], [0], [0], [1], [0, 0, 1, 1], [], []>} : vector<122x32xf32>, vector<32x32xf32>, vector<122x32xf32> -> vector<122x32xf32>
    %177 = arith.addf %172, %176 : vector<122x32xf32>
    %c1_129 = arith.constant 1 : index
    %c2_130 = arith.constant 2 : index
    %c0_131 = arith.constant 0 : index
    %178 = vector.load %arg24[%c1_129, %c2_130, %c0_131] : memref<2x124x32xf32, #tpu.memory_space<vmem>>, vector<1x122x32xf32>
    %179 = vector.shape_cast %178 : vector<1x122x32xf32> to vector<122x32xf32>
    %c64_132 = arith.constant 64 : index
    %c0_133 = arith.constant 0 : index
    %180 = vector.load %arg5[%c64_132, %c0_133] : memref<96x32xf32, #tpu.memory_space<vmem>>, vector<32x32xf32>
    %cst_134 = arith.constant dense<0.000000e+00> : vector<122x32xf32>
    %181 = tpu.matmul %179, %180, %cst_134 {dimension_numbers = #tpu.dot_dimension_numbers<[1], [0], [0], [1], [0, 0, 1, 1], [], []>} : vector<122x32xf32>, vector<32x32xf32>, vector<122x32xf32> -> vector<122x32xf32>
    %182 = arith.addf %177, %181 : vector<122x32xf32>
    %c0_135 = arith.constant 0 : index
    %c0_136 = arith.constant 0 : index
    %183 = vector.load %arg6[%c0_135, %c0_136] : memref<1x32xf32, #tpu.memory_space<vmem>>, vector<1x32xf32>
    %184 = vector.broadcast %183 : vector<1x32xf32> to vector<122x32xf32>
    %185 = arith.addf %182, %184 : vector<122x32xf32>
    %cst_137 = arith.constant dense<0.000000e+00> : vector<32xf32>
    %186 = vector.multi_reduction <add>, %185, %cst_137 [0] : vector<122x32xf32> to vector<32xf32>
    %187 = vector.shape_cast %186 : vector<32xf32> to vector<1x32xf32>
    %188 = arith.addf %163, %187 : vector<1x32xf32>
    %189 = arith.mulf %185, %185 : vector<122x32xf32>
    %cst_138 = arith.constant dense<0.000000e+00> : vector<32xf32>
    %190 = vector.multi_reduction <add>, %189, %cst_138 [0] : vector<122x32xf32> to vector<32xf32>
    %191 = vector.shape_cast %190 : vector<32xf32> to vector<1x32xf32>
    %192 = arith.addf %167, %191 : vector<1x32xf32>
    %c122 = arith.constant 122 : index
    %c0_139 = arith.constant 0 : index
    %193 = vector.load %arg21[%c122, %c0_139] : memref<244x32xf32, #tpu.memory_space<vmem>>, vector<122x32xf32>
    tpu.vector_store %arg21[%c122, %c0_139], %185 {strides = array<i32>} : memref<244x32xf32, #tpu.memory_space<vmem>>, vector<122x32xf32>,
    %cst_140 = arith.constant 0.00409836043 : f32
    %194 = vector.broadcast %cst_140 : f32 to vector<1x32xf32>
    %195 = arith.mulf %188, %194 : vector<1x32xf32>
    %cst_141 = arith.constant 0.00409836043 : f32
    %196 = vector.broadcast %cst_141 : f32 to vector<1x32xf32>
    %197 = arith.mulf %192, %196 : vector<1x32xf32>
    %198 = arith.mulf %195, %195 : vector<1x32xf32>
    %199 = arith.subf %197, %198 : vector<1x32xf32>
    %c0_142 = arith.constant 0 : index
    %c0_143 = arith.constant 0 : index
    %200 = vector.load %arg7[%c0_142, %c0_143] : memref<1x32xf32, #tpu.memory_space<vmem>>, vector<1x32xf32>
    %cst_144 = arith.constant 9.99999974E-6 : f32
    %201 = vector.broadcast %cst_144 : f32 to vector<1x32xf32>
    %202 = arith.addf %199, %201 : vector<1x32xf32>
    %203 = math.rsqrt %202 : vector<1x32xf32>
    %204 = arith.mulf %200, %203 : vector<1x32xf32>
    %c0_145 = arith.constant 0 : index
    %c0_146 = arith.constant 0 : index
    %205 = vector.load %arg8[%c0_145, %c0_146] : memref<1x32xf32, #tpu.memory_space<vmem>>, vector<1x32xf32>
    %206 = arith.mulf %195, %204 : vector<1x32xf32>
    %207 = arith.subf %205, %206 : vector<1x32xf32>
    %c0_147 = arith.constant 0 : index
    %c0_148 = arith.constant 0 : index
    %208 = tpu.strided_load %arg21[%c0_147, %c0_148] {strides = array<i32: 4, 1>} : memref<244x32xf32, #tpu.memory_space<vmem>>, vector<30x32xf32>
    %209 = vector.broadcast %204 : vector<1x32xf32> to vector<30x32xf32>
    %210 = arith.mulf %208, %209 : vector<30x32xf32>
    %211 = vector.broadcast %207 : vector<1x32xf32> to vector<30x32xf32>
    %212 = arith.addf %210, %211 : vector<30x32xf32>
    %c1_149 = arith.constant 1 : index
    %c0_150 = arith.constant 0 : index
    %213 = tpu.strided_load %arg21[%c1_149, %c0_150] {strides = array<i32: 4, 1>} : memref<244x32xf32, #tpu.memory_space<vmem>>, vector<30x32xf32>
    %214 = vector.broadcast %204 : vector<1x32xf32> to vector<30x32xf32>
    %215 = arith.mulf %213, %214 : vector<30x32xf32>
    %216 = vector.broadcast %207 : vector<1x32xf32> to vector<30x32xf32>
    %217 = arith.addf %215, %216 : vector<30x32xf32>
    %218 = arith.maximumf %212, %217 : vector<30x32xf32>
    %c2_151 = arith.constant 2 : index
    %c0_152 = arith.constant 0 : index
    %219 = tpu.strided_load %arg21[%c2_151, %c0_152] {strides = array<i32: 4, 1>} : memref<244x32xf32, #tpu.memory_space<vmem>>, vector<30x32xf32>
    %220 = vector.broadcast %204 : vector<1x32xf32> to vector<30x32xf32>
    %221 = arith.mulf %219, %220 : vector<30x32xf32>
    %222 = vector.broadcast %207 : vector<1x32xf32> to vector<30x32xf32>
    %223 = arith.addf %221, %222 : vector<30x32xf32>
    %224 = arith.maximumf %218, %223 : vector<30x32xf32>
    %c3_153 = arith.constant 3 : index
    %c0_154 = arith.constant 0 : index
    %225 = tpu.strided_load %arg21[%c3_153, %c0_154] {strides = array<i32: 4, 1>} : memref<244x32xf32, #tpu.memory_space<vmem>>, vector<30x32xf32>
    %226 = vector.broadcast %204 : vector<1x32xf32> to vector<30x32xf32>
    %227 = arith.mulf %225, %226 : vector<30x32xf32>
    %228 = vector.broadcast %207 : vector<1x32xf32> to vector<30x32xf32>
    %229 = arith.addf %227, %228 : vector<30x32xf32>
    %230 = arith.maximumf %224, %229 : vector<30x32xf32>
    %cst_155 = arith.constant 0.000000e+00 : f32
    %231 = vector.broadcast %cst_155 : f32 to vector<30x32xf32>
    %232 = arith.maximumf %230, %231 : vector<30x32xf32>
    %c0_156 = arith.constant 0 : index
    %c0_157 = arith.constant 0 : index
    %c0_158 = arith.constant 0 : index
    %233 = vector.load %arg25[%c0_156, %c0_157, %c0_158] : memref<2x30x32xf32, #tpu.memory_space<vmem>>, vector<1x30x32xf32>
    %234 = vector.shape_cast %233 : vector<1x30x32xf32> to vector<30x32xf32>
    %235 = vector.shape_cast %232 : vector<30x32xf32> to vector<1x30x32xf32>
    tpu.vector_store %arg25[%c0_156, %c0_157, %c0_158], %235 {strides = array<i32>} : memref<2x30x32xf32, #tpu.memory_space<vmem>>, vector<1x30x32xf32>,
    %c122_159 = arith.constant 122 : index
    %c0_160 = arith.constant 0 : index
    %236 = tpu.strided_load %arg21[%c122_159, %c0_160] {strides = array<i32: 4, 1>} : memref<244x32xf32, #tpu.memory_space<vmem>>, vector<30x32xf32>
    %237 = vector.broadcast %204 : vector<1x32xf32> to vector<30x32xf32>
    %238 = arith.mulf %236, %237 : vector<30x32xf32>
    %239 = vector.broadcast %207 : vector<1x32xf32> to vector<30x32xf32>
    %240 = arith.addf %238, %239 : vector<30x32xf32>
    %c123 = arith.constant 123 : index
    %c0_161 = arith.constant 0 : index
    %241 = tpu.strided_load %arg21[%c123, %c0_161] {strides = array<i32: 4, 1>} : memref<244x32xf32, #tpu.memory_space<vmem>>, vector<30x32xf32>
    %242 = vector.broadcast %204 : vector<1x32xf32> to vector<30x32xf32>
    %243 = arith.mulf %241, %242 : vector<30x32xf32>
    %244 = vector.broadcast %207 : vector<1x32xf32> to vector<30x32xf32>
    %245 = arith.addf %243, %244 : vector<30x32xf32>
    %246 = arith.maximumf %240, %245 : vector<30x32xf32>
    %c124 = arith.constant 124 : index
    %c0_162 = arith.constant 0 : index
    %247 = tpu.strided_load %arg21[%c124, %c0_162] {strides = array<i32: 4, 1>} : memref<244x32xf32, #tpu.memory_space<vmem>>, vector<30x32xf32>
    %248 = vector.broadcast %204 : vector<1x32xf32> to vector<30x32xf32>
    %249 = arith.mulf %247, %248 : vector<30x32xf32>
    %250 = vector.broadcast %207 : vector<1x32xf32> to vector<30x32xf32>
    %251 = arith.addf %249, %250 : vector<30x32xf32>
    %252 = arith.maximumf %246, %251 : vector<30x32xf32>
    %c125 = arith.constant 125 : index
    %c0_163 = arith.constant 0 : index
    %253 = tpu.strided_load %arg21[%c125, %c0_163] {strides = array<i32: 4, 1>} : memref<244x32xf32, #tpu.memory_space<vmem>>, vector<30x32xf32>
    %254 = vector.broadcast %204 : vector<1x32xf32> to vector<30x32xf32>
    %255 = arith.mulf %253, %254 : vector<30x32xf32>
    %256 = vector.broadcast %207 : vector<1x32xf32> to vector<30x32xf32>
    %257 = arith.addf %255, %256 : vector<30x32xf32>
    %258 = arith.maximumf %252, %257 : vector<30x32xf32>
    %cst_164 = arith.constant 0.000000e+00 : f32
    %259 = vector.broadcast %cst_164 : f32 to vector<30x32xf32>
    %260 = arith.maximumf %258, %259 : vector<30x32xf32>
    %c1_165 = arith.constant 1 : index
    %c0_166 = arith.constant 0 : index
    %c0_167 = arith.constant 0 : index
    %261 = vector.load %arg25[%c1_165, %c0_166, %c0_167] : memref<2x30x32xf32, #tpu.memory_space<vmem>>, vector<1x30x32xf32>
    %262 = vector.shape_cast %261 : vector<1x30x32xf32> to vector<30x32xf32>
    %263 = vector.shape_cast %260 : vector<30x32xf32> to vector<1x30x32xf32>
    tpu.vector_store %arg25[%c1_165, %c0_166, %c0_167], %263 {strides = array<i32>} : memref<2x30x32xf32, #tpu.memory_space<vmem>>, vector<1x30x32xf32>,
    %cst_168 = arith.constant 0.000000e+00 : f32
    %264 = vector.broadcast %cst_168 : f32 to vector<1x64xf32>
    %cst_169 = arith.constant 0.000000e+00 : f32
    %265 = vector.broadcast %cst_169 : f32 to vector<1x64xf32>
    %c0_170 = arith.constant 0 : index
    %c0_171 = arith.constant 0 : index
    %c0_172 = arith.constant 0 : index
    %266 = vector.load %arg25[%c0_170, %c0_171, %c0_172] : memref<2x30x32xf32, #tpu.memory_space<vmem>>, vector<1x28x32xf32>
    %267 = vector.shape_cast %266 : vector<1x28x32xf32> to vector<28x32xf32>
    %c0_173 = arith.constant 0 : index
    %c0_174 = arith.constant 0 : index
    %268 = vector.load %arg9[%c0_173, %c0_174] : memref<96x64xf32, #tpu.memory_space<vmem>>, vector<32x64xf32>
    %cst_175 = arith.constant dense<0.000000e+00> : vector<28x64xf32>
    %269 = tpu.matmul %267, %268, %cst_175 {dimension_numbers = #tpu.dot_dimension_numbers<[1], [0], [0], [1], [0, 0, 1, 1], [], []>} : vector<28x32xf32>, vector<32x64xf32>, vector<28x64xf32> -> vector<28x64xf32>
    %c0_176 = arith.constant 0 : index
    %c1_177 = arith.constant 1 : index
    %c0_178 = arith.constant 0 : index
    %270 = vector.load %arg25[%c0_176, %c1_177, %c0_178] : memref<2x30x32xf32, #tpu.memory_space<vmem>>, vector<1x28x32xf32>
    %271 = vector.shape_cast %270 : vector<1x28x32xf32> to vector<28x32xf32>
    %c32_179 = arith.constant 32 : index
    %c0_180 = arith.constant 0 : index
    %272 = vector.load %arg9[%c32_179, %c0_180] : memref<96x64xf32, #tpu.memory_space<vmem>>, vector<32x64xf32>
    %cst_181 = arith.constant dense<0.000000e+00> : vector<28x64xf32>
    %273 = tpu.matmul %271, %272, %cst_181 {dimension_numbers = #tpu.dot_dimension_numbers<[1], [0], [0], [1], [0, 0, 1, 1], [], []>} : vector<28x32xf32>, vector<32x64xf32>, vector<28x64xf32> -> vector<28x64xf32>
    %274 = arith.addf %269, %273 : vector<28x64xf32>
    %c0_182 = arith.constant 0 : index
    %c2_183 = arith.constant 2 : index
    %c0_184 = arith.constant 0 : index
    %275 = vector.load %arg25[%c0_182, %c2_183, %c0_184] : memref<2x30x32xf32, #tpu.memory_space<vmem>>, vector<1x28x32xf32>
    %276 = vector.shape_cast %275 : vector<1x28x32xf32> to vector<28x32xf32>
    %c64_185 = arith.constant 64 : index
    %c0_186 = arith.constant 0 : index
    %277 = vector.load %arg9[%c64_185, %c0_186] : memref<96x64xf32, #tpu.memory_space<vmem>>, vector<32x64xf32>
    %cst_187 = arith.constant dense<0.000000e+00> : vector<28x64xf32>
    %278 = tpu.matmul %276, %277, %cst_187 {dimension_numbers = #tpu.dot_dimension_numbers<[1], [0], [0], [1], [0, 0, 1, 1], [], []>} : vector<28x32xf32>, vector<32x64xf32>, vector<28x64xf32> -> vector<28x64xf32>
    %279 = arith.addf %274, %278 : vector<28x64xf32>
    %c0_188 = arith.constant 0 : index
    %c0_189 = arith.constant 0 : index
    %280 = vector.load %arg10[%c0_188, %c0_189] : memref<1x64xf32, #tpu.memory_space<vmem>>, vector<1x64xf32>
    %281 = vector.broadcast %280 : vector<1x64xf32> to vector<28x64xf32>
    %282 = arith.addf %279, %281 : vector<28x64xf32>
    %cst_190 = arith.constant dense<0.000000e+00> : vector<64xf32>
    %283 = vector.multi_reduction <add>, %282, %cst_190 [0] : vector<28x64xf32> to vector<64xf32>
    %284 = vector.shape_cast %283 : vector<64xf32> to vector<1x64xf32>
    %285 = arith.addf %264, %284 : vector<1x64xf32>
    %286 = arith.mulf %282, %282 : vector<28x64xf32>
    %cst_191 = arith.constant dense<0.000000e+00> : vector<64xf32>
    %287 = vector.multi_reduction <add>, %286, %cst_191 [0] : vector<28x64xf32> to vector<64xf32>
    %288 = vector.shape_cast %287 : vector<64xf32> to vector<1x64xf32>
    %289 = arith.addf %265, %288 : vector<1x64xf32>
    %c0_192 = arith.constant 0 : index
    %c0_193 = arith.constant 0 : index
    %290 = vector.load %arg22[%c0_192, %c0_193] : memref<56x64xf32, #tpu.memory_space<vmem>>, vector<28x64xf32>
    tpu.vector_store %arg22[%c0_192, %c0_193], %282 {strides = array<i32>} : memref<56x64xf32, #tpu.memory_space<vmem>>, vector<28x64xf32>,
    %c1_194 = arith.constant 1 : index
    %c0_195 = arith.constant 0 : index
    %c0_196 = arith.constant 0 : index
    %291 = vector.load %arg25[%c1_194, %c0_195, %c0_196] : memref<2x30x32xf32, #tpu.memory_space<vmem>>, vector<1x28x32xf32>
    %292 = vector.shape_cast %291 : vector<1x28x32xf32> to vector<28x32xf32>
    %c0_197 = arith.constant 0 : index
    %c0_198 = arith.constant 0 : index
    %293 = vector.load %arg9[%c0_197, %c0_198] : memref<96x64xf32, #tpu.memory_space<vmem>>, vector<32x64xf32>
    %cst_199 = arith.constant dense<0.000000e+00> : vector<28x64xf32>
    %294 = tpu.matmul %292, %293, %cst_199 {dimension_numbers = #tpu.dot_dimension_numbers<[1], [0], [0], [1], [0, 0, 1, 1], [], []>} : vector<28x32xf32>, vector<32x64xf32>, vector<28x64xf32> -> vector<28x64xf32>
    %c1_200 = arith.constant 1 : index
    %c1_201 = arith.constant 1 : index
    %c0_202 = arith.constant 0 : index
    %295 = vector.load %arg25[%c1_200, %c1_201, %c0_202] : memref<2x30x32xf32, #tpu.memory_space<vmem>>, vector<1x28x32xf32>
    %296 = vector.shape_cast %295 : vector<1x28x32xf32> to vector<28x32xf32>
    %c32_203 = arith.constant 32 : index
    %c0_204 = arith.constant 0 : index
    %297 = vector.load %arg9[%c32_203, %c0_204] : memref<96x64xf32, #tpu.memory_space<vmem>>, vector<32x64xf32>
    %cst_205 = arith.constant dense<0.000000e+00> : vector<28x64xf32>
    %298 = tpu.matmul %296, %297, %cst_205 {dimension_numbers = #tpu.dot_dimension_numbers<[1], [0], [0], [1], [0, 0, 1, 1], [], []>} : vector<28x32xf32>, vector<32x64xf32>, vector<28x64xf32> -> vector<28x64xf32>
    %299 = arith.addf %294, %298 : vector<28x64xf32>
    %c1_206 = arith.constant 1 : index
    %c2_207 = arith.constant 2 : index
    %c0_208 = arith.constant 0 : index
    %300 = vector.load %arg25[%c1_206, %c2_207, %c0_208] : memref<2x30x32xf32, #tpu.memory_space<vmem>>, vector<1x28x32xf32>
    %301 = vector.shape_cast %300 : vector<1x28x32xf32> to vector<28x32xf32>
    %c64_209 = arith.constant 64 : index
    %c0_210 = arith.constant 0 : index
    %302 = vector.load %arg9[%c64_209, %c0_210] : memref<96x64xf32, #tpu.memory_space<vmem>>, vector<32x64xf32>
    %cst_211 = arith.constant dense<0.000000e+00> : vector<28x64xf32>
    %303 = tpu.matmul %301, %302, %cst_211 {dimension_numbers = #tpu.dot_dimension_numbers<[1], [0], [0], [1], [0, 0, 1, 1], [], []>} : vector<28x32xf32>, vector<32x64xf32>, vector<28x64xf32> -> vector<28x64xf32>
    %304 = arith.addf %299, %303 : vector<28x64xf32>
    %c0_212 = arith.constant 0 : index
    %c0_213 = arith.constant 0 : index
    %305 = vector.load %arg10[%c0_212, %c0_213] : memref<1x64xf32, #tpu.memory_space<vmem>>, vector<1x64xf32>
    %306 = vector.broadcast %305 : vector<1x64xf32> to vector<28x64xf32>
    %307 = arith.addf %304, %306 : vector<28x64xf32>
    %cst_214 = arith.constant dense<0.000000e+00> : vector<64xf32>
    %308 = vector.multi_reduction <add>, %307, %cst_214 [0] : vector<28x64xf32> to vector<64xf32>
    %309 = vector.shape_cast %308 : vector<64xf32> to vector<1x64xf32>
    %310 = arith.addf %285, %309 : vector<1x64xf32>
    %311 = arith.mulf %307, %307 : vector<28x64xf32>
    %cst_215 = arith.constant dense<0.000000e+00> : vector<64xf32>
    %312 = vector.multi_reduction <add>, %311, %cst_215 [0] : vector<28x64xf32> to vector<64xf32>
    %313 = vector.shape_cast %312 : vector<64xf32> to vector<1x64xf32>
    %314 = arith.addf %289, %313 : vector<1x64xf32>
    %c28 = arith.constant 28 : index
    %c0_216 = arith.constant 0 : index
    %315 = vector.load %arg22[%c28, %c0_216] : memref<56x64xf32, #tpu.memory_space<vmem>>, vector<28x64xf32>
    tpu.vector_store %arg22[%c28, %c0_216], %307 {strides = array<i32>} : memref<56x64xf32, #tpu.memory_space<vmem>>, vector<28x64xf32>,
    %cst_217 = arith.constant 0.0178571437 : f32
    %316 = vector.broadcast %cst_217 : f32 to vector<1x64xf32>
    %317 = arith.mulf %310, %316 : vector<1x64xf32>
    %cst_218 = arith.constant 0.0178571437 : f32
    %318 = vector.broadcast %cst_218 : f32 to vector<1x64xf32>
    %319 = arith.mulf %314, %318 : vector<1x64xf32>
    %320 = arith.mulf %317, %317 : vector<1x64xf32>
    %321 = arith.subf %319, %320 : vector<1x64xf32>
    %c0_219 = arith.constant 0 : index
    %c0_220 = arith.constant 0 : index
    %322 = vector.load %arg11[%c0_219, %c0_220] : memref<1x64xf32, #tpu.memory_space<vmem>>, vector<1x64xf32>
    %cst_221 = arith.constant 9.99999974E-6 : f32
    %323 = vector.broadcast %cst_221 : f32 to vector<1x64xf32>
    %324 = arith.addf %321, %323 : vector<1x64xf32>
    %325 = math.rsqrt %324 : vector<1x64xf32>
    %326 = arith.mulf %322, %325 : vector<1x64xf32>
    %c0_222 = arith.constant 0 : index
    %c0_223 = arith.constant 0 : index
    %327 = vector.load %arg12[%c0_222, %c0_223] : memref<1x64xf32, #tpu.memory_space<vmem>>, vector<1x64xf32>
    %328 = arith.mulf %317, %326 : vector<1x64xf32>
    %329 = arith.subf %327, %328 : vector<1x64xf32>
    %c0_224 = arith.constant 0 : index
    %c0_225 = arith.constant 0 : index
    %330 = tpu.strided_load %arg22[%c0_224, %c0_225] {strides = array<i32: 4, 1>} : memref<56x64xf32, #tpu.memory_space<vmem>>, vector<7x64xf32>
    %331 = vector.broadcast %326 : vector<1x64xf32> to vector<7x64xf32>
    %332 = arith.mulf %330, %331 : vector<7x64xf32>
    %333 = vector.broadcast %329 : vector<1x64xf32> to vector<7x64xf32>
    %334 = arith.addf %332, %333 : vector<7x64xf32>
    %c1_226 = arith.constant 1 : index
    %c0_227 = arith.constant 0 : index
    %335 = tpu.strided_load %arg22[%c1_226, %c0_227] {strides = array<i32: 4, 1>} : memref<56x64xf32, #tpu.memory_space<vmem>>, vector<7x64xf32>
    %336 = vector.broadcast %326 : vector<1x64xf32> to vector<7x64xf32>
    %337 = arith.mulf %335, %336 : vector<7x64xf32>
    %338 = vector.broadcast %329 : vector<1x64xf32> to vector<7x64xf32>
    %339 = arith.addf %337, %338 : vector<7x64xf32>
    %340 = arith.maximumf %334, %339 : vector<7x64xf32>
    %c2_228 = arith.constant 2 : index
    %c0_229 = arith.constant 0 : index
    %341 = tpu.strided_load %arg22[%c2_228, %c0_229] {strides = array<i32: 4, 1>} : memref<56x64xf32, #tpu.memory_space<vmem>>, vector<7x64xf32>
    %342 = vector.broadcast %326 : vector<1x64xf32> to vector<7x64xf32>
    %343 = arith.mulf %341, %342 : vector<7x64xf32>
    %344 = vector.broadcast %329 : vector<1x64xf32> to vector<7x64xf32>
    %345 = arith.addf %343, %344 : vector<7x64xf32>
    %346 = arith.maximumf %340, %345 : vector<7x64xf32>
    %c3_230 = arith.constant 3 : index
    %c0_231 = arith.constant 0 : index
    %347 = tpu.strided_load %arg22[%c3_230, %c0_231] {strides = array<i32: 4, 1>} : memref<56x64xf32, #tpu.memory_space<vmem>>, vector<7x64xf32>
    %348 = vector.broadcast %326 : vector<1x64xf32> to vector<7x64xf32>
    %349 = arith.mulf %347, %348 : vector<7x64xf32>
    %350 = vector.broadcast %329 : vector<1x64xf32> to vector<7x64xf32>
    %351 = arith.addf %349, %350 : vector<7x64xf32>
    %352 = arith.maximumf %346, %351 : vector<7x64xf32>
    %cst_232 = arith.constant 0.000000e+00 : f32
    %353 = vector.broadcast %cst_232 : f32 to vector<7x64xf32>
    %354 = arith.maximumf %352, %353 : vector<7x64xf32>
    %c0_233 = arith.constant 0 : index
    %c0_234 = arith.constant 0 : index
    %c0_235 = arith.constant 0 : index
    %355 = vector.load %arg26[%c0_233, %c0_234, %c0_235] : memref<2x7x64xf32, #tpu.memory_space<vmem>>, vector<1x7x64xf32>
    %356 = vector.shape_cast %355 : vector<1x7x64xf32> to vector<7x64xf32>
    %357 = vector.shape_cast %354 : vector<7x64xf32> to vector<1x7x64xf32>
    tpu.vector_store %arg26[%c0_233, %c0_234, %c0_235], %357 {strides = array<i32>} : memref<2x7x64xf32, #tpu.memory_space<vmem>>, vector<1x7x64xf32>,
    %c28_236 = arith.constant 28 : index
    %c0_237 = arith.constant 0 : index
    %358 = tpu.strided_load %arg22[%c28_236, %c0_237] {strides = array<i32: 4, 1>} : memref<56x64xf32, #tpu.memory_space<vmem>>, vector<7x64xf32>
    %359 = vector.broadcast %326 : vector<1x64xf32> to vector<7x64xf32>
    %360 = arith.mulf %358, %359 : vector<7x64xf32>
    %361 = vector.broadcast %329 : vector<1x64xf32> to vector<7x64xf32>
    %362 = arith.addf %360, %361 : vector<7x64xf32>
    %c29 = arith.constant 29 : index
    %c0_238 = arith.constant 0 : index
    %363 = tpu.strided_load %arg22[%c29, %c0_238] {strides = array<i32: 4, 1>} : memref<56x64xf32, #tpu.memory_space<vmem>>, vector<7x64xf32>
    %364 = vector.broadcast %326 : vector<1x64xf32> to vector<7x64xf32>
    %365 = arith.mulf %363, %364 : vector<7x64xf32>
    %366 = vector.broadcast %329 : vector<1x64xf32> to vector<7x64xf32>
    %367 = arith.addf %365, %366 : vector<7x64xf32>
    %368 = arith.maximumf %362, %367 : vector<7x64xf32>
    %c30 = arith.constant 30 : index
    %c0_239 = arith.constant 0 : index
    %369 = tpu.strided_load %arg22[%c30, %c0_239] {strides = array<i32: 4, 1>} : memref<56x64xf32, #tpu.memory_space<vmem>>, vector<7x64xf32>
    %370 = vector.broadcast %326 : vector<1x64xf32> to vector<7x64xf32>
    %371 = arith.mulf %369, %370 : vector<7x64xf32>
    %372 = vector.broadcast %329 : vector<1x64xf32> to vector<7x64xf32>
    %373 = arith.addf %371, %372 : vector<7x64xf32>
    %374 = arith.maximumf %368, %373 : vector<7x64xf32>
    %c31 = arith.constant 31 : index
    %c0_240 = arith.constant 0 : index
    %375 = tpu.strided_load %arg22[%c31, %c0_240] {strides = array<i32: 4, 1>} : memref<56x64xf32, #tpu.memory_space<vmem>>, vector<7x64xf32>
    %376 = vector.broadcast %326 : vector<1x64xf32> to vector<7x64xf32>
    %377 = arith.mulf %375, %376 : vector<7x64xf32>
    %378 = vector.broadcast %329 : vector<1x64xf32> to vector<7x64xf32>
    %379 = arith.addf %377, %378 : vector<7x64xf32>
    %380 = arith.maximumf %374, %379 : vector<7x64xf32>
    %cst_241 = arith.constant 0.000000e+00 : f32
    %381 = vector.broadcast %cst_241 : f32 to vector<7x64xf32>
    %382 = arith.maximumf %380, %381 : vector<7x64xf32>
    %c1_242 = arith.constant 1 : index
    %c0_243 = arith.constant 0 : index
    %c0_244 = arith.constant 0 : index
    %383 = vector.load %arg26[%c1_242, %c0_243, %c0_244] : memref<2x7x64xf32, #tpu.memory_space<vmem>>, vector<1x7x64xf32>
    %384 = vector.shape_cast %383 : vector<1x7x64xf32> to vector<7x64xf32>
    %385 = vector.shape_cast %382 : vector<7x64xf32> to vector<1x7x64xf32>
    tpu.vector_store %arg26[%c1_242, %c0_243, %c0_244], %385 {strides = array<i32>} : memref<2x7x64xf32, #tpu.memory_space<vmem>>, vector<1x7x64xf32>,
    %cst_245 = arith.constant 0.000000e+00 : f32
    %386 = vector.broadcast %cst_245 : f32 to vector<1x64xf32>
    %cst_246 = arith.constant 0.000000e+00 : f32
    %387 = vector.broadcast %cst_246 : f32 to vector<1x64xf32>
    %c0_247 = arith.constant 0 : index
    %c0_248 = arith.constant 0 : index
    %c0_249 = arith.constant 0 : index
    %388 = vector.load %arg26[%c0_247, %c0_248, %c0_249] : memref<2x7x64xf32, #tpu.memory_space<vmem>>, vector<1x5x64xf32>
    %389 = vector.shape_cast %388 : vector<1x5x64xf32> to vector<5x64xf32>
    %c0_250 = arith.constant 0 : index
    %c0_251 = arith.constant 0 : index
    %390 = vector.load %arg13[%c0_250, %c0_251] : memref<192x64xf32, #tpu.memory_space<vmem>>, vector<64x64xf32>
    %cst_252 = arith.constant dense<0.000000e+00> : vector<5x64xf32>
    %391 = tpu.matmul %389, %390, %cst_252 {dimension_numbers = #tpu.dot_dimension_numbers<[1], [0], [0], [1], [0, 0, 1, 1], [], []>} : vector<5x64xf32>, vector<64x64xf32>, vector<5x64xf32> -> vector<5x64xf32>
    %c0_253 = arith.constant 0 : index
    %c1_254 = arith.constant 1 : index
    %c0_255 = arith.constant 0 : index
    %392 = vector.load %arg26[%c0_253, %c1_254, %c0_255] : memref<2x7x64xf32, #tpu.memory_space<vmem>>, vector<1x5x64xf32>
    %393 = vector.shape_cast %392 : vector<1x5x64xf32> to vector<5x64xf32>
    %c64_256 = arith.constant 64 : index
    %c0_257 = arith.constant 0 : index
    %394 = vector.load %arg13[%c64_256, %c0_257] : memref<192x64xf32, #tpu.memory_space<vmem>>, vector<64x64xf32>
    %cst_258 = arith.constant dense<0.000000e+00> : vector<5x64xf32>
    %395 = tpu.matmul %393, %394, %cst_258 {dimension_numbers = #tpu.dot_dimension_numbers<[1], [0], [0], [1], [0, 0, 1, 1], [], []>} : vector<5x64xf32>, vector<64x64xf32>, vector<5x64xf32> -> vector<5x64xf32>
    %396 = arith.addf %391, %395 : vector<5x64xf32>
    %c0_259 = arith.constant 0 : index
    %c2_260 = arith.constant 2 : index
    %c0_261 = arith.constant 0 : index
    %397 = vector.load %arg26[%c0_259, %c2_260, %c0_261] : memref<2x7x64xf32, #tpu.memory_space<vmem>>, vector<1x5x64xf32>
    %398 = vector.shape_cast %397 : vector<1x5x64xf32> to vector<5x64xf32>
    %c128 = arith.constant 128 : index
    %c0_262 = arith.constant 0 : index
    %399 = vector.load %arg13[%c128, %c0_262] : memref<192x64xf32, #tpu.memory_space<vmem>>, vector<64x64xf32>
    %cst_263 = arith.constant dense<0.000000e+00> : vector<5x64xf32>
    %400 = tpu.matmul %398, %399, %cst_263 {dimension_numbers = #tpu.dot_dimension_numbers<[1], [0], [0], [1], [0, 0, 1, 1], [], []>} : vector<5x64xf32>, vector<64x64xf32>, vector<5x64xf32> -> vector<5x64xf32>
    %401 = arith.addf %396, %400 : vector<5x64xf32>
    %c0_264 = arith.constant 0 : index
    %c0_265 = arith.constant 0 : index
    %402 = vector.load %arg14[%c0_264, %c0_265] : memref<1x64xf32, #tpu.memory_space<vmem>>, vector<1x64xf32>
    %403 = vector.broadcast %402 : vector<1x64xf32> to vector<5x64xf32>
    %404 = arith.addf %401, %403 : vector<5x64xf32>
    %cst_266 = arith.constant dense<0.000000e+00> : vector<64xf32>
    %405 = vector.multi_reduction <add>, %404, %cst_266 [0] : vector<5x64xf32> to vector<64xf32>
    %406 = vector.shape_cast %405 : vector<64xf32> to vector<1x64xf32>
    %407 = arith.addf %386, %406 : vector<1x64xf32>
    %408 = arith.mulf %404, %404 : vector<5x64xf32>
    %cst_267 = arith.constant dense<0.000000e+00> : vector<64xf32>
    %409 = vector.multi_reduction <add>, %408, %cst_267 [0] : vector<5x64xf32> to vector<64xf32>
    %410 = vector.shape_cast %409 : vector<64xf32> to vector<1x64xf32>
    %411 = arith.addf %387, %410 : vector<1x64xf32>
    %c0_268 = arith.constant 0 : index
    %c0_269 = arith.constant 0 : index
    %412 = vector.load %arg23[%c0_268, %c0_269] : memref<10x64xf32, #tpu.memory_space<vmem>>, vector<5x64xf32>
    tpu.vector_store %arg23[%c0_268, %c0_269], %404 {strides = array<i32>} : memref<10x64xf32, #tpu.memory_space<vmem>>, vector<5x64xf32>,
    %c1_270 = arith.constant 1 : index
    %c0_271 = arith.constant 0 : index
    %c0_272 = arith.constant 0 : index
    %413 = vector.load %arg26[%c1_270, %c0_271, %c0_272] : memref<2x7x64xf32, #tpu.memory_space<vmem>>, vector<1x5x64xf32>
    %414 = vector.shape_cast %413 : vector<1x5x64xf32> to vector<5x64xf32>
    %c0_273 = arith.constant 0 : index
    %c0_274 = arith.constant 0 : index
    %415 = vector.load %arg13[%c0_273, %c0_274] : memref<192x64xf32, #tpu.memory_space<vmem>>, vector<64x64xf32>
    %cst_275 = arith.constant dense<0.000000e+00> : vector<5x64xf32>
    %416 = tpu.matmul %414, %415, %cst_275 {dimension_numbers = #tpu.dot_dimension_numbers<[1], [0], [0], [1], [0, 0, 1, 1], [], []>} : vector<5x64xf32>, vector<64x64xf32>, vector<5x64xf32> -> vector<5x64xf32>
    %c1_276 = arith.constant 1 : index
    %c1_277 = arith.constant 1 : index
    %c0_278 = arith.constant 0 : index
    %417 = vector.load %arg26[%c1_276, %c1_277, %c0_278] : memref<2x7x64xf32, #tpu.memory_space<vmem>>, vector<1x5x64xf32>
    %418 = vector.shape_cast %417 : vector<1x5x64xf32> to vector<5x64xf32>
    %c64_279 = arith.constant 64 : index
    %c0_280 = arith.constant 0 : index
    %419 = vector.load %arg13[%c64_279, %c0_280] : memref<192x64xf32, #tpu.memory_space<vmem>>, vector<64x64xf32>
    %cst_281 = arith.constant dense<0.000000e+00> : vector<5x64xf32>
    %420 = tpu.matmul %418, %419, %cst_281 {dimension_numbers = #tpu.dot_dimension_numbers<[1], [0], [0], [1], [0, 0, 1, 1], [], []>} : vector<5x64xf32>, vector<64x64xf32>, vector<5x64xf32> -> vector<5x64xf32>
    %421 = arith.addf %416, %420 : vector<5x64xf32>
    %c1_282 = arith.constant 1 : index
    %c2_283 = arith.constant 2 : index
    %c0_284 = arith.constant 0 : index
    %422 = vector.load %arg26[%c1_282, %c2_283, %c0_284] : memref<2x7x64xf32, #tpu.memory_space<vmem>>, vector<1x5x64xf32>
    %423 = vector.shape_cast %422 : vector<1x5x64xf32> to vector<5x64xf32>
    %c128_285 = arith.constant 128 : index
    %c0_286 = arith.constant 0 : index
    %424 = vector.load %arg13[%c128_285, %c0_286] : memref<192x64xf32, #tpu.memory_space<vmem>>, vector<64x64xf32>
    %cst_287 = arith.constant dense<0.000000e+00> : vector<5x64xf32>
    %425 = tpu.matmul %423, %424, %cst_287 {dimension_numbers = #tpu.dot_dimension_numbers<[1], [0], [0], [1], [0, 0, 1, 1], [], []>} : vector<5x64xf32>, vector<64x64xf32>, vector<5x64xf32> -> vector<5x64xf32>
    %426 = arith.addf %421, %425 : vector<5x64xf32>
    %c0_288 = arith.constant 0 : index
    %c0_289 = arith.constant 0 : index
    %427 = vector.load %arg14[%c0_288, %c0_289] : memref<1x64xf32, #tpu.memory_space<vmem>>, vector<1x64xf32>
    %428 = vector.broadcast %427 : vector<1x64xf32> to vector<5x64xf32>
    %429 = arith.addf %426, %428 : vector<5x64xf32>
    %cst_290 = arith.constant dense<0.000000e+00> : vector<64xf32>
    %430 = vector.multi_reduction <add>, %429, %cst_290 [0] : vector<5x64xf32> to vector<64xf32>
    %431 = vector.shape_cast %430 : vector<64xf32> to vector<1x64xf32>
    %432 = arith.addf %407, %431 : vector<1x64xf32>
    %433 = arith.mulf %429, %429 : vector<5x64xf32>
    %cst_291 = arith.constant dense<0.000000e+00> : vector<64xf32>
    %434 = vector.multi_reduction <add>, %433, %cst_291 [0] : vector<5x64xf32> to vector<64xf32>
    %435 = vector.shape_cast %434 : vector<64xf32> to vector<1x64xf32>
    %436 = arith.addf %411, %435 : vector<1x64xf32>
    %c5 = arith.constant 5 : index
    %c0_292 = arith.constant 0 : index
    %437 = vector.load %arg23[%c5, %c0_292] : memref<10x64xf32, #tpu.memory_space<vmem>>, vector<5x64xf32>
    tpu.vector_store %arg23[%c5, %c0_292], %429 {strides = array<i32>} : memref<10x64xf32, #tpu.memory_space<vmem>>, vector<5x64xf32>,
    %cst_293 = arith.constant 1.000000e-01 : f32
    %438 = vector.broadcast %cst_293 : f32 to vector<1x64xf32>
    %439 = arith.mulf %432, %438 : vector<1x64xf32>
    %cst_294 = arith.constant 1.000000e-01 : f32
    %440 = vector.broadcast %cst_294 : f32 to vector<1x64xf32>
    %441 = arith.mulf %436, %440 : vector<1x64xf32>
    %442 = arith.mulf %439, %439 : vector<1x64xf32>
    %443 = arith.subf %441, %442 : vector<1x64xf32>
    %c0_295 = arith.constant 0 : index
    %c0_296 = arith.constant 0 : index
    %444 = vector.load %arg15[%c0_295, %c0_296] : memref<1x64xf32, #tpu.memory_space<vmem>>, vector<1x64xf32>
    %cst_297 = arith.constant 9.99999974E-6 : f32
    %445 = vector.broadcast %cst_297 : f32 to vector<1x64xf32>
    %446 = arith.addf %443, %445 : vector<1x64xf32>
    %447 = math.rsqrt %446 : vector<1x64xf32>
    %448 = arith.mulf %444, %447 : vector<1x64xf32>
    %c0_298 = arith.constant 0 : index
    %c0_299 = arith.constant 0 : index
    %449 = vector.load %arg16[%c0_298, %c0_299] : memref<1x64xf32, #tpu.memory_space<vmem>>, vector<1x64xf32>
    %450 = arith.mulf %439, %448 : vector<1x64xf32>
    %451 = arith.subf %449, %450 : vector<1x64xf32>
    %c0_300 = arith.constant 0 : index
    %c0_301 = arith.constant 0 : index
    %452 = tpu.strided_load %arg23[%c0_300, %c0_301] {strides = array<i32: 4, 1>} : memref<10x64xf32, #tpu.memory_space<vmem>>, vector<1x64xf32>
    %453 = arith.mulf %452, %448 : vector<1x64xf32>
    %454 = arith.addf %453, %451 : vector<1x64xf32>
    %c1_302 = arith.constant 1 : index
    %c0_303 = arith.constant 0 : index
    %455 = tpu.strided_load %arg23[%c1_302, %c0_303] {strides = array<i32: 4, 1>} : memref<10x64xf32, #tpu.memory_space<vmem>>, vector<1x64xf32>
    %456 = arith.mulf %455, %448 : vector<1x64xf32>
    %457 = arith.addf %456, %451 : vector<1x64xf32>
    %458 = arith.maximumf %454, %457 : vector<1x64xf32>
    %c2_304 = arith.constant 2 : index
    %c0_305 = arith.constant 0 : index
    %459 = tpu.strided_load %arg23[%c2_304, %c0_305] {strides = array<i32: 4, 1>} : memref<10x64xf32, #tpu.memory_space<vmem>>, vector<1x64xf32>
    %460 = arith.mulf %459, %448 : vector<1x64xf32>
    %461 = arith.addf %460, %451 : vector<1x64xf32>
    %462 = arith.maximumf %458, %461 : vector<1x64xf32>
    %c3_306 = arith.constant 3 : index
    %c0_307 = arith.constant 0 : index
    %463 = tpu.strided_load %arg23[%c3_306, %c0_307] {strides = array<i32: 4, 1>} : memref<10x64xf32, #tpu.memory_space<vmem>>, vector<1x64xf32>
    %464 = arith.mulf %463, %448 : vector<1x64xf32>
    %465 = arith.addf %464, %451 : vector<1x64xf32>
    %466 = arith.maximumf %462, %465 : vector<1x64xf32>
    %cst_308 = arith.constant 0.000000e+00 : f32
    %467 = vector.broadcast %cst_308 : f32 to vector<1x64xf32>
    %468 = arith.maximumf %466, %467 : vector<1x64xf32>
    %c0_309 = arith.constant 0 : index
    %c0_310 = arith.constant 0 : index
    %c0_311 = arith.constant 0 : index
    %469 = vector.load %arg27[%c0_309, %c0_310, %c0_311] : memref<2x1x64xf32, #tpu.memory_space<vmem>>, vector<1x1x64xf32>
    %470 = vector.shape_cast %469 : vector<1x1x64xf32> to vector<1x64xf32>
    %471 = vector.shape_cast %468 : vector<1x64xf32> to vector<1x1x64xf32>
    tpu.vector_store %arg27[%c0_309, %c0_310, %c0_311], %471 {strides = array<i32>} : memref<2x1x64xf32, #tpu.memory_space<vmem>>, vector<1x1x64xf32>,
    %c5_312 = arith.constant 5 : index
    %c0_313 = arith.constant 0 : index
    %472 = tpu.strided_load %arg23[%c5_312, %c0_313] {strides = array<i32: 4, 1>} : memref<10x64xf32, #tpu.memory_space<vmem>>, vector<1x64xf32>
    %473 = arith.mulf %472, %448 : vector<1x64xf32>
    %474 = arith.addf %473, %451 : vector<1x64xf32>
    %c6 = arith.constant 6 : index
    %c0_314 = arith.constant 0 : index
    %475 = tpu.strided_load %arg23[%c6, %c0_314] {strides = array<i32: 4, 1>} : memref<10x64xf32, #tpu.memory_space<vmem>>, vector<1x64xf32>
    %476 = arith.mulf %475, %448 : vector<1x64xf32>
    %477 = arith.addf %476, %451 : vector<1x64xf32>
    %478 = arith.maximumf %474, %477 : vector<1x64xf32>
    %c7 = arith.constant 7 : index
    %c0_315 = arith.constant 0 : index
    %479 = tpu.strided_load %arg23[%c7, %c0_315] {strides = array<i32: 4, 1>} : memref<10x64xf32, #tpu.memory_space<vmem>>, vector<1x64xf32>
    %480 = arith.mulf %479, %448 : vector<1x64xf32>
    %481 = arith.addf %480, %451 : vector<1x64xf32>
    %482 = arith.maximumf %478, %481 : vector<1x64xf32>
    %c8 = arith.constant 8 : index
    %c0_316 = arith.constant 0 : index
    %483 = tpu.strided_load %arg23[%c8, %c0_316] {strides = array<i32: 4, 1>} : memref<10x64xf32, #tpu.memory_space<vmem>>, vector<1x64xf32>
    %484 = arith.mulf %483, %448 : vector<1x64xf32>
    %485 = arith.addf %484, %451 : vector<1x64xf32>
    %486 = arith.maximumf %482, %485 : vector<1x64xf32>
    %cst_317 = arith.constant 0.000000e+00 : f32
    %487 = vector.broadcast %cst_317 : f32 to vector<1x64xf32>
    %488 = arith.maximumf %486, %487 : vector<1x64xf32>
    %c1_318 = arith.constant 1 : index
    %c0_319 = arith.constant 0 : index
    %c0_320 = arith.constant 0 : index
    %489 = vector.load %arg27[%c1_318, %c0_319, %c0_320] : memref<2x1x64xf32, #tpu.memory_space<vmem>>, vector<1x1x64xf32>
    %490 = vector.shape_cast %489 : vector<1x1x64xf32> to vector<1x64xf32>
    %491 = vector.shape_cast %488 : vector<1x64xf32> to vector<1x1x64xf32>
    tpu.vector_store %arg27[%c1_318, %c0_319, %c0_320], %491 {strides = array<i32>} : memref<2x1x64xf32, #tpu.memory_space<vmem>>, vector<1x1x64xf32>,
    %c0_321 = arith.constant 0 : index
    %c0_322 = arith.constant 0 : index
    %c0_323 = arith.constant 0 : index
    %492 = vector.load %arg27[%c0_321, %c0_322, %c0_323] : memref<2x1x64xf32, #tpu.memory_space<vmem>>, vector<2x1x64xf32>
    %cst_324 = arith.constant dense<0.000000e+00> : vector<2x64xf32>
    %493 = vector.multi_reduction <add>, %492, %cst_324 [1] : vector<2x1x64xf32> to vector<2x64xf32>
    %cst_325 = arith.constant 1.000000e+00 : f32
    %494 = vector.broadcast %cst_325 : f32 to vector<2x64xf32>
    %495 = arith.divf %493, %494 : vector<2x64xf32>
    %c0_326 = arith.constant 0 : index
    %c0_327 = arith.constant 0 : index
    %496 = vector.load %arg17[%c0_326, %c0_327] : memref<64x10xf32, #tpu.memory_space<vmem>>, vector<64x10xf32>
    %cst_328 = arith.constant dense<0.000000e+00> : vector<2x10xf32>
    %497 = tpu.matmul %495, %496, %cst_328 {dimension_numbers = #tpu.dot_dimension_numbers<[1], [0], [0], [1], [0, 0, 1, 1], [], []>} : vector<2x64xf32>, vector<64x10xf32>, vector<2x10xf32> -> vector<2x10xf32>
    %c0_329 = arith.constant 0 : index
    %c0_330 = arith.constant 0 : index
    %498 = vector.load %arg18[%c0_329, %c0_330] : memref<1x10xf32, #tpu.memory_space<vmem>>, vector<1x10xf32>
    %499 = vector.broadcast %498 : vector<1x10xf32> to vector<2x10xf32>
    %500 = arith.addf %497, %499 : vector<2x10xf32>
    %cst_331 = arith.constant dense<0xFF800000> : vector<2xf32>
    %501 = vector.multi_reduction <maximumf>, %500, %cst_331 [1] : vector<2x10xf32> to vector<2xf32>
    %502 = vector.shape_cast %501 : vector<2xf32> to vector<2x1xf32>
    %503 = vector.broadcast %502 : vector<2x1xf32> to vector<2x10xf32>
    %504 = arith.subf %500, %503 : vector<2x10xf32>
    %505 = math.exp %504 : vector<2x10xf32>
    %cst_332 = arith.constant dense<0.000000e+00> : vector<2xf32>
    %506 = vector.multi_reduction <add>, %505, %cst_332 [1] : vector<2x10xf32> to vector<2xf32>
    %507 = vector.shape_cast %506 : vector<2xf32> to vector<2x1xf32>
    %508 = math.log %507 : vector<2x1xf32>
    %509 = arith.addf %502, %508 : vector<2x1xf32>
    %510 = vector.broadcast %509 : vector<2x1xf32> to vector<2x10xf32>
    %511 = arith.subf %500, %510 : vector<2x10xf32>
    %c0_333 = arith.constant 0 : index
    %c0_334 = arith.constant 0 : index
    %512 = vector.load %arg19[%c0_333, %c0_334] : memref<2x10xf32, #tpu.memory_space<vmem>>, vector<2x10xf32>
    tpu.vector_store %arg19[%c0_333, %c0_334], %511 {strides = array<i32>} : memref<2x10xf32, #tpu.memory_space<vmem>>, vector<2x10xf32>,
    return
  }
}

</mosaic_0001>

<llo_original>
// kernel: m5_pallas.1
$region0: #{m5_pallas.1}
  #allocation0 [shape = 'u32[]', space=smem, size = 0x4, offset = 0x4, fixed_abs, tag = 'smem constant byte address 0x4 - core index']
  #allocation1 [shape = 'u32[144,128]{1,0:T(1,128)}', space=vmem, size = 0x12000, scoped, tag = 'internal scratch']
  #allocation2 [shape = 'f32[992,32]{1,0:T(8,128)}', space=vmem, size = 0x7c000, scoped, tag = 'scratch operand']
  #allocation3 [shape = 'f32[244,32]{1,0:T(8,128)}', space=vmem, size = 0x1f000, scoped, tag = 'scratch operand']
  #allocation4 [shape = 'f32[56,64]{1,0:T(8,128)}', space=vmem, size = 0x7000, scoped, tag = 'scratch operand']
  #allocation5 [shape = 'f32[10,64]{1,0:T(8,128)}', space=vmem, size = 0x2000, scoped, tag = 'scratch operand']
  #allocation6 [shape = 'f32[2,124,32]{2,1,0:T(8,128)}', space=vmem, size = 0x20000, scoped, tag = 'scratch operand']
  #allocation7 [shape = 'f32[2,30,32]{2,1,0:T(8,128)}', space=vmem, size = 0x8000, scoped, tag = 'scratch operand']
  #allocation8 [shape = 'f32[2,7,64]{2,1,0:T(8,128)}', space=vmem, size = 0x2000, scoped, tag = 'scratch operand']
  #allocation9 [shape = 'f32[2,1,64]{2,1,0:T(1,128)}', space=vmem, size = 0x400, scoped, tag = 'scratch operand']
  %s0 = inlined_call_operand.vmem [shape: f32[2,500,16], index: 0, kind: input, shape index: {}]
  %s1 = inlined_call_operand.vmem [shape: f32[80,32], index: 1, kind: input, shape index: {}]
  %s2 = inlined_call_operand.vmem [shape: f32[1,32], index: 2, kind: input, shape index: {}]
  %s3 = inlined_call_operand.vmem [shape: f32[1,32], index: 3, kind: input, shape index: {}]
  %s4 = inlined_call_operand.vmem [shape: f32[1,32], index: 4, kind: input, shape index: {}]
  %s5 = inlined_call_operand.vmem [shape: f32[96,32], index: 5, kind: input, shape index: {}]
  %s6 = inlined_call_operand.vmem [shape: f32[1,32], index: 6, kind: input, shape index: {}]
  %s7 = inlined_call_operand.vmem [shape: f32[1,32], index: 7, kind: input, shape index: {}]
  %s8 = inlined_call_operand.vmem [shape: f32[1,32], index: 8, kind: input, shape index: {}]
  %s9 = inlined_call_operand.vmem [shape: f32[96,64], index: 9, kind: input, shape index: {}]
  %s10 = inlined_call_operand.vmem [shape: f32[1,64], index: 10, kind: input, shape index: {}]
  %s11 = inlined_call_operand.vmem [shape: f32[1,64], index: 11, kind: input, shape index: {}]
  %s12 = inlined_call_operand.vmem [shape: f32[1,64], index: 12, kind: input, shape index: {}]
  %s13 = inlined_call_operand.vmem [shape: f32[192,64], index: 13, kind: input, shape index: {}]
  %s14 = inlined_call_operand.vmem [shape: f32[1,64], index: 14, kind: input, shape index: {}]
  %s15 = inlined_call_operand.vmem [shape: f32[1,64], index: 15, kind: input, shape index: {}]
  %s16 = inlined_call_operand.vmem [shape: f32[1,64], index: 16, kind: input, shape index: {}]
  %s17 = inlined_call_operand.vmem [shape: f32[64,10], index: 17, kind: input, shape index: {}]
  %s18 = inlined_call_operand.vmem [shape: f32[1,10], index: 18, kind: input, shape index: {}]
  %s19 = inlined_call_operand.hbm [shape: f32[2,10], index: 19, kind: output, shape index: {}]
  %s20 = sld [smem:[#allocation0]]
  $region86: #{m5_pallas.1} parent=0
    _
  %s22 = ssub.s32 1, %s20
  %s23 = scalar_select 0, %s22, %s20
  $region1: #{m5_pallas.1} parent=0
    #allocation10 [shape = 'u8[1024]{0}', space=vmem, size = 0x400, scoped, tag = 'output window, operand 0, single buffered']
    #allocation11 [shape = 's32[1]{0}', space=sflag, size = 0x4, scoped, tag = 'scoped memory for m5_pallas.1']
    %24 = vsyncpa [#allocation11], 0
    // Predicated region
    $region2: #{m5_pallas.1} parent=1 // pred_check
      _
    $region3: #{m5_pallas.1} parent=1 // pred_check_branch
      %26 = sbr.rel (0) target = $region5
    $region4: #{m5_pallas.1} parent=1 // pred_region
      _
    $region5: #{m5_pallas.1} parent=1 // pred_fallthru
      _
    // Predicated region
    $region6: #{m5_pallas.1} parent=1 // pred_check
      _
    $region7: #{m5_pallas.1} parent=1 // pred_check_branch
      %28 = sbr.rel (0) target = $region9
    $region8: #{m5_pallas.1} parent=1 // pred_region
      _
    $region9: #{m5_pallas.1} parent=1 // pred_fallthru
      _
    // Predicated region
    $region10: #{m5_pallas.1} parent=1 // pred_check
      _
    $region11: #{m5_pallas.1} parent=1 // pred_check_branch
      %30 = sbr.rel (0) target = $region13
    $region12: #{m5_pallas.1} parent=1 // pred_region
      _
    $region13: #{m5_pallas.1} parent=1 // pred_fallthru
      _
    // Predicated region
    $region14: #{m5_pallas.1} parent=1 // pred_check
      _
    $region15: #{m5_pallas.1} parent=1 // pred_check_branch
      %32 = sbr.rel (0) target = $region17
    $region16: #{m5_pallas.1} parent=1 // pred_region
      _
    $region17: #{m5_pallas.1} parent=1 // pred_fallthru
      _
    // Predicated region
    $region18: #{m5_pallas.1} parent=1 // pred_check
      _
    $region19: #{m5_pallas.1} parent=1 // pred_check_branch
      %34 = sbr.rel (0) target = $region21
    $region20: #{m5_pallas.1} parent=1 // pred_region
      _
    $region21: #{m5_pallas.1} parent=1 // pred_fallthru
      _
    // Predicated region
    $region22: #{m5_pallas.1} parent=1 // pred_check
      _
    $region23: #{m5_pallas.1} parent=1 // pred_check_branch
      %36 = sbr.rel (0) target = $region25
    $region24: #{m5_pallas.1} parent=1 // pred_region
      _
    $region25: #{m5_pallas.1} parent=1 // pred_fallthru
      _
    // Predicated region
    $region26: #{m5_pallas.1} parent=1 // pred_check
      _
    $region27: #{m5_pallas.1} parent=1 // pred_check_branch
      %38 = sbr.rel (0) target = $region29
    $region28: #{m5_pallas.1} parent=1 // pred_region
      _
    $region29: #{m5_pallas.1} parent=1 // pred_fallthru
      _
    // Predicated region
    $region30: #{m5_pallas.1} parent=1 // pred_check
      _
    $region31: #{m5_pallas.1} parent=1 // pred_check_branch
      %40 = sbr.rel (0) target = $region33
    $region32: #{m5_pallas.1} parent=1 // pred_region
      _
    $region33: #{m5_pallas.1} parent=1 // pred_fallthru
      _
    // Predicated region
    $region34: #{m5_pallas.1} parent=1 // pred_check
      _
    $region35: #{m5_pallas.1} parent=1 // pred_check_branch
      %42 = sbr.rel (0) target = $region37
    $region36: #{m5_pallas.1} parent=1 // pred_region
      _
    $region37: #{m5_pallas.1} parent=1 // pred_fallthru
      _
    // Predicated region
    $region38: #{m5_pallas.1} parent=1 // pred_check
      _
    $region39: #{m5_pallas.1} parent=1 // pred_check_branch
      %44 = sbr.rel (0) target = $region41
    $region40: #{m5_pallas.1} parent=1 // pred_region
      _
    $region41: #{m5_pallas.1} parent=1 // pred_fallthru
      _
    // Predicated region
    $region42: #{m5_pallas.1} parent=1 // pred_check
      _
    $region43: #{m5_pallas.1} parent=1 // pred_check_branch
      %46 = sbr.rel (0) target = $region45
    $region44: #{m5_pallas.1} parent=1 // pred_region
      _
    $region45: #{m5_pallas.1} parent=1 // pred_fallthru
      _
    // Predicated region
    $region46: #{m5_pallas.1} parent=1 // pred_check
      _
    $region47: #{m5_pallas.1} parent=1 // pred_check_branch
      %48 = sbr.rel (0) target = $region49
    $region48: #{m5_pallas.1} parent=1 // pred_region
      _
    $region49: #{m5_pallas.1} parent=1 // pred_fallthru
      _
    // Predicated region
    $region50: #{m5_pallas.1} parent=1 // pred_check
      _
    $region51: #{m5_pallas.1} parent=1 // pred_check_branch
      %50 = sbr.rel (0) target = $region53
    $region52: #{m5_pallas.1} parent=1 // pred_region
      _
    $region53: #{m5_pallas.1} parent=1 // pred_fallthru
      _
    // Predicated region
    $region54: #{m5_pallas.1} parent=1 // pred_check
      _
    $region55: #{m5_pallas.1} parent=1 // pred_check_branch
      %52 = sbr.rel (0) target = $region57
    $region56: #{m5_pallas.1} parent=1 // pred_region
      _
    $region57: #{m5_pallas.1} parent=1 // pred_fallthru
      _
    // Predicated region
    $region58: #{m5_pallas.1} parent=1 // pred_check
      _
    $region59: #{m5_pallas.1} parent=1 // pred_check_branch
      %54 = sbr.rel (0) target = $region61
    $region60: #{m5_pallas.1} parent=1 // pred_region
      _
    $region61: #{m5_pallas.1} parent=1 // pred_fallthru
      _
    // Predicated region
    $region62: #{m5_pallas.1} parent=1 // pred_check
      _
    $region63: #{m5_pallas.1} parent=1 // pred_check_branch
      %56 = sbr.rel (0) target = $region65
    $region64: #{m5_pallas.1} parent=1 // pred_region
      _
    $region65: #{m5_pallas.1} parent=1 // pred_fallthru
      _
    // Predicated region
    $region66: #{m5_pallas.1} parent=1 // pred_check
      _
    $region67: #{m5_pallas.1} parent=1 // pred_check_branch
      %58 = sbr.rel (0) target = $region69
    $region68: #{m5_pallas.1} parent=1 // pred_region
      _
    $region69: #{m5_pallas.1} parent=1 // pred_fallthru
      _
    // Predicated region
    $region70: #{m5_pallas.1} parent=1 // pred_check
      _
    $region71: #{m5_pallas.1} parent=1 // pred_check_branch
      %60 = sbr.rel (0) target = $region73
    $region72: #{m5_pallas.1} parent=1 // pred_region
      _
    $region73: #{m5_pallas.1} parent=1 // pred_fallthru
      _
    // Predicated region
    $region74: #{m5_pallas.1} parent=1 // pred_check
      _
    $region75: #{m5_pallas.1} parent=1 // pred_check_branch
      %62 = sbr.rel (0) target = $region77
    $region76: #{m5_pallas.1} parent=1 // pred_region
      _
    $region77: #{m5_pallas.1} parent=1 // pred_fallthru
      _
    %v63 = vld [vmem:[%s0] sm:$0xff]
    %v64 = vld [vmem:[%s0 + $0x8] sm:$0xff]
    %v65 = vld [vmem:[%s0 + $0x10] sm:$0xff]
    %v66 = vld [vmem:[%s0 + $0x18] sm:$0xff]
    %v67 = vld [vmem:[%s0 + $0x20] sm:$0xff]
    %v68 = vld [vmem:[%s0 + $0x28] sm:$0xff]
    %v69 = vld [vmem:[%s0 + $0x30] sm:$0xff]
    %v70 = vld [vmem:[%s0 + $0x38] sm:$0xff]
    %v71 = vld [vmem:[%s0 + $0x40] sm:$0xff]
    %v72 = vld [vmem:[%s0 + $0x48] sm:$0xff]
    %v73 = vld [vmem:[%s0 + $0x50] sm:$0xff]
    %v74 = vld [vmem:[%s0 + $0x58] sm:$0xff]
    %v75 = vld [vmem:[%s0 + $0x60] sm:$0xff]
    %v76 = vld [vmem:[%s0 + $0x68] sm:$0xff]
    %v77 = vld [vmem:[%s0 + $0x70] sm:$0xff]
    %v78 = vld [vmem:[%s0 + $0x78] sm:$0xff]
    %v79 = vld [vmem:[%s0 + $0x80] sm:$0xff]
    %v80 = vld [vmem:[%s0 + $0x88] sm:$0xff]
    %v81 = vld [vmem:[%s0 + $0x90] sm:$0xff]
    %v82 = vld [vmem:[%s0 + $0x98] sm:$0xff]
    %v83 = vld [vmem:[%s0 + $0xa0] sm:$0xff]
    %v84 = vld [vmem:[%s0 + $0xa8] sm:$0xff]
    %v85 = vld [vmem:[%s0 + $0xb0] sm:$0xff]
    %v86 = vld [vmem:[%s0 + $0xb8] sm:$0xff]
    %v87 = vld [vmem:[%s0 + $0xc0] sm:$0xff]
    %v88 = vld [vmem:[%s0 + $0xc8] sm:$0xff]
    %v89 = vld [vmem:[%s0 + $0xd0] sm:$0xff]
    %v90 = vld [vmem:[%s0 + $0xd8] sm:$0xff]
    %v91 = vld [vmem:[%s0 + $0xe0] sm:$0xff]
    %v92 = vld [vmem:[%s0 + $0xe8] sm:$0xff]
    %v93 = vld [vmem:[%s0 + $0xf0] sm:$0xff]
    %v94 = vld [vmem:[%s0 + $0xf8] sm:$0xff]
    %v95 = vld [vmem:[%s0 + $0x100] sm:$0xff]
    %v96 = vld [vmem:[%s0 + $0x108] sm:$0xff]
    %v97 = vld [vmem:[%s0 + $0x110] sm:$0xff]
    %v98 = vld [vmem:[%s0 + $0x118] sm:$0xff]
    %v99 = vld [vmem:[%s0 + $0x120] sm:$0xff]
    %v100 = vld [vmem:[%s0 + $0x128] sm:$0xff]
    %v101 = vld [vmem:[%s0 + $0x130] sm:$0xff]
    %v102 = vld [vmem:[%s0 + $0x138] sm:$0xff]
    %v103 = vld [vmem:[%s0 + $0x140] sm:$0xff]
    %v104 = vld [vmem:[%s0 + $0x148] sm:$0xff]
    %v105 = vld [vmem:[%s0 + $0x150] sm:$0xff]
    %v106 = vld [vmem:[%s0 + $0x158] sm:$0xff]
    %v107 = vld [vmem:[%s0 + $0x160] sm:$0xff]
    %v108 = vld [vmem:[%s0 + $0x168] sm:$0xff]
    %v109 = vld [vmem:[%s0 + $0x170] sm:$0xff]
    %v110 = vld [vmem:[%s0 + $0x178] sm:$0xff]
    %v111 = vld [vmem:[%s0 + $0x180] sm:$0xff]
    %v112 = vld [vmem:[%s0 + $0x188] sm:$0xff]
    %v113 = vld [vmem:[%s0 + $0x190] sm:$0xff]
    %v114 = vld [vmem:[%s0 + $0x198] sm:$0xff]
    %v115 = vld [vmem:[%s0 + $0x1a0] sm:$0xff]
    %v116 = vld [vmem:[%s0 + $0x1a8] sm:$0xff]
    %v117 = vld [vmem:[%s0 + $0x1b0] sm:$0xff]
    %v118 = vld [vmem:[%s0 + $0x1b8] sm:$0xff]
    %v119 = vld [vmem:[%s0 + $0x1c0] sm:$0xff]
    %v120 = vld [vmem:[%s0 + $0x1c8] sm:$0xff]
    %v121 = vld [vmem:[%s0 + $0x1d0] sm:$0xff]
    %v122 = vld [vmem:[%s0 + $0x1d8] sm:$0xff]
    %v123 = vld [vmem:[%s0 + $0x1e0] sm:$0xff]
    %v124 = vld [vmem:[%s0 + $0x1e8] sm:$0xff]
    %v125 = vld [vmem:[%s1] sm:$0xff]
    %v126 = vld [vmem:[%s1 + $0x8] sm:$0xff]
    %v127 = vld [vmem:[%s0 + $0x1] sm:$0xff]
    %v128 = vld [vmem:[%s0 + $0x9] sm:$0xff]
    %v129 = vld [vmem:[%s0 + $0x11] sm:$0xff]
    %v130 = vld [vmem:[%s0 + $0x19] sm:$0xff]
    %v131 = vld [vmem:[%s0 + $0x21] sm:$0xff]
    %v132 = vld [vmem:[%s0 + $0x29] sm:$0xff]
    %v133 = vld [vmem:[%s0 + $0x31] sm:$0xff]
    %v134 = vld [vmem:[%s0 + $0x39] sm:$0xff]
    %v135 = vld [vmem:[%s0 + $0x41] sm:$0xff]
    %v136 = vld [vmem:[%s0 + $0x49] sm:$0xff]
    %v137 = vld [vmem:[%s0 + $0x51] sm:$0xff]
    %v138 = vld [vmem:[%s0 + $0x59] sm:$0xff]
    %v139 = vld [vmem:[%s0 + $0x61] sm:$0xff]
    %v140 = vld [vmem:[%s0 + $0x69] sm:$0xff]
    %v141 = vld [vmem:[%s0 + $0x71] sm:$0xff]
    %v142 = vld [vmem:[%s0 + $0x79] sm:$0xff]
    %v143 = vld [vmem:[%s0 + $0x81] sm:$0xff]
    %v144 = vld [vmem:[%s0 + $0x89] sm:$0xff]
    %v145 = vld [vmem:[%s0 + $0x91] sm:$0xff]
    %v146 = vld [vmem:[%s0 + $0x99] sm:$0xff]
    %v147 = vld [vmem:[%s0 + $0xa1] sm:$0xff]
    %v148 = vld [vmem:[%s0 + $0xa9] sm:$0xff]
    %v149 = vld [vmem:[%s0 + $0xb1] sm:$0xff]
    %v150 = vld [vmem:[%s0 + $0xb9] sm:$0xff]
    %v151 = vld [vmem:[%s0 + $0xc1] sm:$0xff]
    %v152 = vld [vmem:[%s0 + $0xc9] sm:$0xff]
    %v153 = vld [vmem:[%s0 + $0xd1] sm:$0xff]
    %v154 = vld [vmem:[%s0 + $0xd9] sm:$0xff]
    %v155 = vld [vmem:[%s0 + $0xe1] sm:$0xff]
    %v156 = vld [vmem:[%s0 + $0xe9] sm:$0xff]
    %v157 = vld [vmem:[%s0 + $0xf1] sm:$0xff]
    %v158 = vld [vmem:[%s0 + $0xf9] sm:$0xff]
    %v159 = vld [vmem:[%s0 + $0x101] sm:$0xff]
    %v160 = vld [vmem:[%s0 + $0x109] sm:$0xff]
    %v161 = vld [vmem:[%s0 + $0x111] sm:$0xff]
    %v162 = vld [vmem:[%s0 + $0x119] sm:$0xff]
    %v163 = vld [vmem:[%s0 + $0x121] sm:$0xff]
    %v164 = vld [vmem:[%s0 + $0x129] sm:$0xff]
    %v165 = vld [vmem:[%s0 + $0x131] sm:$0xff]
    %v166 = vld [vmem:[%s0 + $0x139] sm:$0xff]
    %v167 = vld [vmem:[%s0 + $0x141] sm:$0xff]
    %v168 = vld [vmem:[%s0 + $0x149] sm:$0xff]
    %v169 = vld [vmem:[%s0 + $0x151] sm:$0xff]
    %v170 = vld [vmem:[%s0 + $0x159] sm:$0xff]
    %v171 = vld [vmem:[%s0 + $0x161] sm:$0xff]
    %v172 = vld [vmem:[%s0 + $0x169] sm:$0xff]
    %v173 = vld [vmem:[%s0 + $0x171] sm:$0xff]
    %v174 = vld [vmem:[%s0 + $0x179] sm:$0xff]
    %v175 = vld [vmem:[%s0 + $0x181] sm:$0xff]
    %v176 = vld [vmem:[%s0 + $0x189] sm:$0xff]
    %v177 = vld [vmem:[%s0 + $0x191] sm:$0xff]
    %v178 = vld [vmem:[%s0 + $0x199] sm:$0xff]
    %v179 = vld [vmem:[%s0 + $0x1a1] sm:$0xff]
    %v180 = vld [vmem:[%s0 + $0x1a9] sm:$0xff]
    %v181 = vld [vmem:[%s0 + $0x1b1] sm:$0xff]
    %v182 = vld [vmem:[%s0 + $0x1b9] sm:$0xff]
    %v183 = vld [vmem:[%s0 + $0x1c1] sm:$0xff]
    %v184 = vld [vmem:[%s0 + $0x1c9] sm:$0xff]
    %v185 = vld [vmem:[%s0 + $0x1d1] sm:$0xff]
    %v186 = vld [vmem:[%s0 + $0x1d9] sm:$0xff]
    %v187 = vld [vmem:[%s0 + $0x1e1] sm:$0xff]
    %v188 = vld [vmem:[%s0 + $0x1e9] sm:$0xff]
    %v189 = vld [vmem:[%s1 + $0x10] sm:$0xff]
    %v190 = vld [vmem:[%s1 + $0x18] sm:$0xff]
    %vm191 = vcmask 130048
    %v193 = vsel %vm191, %v127, 0
    %v196 = vsel %vm191, %v128, 0
    %v199 = vsel %vm191, %v129, 0
    %v202 = vsel %vm191, %v130, 0
    %v205 = vsel %vm191, %v131, 0
    %v208 = vsel %vm191, %v132, 0
    %v211 = vsel %vm191, %v133, 0
    %v214 = vsel %vm191, %v134, 0
    %v217 = vsel %vm191, %v135, 0
    %v220 = vsel %vm191, %v136, 0
    %v223 = vsel %vm191, %v137, 0
    %v226 = vsel %vm191, %v138, 0
    %v229 = vsel %vm191, %v139, 0
    %v232 = vsel %vm191, %v140, 0
    %v235 = vsel %vm191, %v141, 0
    %v238 = vsel %vm191, %v142, 0
    %v241 = vsel %vm191, %v143, 0
    %v244 = vsel %vm191, %v144, 0
    %v247 = vsel %vm191, %v145, 0
    %v250 = vsel %vm191, %v146, 0
    %v253 = vsel %vm191, %v147, 0
    %v256 = vsel %vm191, %v148, 0
    %v259 = vsel %vm191, %v149, 0
    %v262 = vsel %vm191, %v150, 0
    %v265 = vsel %vm191, %v151, 0
    %v268 = vsel %vm191, %v152, 0
    %v271 = vsel %vm191, %v153, 0
    %v274 = vsel %vm191, %v154, 0
    %v277 = vsel %vm191, %v155, 0
    %v280 = vsel %vm191, %v156, 0
    %v283 = vsel %vm191, %v157, 0
    %v286 = vsel %vm191, %v158, 0
    %v289 = vsel %vm191, %v159, 0
    %v292 = vsel %vm191, %v160, 0
    %v295 = vsel %vm191, %v161, 0
    %v298 = vsel %vm191, %v162, 0
    %v301 = vsel %vm191, %v163, 0
    %v304 = vsel %vm191, %v164, 0
    %v307 = vsel %vm191, %v165, 0
    %v310 = vsel %vm191, %v166, 0
    %v313 = vsel %vm191, %v167, 0
    %v316 = vsel %vm191, %v168, 0
    %v319 = vsel %vm191, %v169, 0
    %v322 = vsel %vm191, %v170, 0
    %v325 = vsel %vm191, %v171, 0
    %v328 = vsel %vm191, %v172, 0
    %v331 = vsel %vm191, %v173, 0
    %v334 = vsel %vm191, %v174, 0
    %v337 = vsel %vm191, %v175, 0
    %v340 = vsel %vm191, %v176, 0
    %v343 = vsel %vm191, %v177, 0
    %v346 = vsel %vm191, %v178, 0
    %v349 = vsel %vm191, %v179, 0
    %v352 = vsel %vm191, %v180, 0
    %v355 = vsel %vm191, %v181, 0
    %v358 = vsel %vm191, %v182, 0
    %v361 = vsel %vm191, %v183, 0
    %v364 = vsel %vm191, %v184, 0
    %v367 = vsel %vm191, %v185, 0
    %v370 = vsel %vm191, %v186, 0
    %v373 = vsel %vm191, %v187, 0
    %v376 = vsel %vm191, %v188, 0
    %378 = vmatprep.subr.mxu0 0.0
    %379 = vmatpush1.msra.mxu0 %v189
    %380 = vmatprep.subr.mxu0 0.0
    %381 = vmatpush1.msra.mxu0 %v190
    %382 = vmatprep.subr.mxu0 0.0
    %383 = vmatpush1.msra.mxu0 0.0
    %384 = vmatprep.subr.mxu0 0.0
    %385 = vmatpush1.msra.mxu0 0.0
    %386 = vmatprep.subr.mxu0 0.0
    %387 = vmatpush1.msra.mxu0 0.0
    %388 = vmatprep.subr.mxu0 0.0
    %389 = vmatpush1.msra.mxu0 0.0
    %390 = vmatprep.subr.mxu0 0.0
    %391 = vmatpush1.msra.mxu0 0.0
    %392 = vmatprep.subr.mxu0 0.0
    %393 = vmatpush1.msra.mxu0 0.0
    %394 = vmatprep.subr.mxu0 0.0
    %395 = vmatpush1.msra.mxu0 0.0
    %396 = vmatprep.subr.mxu0 0.0
    %397 = vmatpush1.msra.mxu0 0.0
    %398 = vmatprep.subr.mxu0 0.0
    %399 = vmatpush1.msra.mxu0 0.0
    %400 = vmatprep.subr.mxu0 0.0
    %401 = vmatpush1.msra.mxu0 0.0
    %402 = vmatprep.subr.mxu0 0.0
    %403 = vmatpush1.msra.mxu0 0.0
    %404 = vmatprep.subr.mxu0 0.0
    %405 = vmatpush1.msra.mxu0 0.0
    %406 = vmatprep.subr.mxu0 0.0
    %407 = vmatpush1.msra.mxu0 0.0
    %408 = vmatprep.subr.mxu0 0.0
    %409 = vmatpush1.msra.mxu0 0.0
    %410 = vmatprep.subr.mxu0 0.0
    %411 = vmatpush1.msra.mxu0 0.0
    %412 = vmatprep.subr.mxu0 0.0
    %413 = vmatpush1.msra.mxu0 0.0
    %414 = vmatprep.subr.mxu0 0.0
    %415 = vmatpush1.msra.mxu0 0.0
    %416 = vmatprep.subr.mxu0 0.0
    %417 = vmatpush1.msra.mxu0 0.0
    %418 = vmatprep.subr.mxu0 0.0
    %419 = vmatpush1.msra.mxu0 0.0
    %420 = vmatprep.subr.mxu0 0.0
    %421 = vmatpush1.msra.mxu0 0.0
    %422 = vmatprep.subr.mxu0 0.0
    %423 = vmatpush1.msra.mxu0 0.0
    %424 = vmatprep.subr.mxu0 0.0
    %425 = vmatpush1.msra.mxu0 0.0
    %426 = vmatprep.subr.mxu0 0.0
    %427 = vmatpush1.msra.mxu0 0.0
    %428 = vmatprep.subr.mxu0 0.0
    %429 = vmatpush1.msra.mxu0 0.0
    %430 = vmatprep.subr.mxu0 0.0
    %431 = vmatpush1.msra.mxu0 0.0
    %432 = vmatprep.subr.mxu0 0.0
    %433 = vmatpush1.msra.mxu0 0.0
    %434 = vmatprep.subr.mxu0 0.0
    %435 = vmatpush1.msra.mxu0 0.0
    %436 = vmatprep.subr.mxu0 0.0
    %437 = vmatpush1.msra.mxu0 0.0
    %438 = vmatprep.subr.mxu0 0.0
    %439 = vmatpush1.msra.mxu0 0.0
    %440 = vmatprep.subr.mxu0 0.0
    %441 = vmatpush1.msra.mxu0 0.0
    %442 = vmatprep.mubr.f32.mxu0 0.0
    %443 = vmatmul.mubr.f32.gmra.mrb[0].mxu0 %v193
    %v444 = vpop.f32.mrb[0].mxu0
    %v445 = vadd.f32 0.0, %v444
    %v446 = vpop.f32.mrb[0].mxu0
    %447 = vmatprep.mubr.f32.mxu0 0.0
    %448 = vmatmul.mubr.f32.gmra.mrb[0].mxu0 %v196
    %v449 = vpop.f32.mrb[0].mxu0
    %v450 = vadd.f32 0.0, %v449
    %v451 = vpop.f32.mrb[0].mxu0
    %452 = vmatprep.mubr.f32.mxu0 0.0
    %453 = vmatmul.mubr.f32.gmra.mrb[0].mxu0 %v199
    %v454 = vpop.f32.mrb[0].mxu0
    %v455 = vadd.f32 0.0, %v454
    %v456 = vpop.f32.mrb[0].mxu0
    %457 = vmatprep.mubr.f32.mxu0 0.0
    %458 = vmatmul.mubr.f32.gmra.mrb[0].mxu0 %v202
    %v459 = vpop.f32.mrb[0].mxu0
    %v460 = vadd.f32 0.0, %v459
    %v461 = vpop.f32.mrb[0].mxu0
    %462 = vmatprep.mubr.f32.mxu0 0.0
    %463 = vmatmul.mubr.f32.gmra.mrb[0].mxu0 %v205
    %v464 = vpop.f32.mrb[0].mxu0
    %v465 = vadd.f32 0.0, %v464
    %v466 = vpop.f32.mrb[0].mxu0
    %467 = vmatprep.mubr.f32.mxu0 0.0
    %468 = vmatmul.mubr.f32.gmra.mrb[0].mxu0 %v208
    %v469 = vpop.f32.mrb[0].mxu0
    %v470 = vadd.f32 0.0, %v469
    %v471 = vpop.f32.mrb[0].mxu0
    %472 = vmatprep.mubr.f32.mxu0 0.0
    %473 = vmatmul.mubr.f32.gmra.mrb[0].mxu0 %v211
    %v474 = vpop.f32.mrb[0].mxu0
    %v475 = vadd.f32 0.0, %v474
    %v476 = vpop.f32.mrb[0].mxu0
    %477 = vmatprep.mubr.f32.mxu0 0.0
    %478 = vmatmul.mubr.f32.gmra.mrb[0].mxu0 %v214
    %v479 = vpop.f32.mrb[0].mxu0
    %v480 = vadd.f32 0.0, %v479
    %v481 = vpop.f32.mrb[0].mxu0
    %482 = vmatprep.mubr.f32.mxu0 0.0
    %483 = vmatmul.mubr.f32.gmra.mrb[0].mxu0 %v217
    %v484 = vpop.f32.mrb[0].mxu0
    %v485 = vadd.f32 0.0, %v484
    %v486 = vpop.f32.mrb[0].mxu0
    %487 = vmatprep.mubr.f32.mxu0 0.0
    %488 = vmatmul.mubr.f32.gmra.mrb[0].mxu0 %v220
    %v489 = vpop.f32.mrb[0].mxu0
    %v490 = vadd.f32 0.0, %v489
    %v491 = vpop.f32.mrb[0].mxu0
    %492 = vmatprep.mubr.f32.mxu0 0.0
    %493 = vmatmul.mubr.f32.gmra.mrb[0].mxu0 %v223
    %v494 = vpop.f32.mrb[0].mxu0
    %v495 = vadd.f32 0.0, %v494
    %v496 = vpop.f32.mrb[0].mxu0
    %497 = vmatprep.mubr.f32.mxu0 0.0
    %498 = vmatmul.mubr.f32.gmra.mrb[0].mxu0 %v226
    %v499 = vpop.f32.mrb[0].mxu0
    %v500 = vadd.f32 0.0, %v499
    %v501 = vpop.f32.mrb[0].mxu0
    %502 = vmatprep.mubr.f32.mxu0 0.0
    %503 = vmatmul.mubr.f32.gmra.mrb[0].mxu0 %v229
    %v504 = vpop.f32.mrb[0].mxu0
    %v505 = vadd.f32 0.0, %v504
    %v506 = vpop.f32.mrb[0].mxu0
    %507 = vmatprep.mubr.f32.mxu0 0.0
    %508 = vmatmul.mubr.f32.gmra.mrb[0].mxu0 %v232
    %v509 = vpop.f32.mrb[0].mxu0
    %v510 = vadd.f32 0.0, %v509
    %v511 = vpop.f32.mrb[0].mxu0
    %512 = vmatprep.mubr.f32.mxu0 0.0
    %513 = vmatmul.mubr.f32.gmra.mrb[0].mxu0 %v235
    %v514 = vpop.f32.mrb[0].mxu0
    %v515 = vadd.f32 0.0, %v514
    %v516 = vpop.f32.mrb[0].mxu0
    %517 = vmatprep.mubr.f32.mxu0 0.0
    %518 = vmatmul.mubr.f32.gmra.mrb[0].mxu0 %v238
    %v519 = vpop.f32.mrb[0].mxu0
    %v520 = vadd.f32 0.0, %v519
    %v521 = vpop.f32.mrb[0].mxu0
    %522 = vmatprep.mubr.f32.mxu0 0.0
    %523 = vmatmul.mubr.f32.gmra.mrb[0].mxu0 %v241
    %v524 = vpop.f32.mrb[0].mxu0
    %v525 = vadd.f32 0.0, %v524
    %v526 = vpop.f32.mrb[0].mxu0
    %527 = vmatprep.mubr.f32.mxu0 0.0
    %528 = vmatmul.mubr.f32.gmra.mrb[0].mxu0 %v244
    %v529 = vpop.f32.mrb[0].mxu0
    %v530 = vadd.f32 0.0, %v529
    %v531 = vpop.f32.mrb[0].mxu0
    %532 = vmatprep.mubr.f32.mxu0 0.0
    %533 = vmatmul.mubr.f32.gmra.mrb[0].mxu0 %v247
    %v534 = vpop.f32.mrb[0].mxu0
    %v535 = vadd.f32 0.0, %v534
    %v536 = vpop.f32.mrb[0].mxu0
    %537 = vmatprep.mubr.f32.mxu0 0.0
    %538 = vmatmul.mubr.f32.gmra.mrb[0].mxu0 %v250
    %v539 = vpop.f32.mrb[0].mxu0
    %v540 = vadd.f32 0.0, %v539
    %v541 = vpop.f32.mrb[0].mxu0
    %542 = vmatprep.mubr.f32.mxu0 0.0
    %543 = vmatmul.mubr.f32.gmra.mrb[0].mxu0 %v253
    %v544 = vpop.f32.mrb[0].mxu0
    %v545 = vadd.f32 0.0, %v544
    %v546 = vpop.f32.mrb[0].mxu0
    %547 = vmatprep.mubr.f32.mxu0 0.0
    %548 = vmatmul.mubr.f32.gmra.mrb[0].mxu0 %v256
    %v549 = vpop.f32.mrb[0].mxu0
    %v550 = vadd.f32 0.0, %v549
    %v551 = vpop.f32.mrb[0].mxu0
    %552 = vmatprep.mubr.f32.mxu0 0.0
    %553 = vmatmul.mubr.f32.gmra.mrb[0].mxu0 %v259
    %v554 = vpop.f32.mrb[0].mxu0
    %v555 = vadd.f32 0.0, %v554
    %v556 = vpop.f32.mrb[0].mxu0
    %557 = vmatprep.mubr.f32.mxu0 0.0
    %558 = vmatmul.mubr.f32.gmra.mrb[0].mxu0 %v262
    %v559 = vpop.f32.mrb[0].mxu0
    %v560 = vadd.f32 0.0, %v559
    %v561 = vpop.f32.mrb[0].mxu0
    %562 = vmatprep.mubr.f32.mxu0 0.0
    %563 = vmatmul.mubr.f32.gmra.mrb[0].mxu0 %v265
    %v564 = vpop.f32.mrb[0].mxu0
    %v565 = vadd.f32 0.0, %v564
    %v566 = vpop.f32.mrb[0].mxu0
    %567 = vmatprep.mubr.f32.mxu0 0.0
    %568 = vmatmul.mubr.f32.gmra.mrb[0].mxu0 %v268
    %v569 = vpop.f32.mrb[0].mxu0
    %v570 = vadd.f32 0.0, %v569
    %v571 = vpop.f32.mrb[0].mxu0
    %572 = vmatprep.mubr.f32.mxu0 0.0
    %573 = vmatmul.mubr.f32.gmra.mrb[0].mxu0 %v271
    %v574 = vpop.f32.mrb[0].mxu0
    %v575 = vadd.f32 0.0, %v574
    %v576 = vpop.f32.mrb[0].mxu0
    %577 = vmatprep.mubr.f32.mxu0 0.0
    %578 = vmatmul.mubr.f32.gmra.mrb[0].mxu0 %v274
    %v579 = vpop.f32.mrb[0].mxu0
    %v580 = vadd.f32 0.0, %v579
    %v581 = vpop.f32.mrb[0].mxu0
    %582 = vmatprep.mubr.f32.mxu0 0.0
    %583 = vmatmul.mubr.f32.gmra.mrb[0].mxu0 %v277
    %v584 = vpop.f32.mrb[0].mxu0
    %v585 = vadd.f32 0.0, %v584
    %v586 = vpop.f32.mrb[0].mxu0
    %587 = vmatprep.mubr.f32.mxu0 0.0
    %588 = vmatmul.mubr.f32.gmra.mrb[0].mxu0 %v280
    %v589 = vpop.f32.mrb[0].mxu0
    %v590 = vadd.f32 0.0, %v589
    %v591 = vpop.f32.mrb[0].mxu0
    %592 = vmatprep.mubr.f32.mxu0 0.0
    %593 = vmatmul.mubr.f32.gmra.mrb[0].mxu0 %v283
    %v594 = vpop.f32.mrb[0].mxu0
    %v595 = vadd.f32 0.0, %v594
    %v596 = vpop.f32.mrb[0].mxu0
    %597 = vmatprep.mubr.f32.mxu0 0.0
    %598 = vmatmul.mubr.f32.gmra.mrb[0].mxu0 %v286
    %v599 = vpop.f32.mrb[0].mxu0
    %v600 = vadd.f32 0.0, %v599
    %v601 = vpop.f32.mrb[0].mxu0
    %602 = vmatprep.mubr.f32.mxu0 0.0
    %603 = vmatmul.mubr.f32.gmra.mrb[0].mxu0 %v289
    %v604 = vpop.f32.mrb[0].mxu0
    %v605 = vadd.f32 0.0, %v604
    %v606 = vpop.f32.mrb[0].mxu0
    %607 = vmatprep.mubr.f32.mxu0 0.0
    %608 = vmatmul.mubr.f32.gmra.mrb[0].mxu0 %v292
    %v609 = vpop.f32.mrb[0].mxu0
    %v610 = vadd.f32 0.0, %v609
    %v611 = vpop.f32.mrb[0].mxu0
    %612 = vmatprep.mubr.f32.mxu0 0.0
    %613 = vmatmul.mubr.f32.gmra.mrb[0].mxu0 %v295
    %v614 = vpop.f32.mrb[0].mxu0
    %v615 = vadd.f32 0.0, %v614
    %v616 = vpop.f32.mrb[0].mxu0
    %617 = vmatprep.mubr.f32.mxu0 0.0
    %618 = vmatmul.mubr.f32.gmra.mrb[0].mxu0 %v298
    %v619 = vpop.f32.mrb[0].mxu0
    %v620 = vadd.f32 0.0, %v619
    %v621 = vpop.f32.mrb[0].mxu0
    %622 = vmatprep.mubr.f32.mxu0 0.0
    %623 = vmatmul.mubr.f32.gmra.mrb[0].mxu0 %v301
    %v624 = vpop.f32.mrb[0].mxu0
    %v625 = vadd.f32 0.0, %v624
    %v626 = vpop.f32.mrb[0].mxu0
    %627 = vmatprep.mubr.f32.mxu0 0.0
    %628 = vmatmul.mubr.f32.gmra.mrb[0].mxu0 %v304
    %v629 = vpop.f32.mrb[0].mxu0
    %v630 = vadd.f32 0.0, %v629
    %v631 = vpop.f32.mrb[0].mxu0
    %632 = vmatprep.mubr.f32.mxu0 0.0
    %633 = vmatmul.mubr.f32.gmra.mrb[0].mxu0 %v307
    %v634 = vpop.f32.mrb[0].mxu0
    %v635 = vadd.f32 0.0, %v634
    %v636 = vpop.f32.mrb[0].mxu0
    %637 = vmatprep.mubr.f32.mxu0 0.0
    %638 = vmatmul.mubr.f32.gmra.mrb[0].mxu0 %v310
    %v639 = vpop.f32.mrb[0].mxu0
    %v640 = vadd.f32 0.0, %v639
    %v641 = vpop.f32.mrb[0].mxu0
    %642 = vmatprep.mubr.f32.mxu0 0.0
    %643 = vmatmul.mubr.f32.gmra.mrb[0].mxu0 %v313
    %v644 = vpop.f32.mrb[0].mxu0
    %v645 = vadd.f32 0.0, %v644
    %v646 = vpop.f32.mrb[0].mxu0
    %647 = vmatprep.mubr.f32.mxu0 0.0
    %648 = vmatmul.mubr.f32.gmra.mrb[0].mxu0 %v316
    %v649 = vpop.f32.mrb[0].mxu0
    %v650 = vadd.f32 0.0, %v649
    %v651 = vpop.f32.mrb[0].mxu0
    %652 = vmatprep.mubr.f32.mxu0 0.0
    %653 = vmatmul.mubr.f32.gmra.mrb[0].mxu0 %v319
    %v654 = vpop.f32.mrb[0].mxu0
    %v655 = vadd.f32 0.0, %v654
    %v656 = vpop.f32.mrb[0].mxu0
    %657 = vmatprep.mubr.f32.mxu0 0.0
    %658 = vmatmul.mubr.f32.gmra.mrb[0].mxu0 %v322
    %v659 = vpop.f32.mrb[0].mxu0
    %v660 = vadd.f32 0.0, %v659
    %v661 = vpop.f32.mrb[0].mxu0
    %662 = vmatprep.mubr.f32.mxu0 0.0
    %663 = vmatmul.mubr.f32.gmra.mrb[0].mxu0 %v325
    %v664 = vpop.f32.mrb[0].mxu0
    %v665 = vadd.f32 0.0, %v664
    %v666 = vpop.f32.mrb[0].mxu0
    %667 = vmatprep.mubr.f32.mxu0 0.0
    %668 = vmatmul.mubr.f32.gmra.mrb[0].mxu0 %v328
    %v669 = vpop.f32.mrb[0].mxu0
    %v670 = vadd.f32 0.0, %v669
    %v671 = vpop.f32.mrb[0].mxu0
    %672 = vmatprep.mubr.f32.mxu0 0.0
    %673 = vmatmul.mubr.f32.gmra.mrb[0].mxu0 %v331
    %v674 = vpop.f32.mrb[0].mxu0
    %v675 = vadd.f32 0.0, %v674
    %v676 = vpop.f32.mrb[0].mxu0
    %677 = vmatprep.mubr.f32.mxu0 0.0
    %678 = vmatmul.mubr.f32.gmra.mrb[0].mxu0 %v334
    %v679 = vpop.f32.mrb[0].mxu0
    %v680 = vadd.f32 0.0, %v679
    %v681 = vpop.f32.mrb[0].mxu0
    %682 = vmatprep.mubr.f32.mxu0 0.0
    %683 = vmatmul.mubr.f32.gmra.mrb[0].mxu0 %v337
    %v684 = vpop.f32.mrb[0].mxu0
    %v685 = vadd.f32 0.0, %v684
    %v686 = vpop.f32.mrb[0].mxu0
    %687 = vmatprep.mubr.f32.mxu0 0.0
    %688 = vmatmul.mubr.f32.gmra.mrb[0].mxu0 %v340
    %v689 = vpop.f32.mrb[0].mxu0
    %v690 = vadd.f32 0.0, %v689
    %v691 = vpop.f32.mrb[0].mxu0
    %692 = vmatprep.mubr.f32.mxu0 0.0
    %693 = vmatmul.mubr.f32.gmra.mrb[0].mxu0 %v343
    %v694 = vpop.f32.mrb[0].mxu0
    %v695 = vadd.f32 0.0, %v694
    %v696 = vpop.f32.mrb[0].mxu0
    %697 = vmatprep.mubr.f32.mxu0 0.0
    %698 = vmatmul.mubr.f32.gmra.mrb[0].mxu0 %v346
    %v699 = vpop.f32.mrb[0].mxu0
    %v700 = vadd.f32 0.0, %v699
    %v701 = vpop.f32.mrb[0].mxu0
    %702 = vmatprep.mubr.f32.mxu0 0.0
    %703 = vmatmul.mubr.f32.gmra.mrb[0].mxu0 %v349
    %v704 = vpop.f32.mrb[0].mxu0
    %v705 = vadd.f32 0.0, %v704
    %v706 = vpop.f32.mrb[0].mxu0
    %707 = vmatprep.mubr.f32.mxu0 0.0
    %708 = vmatmul.mubr.f32.gmra.mrb[0].mxu0 %v352
    %v709 = vpop.f32.mrb[0].mxu0
    %v710 = vadd.f32 0.0, %v709
    %v711 = vpop.f32.mrb[0].mxu0
    %712 = vmatprep.mubr.f32.mxu0 0.0
    %713 = vmatmul.mubr.f32.gmra.mrb[0].mxu0 %v355
    %v714 = vpop.f32.mrb[0].mxu0
    %v715 = vadd.f32 0.0, %v714
    %v716 = vpop.f32.mrb[0].mxu0
    %717 = vmatprep.mubr.f32.mxu0 0.0
    %718 = vmatmul.mubr.f32.gmra.mrb[0].mxu0 %v358
    %v719 = vpop.f32.mrb[0].mxu0
    %v720 = vadd.f32 0.0, %v719
    %v721 = vpop.f32.mrb[0].mxu0
    %722 = vmatprep.mubr.f32.mxu0 0.0
    %723 = vmatmul.mubr.f32.gmra.mrb[0].mxu0 %v361
    %v724 = vpop.f32.mrb[0].mxu0
    %v725 = vadd.f32 0.0, %v724
    %v726 = vpop.f32.mrb[0].mxu0
    %727 = vmatprep.mubr.f32.mxu0 0.0
    %728 = vmatmul.mubr.f32.gmra.mrb[0].mxu0 %v364
    %v729 = vpop.f32.mrb[0].mxu0
    %v730 = vadd.f32 0.0, %v729
    %v731 = vpop.f32.mrb[0].mxu0
    %732 = vmatprep.mubr.f32.mxu0 0.0
    %733 = vmatmul.mubr.f32.gmra.mrb[0].mxu0 %v367
    %v734 = vpop.f32.mrb[0].mxu0
    %v735 = vadd.f32 0.0, %v734
    %v736 = vpop.f32.mrb[0].mxu0
    %737 = vmatprep.mubr.f32.mxu0 0.0
    %738 = vmatmul.mubr.f32.gmra.mrb[0].mxu0 %v370
    %v739 = vpop.f32.mrb[0].mxu0
    %v740 = vadd.f32 0.0, %v739
    %v741 = vpop.f32.mrb[0].mxu0
    %742 = vmatprep.mubr.f32.mxu0 0.0
    %743 = vmatmul.mubr.f32.gmra.mrb[0].mxu0 %v373
    %v744 = vpop.f32.mrb[0].mxu0
    %v745 = vadd.f32 0.0, %v744
    %v746 = vpop.f32.mrb[0].mxu0
    %747 = vmatprep.mubr.f32.mxu0 0.0
    %748 = vmatmul.mubr.f32.gmra.mrb[0].mxu0 %v376
    %v749 = vpop.f32.mrb[0].mxu0
    %v750 = vadd.f32 0.0, %v749
    %v751 = vpop.f32.mrb[0].mxu0
    %752 = vdwg.mxu0
    %v754 = vsel %vm191, %v63, 0
    %v757 = vsel %vm191, %v64, 0
    %v760 = vsel %vm191, %v65, 0
    %v763 = vsel %vm191, %v66, 0
    %v766 = vsel %vm191, %v67, 0
    %v769 = vsel %vm191, %v68, 0
    %v772 = vsel %vm191, %v69, 0
    %v775 = vsel %vm191, %v70, 0
    %v778 = vsel %vm191, %v71, 0
    %v781 = vsel %vm191, %v72, 0
    %v784 = vsel %vm191, %v73, 0
    %v787 = vsel %vm191, %v74, 0
    %v790 = vsel %vm191, %v75, 0
    %v793 = vsel %vm191, %v76, 0
    %v796 = vsel %vm191, %v77, 0
    %v799 = vsel %vm191, %v78, 0
    %v802 = vsel %vm191, %v79, 0
    %v805 = vsel %vm191, %v80, 0
    %v808 = vsel %vm191, %v81, 0
    %v811 = vsel %vm191, %v82, 0
    %v814 = vsel %vm191, %v83, 0
    %v817 = vsel %vm191, %v84, 0
    %v820 = vsel %vm191, %v85, 0
    %v823 = vsel %vm191, %v86, 0
    %v826 = vsel %vm191, %v87, 0
    %v829 = vsel %vm191, %v88, 0
    %v832 = vsel %vm191, %v89, 0
    %v835 = vsel %vm191, %v90, 0
    %v838 = vsel %vm191, %v91, 0
    %v841 = vsel %vm191, %v92, 0
    %v844 = vsel %vm191, %v93, 0
    %v847 = vsel %vm191, %v94, 0
    %v850 = vsel %vm191, %v95, 0
    %v853 = vsel %vm191, %v96, 0
    %v856 = vsel %vm191, %v97, 0
    %v859 = vsel %vm191, %v98, 0
    %v862 = vsel %vm191, %v99, 0
    %v865 = vsel %vm191, %v100, 0
    %v868 = vsel %vm191, %v101, 0
    %v871 = vsel %vm191, %v102, 0
    %v874 = vsel %vm191, %v103, 0
    %v877 = vsel %vm191, %v104, 0
    %v880 = vsel %vm191, %v105, 0
    %v883 = vsel %vm191, %v106, 0
    %v886 = vsel %vm191, %v107, 0
    %v889 = vsel %vm191, %v108, 0
    %v892 = vsel %vm191, %v109, 0
    %v895 = vsel %vm191, %v110, 0
    %v898 = vsel %vm191, %v111, 0
    %v901 = vsel %vm191, %v112, 0
    %v904 = vsel %vm191, %v113, 0
    %v907 = vsel %vm191, %v114, 0
    %v910 = vsel %vm191, %v115, 0
    %v913 = vsel %vm191, %v116, 0
    %v916 = vsel %vm191, %v117, 0
    %v919 = vsel %vm191, %v118, 0
    %v922 = vsel %vm191, %v119, 0
    %v925 = vsel %vm191, %v120, 0
    %v928 = vsel %vm191, %v121, 0
    %v931 = vsel %vm191, %v122, 0
    %v934 = vsel %vm191, %v123, 0
    %v937 = vsel %vm191, %v124, 0
    %939 = vmatprep.subr.mxu0 0.0
    %940 = vmatpush1.msra.mxu0 %v125
    %941 = vmatprep.subr.mxu0 0.0
    %942 = vmatpush1.msra.mxu0 %v126
    %943 = vmatprep.subr.mxu0 0.0
    %944 = vmatpush1.msra.mxu0 0.0
    %945 = vmatprep.subr.mxu0 0.0
    %946 = vmatpush1.msra.mxu0 0.0
    %947 = vmatprep.subr.mxu0 0.0
    %948 = vmatpush1.msra.mxu0 0.0
    %949 = vmatprep.subr.mxu0 0.0
    %950 = vmatpush1.msra.mxu0 0.0
    %951 = vmatprep.subr.mxu0 0.0
    %952 = vmatpush1.msra.mxu0 0.0
    %953 = vmatprep.subr.mxu0 0.0
    %954 = vmatpush1.msra.mxu0 0.0
    %955 = vmatprep.subr.mxu0 0.0
    %956 = vmatpush1.msra.mxu0 0.0
    %957 = vmatprep.subr.mxu0 0.0
    %958 = vmatpush1.msra.mxu0 0.0
    %959 = vmatprep.subr.mxu0 0.0
    %960 = vmatpush1.msra.mxu0 0.0
    %961 = vmatprep.subr.mxu0 0.0
    %962 = vmatpush1.msra.mxu0 0.0
    %963 = vmatprep.subr.mxu0 0.0
    %964 = vmatpush1.msra.mxu0 0.0
    %965 = vmatprep.subr.mxu0 0.0
    %966 = vmatpush1.msra.mxu0 0.0
    %967 = vmatprep.subr.mxu0 0.0
    %968 = vmatpush1.msra.mxu0 0.0
    %969 = vmatprep.subr.mxu0 0.0
    %970 = vmatpush1.msra.mxu0 0.0
    %971 = vmatprep.subr.mxu0 0.0
    %972 = vmatpush1.msra.mxu0 0.0
    %973 = vmatprep.subr.mxu0 0.0
    %974 = vmatpush1.msra.mxu0 0.0
    %975 = vmatprep.subr.mxu0 0.0
    %976 = vmatpush1.msra.mxu0 0.0
    %977 = vmatprep.subr.mxu0 0.0
    %978 = vmatpush1.msra.mxu0 0.0
    %979 = vmatprep.subr.mxu0 0.0
    %980 = vmatpush1.msra.mxu0 0.0
    %981 = vmatprep.subr.mxu0 0.0
    %982 = vmatpush1.msra.mxu0 0.0
    %983 = vmatprep.subr.mxu0 0.0
    %984 = vmatpush1.msra.mxu0 0.0
    %985 = vmatprep.subr.mxu0 0.0
    %986 = vmatpush1.msra.mxu0 0.0
    %987 = vmatprep.subr.mxu0 0.0
    %988 = vmatpush1.msra.mxu0 0.0
    %989 = vmatprep.subr.mxu0 0.0
    %990 = vmatpush1.msra.mxu0 0.0
    %991 = vmatprep.subr.mxu0 0.0
    %992 = vmatpush1.msra.mxu0 0.0
    %993 = vmatprep.subr.mxu0 0.0
    %994 = vmatpush1.msra.mxu0 0.0
    %995 = vmatprep.subr.mxu0 0.0
    %996 = vmatpush1.msra.mxu0 0.0
    %997 = vmatprep.subr.mxu0 0.0
    %998 = vmatpush1.msra.mxu0 0.0
    %999 = vmatprep.subr.mxu0 0.0
    %1000 = vmatpush1.msra.mxu0 0.0
    %1001 = vmatprep.subr.mxu0 0.0
    %1002 = vmatpush1.msra.mxu0 0.0
    %1003 = vmatprep.mubr.f32.mxu0 0.0
    %1004 = vmatmul.mubr.f32.gmra.mrb[0].mxu0 %v754
    %v1005 = vpop.f32.mrb[0].mxu0
    %v1006 = vadd.f32 %v445, %v1005
    %v1007 = vpop.f32.mrb[0].mxu0
    %1008 = vmatprep.mubr.f32.mxu0 0.0
    %1009 = vmatmul.mubr.f32.gmra.mrb[0].mxu0 %v757
    %v1010 = vpop.f32.mrb[0].mxu0
    %v1011 = vadd.f32 %v450, %v1010
    %v1012 = vpop.f32.mrb[0].mxu0
    %1013 = vmatprep.mubr.f32.mxu0 0.0
    %1014 = vmatmul.mubr.f32.gmra.mrb[0].mxu0 %v760
    %v1015 = vpop.f32.mrb[0].mxu0
    %v1016 = vadd.f32 %v455, %v1015
    %v1017 = vpop.f32.mrb[0].mxu0
    %1018 = vmatprep.mubr.f32.mxu0 0.0
    %1019 = vmatmul.mubr.f32.gmra.mrb[0].mxu0 %v763
    %v1020 = vpop.f32.mrb[0].mxu0
    %v1021 = vadd.f32 %v460, %v1020
    %v1022 = vpop.f32.mrb[0].mxu0
    %1023 = vmatprep.mubr.f32.mxu0 0.0
    %1024 = vmatmul.mubr.f32.gmra.mrb[0].mxu0 %v766
    %v1025 = vpop.f32.mrb[0].mxu0
    %v1026 = vadd.f32 %v465, %v1025
    %v1027 = vpop.f32.mrb[0].mxu0
    %1028 = vmatprep.mubr.f32.mxu0 0.0
    %1029 = vmatmul.mubr.f32.gmra.mrb[0].mxu0 %v769
    %v1030 = vpop.f32.mrb[0].mxu0
    %v1031 = vadd.f32 %v470, %v1030
    %v1032 = vpop.f32.mrb[0].mxu0
    %1033 = vmatprep.mubr.f32.mxu0 0.0
    %1034 = vmatmul.mubr.f32.gmra.mrb[0].mxu0 %v772
    %v1035 = vpop.f32.mrb[0].mxu0
    %v1036 = vadd.f32 %v475, %v1035
    %v1037 = vpop.f32.mrb[0].mxu0
    %1038 = vmatprep.mubr.f32.mxu0 0.0
    %1039 = vmatmul.mubr.f32.gmra.mrb[0].mxu0 %v775
    %v1040 = vpop.f32.mrb[0].mxu0
    %v1041 = vadd.f32 %v480, %v1040
    %v1042 = vpop.f32.mrb[0].mxu0
    %1043 = vmatprep.mubr.f32.mxu0 0.0
    %1044 = vmatmul.mubr.f32.gmra.mrb[0].mxu0 %v778
    %v1045 = vpop.f32.mrb[0].mxu0
    %v1046 = vadd.f32 %v485, %v1045
    %v1047 = vpop.f32.mrb[0].mxu0
    %1048 = vmatprep.mubr.f32.mxu0 0.0
    %1049 = vmatmul.mubr.f32.gmra.mrb[0].mxu0 %v781
    %v1050 = vpop.f32.mrb[0].mxu0
    %v1051 = vadd.f32 %v490, %v1050
    %v1052 = vpop.f32.mrb[0].mxu0
    %1053 = vmatprep.mubr.f32.mxu0 0.0
    %1054 = vmatmul.mubr.f32.gmra.mrb[0].mxu0 %v784
    %v1055 = vpop.f32.mrb[0].mxu0
    %v1056 = vadd.f32 %v495, %v1055
    %v1057 = vpop.f32.mrb[0].mxu0
    %1058 = vmatprep.mubr.f32.mxu0 0.0
    %1059 = vmatmul.mubr.f32.gmra.mrb[0].mxu0 %v787
    %v1060 = vpop.f32.mrb[0].mxu0
    %v1061 = vadd.f32 %v500, %v1060
    %v1062 = vpop.f32.mrb[0].mxu0
    %1063 = vmatprep.mubr.f32.mxu0 0.0
    %1064 = vmatmul.mubr.f32.gmra.mrb[0].mxu0 %v790
    %v1065 = vpop.f32.mrb[0].mxu0
    %v1066 = vadd.f32 %v505, %v1065
    %v1067 = vpop.f32.mrb[0].mxu0
    %1068 = vmatprep.mubr.f32.mxu0 0.0
    %1069 = vmatmul.mubr.f32.gmra.mrb[0].mxu0 %v793
    %v1070 = vpop.f32.mrb[0].mxu0
    %v1071 = vadd.f32 %v510, %v1070
    %v1072 = vpop.f32.mrb[0].mxu0
    %1073 = vmatprep.mubr.f32.mxu0 0.0
    %1074 = vmatmul.mubr.f32.gmra.mrb[0].mxu0 %v796
    %v1075 = vpop.f32.mrb[0].mxu0
    %v1076 = vadd.f32 %v515, %v1075
    %v1077 = vpop.f32.mrb[0].mxu0
    %1078 = vmatprep.mubr.f32.mxu0 0.0
    %1079 = vmatmul.mubr.f32.gmra.mrb[0].mxu0 %v799
    %v1080 = vpop.f32.mrb[0].mxu0
    %v1081 = vadd.f32 %v520, %v1080
    %v1082 = vpop.f32.mrb[0].mxu0
    %1083 = vmatprep.mubr.f32.mxu0 0.0
    %1084 = vmatmul.mubr.f32.gmra.mrb[0].mxu0 %v802
    %v1085 = vpop.f32.mrb[0].mxu0
    %v1086 = vadd.f32 %v525, %v1085
    %v1087 = vpop.f32.mrb[0].mxu0
    %1088 = vmatprep.mubr.f32.mxu0 0.0
    %1089 = vmatmul.mubr.f32.gmra.mrb[0].mxu0 %v805
    %v1090 = vpop.f32.mrb[0].mxu0
    %v1091 = vadd.f32 %v530, %v1090
    %v1092 = vpop.f32.mrb[0].mxu0
    %1093 = vmatprep.mubr.f32.mxu0 0.0
    %1094 = vmatmul.mubr.f32.gmra.mrb[0].mxu0 %v808
    %v1095 = vpop.f32.mrb[0].mxu0
    %v1096 = vadd.f32 %v535, %v1095
    %v1097 = vpop.f32.mrb[0].mxu0
    %1098 = vmatprep.mubr.f32.mxu0 0.0
    %1099 = vmatmul.mubr.f32.gmra.mrb[0].mxu0 %v811
    %v1100 = vpop.f32.mrb[0].mxu0
    %v1101 = vadd.f32 %v540, %v1100
    %v1102 = vpop.f32.mrb[0].mxu0
    %1103 = vmatprep.mubr.f32.mxu0 0.0
    %1104 = vmatmul.mubr.f32.gmra.mrb[0].mxu0 %v814
    %v1105 = vpop.f32.mrb[0].mxu0
    %v1106 = vadd.f32 %v545, %v1105
    %v1107 = vpop.f32.mrb[0].mxu0
    %1108 = vmatprep.mubr.f32.mxu0 0.0
    %1109 = vmatmul.mubr.f32.gmra.mrb[0].mxu0 %v817
    %v1110 = vpop.f32.mrb[0].mxu0
    %v1111 = vadd.f32 %v550, %v1110
    %v1112 = vpop.f32.mrb[0].mxu0
    %1113 = vmatprep.mubr.f32.mxu0 0.0
    %1114 = vmatmul.mubr.f32.gmra.mrb[0].mxu0 %v820
    %v1115 = vpop.f32.mrb[0].mxu0
    %v1116 = vadd.f32 %v555, %v1115
    %v1117 = vpop.f32.mrb[0].mxu0
    %1118 = vmatprep.mubr.f32.mxu0 0.0
    %1119 = vmatmul.mubr.f32.gmra.mrb[0].mxu0 %v823
    %v1120 = vpop.f32.mrb[0].mxu0
    %v1121 = vadd.f32 %v560, %v1120
    %v1122 = vpop.f32.mrb[0].mxu0
    %1123 = vmatprep.mubr.f32.mxu0 0.0
    %1124 = vmatmul.mubr.f32.gmra.mrb[0].mxu0 %v826
    %v1125 = vpop.f32.mrb[0].mxu0
    %v1126 = vadd.f32 %v565, %v1125
    %v1127 = vpop.f32.mrb[0].mxu0
    %1128 = vmatprep.mubr.f32.mxu0 0.0
    %1129 = vmatmul.mubr.f32.gmra.mrb[0].mxu0 %v829
    %v1130 = vpop.f32.mrb[0].mxu0
    %v1131 = vadd.f32 %v570, %v1130
    %v1132 = vpop.f32.mrb[0].mxu0
    %1133 = vmatprep.mubr.f32.mxu0 0.0
    %1134 = vmatmul.mubr.f32.gmra.mrb[0].mxu0 %v832
    %v1135 = vpop.f32.mrb[0].mxu0
    %v1136 = vadd.f32 %v575, %v1135
    %v1137 = vpop.f32.mrb[0].mxu0
    %1138 = vmatprep.mubr.f32.mxu0 0.0
    %1139 = vmatmul.mubr.f32.gmra.mrb[0].mxu0 %v835
    %v1140 = vpop.f32.mrb[0].mxu0
    %v1141 = vadd.f32 %v580, %v1140
    %v1142 = vpop.f32.mrb[0].mxu0
    %1143 = vmatprep.mubr.f32.mxu0 0.0
    %1144 = vmatmul.mubr.f32.gmra.mrb[0].mxu0 %v838
    %v1145 = vpop.f32.mrb[0].mxu0
    %v1146 = vadd.f32 %v585, %v1145
    %v1147 = vpop.f32.mrb[0].mxu0
    %1148 = vmatprep.mubr.f32.mxu0 0.0
    %1149 = vmatmul.mubr.f32.gmra.mrb[0].mxu0 %v841
    %v1150 = vpop.f32.mrb[0].mxu0
    %v1151 = vadd.f32 %v590, %v1150
    %v1152 = vpop.f32.mrb[0].mxu0
    %1153 = vmatprep.mubr.f32.mxu0 0.0
    %1154 = vmatmul.mubr.f32.gmra.mrb[0].mxu0 %v844
    %v1155 = vpop.f32.mrb[0].mxu0
    %v1156 = vadd.f32 %v595, %v1155
    %v1157 = vpop.f32.mrb[0].mxu0
    %1158 = vmatprep.mubr.f32.mxu0 0.0
    %1159 = vmatmul.mubr.f32.gmra.mrb[0].mxu0 %v847
    %v1160 = vpop.f32.mrb[0].mxu0
    %v1161 = vadd.f32 %v600, %v1160
    %v1162 = vpop.f32.mrb[0].mxu0
    %1163 = vmatprep.mubr.f32.mxu0 0.0
    %1164 = vmatmul.mubr.f32.gmra.mrb[0].mxu0 %v850
    %v1165 = vpop.f32.mrb[0].mxu0
    %v1166 = vadd.f32 %v605, %v1165
    %v1167 = vpop.f32.mrb[0].mxu0
    %1168 = vmatprep.mubr.f32.mxu0 0.0
    %1169 = vmatmul.mubr.f32.gmra.mrb[0].mxu0 %v853
    %v1170 = vpop.f32.mrb[0].mxu0
    %v1171 = vadd.f32 %v610, %v1170
    %v1172 = vpop.f32.mrb[0].mxu0
    %1173 = vmatprep.mubr.f32.mxu0 0.0
    %1174 = vmatmul.mubr.f32.gmra.mrb[0].mxu0 %v856
    %v1175 = vpop.f32.mrb[0].mxu0
    %v1176 = vadd.f32 %v615, %v1175
    %v1177 = vpop.f32.mrb[0].mxu0
    %1178 = vmatprep.mubr.f32.mxu0 0.0
    %1179 = vmatmul.mubr.f32.gmra.mrb[0].mxu0 %v859
    %v1180 = vpop.f32.mrb[0].mxu0
    %v1181 = vadd.f32 %v620, %v1180
    %v1182 = vpop.f32.mrb[0].mxu0
    %1183 = vmatprep.mubr.f32.mxu0 0.0
    %1184 = vmatmul.mubr.f32.gmra.mrb[0].mxu0 %v862
    %v1185 = vpop.f32.mrb[0].mxu0
    %v1186 = vadd.f32 %v625, %v1185
    %v1187 = vpop.f32.mrb[0].mxu0
    %1188 = vmatprep.mubr.f32.mxu0 0.0
    %1189 = vmatmul.mubr.f32.gmra.mrb[0].mxu0 %v865
    %v1190 = vpop.f32.mrb[0].mxu0
    %v1191 = vadd.f32 %v630, %v1190
    %v1192 = vpop.f32.mrb[0].mxu0
    %1193 = vmatprep.mubr.f32.mxu0 0.0
    %1194 = vmatmul.mubr.f32.gmra.mrb[0].mxu0 %v868
    %v1195 = vpop.f32.mrb[0].mxu0
    %v1196 = vadd.f32 %v635, %v1195
    %v1197 = vpop.f32.mrb[0].mxu0
    %1198 = vmatprep.mubr.f32.mxu0 0.0
    %1199 = vmatmul.mubr.f32.gmra.mrb[0].mxu0 %v871
    %v1200 = vpop.f32.mrb[0].mxu0
    %v1201 = vadd.f32 %v640, %v1200
    %v1202 = vpop.f32.mrb[0].mxu0
    %1203 = vmatprep.mubr.f32.mxu0 0.0
    %1204 = vmatmul.mubr.f32.gmra.mrb[0].mxu0 %v874
    %v1205 = vpop.f32.mrb[0].mxu0
    %v1206 = vadd.f32 %v645, %v1205
    %v1207 = vpop.f32.mrb[0].mxu0
    %1208 = vmatprep.mubr.f32.mxu0 0.0
    %1209 = vmatmul.mubr.f32.gmra.mrb[0].mxu0 %v877
    %v1210 = vpop.f32.mrb[0].mxu0
    %v1211 = vadd.f32 %v650, %v1210
    %v1212 = vpop.f32.mrb[0].mxu0
    %1213 = vmatprep.mubr.f32.mxu0 0.0
    %1214 = vmatmul.mubr.f32.gmra.mrb[0].mxu0 %v880
    %v1215 = vpop.f32.mrb[0].mxu0
    %v1216 = vadd.f32 %v655, %v1215
    %v1217 = vpop.f32.mrb[0].mxu0
    %1218 = vmatprep.mubr.f32.mxu0 0.0
    %1219 = vmatmul.mubr.f32.gmra.mrb[0].mxu0 %v883
    %v1220 = vpop.f32.mrb[0].mxu0
    %v1221 = vadd.f32 %v660, %v1220
    %v1222 = vpop.f32.mrb[0].mxu0
    %1223 = vmatprep.mubr.f32.mxu0 0.0
    %1224 = vmatmul.mubr.f32.gmra.mrb[0].mxu0 %v886
    %v1225 = vpop.f32.mrb[0].mxu0
    %v1226 = vadd.f32 %v665, %v1225
    %v1227 = vpop.f32.mrb[0].mxu0
    %1228 = vmatprep.mubr.f32.mxu0 0.0
    %1229 = vmatmul.mubr.f32.gmra.mrb[0].mxu0 %v889
    %v1230 = vpop.f32.mrb[0].mxu0
    %v1231 = vadd.f32 %v670, %v1230
    %v1232 = vpop.f32.mrb[0].mxu0
    %1233 = vmatprep.mubr.f32.mxu0 0.0
    %1234 = vmatmul.mubr.f32.gmra.mrb[0].mxu0 %v892
    %v1235 = vpop.f32.mrb[0].mxu0
    %v1236 = vadd.f32 %v675, %v1235
    %v1237 = vpop.f32.mrb[0].mxu0
    %1238 = vmatprep.mubr.f32.mxu0 0.0
    %1239 = vmatmul.mubr.f32.gmra.mrb[0].mxu0 %v895
    %v1240 = vpop.f32.mrb[0].mxu0
    %v1241 = vadd.f32 %v680, %v1240
    %v1242 = vpop.f32.mrb[0].mxu0
    %1243 = vmatprep.mubr.f32.mxu0 0.0
    %1244 = vmatmul.mubr.f32.gmra.mrb[0].mxu0 %v898
    %v1245 = vpop.f32.mrb[0].mxu0
    %v1246 = vadd.f32 %v685, %v1245
    %v1247 = vpop.f32.mrb[0].mxu0
    %1248 = vmatprep.mubr.f32.mxu0 0.0
    %1249 = vmatmul.mubr.f32.gmra.mrb[0].mxu0 %v901
    %v1250 = vpop.f32.mrb[0].mxu0
    %v1251 = vadd.f32 %v690, %v1250
    %v1252 = vpop.f32.mrb[0].mxu0
    %1253 = vmatprep.mubr.f32.mxu0 0.0
    %1254 = vmatmul.mubr.f32.gmra.mrb[0].mxu0 %v904
    %v1255 = vpop.f32.mrb[0].mxu0
    %v1256 = vadd.f32 %v695, %v1255
    %v1257 = vpop.f32.mrb[0].mxu0
    %1258 = vmatprep.mubr.f32.mxu0 0.0
    %1259 = vmatmul.mubr.f32.gmra.mrb[0].mxu0 %v907
    %v1260 = vpop.f32.mrb[0].mxu0
    %v1261 = vadd.f32 %v700, %v1260
    %v1262 = vpop.f32.mrb[0].mxu0
    %1263 = vmatprep.mubr.f32.mxu0 0.0
    %1264 = vmatmul.mubr.f32.gmra.mrb[0].mxu0 %v910
    %v1265 = vpop.f32.mrb[0].mxu0
    %v1266 = vadd.f32 %v705, %v1265
    %v1267 = vpop.f32.mrb[0].mxu0
    %1268 = vmatprep.mubr.f32.mxu0 0.0
    %1269 = vmatmul.mubr.f32.gmra.mrb[0].mxu0 %v913
    %v1270 = vpop.f32.mrb[0].mxu0
    %v1271 = vadd.f32 %v710, %v1270
    %v1272 = vpop.f32.mrb[0].mxu0
    %1273 = vmatprep.mubr.f32.mxu0 0.0
    %1274 = vmatmul.mubr.f32.gmra.mrb[0].mxu0 %v916
    %v1275 = vpop.f32.mrb[0].mxu0
    %v1276 = vadd.f32 %v715, %v1275
    %v1277 = vpop.f32.mrb[0].mxu0
    %1278 = vmatprep.mubr.f32.mxu0 0.0
    %1279 = vmatmul.mubr.f32.gmra.mrb[0].mxu0 %v919
    %v1280 = vpop.f32.mrb[0].mxu0
    %v1281 = vadd.f32 %v720, %v1280
    %v1282 = vpop.f32.mrb[0].mxu0
    %1283 = vmatprep.mubr.f32.mxu0 0.0
    %1284 = vmatmul.mubr.f32.gmra.mrb[0].mxu0 %v922
    %v1285 = vpop.f32.mrb[0].mxu0
    %v1286 = vadd.f32 %v725, %v1285
    %v1287 = vpop.f32.mrb[0].mxu0
    %1288 = vmatprep.mubr.f32.mxu0 0.0
    %1289 = vmatmul.mubr.f32.gmra.mrb[0].mxu0 %v925
    %v1290 = vpop.f32.mrb[0].mxu0
    %v1291 = vadd.f32 %v730, %v1290
    %v1292 = vpop.f32.mrb[0].mxu0
    %1293 = vmatprep.mubr.f32.mxu0 0.0
    %1294 = vmatmul.mubr.f32.gmra.mrb[0].mxu0 %v928
    %v1295 = vpop.f32.mrb[0].mxu0
    %v1296 = vadd.f32 %v735, %v1295
    %v1297 = vpop.f32.mrb[0].mxu0
    %1298 = vmatprep.mubr.f32.mxu0 0.0
    %1299 = vmatmul.mubr.f32.gmra.mrb[0].mxu0 %v931
    %v1300 = vpop.f32.mrb[0].mxu0
    %v1301 = vadd.f32 %v740, %v1300
    %v1302 = vpop.f32.mrb[0].mxu0
    %1303 = vmatprep.mubr.f32.mxu0 0.0
    %1304 = vmatmul.mubr.f32.gmra.mrb[0].mxu0 %v934
    %v1305 = vpop.f32.mrb[0].mxu0
    %v1306 = vadd.f32 %v745, %v1305
    %v1307 = vpop.f32.mrb[0].mxu0
    %1308 = vmatprep.mubr.f32.mxu0 0.0
    %1309 = vmatmul.mubr.f32.gmra.mrb[0].mxu0 %v937
    %v1310 = vpop.f32.mrb[0].mxu0
    %v1311 = vadd.f32 %v750, %v1310
    %v1312 = vpop.f32.mrb[0].mxu0
    %1313 = vdwg.mxu0
    %v1314 = vld [vmem:[%s0 + $0x2] sm:$0xff]
    %v1315 = vld [vmem:[%s0 + $0xa] sm:$0xff]
    %v1316 = vld [vmem:[%s0 + $0x12] sm:$0xff]
    %v1317 = vld [vmem:[%s0 + $0x1a] sm:$0xff]
    %v1318 = vld [vmem:[%s0 + $0x22] sm:$0xff]
    %v1319 = vld [vmem:[%s0 + $0x2a] sm:$0xff]
    %v1320 = vld [vmem:[%s0 + $0x32] sm:$0xff]
    %v1321 = vld [vmem:[%s0 + $0x3a] sm:$0xff]
    %v1322 = vld [vmem:[%s0 + $0x42] sm:$0xff]
    %v1323 = vld [vmem:[%s0 + $0x4a] sm:$0xff]
    %v1324 = vld [vmem:[%s0 + $0x52] sm:$0xff]
    %v1325 = vld [vmem:[%s0 + $0x5a] sm:$0xff]
    %v1326 = vld [vmem:[%s0 + $0x62] sm:$0xff]
    %v1327 = vld [vmem:[%s0 + $0x6a] sm:$0xff]
    %v1328 = vld [vmem:[%s0 + $0x72] sm:$0xff]
    %v1329 = vld [vmem:[%s0 + $0x7a] sm:$0xff]
    %v1330 = vld [vmem:[%s0 + $0x82] sm:$0xff]
    %v1331 = vld [vmem:[%s0 + $0x8a] sm:$0xff]
    %v1332 = vld [vmem:[%s0 + $0x92] sm:$0xff]
    %v1333 = vld [vmem:[%s0 + $0x9a] sm:$0xff]
    %v1334 = vld [vmem:[%s0 + $0xa2] sm:$0xff]
    %v1335 = vld [vmem:[%s0 + $0xaa] sm:$0xff]
    %v1336 = vld [vmem:[%s0 + $0xb2] sm:$0xff]
    %v1337 = vld [vmem:[%s0 + $0xba] sm:$0xff]
    %v1338 = vld [vmem:[%s0 + $0xc2] sm:$0xff]
    %v1339 = vld [vmem:[%s0 + $0xca] sm:$0xff]
    %v1340 = vld [vmem:[%s0 + $0xd2] sm:$0xff]
    %v1341 = vld [vmem:[%s0 + $0xda] sm:$0xff]
    %v1342 = vld [vmem:[%s0 + $0xe2] sm:$0xff]
    %v1343 = vld [vmem:[%s0 + $0xea] sm:$0xff]
    %v1344 = vld [vmem:[%s0 + $0xf2] sm:$0xff]
    %v1345 = vld [vmem:[%s0 + $0xfa] sm:$0xff]
    %v1346 = vld [vmem:[%s0 + $0x102] sm:$0xff]
    %v1347 = vld [vmem:[%s0 + $0x10a] sm:$0xff]
    %v1348 = vld [vmem:[%s0 + $0x112] sm:$0xff]
    %v1349 = vld [vmem:[%s0 + $0x11a] sm:$0xff]
    %v1350 = vld [vmem:[%s0 + $0x122] sm:$0xff]
    %v1351 = vld [vmem:[%s0 + $0x12a] sm:$0xff]
    %v1352 = vld [vmem:[%s0 + $0x132] sm:$0xff]
    %v1353 = vld [vmem:[%s0 + $0x13a] sm:$0xff]
    %v1354 = vld [vmem:[%s0 + $0x142] sm:$0xff]
    %v1355 = vld [vmem:[%s0 + $0x14a] sm:$0xff]
    %v1356 = vld [vmem:[%s0 + $0x152] sm:$0xff]
    %v1357 = vld [vmem:[%s0 + $0x15a] sm:$0xff]
    %v1358 = vld [vmem:[%s0 + $0x162] sm:$0xff]
    %v1359 = vld [vmem:[%s0 + $0x16a] sm:$0xff]
    %v1360 = vld [vmem:[%s0 + $0x172] sm:$0xff]
    %v1361 = vld [vmem:[%s0 + $0x17a] sm:$0xff]
    %v1362 = vld [vmem:[%s0 + $0x182] sm:$0xff]
    %v1363 = vld [vmem:[%s0 + $0x18a] sm:$0xff]
    %v1364 = vld [vmem:[%s0 + $0x192] sm:$0xff]
    %v1365 = vld [vmem:[%s0 + $0x19a] sm:$0xff]
    %v1366 = vld [vmem:[%s0 + $0x1a2] sm:$0xff]
    %v1367 = vld [vmem:[%s0 + $0x1aa] sm:$0xff]
    %v1368 = vld [vmem:[%s0 + $0x1b2] sm:$0xff]
    %v1369 = vld [vmem:[%s0 + $0x1ba] sm:$0xff]
    %v1370 = vld [vmem:[%s0 + $0x1c2] sm:$0xff]
    %v1371 = vld [vmem:[%s0 + $0x1ca] sm:$0xff]
    %v1372 = vld [vmem:[%s0 + $0x1d2] sm:$0xff]
    %v1373 = vld [vmem:[%s0 + $0x1da] sm:$0xff]
    %v1374 = vld [vmem:[%s0 + $0x1e2] sm:$0xff]
    %v1375 = vld [vmem:[%s0 + $0x1ea] sm:$0xff]
    %v1376 = vld [vmem:[%s1 + $0x20] sm:$0xff]
    %v1377 = vld [vmem:[%s1 + $0x28] sm:$0xff]
    %v1379 = vsel %vm191, %v1314, 0
    %v1382 = vsel %vm191, %v1315, 0
    %v1385 = vsel %vm191, %v1316, 0
    %v1388 = vsel %vm191, %v1317, 0
    %v1391 = vsel %vm191, %v1318, 0
    %v1394 = vsel %vm191, %v1319, 0
    %v1397 = vsel %vm191, %v1320, 0
    %v1400 = vsel %vm191, %v1321, 0
    %v1403 = vsel %vm191, %v1322, 0
    %v1406 = vsel %vm191, %v1323, 0
    %v1409 = vsel %vm191, %v1324, 0
    %v1412 = vsel %vm191, %v1325, 0
    %v1415 = vsel %vm191, %v1326, 0
    %v1418 = vsel %vm191, %v1327, 0
    %v1421 = vsel %vm191, %v1328, 0
    %v1424 = vsel %vm191, %v1329, 0
    %v1427 = vsel %vm191, %v1330, 0
    %v1430 = vsel %vm191, %v1331, 0
    %v1433 = vsel %vm191, %v1332, 0
    %v1436 = vsel %vm191, %v1333, 0
    %v1439 = vsel %vm191, %v1334, 0
    %v1442 = vsel %vm191, %v1335, 0
    %v1445 = vsel %vm191, %v1336, 0
    %v1448 = vsel %vm191, %v1337, 0
    %v1451 = vsel %vm191, %v1338, 0
    %v1454 = vsel %vm191, %v1339, 0
    %v1457 = vsel %vm191, %v1340, 0
    %v1460 = vsel %vm191, %v1341, 0
    %v1463 = vsel %vm191, %v1342, 0
    %v1466 = vsel %vm191, %v1343, 0
    %v1469 = vsel %vm191, %v1344, 0
    %v1472 = vsel %vm191, %v1345, 0
    %v1475 = vsel %vm191, %v1346, 0
    %v1478 = vsel %vm191, %v1347, 0
    %v1481 = vsel %vm191, %v1348, 0
    %v1484 = vsel %vm191, %v1349, 0
    %v1487 = vsel %vm191, %v1350, 0
    %v1490 = vsel %vm191, %v1351, 0
    %v1493 = vsel %vm191, %v1352, 0
    %v1496 = vsel %vm191, %v1353, 0
    %v1499 = vsel %vm191, %v1354, 0
    %v1502 = vsel %vm191, %v1355, 0
    %v1505 = vsel %vm191, %v1356, 0
    %v1508 = vsel %vm191, %v1357, 0
    %v1511 = vsel %vm191, %v1358, 0
    %v1514 = vsel %vm191, %v1359, 0
    %v1517 = vsel %vm191, %v1360, 0
    %v1520 = vsel %vm191, %v1361, 0
    %v1523 = vsel %vm191, %v1362, 0
    %v1526 = vsel %vm191, %v1363, 0
    %v1529 = vsel %vm191, %v1364, 0
    %v1532 = vsel %vm191, %v1365, 0
    %v1535 = vsel %vm191, %v1366, 0
    %v1538 = vsel %vm191, %v1367, 0
    %v1541 = vsel %vm191, %v1368, 0
    %v1544 = vsel %vm191, %v1369, 0
    %v1547 = vsel %vm191, %v1370, 0
    %v1550 = vsel %vm191, %v1371, 0
    %v1553 = vsel %vm191, %v1372, 0
    %v1556 = vsel %vm191, %v1373, 0
    %v1559 = vsel %vm191, %v1374, 0
    %v1562 = vsel %vm191, %v1375, 0
    %1564 = vmatprep.subr.mxu0 0.0
    %1565 = vmatpush1.msra.mxu0 %v1376
    %1566 = vmatprep.subr.mxu0 0.0
    %1567 = vmatpush1.msra.mxu0 %v1377
    %1568 = vmatprep.subr.mxu0 0.0
    %1569 = vmatpush1.msra.mxu0 0.0
    %1570 = vmatprep.subr.mxu0 0.0
    %1571 = vmatpush1.msra.mxu0 0.0
    %1572 = vmatprep.subr.mxu0 0.0
    %1573 = vmatpush1.msra.mxu0 0.0
    %1574 = vmatprep.subr.mxu0 0.0
    %1575 = vmatpush1.msra.mxu0 0.0
    %1576 = vmatprep.subr.mxu0 0.0
    %1577 = vmatpush1.msra.mxu0 0.0
    %1578 = vmatprep.subr.mxu0 0.0
    %1579 = vmatpush1.msra.mxu0 0.0
    %1580 = vmatprep.subr.mxu0 0.0
    %1581 = vmatpush1.msra.mxu0 0.0
    %1582 = vmatprep.subr.mxu0 0.0
    %1583 = vmatpush1.msra.mxu0 0.0
    %1584 = vmatprep.subr.mxu0 0.0
    %1585 = vmatpush1.msra.mxu0 0.0
    %1586 = vmatprep.subr.mxu0 0.0
    %1587 = vmatpush1.msra.mxu0 0.0
    %1588 = vmatprep.subr.mxu0 0.0
    %1589 = vmatpush1.msra.mxu0 0.0
    %1590 = vmatprep.subr.mxu0 0.0
    %1591 = vmatpush1.msra.mxu0 0.0
    %1592 = vmatprep.subr.mxu0 0.0
    %1593 = vmatpush1.msra.mxu0 0.0
    %1594 = vmatprep.subr.mxu0 0.0
    %1595 = vmatpush1.msra.mxu0 0.0
    %1596 = vmatprep.subr.mxu0 0.0
    %1597 = vmatpush1.msra.mxu0 0.0
    %1598 = vmatprep.subr.mxu0 0.0
    %1599 = vmatpush1.msra.mxu0 0.0
    %1600 = vmatprep.subr.mxu0 0.0
    %1601 = vmatpush1.msra.mxu0 0.0
    %1602 = vmatprep.subr.mxu0 0.0
    %1603 = vmatpush1.msra.mxu0 0.0
    %1604 = vmatprep.subr.mxu0 0.0
    %1605 = vmatpush1.msra.mxu0 0.0
    %1606 = vmatprep.subr.mxu0 0.0
    %1607 = vmatpush1.msra.mxu0 0.0
    %1608 = vmatprep.subr.mxu0 0.0
    %1609 = vmatpush1.msra.mxu0 0.0
    %1610 = vmatprep.subr.mxu0 0.0
    %1611 = vmatpush1.msra.mxu0 0.0
    %1612 = vmatprep.subr.mxu0 0.0
    %1613 = vmatpush1.msra.mxu0 0.0
    %1614 = vmatprep.subr.mxu0 0.0
    %1615 = vmatpush1.msra.mxu0 0.0
    %1616 = vmatprep.subr.mxu0 0.0
    %1617 = vmatpush1.msra.mxu0 0.0
    %1618 = vmatprep.subr.mxu0 0.0
    %1619 = vmatpush1.msra.mxu0 0.0
    %1620 = vmatprep.subr.mxu0 0.0
    %1621 = vmatpush1.msra.mxu0 0.0
    %1622 = vmatprep.subr.mxu0 0.0
    %1623 = vmatpush1.msra.mxu0 0.0
    %1624 = vmatprep.subr.mxu0 0.0
    %1625 = vmatpush1.msra.mxu0 0.0
    %1626 = vmatprep.subr.mxu0 0.0
    %1627 = vmatpush1.msra.mxu0 0.0
    %1628 = vmatprep.mubr.f32.mxu0 0.0
    %1629 = vmatmul.mubr.f32.gmra.mrb[0].mxu0 %v1379
    %v1630 = vpop.f32.mrb[0].mxu0
    %v1631 = vadd.f32 0.0, %v1630
    %v1632 = vpop.f32.mrb[0].mxu0
    %1633 = vmatprep.mubr.f32.mxu0 0.0
    %1634 = vmatmul.mubr.f32.gmra.mrb[0].mxu0 %v1382
    %v1635 = vpop.f32.mrb[0].mxu0
    %v1636 = vadd.f32 0.0, %v1635
    %v1637 = vpop.f32.mrb[0].mxu0
    %1638 = vmatprep.mubr.f32.mxu0 0.0
    %1639 = vmatmul.mubr.f32.gmra.mrb[0].mxu0 %v1385
    %v1640 = vpop.f32.mrb[0].mxu0
    %v1641 = vadd.f32 0.0, %v1640
    %v1642 = vpop.f32.mrb[0].mxu0
    %1643 = vmatprep.mubr.f32.mxu0 0.0
    %1644 = vmatmul.mubr.f32.gmra.mrb[0].mxu0 %v1388
    %v1645 = vpop.f32.mrb[0].mxu0
    %v1646 = vadd.f32 0.0, %v1645
    %v1647 = vpop.f32.mrb[0].mxu0
    %1648 = vmatprep.mubr.f32.mxu0 0.0
    %1649 = vmatmul.mubr.f32.gmra.mrb[0].mxu0 %v1391
    %v1650 = vpop.f32.mrb[0].mxu0
    %v1651 = vadd.f32 0.0, %v1650
    %v1652 = vpop.f32.mrb[0].mxu0
    %1653 = vmatprep.mubr.f32.mxu0 0.0
    %1654 = vmatmul.mubr.f32.gmra.mrb[0].mxu0 %v1394
    %v1655 = vpop.f32.mrb[0].mxu0
    %v1656 = vadd.f32 0.0, %v1655
    %v1657 = vpop.f32.mrb[0].mxu0
    %1658 = vmatprep.mubr.f32.mxu0 0.0
    %1659 = vmatmul.mubr.f32.gmra.mrb[0].mxu0 %v1397
    %v1660 = vpop.f32.mrb[0].mxu0
    %v1661 = vadd.f32 0.0, %v1660
    %v1662 = vpop.f32.mrb[0].mxu0
    %1663 = vmatprep.mubr.f32.mxu0 0.0
    %1664 = vmatmul.mubr.f32.gmra.mrb[0].mxu0 %v1400
    %v1665 = vpop.f32.mrb[0].mxu0
    %v1666 = vadd.f32 0.0, %v1665
    %v1667 = vpop.f32.mrb[0].mxu0
    %1668 = vmatprep.mubr.f32.mxu0 0.0
    %1669 = vmatmul.mubr.f32.gmra.mrb[0].mxu0 %v1403
    %v1670 = vpop.f32.mrb[0].mxu0
    %v1671 = vadd.f32 0.0, %v1670
    %v1672 = vpop.f32.mrb[0].mxu0
    %1673 = vmatprep.mubr.f32.mxu0 0.0
    %1674 = vmatmul.mubr.f32.gmra.mrb[0].mxu0 %v1406
    %v1675 = vpop.f32.mrb[0].mxu0
    %v1676 = vadd.f32 0.0, %v1675
    %v1677 = vpop.f32.mrb[0].mxu0
    %1678 = vmatprep.mubr.f32.mxu0 0.0
    %1679 = vmatmul.mubr.f32.gmra.mrb[0].mxu0 %v1409
    %v1680 = vpop.f32.mrb[0].mxu0
    %v1681 = vadd.f32 0.0, %v1680
    %v1682 = vpop.f32.mrb[0].mxu0
    %1683 = vmatprep.mubr.f32.mxu0 0.0
    %1684 = vmatmul.mubr.f32.gmra.mrb[0].mxu0 %v1412
    %v1685 = vpop.f32.mrb[0].mxu0
    %v1686 = vadd.f32 0.0, %v1685
    %v1687 = vpop.f32.mrb[0].mxu0
    %1688 = vmatprep.mubr.f32.mxu0 0.0
    %1689 = vmatmul.mubr.f32.gmra.mrb[0].mxu0 %v1415
    %v1690 = vpop.f32.mrb[0].mxu0
    %v1691 = vadd.f32 0.0, %v1690
    %v1692 = vpop.f32.mrb[0].mxu0
    %1693 = vmatprep.mubr.f32.mxu0 0.0
    %1694 = vmatmul.mubr.f32.gmra.mrb[0].mxu0 %v1418
    %v1695 = vpop.f32.mrb[0].mxu0
    %v1696 = vadd.f32 0.0, %v1695
    %v1697 = vpop.f32.mrb[0].mxu0
    %1698 = vmatprep.mubr.f32.mxu0 0.0
    %1699 = vmatmul.mubr.f32.gmra.mrb[0].mxu0 %v1421
    %v1700 = vpop.f32.mrb[0].mxu0
    %v1701 = vadd.f32 0.0, %v1700
    %v1702 = vpop.f32.mrb[0].mxu0
    %1703 = vmatprep.mubr.f32.mxu0 0.0
    %1704 = vmatmul.mubr.f32.gmra.mrb[0].mxu0 %v1424
    %v1705 = vpop.f32.mrb[0].mxu0
    %v1706 = vadd.f32 0.0, %v1705
    %v1707 = vpop.f32.mrb[0].mxu0
    %1708 = vmatprep.mubr.f32.mxu0 0.0
    %1709 = vmatmul.mubr.f32.gmra.mrb[0].mxu0 %v1427
    %v1710 = vpop.f32.mrb[0].mxu0
    %v1711 = vadd.f32 0.0, %v1710
    %v1712 = vpop.f32.mrb[0].mxu0
    %1713 = vmatprep.mubr.f32.mxu0 0.0
    %1714 = vmatmul.mubr.f32.gmra.mrb[0].mxu0 %v1430
    %v1715 = vpop.f32.mrb[0].mxu0
    %v1716 = vadd.f32 0.0, %v1715
    %v1717 = vpop.f32.mrb[0].mxu0
    %1718 = vmatprep.mubr.f32.mxu0 0.0
    %1719 = vmatmul.mubr.f32.gmra.mrb[0].mxu0 %v1433
    %v1720 = vpop.f32.mrb[0].mxu0
    %v1721 = vadd.f32 0.0, %v1720
    %v1722 = vpop.f32.mrb[0].mxu0
    %1723 = vmatprep.mubr.f32.mxu0 0.0
    %1724 = vmatmul.mubr.f32.gmra.mrb[0].mxu0 %v1436
    %v1725 = vpop.f32.mrb[0].mxu0
    %v1726 = vadd.f32 0.0, %v1725
    %v1727 = vpop.f32.mrb[0].mxu0
    %1728 = vmatprep.mubr.f32.mxu0 0.0
    %1729 = vmatmul.mubr.f32.gmra.mrb[0].mxu0 %v1439
    %v1730 = vpop.f32.mrb[0].mxu0
    %v1731 = vadd.f32 0.0, %v1730
    %v1732 = vpop.f32.mrb[0].mxu0
    %1733 = vmatprep.mubr.f32.mxu0 0.0
    %1734 = vmatmul.mubr.f32.gmra.mrb[0].mxu0 %v1442
    %v1735 = vpop.f32.mrb[0].mxu0
    %v1736 = vadd.f32 0.0, %v1735
    %v1737 = vpop.f32.mrb[0].mxu0
    %1738 = vmatprep.mubr.f32.mxu0 0.0
    %1739 = vmatmul.mubr.f32.gmra.mrb[0].mxu0 %v1445
    %v1740 = vpop.f32.mrb[0].mxu0
    %v1741 = vadd.f32 0.0, %v1740
    %v1742 = vpop.f32.mrb[0].mxu0
    %1743 = vmatprep.mubr.f32.mxu0 0.0
    %1744 = vmatmul.mubr.f32.gmra.mrb[0].mxu0 %v1448
    %v1745 = vpop.f32.mrb[0].mxu0
    %v1746 = vadd.f32 0.0, %v1745
    %v1747 = vpop.f32.mrb[0].mxu0
    %1748 = vmatprep.mubr.f32.mxu0 0.0
    %1749 = vmatmul.mubr.f32.gmra.mrb[0].mxu0 %v1451
    %v1750 = vpop.f32.mrb[0].mxu0
    %v1751 = vadd.f32 0.0, %v1750
    %v1752 = vpop.f32.mrb[0].mxu0
    %1753 = vmatprep.mubr.f32.mxu0 0.0
    %1754 = vmatmul.mubr.f32.gmra.mrb[0].mxu0 %v1454
    %v1755 = vpop.f32.mrb[0].mxu0
    %v1756 = vadd.f32 0.0, %v1755
    %v1757 = vpop.f32.mrb[0].mxu0
    %1758 = vmatprep.mubr.f32.mxu0 0.0
    %1759 = vmatmul.mubr.f32.gmra.mrb[0].mxu0 %v1457
    %v1760 = vpop.f32.mrb[0].mxu0
    %v1761 = vadd.f32 0.0, %v1760
    %v1762 = vpop.f32.mrb[0].mxu0
    %1763 = vmatprep.mubr.f32.mxu0 0.0
    %1764 = vmatmul.mubr.f32.gmra.mrb[0].mxu0 %v1460
    %v1765 = vpop.f32.mrb[0].mxu0
    %v1766 = vadd.f32 0.0, %v1765
    %v1767 = vpop.f32.mrb[0].mxu0
    %1768 = vmatprep.mubr.f32.mxu0 0.0
    %1769 = vmatmul.mubr.f32.gmra.mrb[0].mxu0 %v1463
    %v1770 = vpop.f32.mrb[0].mxu0
    %v1771 = vadd.f32 0.0, %v1770
    %v1772 = vpop.f32.mrb[0].mxu0
    %1773 = vmatprep.mubr.f32.mxu0 0.0
    %1774 = vmatmul.mubr.f32.gmra.mrb[0].mxu0 %v1466
    %v1775 = vpop.f32.mrb[0].mxu0
    %v1776 = vadd.f32 0.0, %v1775
    %v1777 = vpop.f32.mrb[0].mxu0
    %1778 = vmatprep.mubr.f32.mxu0 0.0
    %1779 = vmatmul.mubr.f32.gmra.mrb[0].mxu0 %v1469
    %v1780 = vpop.f32.mrb[0].mxu0
    %v1781 = vadd.f32 0.0, %v1780
    %v1782 = vpop.f32.mrb[0].mxu0
    %1783 = vmatprep.mubr.f32.mxu0 0.0
    %1784 = vmatmul.mubr.f32.gmra.mrb[0].mxu0 %v1472
    %v1785 = vpop.f32.mrb[0].mxu0
    %v1786 = vadd.f32 0.0, %v1785
    %v1787 = vpop.f32.mrb[0].mxu0
    %1788 = vmatprep.mubr.f32.mxu0 0.0
    %1789 = vmatmul.mubr.f32.gmra.mrb[0].mxu0 %v1475
    %v1790 = vpop.f32.mrb[0].mxu0
    %v1791 = vadd.f32 0.0, %v1790
    %v1792 = vpop.f32.mrb[0].mxu0
    %1793 = vmatprep.mubr.f32.mxu0 0.0
    %1794 = vmatmul.mubr.f32.gmra.mrb[0].mxu0 %v1478
    %v1795 = vpop.f32.mrb[0].mxu0
    %v1796 = vadd.f32 0.0, %v1795
    %v1797 = vpop.f32.mrb[0].mxu0
    %1798 = vmatprep.mubr.f32.mxu0 0.0
    %1799 = vmatmul.mubr.f32.gmra.mrb[0].mxu0 %v1481
    %v1800 = vpop.f32.mrb[0].mxu0
    %v1801 = vadd.f32 0.0, %v1800
    %v1802 = vpop.f32.mrb[0].mxu0
    %1803 = vmatprep.mubr.f32.mxu0 0.0
    %1804 = vmatmul.mubr.f32.gmra.mrb[0].mxu0 %v1484
    %v1805 = vpop.f32.mrb[0].mxu0
    %v1806 = vadd.f32 0.0, %v1805
    %v1807 = vpop.f32.mrb[0].mxu0
    %1808 = vmatprep.mubr.f32.mxu0 0.0
    %1809 = vmatmul.mubr.f32.gmra.mrb[0].mxu0 %v1487
    %v1810 = vpop.f32.mrb[0].mxu0
    %v1811 = vadd.f32 0.0, %v1810
    %v1812 = vpop.f32.mrb[0].mxu0
    %1813 = vmatprep.mubr.f32.mxu0 0.0
    %1814 = vmatmul.mubr.f32.gmra.mrb[0].mxu0 %v1490
    %v1815 = vpop.f32.mrb[0].mxu0
    %v1816 = vadd.f32 0.0, %v1815
    %v1817 = vpop.f32.mrb[0].mxu0
    %1818 = vmatprep.mubr.f32.mxu0 0.0
    %1819 = vmatmul.mubr.f32.gmra.mrb[0].mxu0 %v1493
    %v1820 = vpop.f32.mrb[0].mxu0
    %v1821 = vadd.f32 0.0, %v1820
    %v1822 = vpop.f32.mrb[0].mxu0
    %1823 = vmatprep.mubr.f32.mxu0 0.0
    %1824 = vmatmul.mubr.f32.gmra.mrb[0].mxu0 %v1496
    %v1825 = vpop.f32.mrb[0].mxu0
    %v1826 = vadd.f32 0.0, %v1825
    %v1827 = vpop.f32.mrb[0].mxu0
    %1828 = vmatprep.mubr.f32.mxu0 0.0
    %1829 = vmatmul.mubr.f32.gmra.mrb[0].mxu0 %v1499
    %v1830 = vpop.f32.mrb[0].mxu0
    %v1831 = vadd.f32 0.0, %v1830
    %v1832 = vpop.f32.mrb[0].mxu0
    %1833 = vmatprep.mubr.f32.mxu0 0.0
    %1834 = vmatmul.mubr.f32.gmra.mrb[0].mxu0 %v1502
    %v1835 = vpop.f32.mrb[0].mxu0
    %v1836 = vadd.f32 0.0, %v1835
    %v1837 = vpop.f32.mrb[0].mxu0
    %1838 = vmatprep.mubr.f32.mxu0 0.0
    %1839 = vmatmul.mubr.f32.gmra.mrb[0].mxu0 %v1505
    %v1840 = vpop.f32.mrb[0].mxu0
    %v1841 = vadd.f32 0.0, %v1840
    %v1842 = vpop.f32.mrb[0].mxu0
    %1843 = vmatprep.mubr.f32.mxu0 0.0
    %1844 = vmatmul.mubr.f32.gmra.mrb[0].mxu0 %v1508
    %v1845 = vpop.f32.mrb[0].mxu0
    %v1846 = vadd.f32 0.0, %v1845
    %v1847 = vpop.f32.mrb[0].mxu0
    %1848 = vmatprep.mubr.f32.mxu0 0.0
    %1849 = vmatmul.mubr.f32.gmra.mrb[0].mxu0 %v1511
    %v1850 = vpop.f32.mrb[0].mxu0
    %v1851 = vadd.f32 0.0, %v1850
    %v1852 = vpop.f32.mrb[0].mxu0
    %1853 = vmatprep.mubr.f32.mxu0 0.0
    %1854 = vmatmul.mubr.f32.gmra.mrb[0].mxu0 %v1514
    %v1855 = vpop.f32.mrb[0].mxu0
    %v1856 = vadd.f32 0.0, %v1855
    %v1857 = vpop.f32.mrb[0].mxu0
    %1858 = vmatprep.mubr.f32.mxu0 0.0
    %1859 = vmatmul.mubr.f32.gmra.mrb[0].mxu0 %v1517
    %v1860 = vpop.f32.mrb[0].mxu0
    %v1861 = vadd.f32 0.0, %v1860
    %v1862 = vpop.f32.mrb[0].mxu0
    %1863 = vmatprep.mubr.f32.mxu0 0.0
    %1864 = vmatmul.mubr.f32.gmra.mrb[0].mxu0 %v1520
    %v1865 = vpop.f32.mrb[0].mxu0
    %v1866 = vadd.f32 0.0, %v1865
    %v1867 = vpop.f32.mrb[0].mxu0
    %1868 = vmatprep.mubr.f32.mxu0 0.0
    %1869 = vmatmul.mubr.f32.gmra.mrb[0].mxu0 %v1523
    %v1870 = vpop.f32.mrb[0].mxu0
    %v1871 = vadd.f32 0.0, %v1870
    %v1872 = vpop.f32.mrb[0].mxu0
    %1873 = vmatprep.mubr.f32.mxu0 0.0
    %1874 = vmatmul.mubr.f32.gmra.mrb[0].mxu0 %v1526
    %v1875 = vpop.f32.mrb[0].mxu0
    %v1876 = vadd.f32 0.0, %v1875
    %v1877 = vpop.f32.mrb[0].mxu0
    %1878 = vmatprep.mubr.f32.mxu0 0.0
    %1879 = vmatmul.mubr.f32.gmra.mrb[0].mxu0 %v1529
    %v1880 = vpop.f32.mrb[0].mxu0
    %v1881 = vadd.f32 0.0, %v1880
    %v1882 = vpop.f32.mrb[0].mxu0
    %1883 = vmatprep.mubr.f32.mxu0 0.0
    %1884 = vmatmul.mubr.f32.gmra.mrb[0].mxu0 %v1532
    %v1885 = vpop.f32.mrb[0].mxu0
    %v1886 = vadd.f32 0.0, %v1885
    %v1887 = vpop.f32.mrb[0].mxu0
    %1888 = vmatprep.mubr.f32.mxu0 0.0
    %1889 = vmatmul.mubr.f32.gmra.mrb[0].mxu0 %v1535
    %v1890 = vpop.f32.mrb[0].mxu0
    %v1891 = vadd.f32 0.0, %v1890
    %v1892 = vpop.f32.mrb[0].mxu0
    %1893 = vmatprep.mubr.f32.mxu0 0.0
    %1894 = vmatmul.mubr.f32.gmra.mrb[0].mxu0 %v1538
    %v1895 = vpop.f32.mrb[0].mxu0
    %v1896 = vadd.f32 0.0, %v1895
    %v1897 = vpop.f32.mrb[0].mxu0
    %1898 = vmatprep.mubr.f32.mxu0 0.0
    %1899 = vmatmul.mubr.f32.gmra.mrb[0].mxu0 %v1541
    %v1900 = vpop.f32.mrb[0].mxu0
    %v1901 = vadd.f32 0.0, %v1900
    %v1902 = vpop.f32.mrb[0].mxu0
    %1903 = vmatprep.mubr.f32.mxu0 0.0
    %1904 = vmatmul.mubr.f32.gmra.mrb[0].mxu0 %v1544
    %v1905 = vpop.f32.mrb[0].mxu0
    %v1906 = vadd.f32 0.0, %v1905
    %v1907 = vpop.f32.mrb[0].mxu0
    %1908 = vmatprep.mubr.f32.mxu0 0.0
    %1909 = vmatmul.mubr.f32.gmra.mrb[0].mxu0 %v1547
    %v1910 = vpop.f32.mrb[0].mxu0
    %v1911 = vadd.f32 0.0, %v1910
    %v1912 = vpop.f32.mrb[0].mxu0
    %1913 = vmatprep.mubr.f32.mxu0 0.0
    %1914 = vmatmul.mubr.f32.gmra.mrb[0].mxu0 %v1550
    %v1915 = vpop.f32.mrb[0].mxu0
    %v1916 = vadd.f32 0.0, %v1915
    %v1917 = vpop.f32.mrb[0].mxu0
    %1918 = vmatprep.mubr.f32.mxu0 0.0
    %1919 = vmatmul.mubr.f32.gmra.mrb[0].mxu0 %v1553
    %v1920 = vpop.f32.mrb[0].mxu0
    %v1921 = vadd.f32 0.0, %v1920
    %v1922 = vpop.f32.mrb[0].mxu0
    %1923 = vmatprep.mubr.f32.mxu0 0.0
    %1924 = vmatmul.mubr.f32.gmra.mrb[0].mxu0 %v1556
    %v1925 = vpop.f32.mrb[0].mxu0
    %v1926 = vadd.f32 0.0, %v1925
    %v1927 = vpop.f32.mrb[0].mxu0
    %1928 = vmatprep.mubr.f32.mxu0 0.0
    %1929 = vmatmul.mubr.f32.gmra.mrb[0].mxu0 %v1559
    %v1930 = vpop.f32.mrb[0].mxu0
    %v1931 = vadd.f32 0.0, %v1930
    %v1932 = vpop.f32.mrb[0].mxu0
    %1933 = vmatprep.mubr.f32.mxu0 0.0
    %1934 = vmatmul.mubr.f32.gmra.mrb[0].mxu0 %v1562
    %v1935 = vpop.f32.mrb[0].mxu0
    %v1936 = vadd.f32 0.0, %v1935
    %v1937 = vpop.f32.mrb[0].mxu0
    %1938 = vdwg.mxu0
    %v1939 = vadd.f32 %v1006, %v1631
    %v1940 = vadd.f32 %v1011, %v1636
    %v1941 = vadd.f32 %v1016, %v1641
    %v1942 = vadd.f32 %v1021, %v1646
    %v1943 = vadd.f32 %v1026, %v1651
    %v1944 = vadd.f32 %v1031, %v1656
    %v1945 = vadd.f32 %v1036, %v1661
    %v1946 = vadd.f32 %v1041, %v1666
    %v1947 = vadd.f32 %v1046, %v1671
    %v1948 = vadd.f32 %v1051, %v1676
    %v1949 = vadd.f32 %v1056, %v1681
    %v1950 = vadd.f32 %v1061, %v1686
    %v1951 = vadd.f32 %v1066, %v1691
    %v1952 = vadd.f32 %v1071, %v1696
    %v1953 = vadd.f32 %v1076, %v1701
    %v1954 = vadd.f32 %v1081, %v1706
    %v1955 = vadd.f32 %v1086, %v1711
    %v1956 = vadd.f32 %v1091, %v1716
    %v1957 = vadd.f32 %v1096, %v1721
    %v1958 = vadd.f32 %v1101, %v1726
    %v1959 = vadd.f32 %v1106, %v1731
    %v1960 = vadd.f32 %v1111, %v1736
    %v1961 = vadd.f32 %v1116, %v1741
    %v1962 = vadd.f32 %v1121, %v1746
    %v1963 = vadd.f32 %v1126, %v1751
    %v1964 = vadd.f32 %v1131, %v1756
    %v1965 = vadd.f32 %v1136, %v1761
    %v1966 = vadd.f32 %v1141, %v1766
    %v1967 = vadd.f32 %v1146, %v1771
    %v1968 = vadd.f32 %v1151, %v1776
    %v1969 = vadd.f32 %v1156, %v1781
    %v1970 = vadd.f32 %v1161, %v1786
    %v1971 = vadd.f32 %v1166, %v1791
    %v1972 = vadd.f32 %v1171, %v1796
    %v1973 = vadd.f32 %v1176, %v1801
    %v1974 = vadd.f32 %v1181, %v1806
    %v1975 = vadd.f32 %v1186, %v1811
    %v1976 = vadd.f32 %v1191, %v1816
    %v1977 = vadd.f32 %v1196, %v1821
    %v1978 = vadd.f32 %v1201, %v1826
    %v1979 = vadd.f32 %v1206, %v1831
    %v1980 = vadd.f32 %v1211, %v1836
    %v1981 = vadd.f32 %v1216, %v1841
    %v1982 = vadd.f32 %v1221, %v1846
    %v1983 = vadd.f32 %v1226, %v1851
    %v1984 = vadd.f32 %v1231, %v1856
    %v1985 = vadd.f32 %v1236, %v1861
    %v1986 = vadd.f32 %v1241, %v1866
    %v1987 = vadd.f32 %v1246, %v1871
    %v1988 = vadd.f32 %v1251, %v1876
    %v1989 = vadd.f32 %v1256, %v1881
    %v1990 = vadd.f32 %v1261, %v1886
    %v1991 = vadd.f32 %v1266, %v1891
    %v1992 = vadd.f32 %v1271, %v1896
    %v1993 = vadd.f32 %v1276, %v1901
    %v1994 = vadd.f32 %v1281, %v1906
    %v1995 = vadd.f32 %v1286, %v1911
    %v1996 = vadd.f32 %v1291, %v1916
    %v1997 = vadd.f32 %v1296, %v1921
    %v1998 = vadd.f32 %v1301, %v1926
    %v1999 = vadd.f32 %v1306, %v1931
    %v2000 = vadd.f32 %v1311, %v1936
    %v2001 = vld [vmem:[%s0 + $0x3] sm:$0xff]
    %v2002 = vld [vmem:[%s0 + $0xb] sm:$0xff]
    %v2003 = vld [vmem:[%s0 + $0x13] sm:$0xff]
    %v2004 = vld [vmem:[%s0 + $0x1b] sm:$0xff]
    %v2005 = vld [vmem:[%s0 + $0x23] sm:$0xff]
    %v2006 = vld [vmem:[%s0 + $0x2b] sm:$0xff]
    %v2007 = vld [vmem:[%s0 + $0x33] sm:$0xff]
    %v2008 = vld [vmem:[%s0 + $0x3b] sm:$0xff]
    %v2009 = vld [vmem:[%s0 + $0x43] sm:$0xff]
    %v2010 = vld [vmem:[%s0 + $0x4b] sm:$0xff]
    %v2011 = vld [vmem:[%s0 + $0x53] sm:$0xff]
    %v2012 = vld [vmem:[%s0 + $0x5b] sm:$0xff]
    %v2013 = vld [vmem:[%s0 + $0x63] sm:$0xff]
    %v2014 = vld [vmem:[%s0 + $0x6b] sm:$0xff]
    %v2015 = vld [vmem:[%s0 + $0x73] sm:$0xff]
    %v2016 = vld [vmem:[%s0 + $0x7b] sm:$0xff]
    %v2017 = vld [vmem:[%s0 + $0x83] sm:$0xff]
    %v2018 = vld [vmem:[%s0 + $0x8b] sm:$0xff]
    %v2019 = vld [vmem:[%s0 + $0x93] sm:$0xff]
    %v2020 = vld [vmem:[%s0 + $0x9b] sm:$0xff]
    %v2021 = vld [vmem:[%s0 + $0xa3] sm:$0xff]
    %v2022 = vld [vmem:[%s0 + $0xab] sm:$0xff]
    %v2023 = vld [vmem:[%s0 + $0xb3] sm:$0xff]
    %v2024 = vld [vmem:[%s0 + $0xbb] sm:$0xff]
    %v2025 = vld [vmem:[%s0 + $0xc3] sm:$0xff]
    %v2026 = vld [vmem:[%s0 + $0xcb] sm:$0xff]
    %v2027 = vld [vmem:[%s0 + $0xd3] sm:$0xff]
    %v2028 = vld [vmem:[%s0 + $0xdb] sm:$0xff]
    %v2029 = vld [vmem:[%s0 + $0xe3] sm:$0xff]
    %v2030 = vld [vmem:[%s0 + $0xeb] sm:$0xff]
    %v2031 = vld [vmem:[%s0 + $0xf3] sm:$0xff]
    %v2032 = vld [vmem:[%s0 + $0xfb] sm:$0xff]
    %v2033 = vld [vmem:[%s0 + $0x103] sm:$0xff]
    %v2034 = vld [vmem:[%s0 + $0x10b] sm:$0xff]
    %v2035 = vld [vmem:[%s0 + $0x113] sm:$0xff]
    %v2036 = vld [vmem:[%s0 + $0x11b] sm:$0xff]
    %v2037 = vld [vmem:[%s0 + $0x123] sm:$0xff]
    %v2038 = vld [vmem:[%s0 + $0x12b] sm:$0xff]
    %v2039 = vld [vmem:[%s0 + $0x133] sm:$0xff]
    %v2040 = vld [vmem:[%s0 + $0x13b] sm:$0xff]
    %v2041 = vld [vmem:[%s0 + $0x143] sm:$0xff]
    %v2042 = vld [vmem:[%s0 + $0x14b] sm:$0xff]
    %v2043 = vld [vmem:[%s0 + $0x153] sm:$0xff]
    %v2044 = vld [vmem:[%s0 + $0x15b] sm:$0xff]
    %v2045 = vld [vmem:[%s0 + $0x163] sm:$0xff]
    %v2046 = vld [vmem:[%s0 + $0x16b] sm:$0xff]
    %v2047 = vld [vmem:[%s0 + $0x173] sm:$0xff]
    %v2048 = vld [vmem:[%s0 + $0x17b] sm:$0xff]
    %v2049 = vld [vmem:[%s0 + $0x183] sm:$0xff]
    %v2050 = vld [vmem:[%s0 + $0x18b] sm:$0xff]
    %v2051 = vld [vmem:[%s0 + $0x193] sm:$0xff]
    %v2052 = vld [vmem:[%s0 + $0x19b] sm:$0xff]
    %v2053 = vld [vmem:[%s0 + $0x1a3] sm:$0xff]
    %v2054 = vld [vmem:[%s0 + $0x1ab] sm:$0xff]
    %v2055 = vld [vmem:[%s0 + $0x1b3] sm:$0xff]
    %v2056 = vld [vmem:[%s0 + $0x1bb] sm:$0xff]
    %v2057 = vld [vmem:[%s0 + $0x1c3] sm:$0xff]
    %v2058 = vld [vmem:[%s0 + $0x1cb] sm:$0xff]
    %v2059 = vld [vmem:[%s0 + $0x1d3] sm:$0xff]
    %v2060 = vld [vmem:[%s0 + $0x1db] sm:$0xff]
    %v2061 = vld [vmem:[%s0 + $0x1e3] sm:$0xff]
    %v2062 = vld [vmem:[%s0 + $0x1eb] sm:$0xff]
    %v2063 = vld [vmem:[%s1 + $0x30] sm:$0xff]
    %v2064 = vld [vmem:[%s1 + $0x38] sm:$0xff]
    %v2066 = vsel %vm191, %v2001, 0
    %v2069 = vsel %vm191, %v2002, 0
    %v2072 = vsel %vm191, %v2003, 0
    %v2075 = vsel %vm191, %v2004, 0
    %v2078 = vsel %vm191, %v2005, 0
    %v2081 = vsel %vm191, %v2006, 0
    %v2084 = vsel %vm191, %v2007, 0
    %v2087 = vsel %vm191, %v2008, 0
    %v2090 = vsel %vm191, %v2009, 0
    %v2093 = vsel %vm191, %v2010, 0
    %v2096 = vsel %vm191, %v2011, 0
    %v2099 = vsel %vm191, %v2012, 0
    %v2102 = vsel %vm191, %v2013, 0
    %v2105 = vsel %vm191, %v2014, 0
    %v2108 = vsel %vm191, %v2015, 0
    %v2111 = vsel %vm191, %v2016, 0
    %v2114 = vsel %vm191, %v2017, 0
    %v2117 = vsel %vm191, %v2018, 0
    %v2120 = vsel %vm191, %v2019, 0
    %v2123 = vsel %vm191, %v2020, 0
    %v2126 = vsel %vm191, %v2021, 0
    %v2129 = vsel %vm191, %v2022, 0
    %v2132 = vsel %vm191, %v2023, 0
    %v2135 = vsel %vm191, %v2024, 0
    %v2138 = vsel %vm191, %v2025, 0
    %v2141 = vsel %vm191, %v2026, 0
    %v2144 = vsel %vm191, %v2027, 0
    %v2147 = vsel %vm191, %v2028, 0
    %v2150 = vsel %vm191, %v2029, 0
    %v2153 = vsel %vm191, %v2030, 0
    %v2156 = vsel %vm191, %v2031, 0
    %v2159 = vsel %vm191, %v2032, 0
    %v2162 = vsel %vm191, %v2033, 0
    %v2165 = vsel %vm191, %v2034, 0
    %v2168 = vsel %vm191, %v2035, 0
    %v2171 = vsel %vm191, %v2036, 0
    %v2174 = vsel %vm191, %v2037, 0
    %v2177 = vsel %vm191, %v2038, 0
    %v2180 = vsel %vm191, %v2039, 0
    %v2183 = vsel %vm191, %v2040, 0
    %v2186 = vsel %vm191, %v2041, 0
    %v2189 = vsel %vm191, %v2042, 0
    %v2192 = vsel %vm191, %v2043, 0
    %v2195 = vsel %vm191, %v2044, 0
    %v2198 = vsel %vm191, %v2045, 0
    %v2201 = vsel %vm191, %v2046, 0
    %v2204 = vsel %vm191, %v2047, 0
    %v2207 = vsel %vm191, %v2048, 0
    %v2210 = vsel %vm191, %v2049, 0
    %v2213 = vsel %vm191, %v2050, 0
    %v2216 = vsel %vm191, %v2051, 0
    %v2219 = vsel %vm191, %v2052, 0
    %v2222 = vsel %vm191, %v2053, 0
    %v2225 = vsel %vm191, %v2054, 0
    %v2228 = vsel %vm191, %v2055, 0
    %v2231 = vsel %vm191, %v2056, 0
    %v2234 = vsel %vm191, %v2057, 0
    %v2237 = vsel %vm191, %v2058, 0
    %v2240 = vsel %vm191, %v2059, 0
    %v2243 = vsel %vm191, %v2060, 0
    %v2246 = vsel %vm191, %v2061, 0
    %v2249 = vsel %vm191, %v2062, 0
    %2251 = vmatprep.subr.mxu0 0.0
    %2252 = vmatpush1.msra.mxu0 %v2063
    %2253 = vmatprep.subr.mxu0 0.0
    %2254 = vmatpush1.msra.mxu0 %v2064
    %2255 = vmatprep.subr.mxu0 0.0
    %2256 = vmatpush1.msra.mxu0 0.0
    %2257 = vmatprep.subr.mxu0 0.0
    %2258 = vmatpush1.msra.mxu0 0.0
    %2259 = vmatprep.subr.mxu0 0.0
    %2260 = vmatpush1.msra.mxu0 0.0
    %2261 = vmatprep.subr.mxu0 0.0
    %2262 = vmatpush1.msra.mxu0 0.0
    %2263 = vmatprep.subr.mxu0 0.0
    %2264 = vmatpush1.msra.mxu0 0.0
    %2265 = vmatprep.subr.mxu0 0.0
    %2266 = vmatpush1.msra.mxu0 0.0
    %2267 = vmatprep.subr.mxu0 0.0
    %2268 = vmatpush1.msra.mxu0 0.0
    %2269 = vmatprep.subr.mxu0 0.0
    %2270 = vmatpush1.msra.mxu0 0.0
    %2271 = vmatprep.subr.mxu0 0.0
    %2272 = vmatpush1.msra.mxu0 0.0
    %2273 = vmatprep.subr.mxu0 0.0
    %2274 = vmatpush1.msra.mxu0 0.0
    %2275 = vmatprep.subr.mxu0 0.0
    %2276 = vmatpush1.msra.mxu0 0.0
    %2277 = vmatprep.subr.mxu0 0.0
    %2278 = vmatpush1.msra.mxu0 0.0
    %2279 = vmatprep.subr.mxu0 0.0
    %2280 = vmatpush1.msra.mxu0 0.0
    %2281 = vmatprep.subr.mxu0 0.0
    %2282 = vmatpush1.msra.mxu0 0.0
    %2283 = vmatprep.subr.mxu0 0.0
    %2284 = vmatpush1.msra.mxu0 0.0
    %2285 = vmatprep.subr.mxu0 0.0
    %2286 = vmatpush1.msra.mxu0 0.0
    %2287 = vmatprep.subr.mxu0 0.0
    %2288 = vmatpush1.msra.mxu0 0.0
    %2289 = vmatprep.subr.mxu0 0.0
    %2290 = vmatpush1.msra.mxu0 0.0
    %2291 = vmatprep.subr.mxu0 0.0
    %2292 = vmatpush1.msra.mxu0 0.0
    %2293 = vmatprep.subr.mxu0 0.0
    %2294 = vmatpush1.msra.mxu0 0.0
    %2295 = vmatprep.subr.mxu0 0.0
    %2296 = vmatpush1.msra.mxu0 0.0
    %2297 = vmatprep.subr.mxu0 0.0
    %2298 = vmatpush1.msra.mxu0 0.0
    %2299 = vmatprep.subr.mxu0 0.0
    %2300 = vmatpush1.msra.mxu0 0.0
    %2301 = vmatprep.subr.mxu0 0.0
    %2302 = vmatpush1.msra.mxu0 0.0
    %2303 = vmatprep.subr.mxu0 0.0
    %2304 = vmatpush1.msra.mxu0 0.0
    %2305 = vmatprep.subr.mxu0 0.0
    %2306 = vmatpush1.msra.mxu0 0.0
    %2307 = vmatprep.subr.mxu0 0.0
    %2308 = vmatpush1.msra.mxu0 0.0
    %2309 = vmatprep.subr.mxu0 0.0
    %2310 = vmatpush1.msra.mxu0 0.0
    %2311 = vmatprep.subr.mxu0 0.0
    %2312 = vmatpush1.msra.mxu0 0.0
    %2313 = vmatprep.subr.mxu0 0.0
    %2314 = vmatpush1.msra.mxu0 0.0
    %2315 = vmatprep.mubr.f32.mxu0 0.0
    %2316 = vmatmul.mubr.f32.gmra.mrb[0].mxu0 %v2066
    %v2317 = vpop.f32.mrb[0].mxu0
    %v2318 = vadd.f32 0.0, %v2317
    %v2319 = vpop.f32.mrb[0].mxu0
    %2320 = vmatprep.mubr.f32.mxu0 0.0
    %2321 = vmatmul.mubr.f32.gmra.mrb[0].mxu0 %v2069
    %v2322 = vpop.f32.mrb[0].mxu0
    %v2323 = vadd.f32 0.0, %v2322
    %v2324 = vpop.f32.mrb[0].mxu0
    %2325 = vmatprep.mubr.f32.mxu0 0.0
    %2326 = vmatmul.mubr.f32.gmra.mrb[0].mxu0 %v2072
    %v2327 = vpop.f32.mrb[0].mxu0
    %v2328 = vadd.f32 0.0, %v2327
    %v2329 = vpop.f32.mrb[0].mxu0
    %2330 = vmatprep.mubr.f32.mxu0 0.0
    %2331 = vmatmul.mubr.f32.gmra.mrb[0].mxu0 %v2075
    %v2332 = vpop.f32.mrb[0].mxu0
    %v2333 = vadd.f32 0.0, %v2332
    %v2334 = vpop.f32.mrb[0].mxu0
    %2335 = vmatprep.mubr.f32.mxu0 0.0
    %2336 = vmatmul.mubr.f32.gmra.mrb[0].mxu0 %v2078
    %v2337 = vpop.f32.mrb[0].mxu0
    %v2338 = vadd.f32 0.0, %v2337
    %v2339 = vpop.f32.mrb[0].mxu0
    %2340 = vmatprep.mubr.f32.mxu0 0.0
    %2341 = vmatmul.mubr.f32.gmra.mrb[0].mxu0 %v2081
    %v2342 = vpop.f32.mrb[0].mxu0
    %v2343 = vadd.f32 0.0, %v2342
    %v2344 = vpop.f32.mrb[0].mxu0
    %2345 = vmatprep.mubr.f32.mxu0 0.0
    %2346 = vmatmul.mubr.f32.gmra.mrb[0].mxu0 %v2084
    %v2347 = vpop.f32.mrb[0].mxu0
    %v2348 = vadd.f32 0.0, %v2347
    %v2349 = vpop.f32.mrb[0].mxu0
    %2350 = vmatprep.mubr.f32.mxu0 0.0
    %2351 = vmatmul.mubr.f32.gmra.mrb[0].mxu0 %v2087
    %v2352 = vpop.f32.mrb[0].mxu0
    %v2353 = vadd.f32 0.0, %v2352
    %v2354 = vpop.f32.mrb[0].mxu0
    %2355 = vmatprep.mubr.f32.mxu0 0.0
    %2356 = vmatmul.mubr.f32.gmra.mrb[0].mxu0 %v2090
    %v2357 = vpop.f32.mrb[0].mxu0
    %v2358 = vadd.f32 0.0, %v2357
    %v2359 = vpop.f32.mrb[0].mxu0
    %2360 = vmatprep.mubr.f32.mxu0 0.0
    %2361 = vmatmul.mubr.f32.gmra.mrb[0].mxu0 %v2093
    %v2362 = vpop.f32.mrb[0].mxu0
    %v2363 = vadd.f32 0.0, %v2362
    %v2364 = vpop.f32.mrb[0].mxu0
    %2365 = vmatprep.mubr.f32.mxu0 0.0
    %2366 = vmatmul.mubr.f32.gmra.mrb[0].mxu0 %v2096
    %v2367 = vpop.f32.mrb[0].mxu0
    %v2368 = vadd.f32 0.0, %v2367
    %v2369 = vpop.f32.mrb[0].mxu0
    %2370 = vmatprep.mubr.f32.mxu0 0.0
    %2371 = vmatmul.mubr.f32.gmra.mrb[0].mxu0 %v2099
    %v2372 = vpop.f32.mrb[0].mxu0
    %v2373 = vadd.f32 0.0, %v2372
    %v2374 = vpop.f32.mrb[0].mxu0
    %2375 = vmatprep.mubr.f32.mxu0 0.0
    %2376 = vmatmul.mubr.f32.gmra.mrb[0].mxu0 %v2102
    %v2377 = vpop.f32.mrb[0].mxu0
    %v2378 = vadd.f32 0.0, %v2377
    %v2379 = vpop.f32.mrb[0].mxu0
    %2380 = vmatprep.mubr.f32.mxu0 0.0
    %2381 = vmatmul.mubr.f32.gmra.mrb[0].mxu0 %v2105
    %v2382 = vpop.f32.mrb[0].mxu0
    %v2383 = vadd.f32 0.0, %v2382
    %v2384 = vpop.f32.mrb[0].mxu0
    %2385 = vmatprep.mubr.f32.mxu0 0.0
    %2386 = vmatmul.mubr.f32.gmra.mrb[0].mxu0 %v2108
    %v2387 = vpop.f32.mrb[0].mxu0
    %v2388 = vadd.f32 0.0, %v2387
    %v2389 = vpop.f32.mrb[0].mxu0
    %2390 = vmatprep.mubr.f32.mxu0 0.0
    %2391 = vmatmul.mubr.f32.gmra.mrb[0].mxu0 %v2111
    %v2392 = vpop.f32.mrb[0].mxu0
    %v2393 = vadd.f32 0.0, %v2392
    %v2394 = vpop.f32.mrb[0].mxu0
    %2395 = vmatprep.mubr.f32.mxu0 0.0
    %2396 = vmatmul.mubr.f32.gmra.mrb[0].mxu0 %v2114
    %v2397 = vpop.f32.mrb[0].mxu0
    %v2398 = vadd.f32 0.0, %v2397
    %v2399 = vpop.f32.mrb[0].mxu0
    %2400 = vmatprep.mubr.f32.mxu0 0.0
    %2401 = vmatmul.mubr.f32.gmra.mrb[0].mxu0 %v2117
    %v2402 = vpop.f32.mrb[0].mxu0
    %v2403 = vadd.f32 0.0, %v2402
    %v2404 = vpop.f32.mrb[0].mxu0
    %2405 = vmatprep.mubr.f32.mxu0 0.0
    %2406 = vmatmul.mubr.f32.gmra.mrb[0].mxu0 %v2120
    %v2407 = vpop.f32.mrb[0].mxu0
    %v2408 = vadd.f32 0.0, %v2407
    %v2409 = vpop.f32.mrb[0].mxu0
    %2410 = vmatprep.mubr.f32.mxu0 0.0
    %2411 = vmatmul.mubr.f32.gmra.mrb[0].mxu0 %v2123
    %v2412 = vpop.f32.mrb[0].mxu0
    %v2413 = vadd.f32 0.0, %v2412
    %v2414 = vpop.f32.mrb[0].mxu0
    %2415 = vmatprep.mubr.f32.mxu0 0.0
    %2416 = vmatmul.mubr.f32.gmra.mrb[0].mxu0 %v2126
    %v2417 = vpop.f32.mrb[0].mxu0
    %v2418 = vadd.f32 0.0, %v2417
    %v2419 = vpop.f32.mrb[0].mxu0
    %2420 = vmatprep.mubr.f32.mxu0 0.0
    %2421 = vmatmul.mubr.f32.gmra.mrb[0].mxu0 %v2129
    %v2422 = vpop.f32.mrb[0].mxu0
    %v2423 = vadd.f32 0.0, %v2422
    %v2424 = vpop.f32.mrb[0].mxu0
    %2425 = vmatprep.mubr.f32.mxu0 0.0
    %2426 = vmatmul.mubr.f32.gmra.mrb[0].mxu0 %v2132
    %v2427 = vpop.f32.mrb[0].mxu0
    %v2428 = vadd.f32 0.0, %v2427
    %v2429 = vpop.f32.mrb[0].mxu0
    %2430 = vmatprep.mubr.f32.mxu0 0.0
    %2431 = vmatmul.mubr.f32.gmra.mrb[0].mxu0 %v2135
    %v2432 = vpop.f32.mrb[0].mxu0
    %v2433 = vadd.f32 0.0, %v2432
    %v2434 = vpop.f32.mrb[0].mxu0
    %2435 = vmatprep.mubr.f32.mxu0 0.0
    %2436 = vmatmul.mubr.f32.gmra.mrb[0].mxu0 %v2138
    %v2437 = vpop.f32.mrb[0].mxu0
    %v2438 = vadd.f32 0.0, %v2437
    %v2439 = vpop.f32.mrb[0].mxu0
    %2440 = vmatprep.mubr.f32.mxu0 0.0
    %2441 = vmatmul.mubr.f32.gmra.mrb[0].mxu0 %v2141
    %v2442 = vpop.f32.mrb[0].mxu0
    %v2443 = vadd.f32 0.0, %v2442
    %v2444 = vpop.f32.mrb[0].mxu0
    %2445 = vmatprep.mubr.f32.mxu0 0.0
    %2446 = vmatmul.mubr.f32.gmra.mrb[0].mxu0 %v2144
    %v2447 = vpop.f32.mrb[0].mxu0
    %v2448 = vadd.f32 0.0, %v2447
    %v2449 = vpop.f32.mrb[0].mxu0
    %2450 = vmatprep.mubr.f32.mxu0 0.0
    %2451 = vmatmul.mubr.f32.gmra.mrb[0].mxu0 %v2147
    %v2452 = vpop.f32.mrb[0].mxu0
    %v2453 = vadd.f32 0.0, %v2452
    %v2454 = vpop.f32.mrb[0].mxu0
    %2455 = vmatprep.mubr.f32.mxu0 0.0
    %2456 = vmatmul.mubr.f32.gmra.mrb[0].mxu0 %v2150
    %v2457 = vpop.f32.mrb[0].mxu0
    %v2458 = vadd.f32 0.0, %v2457
    %v2459 = vpop.f32.mrb[0].mxu0
    %2460 = vmatprep.mubr.f32.mxu0 0.0
    %2461 = vmatmul.mubr.f32.gmra.mrb[0].mxu0 %v2153
    %v2462 = vpop.f32.mrb[0].mxu0
    %v2463 = vadd.f32 0.0, %v2462
    %v2464 = vpop.f32.mrb[0].mxu0
    %2465 = vmatprep.mubr.f32.mxu0 0.0
    %2466 = vmatmul.mubr.f32.gmra.mrb[0].mxu0 %v2156
    %v2467 = vpop.f32.mrb[0].mxu0
    %v2468 = vadd.f32 0.0, %v2467
    %v2469 = vpop.f32.mrb[0].mxu0
    %2470 = vmatprep.mubr.f32.mxu0 0.0
    %2471 = vmatmul.mubr.f32.gmra.mrb[0].mxu0 %v2159
    %v2472 = vpop.f32.mrb[0].mxu0
    %v2473 = vadd.f32 0.0, %v2472
    %v2474 = vpop.f32.mrb[0].mxu0
    %2475 = vmatprep.mubr.f32.mxu0 0.0
    %2476 = vmatmul.mubr.f32.gmra.mrb[0].mxu0 %v2162
    %v2477 = vpop.f32.mrb[0].mxu0
    %v2478 = vadd.f32 0.0, %v2477
    %v2479 = vpop.f32.mrb[0].mxu0
    %2480 = vmatprep.mubr.f32.mxu0 0.0
    %2481 = vmatmul.mubr.f32.gmra.mrb[0].mxu0 %v2165
    %v2482 = vpop.f32.mrb[0].mxu0
    %v2483 = vadd.f32 0.0, %v2482
    %v2484 = vpop.f32.mrb[0].mxu0
    %2485 = vmatprep.mubr.f32.mxu0 0.0
    %2486 = vmatmul.mubr.f32.gmra.mrb[0].mxu0 %v2168
    %v2487 = vpop.f32.mrb[0].mxu0
    %v2488 = vadd.f32 0.0, %v2487
    %v2489 = vpop.f32.mrb[0].mxu0
    %2490 = vmatprep.mubr.f32.mxu0 0.0
    %2491 = vmatmul.mubr.f32.gmra.mrb[0].mxu0 %v2171
    %v2492 = vpop.f32.mrb[0].mxu0
    %v2493 = vadd.f32 0.0, %v2492
    %v2494 = vpop.f32.mrb[0].mxu0
    %2495 = vmatprep.mubr.f32.mxu0 0.0
    %2496 = vmatmul.mubr.f32.gmra.mrb[0].mxu0 %v2174
    %v2497 = vpop.f32.mrb[0].mxu0
    %v2498 = vadd.f32 0.0, %v2497
    %v2499 = vpop.f32.mrb[0].mxu0
    %2500 = vmatprep.mubr.f32.mxu0 0.0
    %2501 = vmatmul.mubr.f32.gmra.mrb[0].mxu0 %v2177
    %v2502 = vpop.f32.mrb[0].mxu0
    %v2503 = vadd.f32 0.0, %v2502
    %v2504 = vpop.f32.mrb[0].mxu0
    %2505 = vmatprep.mubr.f32.mxu0 0.0
    %2506 = vmatmul.mubr.f32.gmra.mrb[0].mxu0 %v2180
    %v2507 = vpop.f32.mrb[0].mxu0
    %v2508 = vadd.f32 0.0, %v2507
    %v2509 = vpop.f32.mrb[0].mxu0
    %2510 = vmatprep.mubr.f32.mxu0 0.0
    %2511 = vmatmul.mubr.f32.gmra.mrb[0].mxu0 %v2183
    %v2512 = vpop.f32.mrb[0].mxu0
    %v2513 = vadd.f32 0.0, %v2512
    %v2514 = vpop.f32.mrb[0].mxu0
    %2515 = vmatprep.mubr.f32.mxu0 0.0
    %2516 = vmatmul.mubr.f32.gmra.mrb[0].mxu0 %v2186
    %v2517 = vpop.f32.mrb[0].mxu0
    %v2518 = vadd.f32 0.0, %v2517
    %v2519 = vpop.f32.mrb[0].mxu0
    %2520 = vmatprep.mubr.f32.mxu0 0.0
    %2521 = vmatmul.mubr.f32.gmra.mrb[0].mxu0 %v2189
    %v2522 = vpop.f32.mrb[0].mxu0
    %v2523 = vadd.f32 0.0, %v2522
    %v2524 = vpop.f32.mrb[0].mxu0
    %2525 = vmatprep.mubr.f32.mxu0 0.0
    %2526 = vmatmul.mubr.f32.gmra.mrb[0].mxu0 %v2192
    %v2527 = vpop.f32.mrb[0].mxu0
    %v2528 = vadd.f32 0.0, %v2527
    %v2529 = vpop.f32.mrb[0].mxu0
    %2530 = vmatprep.mubr.f32.mxu0 0.0
    %2531 = vmatmul.mubr.f32.gmra.mrb[0].mxu0 %v2195
    %v2532 = vpop.f32.mrb[0].mxu0
    %v2533 = vadd.f32 0.0, %v2532
    %v2534 = vpop.f32.mrb[0].mxu0
    %2535 = vmatprep.mubr.f32.mxu0 0.0
    %2536 = vmatmul.mubr.f32.gmra.mrb[0].mxu0 %v2198
    %v2537 = vpop.f32.mrb[0].mxu0
    %v2538 = vadd.f32 0.0, %v2537
    %v2539 = vpop.f32.mrb[0].mxu0
    %2540 = vmatprep.mubr.f32.mxu0 0.0
    %2541 = vmatmul.mubr.f32.gmra.mrb[0].mxu0 %v2201
    %v2542 = vpop.f32.mrb[0].mxu0
    %v2543 = vadd.f32 0.0, %v2542
    %v2544 = vpop.f32.mrb[0].mxu0
    %2545 = vmatprep.mubr.f32.mxu0 0.0
    %2546 = vmatmul.mubr.f32.gmra.mrb[0].mxu0 %v2204
    %v2547 = vpop.f32.mrb[0].mxu0
    %v2548 = vadd.f32 0.0, %v2547
    %v2549 = vpop.f32.mrb[0].mxu0
    %2550 = vmatprep.mubr.f32.mxu0 0.0
    %2551 = vmatmul.mubr.f32.gmra.mrb[0].mxu0 %v2207
    %v2552 = vpop.f32.mrb[0].mxu0
    %v2553 = vadd.f32 0.0, %v2552
    %v2554 = vpop.f32.mrb[0].mxu0
    %2555 = vmatprep.mubr.f32.mxu0 0.0
    %2556 = vmatmul.mubr.f32.gmra.mrb[0].mxu0 %v2210
    %v2557 = vpop.f32.mrb[0].mxu0
    %v2558 = vadd.f32 0.0, %v2557
    %v2559 = vpop.f32.mrb[0].mxu0
    %2560 = vmatprep.mubr.f32.mxu0 0.0
    %2561 = vmatmul.mubr.f32.gmra.mrb[0].mxu0 %v2213
    %v2562 = vpop.f32.mrb[0].mxu0
    %v2563 = vadd.f32 0.0, %v2562
    %v2564 = vpop.f32.mrb[0].mxu0
    %2565 = vmatprep.mubr.f32.mxu0 0.0
    %2566 = vmatmul.mubr.f32.gmra.mrb[0].mxu0 %v2216
    %v2567 = vpop.f32.mrb[0].mxu0
    %v2568 = vadd.f32 0.0, %v2567
    %v2569 = vpop.f32.mrb[0].mxu0
    %2570 = vmatprep.mubr.f32.mxu0 0.0
    %2571 = vmatmul.mubr.f32.gmra.mrb[0].mxu0 %v2219
    %v2572 = vpop.f32.mrb[0].mxu0
    %v2573 = vadd.f32 0.0, %v2572
    %v2574 = vpop.f32.mrb[0].mxu0
    %2575 = vmatprep.mubr.f32.mxu0 0.0
    %2576 = vmatmul.mubr.f32.gmra.mrb[0].mxu0 %v2222
    %v2577 = vpop.f32.mrb[0].mxu0
    %v2578 = vadd.f32 0.0, %v2577
    %v2579 = vpop.f32.mrb[0].mxu0
    %2580 = vmatprep.mubr.f32.mxu0 0.0
    %2581 = vmatmul.mubr.f32.gmra.mrb[0].mxu0 %v2225
    %v2582 = vpop.f32.mrb[0].mxu0
    %v2583 = vadd.f32 0.0, %v2582
    %v2584 = vpop.f32.mrb[0].mxu0
    %2585 = vmatprep.mubr.f32.mxu0 0.0
    %2586 = vmatmul.mubr.f32.gmra.mrb[0].mxu0 %v2228
    %v2587 = vpop.f32.mrb[0].mxu0
    %v2588 = vadd.f32 0.0, %v2587
    %v2589 = vpop.f32.mrb[0].mxu0
    %2590 = vmatprep.mubr.f32.mxu0 0.0
    %2591 = vmatmul.mubr.f32.gmra.mrb[0].mxu0 %v2231
    %v2592 = vpop.f32.mrb[0].mxu0
    %v2593 = vadd.f32 0.0, %v2592
    %v2594 = vpop.f32.mrb[0].mxu0
    %2595 = vmatprep.mubr.f32.mxu0 0.0
    %2596 = vmatmul.mubr.f32.gmra.mrb[0].mxu0 %v2234
    %v2597 = vpop.f32.mrb[0].mxu0
    %v2598 = vadd.f32 0.0, %v2597
    %v2599 = vpop.f32.mrb[0].mxu0
    %2600 = vmatprep.mubr.f32.mxu0 0.0
    %2601 = vmatmul.mubr.f32.gmra.mrb[0].mxu0 %v2237
    %v2602 = vpop.f32.mrb[0].mxu0
    %v2603 = vadd.f32 0.0, %v2602
    %v2604 = vpop.f32.mrb[0].mxu0
    %2605 = vmatprep.mubr.f32.mxu0 0.0
    %2606 = vmatmul.mubr.f32.gmra.mrb[0].mxu0 %v2240
    %v2607 = vpop.f32.mrb[0].mxu0
    %v2608 = vadd.f32 0.0, %v2607
    %v2609 = vpop.f32.mrb[0].mxu0
    %2610 = vmatprep.mubr.f32.mxu0 0.0
    %2611 = vmatmul.mubr.f32.gmra.mrb[0].mxu0 %v2243
    %v2612 = vpop.f32.mrb[0].mxu0
    %v2613 = vadd.f32 0.0, %v2612
    %v2614 = vpop.f32.mrb[0].mxu0
    %2615 = vmatprep.mubr.f32.mxu0 0.0
    %2616 = vmatmul.mubr.f32.gmra.mrb[0].mxu0 %v2246
    %v2617 = vpop.f32.mrb[0].mxu0
    %v2618 = vadd.f32 0.0, %v2617
    %v2619 = vpop.f32.mrb[0].mxu0
    %2620 = vmatprep.mubr.f32.mxu0 0.0
    %2621 = vmatmul.mubr.f32.gmra.mrb[0].mxu0 %v2249
    %v2622 = vpop.f32.mrb[0].mxu0
    %v2623 = vadd.f32 0.0, %v2622
    %v2624 = vpop.f32.mrb[0].mxu0
    %2625 = vdwg.mxu0
    %v2626 = vadd.f32 %v1939, %v2318
    %v2627 = vadd.f32 %v1940, %v2323
    %v2628 = vadd.f32 %v1941, %v2328
    %v2629 = vadd.f32 %v1942, %v2333
    %v2630 = vadd.f32 %v1943, %v2338
    %v2631 = vadd.f32 %v1944, %v2343
    %v2632 = vadd.f32 %v1945, %v2348
    %v2633 = vadd.f32 %v1946, %v2353
    %v2634 = vadd.f32 %v1947, %v2358
    %v2635 = vadd.f32 %v1948, %v2363
    %v2636 = vadd.f32 %v1949, %v2368
    %v2637 = vadd.f32 %v1950, %v2373
    %v2638 = vadd.f32 %v1951, %v2378
    %v2639 = vadd.f32 %v1952, %v2383
    %v2640 = vadd.f32 %v1953, %v2388
    %v2641 = vadd.f32 %v1954, %v2393
    %v2642 = vadd.f32 %v1955, %v2398
    %v2643 = vadd.f32 %v1956, %v2403
    %v2644 = vadd.f32 %v1957, %v2408
    %v2645 = vadd.f32 %v1958, %v2413
    %v2646 = vadd.f32 %v1959, %v2418
    %v2647 = vadd.f32 %v1960, %v2423
    %v2648 = vadd.f32 %v1961, %v2428
    %v2649 = vadd.f32 %v1962, %v2433
    %v2650 = vadd.f32 %v1963, %v2438
    %v2651 = vadd.f32 %v1964, %v2443
    %v2652 = vadd.f32 %v1965, %v2448
    %v2653 = vadd.f32 %v1966, %v2453
    %v2654 = vadd.f32 %v1967, %v2458
    %v2655 = vadd.f32 %v1968, %v2463
    %v2656 = vadd.f32 %v1969, %v2468
    %v2657 = vadd.f32 %v1970, %v2473
    %v2658 = vadd.f32 %v1971, %v2478
    %v2659 = vadd.f32 %v1972, %v2483
    %v2660 = vadd.f32 %v1973, %v2488
    %v2661 = vadd.f32 %v1974, %v2493
    %v2662 = vadd.f32 %v1975, %v2498
    %v2663 = vadd.f32 %v1976, %v2503
    %v2664 = vadd.f32 %v1977, %v2508
    %v2665 = vadd.f32 %v1978, %v2513
    %v2666 = vadd.f32 %v1979, %v2518
    %v2667 = vadd.f32 %v1980, %v2523
    %v2668 = vadd.f32 %v1981, %v2528
    %v2669 = vadd.f32 %v1982, %v2533
    %v2670 = vadd.f32 %v1983, %v2538
    %v2671 = vadd.f32 %v1984, %v2543
    %v2672 = vadd.f32 %v1985, %v2548
    %v2673 = vadd.f32 %v1986, %v2553
    %v2674 = vadd.f32 %v1987, %v2558
    %v2675 = vadd.f32 %v1988, %v2563
    %v2676 = vadd.f32 %v1989, %v2568
    %v2677 = vadd.f32 %v1990, %v2573
    %v2678 = vadd.f32 %v1991, %v2578
    %v2679 = vadd.f32 %v1992, %v2583
    %v2680 = vadd.f32 %v1993, %v2588
    %v2681 = vadd.f32 %v1994, %v2593
    %v2682 = vadd.f32 %v1995, %v2598
    %v2683 = vadd.f32 %v1996, %v2603
    %v2684 = vadd.f32 %v1997, %v2608
    %v2685 = vadd.f32 %v1998, %v2613
    %v2686 = vadd.f32 %v1999, %v2618
    %v2687 = vadd.f32 %v2000, %v2623
    %v2688 = vld [vmem:[%s0 + $0x4] sm:$0xff]
    %v2689 = vld [vmem:[%s0 + $0xc] sm:$0xff]
    %v2690 = vld [vmem:[%s0 + $0x14] sm:$0xff]
    %v2691 = vld [vmem:[%s0 + $0x1c] sm:$0xff]
    %v2692 = vld [vmem:[%s0 + $0x24] sm:$0xff]
    %v2693 = vld [vmem:[%s0 + $0x2c] sm:$0xff]
    %v2694 = vld [vmem:[%s0 + $0x34] sm:$0xff]
    %v2695 = vld [vmem:[%s0 + $0x3c] sm:$0xff]
    %v2696 = vld [vmem:[%s0 + $0x44] sm:$0xff]
    %v2697 = vld [vmem:[%s0 + $0x4c] sm:$0xff]
    %v2698 = vld [vmem:[%s0 + $0x54] sm:$0xff]
    %v2699 = vld [vmem:[%s0 + $0x5c] sm:$0xff]
    %v2700 = vld [vmem:[%s0 + $0x64] sm:$0xff]
    %v2701 = vld [vmem:[%s0 + $0x6c] sm:$0xff]
    %v2702 = vld [vmem:[%s0 + $0x74] sm:$0xff]
    %v2703 = vld [vmem:[%s0 + $0x7c] sm:$0xff]
    %v2704 = vld [vmem:[%s0 + $0x84] sm:$0xff]
    %v2705 = vld [vmem:[%s0 + $0x8c] sm:$0xff]
    %v2706 = vld [vmem:[%s0 + $0x94] sm:$0xff]
    %v2707 = vld [vmem:[%s0 + $0x9c] sm:$0xff]
    %v2708 = vld [vmem:[%s0 + $0xa4] sm:$0xff]
    %v2709 = vld [vmem:[%s0 + $0xac] sm:$0xff]
    %v2710 = vld [vmem:[%s0 + $0xb4] sm:$0xff]
    %v2711 = vld [vmem:[%s0 + $0xbc] sm:$0xff]
    %v2712 = vld [vmem:[%s0 + $0xc4] sm:$0xff]
    %v2713 = vld [vmem:[%s0 + $0xcc] sm:$0xff]
    %v2714 = vld [vmem:[%s0 + $0xd4] sm:$0xff]
    %v2715 = vld [vmem:[%s0 + $0xdc] sm:$0xff]
    %v2716 = vld [vmem:[%s0 + $0xe4] sm:$0xff]
    %v2717 = vld [vmem:[%s0 + $0xec] sm:$0xff]
    %v2718 = vld [vmem:[%s0 + $0xf4] sm:$0xff]
    %v2719 = vld [vmem:[%s0 + $0xfc] sm:$0xff]
    %v2720 = vld [vmem:[%s0 + $0x104] sm:$0xff]
    %v2721 = vld [vmem:[%s0 + $0x10c] sm:$0xff]
    %v2722 = vld [vmem:[%s0 + $0x114] sm:$0xff]
    %v2723 = vld [vmem:[%s0 + $0x11c] sm:$0xff]
    %v2724 = vld [vmem:[%s0 + $0x124] sm:$0xff]
    %v2725 = vld [vmem:[%s0 + $0x12c] sm:$0xff]
    %v2726 = vld [vmem:[%s0 + $0x134] sm:$0xff]
    %v2727 = vld [vmem:[%s0 + $0x13c] sm:$0xff]
    %v2728 = vld [vmem:[%s0 + $0x144] sm:$0xff]
    %v2729 = vld [vmem:[%s0 + $0x14c] sm:$0xff]
    %v2730 = vld [vmem:[%s0 + $0x154] sm:$0xff]
    %v2731 = vld [vmem:[%s0 + $0x15c] sm:$0xff]
    %v2732 = vld [vmem:[%s0 + $0x164] sm:$0xff]
    %v2733 = vld [vmem:[%s0 + $0x16c] sm:$0xff]
    %v2734 = vld [vmem:[%s0 + $0x174] sm:$0xff]
    %v2735 = vld [vmem:[%s0 + $0x17c] sm:$0xff]
    %v2736 = vld [vmem:[%s0 + $0x184] sm:$0xff]
    %v2737 = vld [vmem:[%s0 + $0x18c] sm:$0xff]
    %v2738 = vld [vmem:[%s0 + $0x194] sm:$0xff]
    %v2739 = vld [vmem:[%s0 + $0x19c] sm:$0xff]
    %v2740 = vld [vmem:[%s0 + $0x1a4] sm:$0xff]
    %v2741 = vld [vmem:[%s0 + $0x1ac] sm:$0xff]
    %v2742 = vld [vmem:[%s0 + $0x1b4] sm:$0xff]
    %v2743 = vld [vmem:[%s0 + $0x1bc] sm:$0xff]
    %v2744 = vld [vmem:[%s0 + $0x1c4] sm:$0xff]
    %v2745 = vld [vmem:[%s0 + $0x1cc] sm:$0xff]
    %v2746 = vld [vmem:[%s0 + $0x1d4] sm:$0xff]
    %v2747 = vld [vmem:[%s0 + $0x1dc] sm:$0xff]
    %v2748 = vld [vmem:[%s0 + $0x1e4] sm:$0xff]
    %v2749 = vld [vmem:[%s0 + $0x1ec] sm:$0xff]
    %v2750 = vld [vmem:[%s1 + $0x40] sm:$0xff]
    %v2751 = vld [vmem:[%s1 + $0x48] sm:$0xff]
    %v2753 = vsel %vm191, %v2688, 0
    %v2756 = vsel %vm191, %v2689, 0
    %v2759 = vsel %vm191, %v2690, 0
    %v2762 = vsel %vm191, %v2691, 0
    %v2765 = vsel %vm191, %v2692, 0
    %v2768 = vsel %vm191, %v2693, 0
    %v2771 = vsel %vm191, %v2694, 0
    %v2774 = vsel %vm191, %v2695, 0
    %v2777 = vsel %vm191, %v2696, 0
    %v2780 = vsel %vm191, %v2697, 0
    %v2783 = vsel %vm191, %v2698, 0
    %v2786 = vsel %vm191, %v2699, 0
    %v2789 = vsel %vm191, %v2700, 0
    %v2792 = vsel %vm191, %v2701, 0
    %v2795 = vsel %vm191, %v2702, 0
    %v2798 = vsel %vm191, %v2703, 0
    %v2801 = vsel %vm191, %v2704, 0
    %v2804 = vsel %vm191, %v2705, 0
    %v2807 = vsel %vm191, %v2706, 0
    %v2810 = vsel %vm191, %v2707, 0
    %v2813 = vsel %vm191, %v2708, 0
    %v2816 = vsel %vm191, %v2709, 0
    %v2819 = vsel %vm191, %v2710, 0
    %v2822 = vsel %vm191, %v2711, 0
    %v2825 = vsel %vm191, %v2712, 0
    %v2828 = vsel %vm191, %v2713, 0
    %v2831 = vsel %vm191, %v2714, 0
    %v2834 = vsel %vm191, %v2715, 0
    %v2837 = vsel %vm191, %v2716, 0
    %v2840 = vsel %vm191, %v2717, 0
    %v2843 = vsel %vm191, %v2718, 0
    %v2846 = vsel %vm191, %v2719, 0
    %v2849 = vsel %vm191, %v2720, 0
    %v2852 = vsel %vm191, %v2721, 0
    %v2855 = vsel %vm191, %v2722, 0
    %v2858 = vsel %vm191, %v2723, 0
    %v2861 = vsel %vm191, %v2724, 0
    %v2864 = vsel %vm191, %v2725, 0
    %v2867 = vsel %vm191, %v2726, 0
    %v2870 = vsel %vm191, %v2727, 0
    %v2873 = vsel %vm191, %v2728, 0
    %v2876 = vsel %vm191, %v2729, 0
    %v2879 = vsel %vm191, %v2730, 0
    %v2882 = vsel %vm191, %v2731, 0
    %v2885 = vsel %vm191, %v2732, 0
    %v2888 = vsel %vm191, %v2733, 0
    %v2891 = vsel %vm191, %v2734, 0
    %v2894 = vsel %vm191, %v2735, 0
    %v2897 = vsel %vm191, %v2736, 0
    %v2900 = vsel %vm191, %v2737, 0
    %v2903 = vsel %vm191, %v2738, 0
    %v2906 = vsel %vm191, %v2739, 0
    %v2909 = vsel %vm191, %v2740, 0
    %v2912 = vsel %vm191, %v2741, 0
    %v2915 = vsel %vm191, %v2742, 0
    %v2918 = vsel %vm191, %v2743, 0
    %v2921 = vsel %vm191, %v2744, 0
    %v2924 = vsel %vm191, %v2745, 0
    %v2927 = vsel %vm191, %v2746, 0
    %v2930 = vsel %vm191, %v2747, 0
    %v2933 = vsel %vm191, %v2748, 0
    %v2936 = vsel %vm191, %v2749, 0
    %2938 = vmatprep.subr.mxu0 0.0
    %2939 = vmatpush1.msra.mxu0 %v2750
    %2940 = vmatprep.subr.mxu0 0.0
    %2941 = vmatpush1.msra.mxu0 %v2751
    %2942 = vmatprep.subr.mxu0 0.0
    %2943 = vmatpush1.msra.mxu0 0.0
    %2944 = vmatprep.subr.mxu0 0.0
    %2945 = vmatpush1.msra.mxu0 0.0
    %2946 = vmatprep.subr.mxu0 0.0
    %2947 = vmatpush1.msra.mxu0 0.0
    %2948 = vmatprep.subr.mxu0 0.0
    %2949 = vmatpush1.msra.mxu0 0.0
    %2950 = vmatprep.subr.mxu0 0.0
    %2951 = vmatpush1.msra.mxu0 0.0
    %2952 = vmatprep.subr.mxu0 0.0
    %2953 = vmatpush1.msra.mxu0 0.0
    %2954 = vmatprep.subr.mxu0 0.0
    %2955 = vmatpush1.msra.mxu0 0.0
    %2956 = vmatprep.subr.mxu0 0.0
    %2957 = vmatpush1.msra.mxu0 0.0
    %2958 = vmatprep.subr.mxu0 0.0
    %2959 = vmatpush1.msra.mxu0 0.0
    %2960 = vmatprep.subr.mxu0 0.0
    %2961 = vmatpush1.msra.mxu0 0.0
    %2962 = vmatprep.subr.mxu0 0.0
    %2963 = vmatpush1.msra.mxu0 0.0
    %2964 = vmatprep.subr.mxu0 0.0
    %2965 = vmatpush1.msra.mxu0 0.0
    %2966 = vmatprep.subr.mxu0 0.0
    %2967 = vmatpush1.msra.mxu0 0.0
    %2968 = vmatprep.subr.mxu0 0.0
    %2969 = vmatpush1.msra.mxu0 0.0
    %2970 = vmatprep.subr.mxu0 0.0
    %2971 = vmatpush1.msra.mxu0 0.0
    %2972 = vmatprep.subr.mxu0 0.0
    %2973 = vmatpush1.msra.mxu0 0.0
    %2974 = vmatprep.subr.mxu0 0.0
    %2975 = vmatpush1.msra.mxu0 0.0
    %2976 = vmatprep.subr.mxu0 0.0
    %2977 = vmatpush1.msra.mxu0 0.0
    %2978 = vmatprep.subr.mxu0 0.0
    %2979 = vmatpush1.msra.mxu0 0.0
    %2980 = vmatprep.subr.mxu0 0.0
    %2981 = vmatpush1.msra.mxu0 0.0
    %2982 = vmatprep.subr.mxu0 0.0
    %2983 = vmatpush1.msra.mxu0 0.0
    %2984 = vmatprep.subr.mxu0 0.0
    %2985 = vmatpush1.msra.mxu0 0.0
    %2986 = vmatprep.subr.mxu0 0.0
    %2987 = vmatpush1.msra.mxu0 0.0
    %2988 = vmatprep.subr.mxu0 0.0
    %2989 = vmatpush1.msra.mxu0 0.0
    %2990 = vmatprep.subr.mxu0 0.0
    %2991 = vmatpush1.msra.mxu0 0.0
    %2992 = vmatprep.subr.mxu0 0.0
    %2993 = vmatpush1.msra.mxu0 0.0
    %2994 = vmatprep.subr.mxu0 0.0
    %2995 = vmatpush1.msra.mxu0 0.0
    %2996 = vmatprep.subr.mxu0 0.0
    %2997 = vmatpush1.msra.mxu0 0.0
    %2998 = vmatprep.subr.mxu0 0.0
    %2999 = vmatpush1.msra.mxu0 0.0
    %3000 = vmatprep.subr.mxu0 0.0
    %3001 = vmatpush1.msra.mxu0 0.0
    %3002 = vmatprep.mubr.f32.mxu0 0.0
    %3003 = vmatmul.mubr.f32.gmra.mrb[0].mxu0 %v2753
    %v3004 = vpop.f32.mrb[0].mxu0
    %v3005 = vadd.f32 0.0, %v3004
    %v3006 = vpop.f32.mrb[0].mxu0
    %3007 = vmatprep.mubr.f32.mxu0 0.0
    %3008 = vmatmul.mubr.f32.gmra.mrb[0].mxu0 %v2756
    %v3009 = vpop.f32.mrb[0].mxu0
    %v3010 = vadd.f32 0.0, %v3009
    %v3011 = vpop.f32.mrb[0].mxu0
    %3012 = vmatprep.mubr.f32.mxu0 0.0
    %3013 = vmatmul.mubr.f32.gmra.mrb[0].mxu0 %v2759
    %v3014 = vpop.f32.mrb[0].mxu0
    %v3015 = vadd.f32 0.0, %v3014
    %v3016 = vpop.f32.mrb[0].mxu0
    %3017 = vmatprep.mubr.f32.mxu0 0.0
    %3018 = vmatmul.mubr.f32.gmra.mrb[0].mxu0 %v2762
    %v3019 = vpop.f32.mrb[0].mxu0
    %v3020 = vadd.f32 0.0, %v3019
    %v3021 = vpop.f32.mrb[0].mxu0
    %3022 = vmatprep.mubr.f32.mxu0 0.0
    %3023 = vmatmul.mubr.f32.gmra.mrb[0].mxu0 %v2765
    %v3024 = vpop.f32.mrb[0].mxu0
    %v3025 = vadd.f32 0.0, %v3024
    %v3026 = vpop.f32.mrb[0].mxu0
    %3027 = vmatprep.mubr.f32.mxu0 0.0
    %3028 = vmatmul.mubr.f32.gmra.mrb[0].mxu0 %v2768
    %v3029 = vpop.f32.mrb[0].mxu0
    %v3030 = vadd.f32 0.0, %v3029
    %v3031 = vpop.f32.mrb[0].mxu0
    %3032 = vmatprep.mubr.f32.mxu0 0.0
    %3033 = vmatmul.mubr.f32.gmra.mrb[0].mxu0 %v2771
    %v3034 = vpop.f32.mrb[0].mxu0
    %v3035 = vadd.f32 0.0, %v3034
    %v3036 = vpop.f32.mrb[0].mxu0
    %3037 = vmatprep.mubr.f32.mxu0 0.0
    %3038 = vmatmul.mubr.f32.gmra.mrb[0].mxu0 %v2774
    %v3039 = vpop.f32.mrb[0].mxu0
    %v3040 = vadd.f32 0.0, %v3039
    %v3041 = vpop.f32.mrb[0].mxu0
    %3042 = vmatprep.mubr.f32.mxu0 0.0
    %3043 = vmatmul.mubr.f32.gmra.mrb[0].mxu0 %v2777
    %v3044 = vpop.f32.mrb[0].mxu0
    %v3045 = vadd.f32 0.0, %v3044
    %v3046 = vpop.f32.mrb[0].mxu0
    %3047 = vmatprep.mubr.f32.mxu0 0.0
    %3048 = vmatmul.mubr.f32.gmra.mrb[0].mxu0 %v2780
    %v3049 = vpop.f32.mrb[0].mxu0
    %v3050 = vadd.f32 0.0, %v3049
    %v3051 = vpop.f32.mrb[0].mxu0
    %3052 = vmatprep.mubr.f32.mxu0 0.0
    %3053 = vmatmul.mubr.f32.gmra.mrb[0].mxu0 %v2783
    %v3054 = vpop.f32.mrb[0].mxu0
    %v3055 = vadd.f32 0.0, %v3054
    %v3056 = vpop.f32.mrb[0].mxu0
    %3057 = vmatprep.mubr.f32.mxu0 0.0
    %3058 = vmatmul.mubr.f32.gmra.mrb[0].mxu0 %v2786
    %v3059 = vpop.f32.mrb[0].mxu0
    %v3060 = vadd.f32 0.0, %v3059
    %v3061 = vpop.f32.mrb[0].mxu0
    %3062 = vmatprep.mubr.f32.mxu0 0.0
    %3063 = vmatmul.mubr.f32.gmra.mrb[0].mxu0 %v2789
    %v3064 = vpop.f32.mrb[0].mxu0
    %v3065 = vadd.f32 0.0, %v3064
    %v3066 = vpop.f32.mrb[0].mxu0
    %3067 = vmatprep.mubr.f32.mxu0 0.0
    %3068 = vmatmul.mubr.f32.gmra.mrb[0].mxu0 %v2792
    %v3069 = vpop.f32.mrb[0].mxu0
    %v3070 = vadd.f32 0.0, %v3069
    %v3071 = vpop.f32.mrb[0].mxu0
    %3072 = vmatprep.mubr.f32.mxu0 0.0
    %3073 = vmatmul.mubr.f32.gmra.mrb[0].mxu0 %v2795
    %v3074 = vpop.f32.mrb[0].mxu0
    %v3075 = vadd.f32 0.0, %v3074
    %v3076 = vpop.f32.mrb[0].mxu0
    %3077 = vmatprep.mubr.f32.mxu0 0.0
    %3078 = vmatmul.mubr.f32.gmra.mrb[0].mxu0 %v2798
    %v3079 = vpop.f32.mrb[0].mxu0
    %v3080 = vadd.f32 0.0, %v3079
    %v3081 = vpop.f32.mrb[0].mxu0
    %3082 = vmatprep.mubr.f32.mxu0 0.0
    %3083 = vmatmul.mubr.f32.gmra.mrb[0].mxu0 %v2801
    %v3084 = vpop.f32.mrb[0].mxu0
    %v3085 = vadd.f32 0.0, %v3084
    %v3086 = vpop.f32.mrb[0].mxu0
    %3087 = vmatprep.mubr.f32.mxu0 0.0
    %3088 = vmatmul.mubr.f32.gmra.mrb[0].mxu0 %v2804
    %v3089 = vpop.f32.mrb[0].mxu0
    %v3090 = vadd.f32 0.0, %v3089
    %v3091 = vpop.f32.mrb[0].mxu0
    %3092 = vmatprep.mubr.f32.mxu0 0.0
    %3093 = vmatmul.mubr.f32.gmra.mrb[0].mxu0 %v2807
    %v3094 = vpop.f32.mrb[0].mxu0
    %v3095 = vadd.f32 0.0, %v3094
    %v3096 = vpop.f32.mrb[0].mxu0
    %3097 = vmatprep.mubr.f32.mxu0 0.0
    %3098 = vmatmul.mubr.f32.gmra.mrb[0].mxu0 %v2810
    %v3099 = vpop.f32.mrb[0].mxu0
    %v3100 = vadd.f32 0.0, %v3099
    %v3101 = vpop.f32.mrb[0].mxu0
    %3102 = vmatprep.mubr.f32.mxu0 0.0
    %3103 = vmatmul.mubr.f32.gmra.mrb[0].mxu0 %v2813
    %v3104 = vpop.f32.mrb[0].mxu0
    %v3105 = vadd.f32 0.0, %v3104
    %v3106 = vpop.f32.mrb[0].mxu0
    %3107 = vmatprep.mubr.f32.mxu0 0.0
    %3108 = vmatmul.mubr.f32.gmra.mrb[0].mxu0 %v2816
    %v3109 = vpop.f32.mrb[0].mxu0
    %v3110 = vadd.f32 0.0, %v3109
    %v3111 = vpop.f32.mrb[0].mxu0
    %3112 = vmatprep.mubr.f32.mxu0 0.0
    %3113 = vmatmul.mubr.f32.gmra.mrb[0].mxu0 %v2819
    %v3114 = vpop.f32.mrb[0].mxu0
    %v3115 = vadd.f32 0.0, %v3114
    %v3116 = vpop.f32.mrb[0].mxu0
    %3117 = vmatprep.mubr.f32.mxu0 0.0
    %3118 = vmatmul.mubr.f32.gmra.mrb[0].mxu0 %v2822
    %v3119 = vpop.f32.mrb[0].mxu0
    %v3120 = vadd.f32 0.0, %v3119
    %v3121 = vpop.f32.mrb[0].mxu0
    %3122 = vmatprep.mubr.f32.mxu0 0.0
    %3123 = vmatmul.mubr.f32.gmra.mrb[0].mxu0 %v2825
    %v3124 = vpop.f32.mrb[0].mxu0
    %v3125 = vadd.f32 0.0, %v3124
    %v3126 = vpop.f32.mrb[0].mxu0
    %3127 = vmatprep.mubr.f32.mxu0 0.0
    %3128 = vmatmul.mubr.f32.gmra.mrb[0].mxu0 %v2828
    %v3129 = vpop.f32.mrb[0].mxu0
    %v3130 = vadd.f32 0.0, %v3129
    %v3131 = vpop.f32.mrb[0].mxu0
    %3132 = vmatprep.mubr.f32.mxu0 0.0
    %3133 = vmatmul.mubr.f32.gmra.mrb[0].mxu0 %v2831
    %v3134 = vpop.f32.mrb[0].mxu0
    %v3135 = vadd.f32 0.0, %v3134
    %v3136 = vpop.f32.mrb[0].mxu0
    %3137 = vmatprep.mubr.f32.mxu0 0.0
    %3138 = vmatmul.mubr.f32.gmra.mrb[0].mxu0 %v2834
    %v3139 = vpop.f32.mrb[0].mxu0
    %v3140 = vadd.f32 0.0, %v3139
    %v3141 = vpop.f32.mrb[0].mxu0
    %3142 = vmatprep.mubr.f32.mxu0 0.0
    %3143 = vmatmul.mubr.f32.gmra.mrb[0].mxu0 %v2837
    %v3144 = vpop.f32.mrb[0].mxu0
    %v3145 = vadd.f32 0.0, %v3144
    %v3146 = vpop.f32.mrb[0].mxu0
    %3147 = vmatprep.mubr.f32.mxu0 0.0
    %3148 = vmatmul.mubr.f32.gmra.mrb[0].mxu0 %v2840
    %v3149 = vpop.f32.mrb[0].mxu0
    %v3150 = vadd.f32 0.0, %v3149
    %v3151 = vpop.f32.mrb[0].mxu0
    %3152 = vmatprep.mubr.f32.mxu0 0.0
    %3153 = vmatmul.mubr.f32.gmra.mrb[0].mxu0 %v2843
    %v3154 = vpop.f32.mrb[0].mxu0
    %v3155 = vadd.f32 0.0, %v3154
    %v3156 = vpop.f32.mrb[0].mxu0
    %3157 = vmatprep.mubr.f32.mxu0 0.0
    %3158 = vmatmul.mubr.f32.gmra.mrb[0].mxu0 %v2846
    %v3159 = vpop.f32.mrb[0].mxu0
    %v3160 = vadd.f32 0.0, %v3159
    %v3161 = vpop.f32.mrb[0].mxu0
    %3162 = vmatprep.mubr.f32.mxu0 0.0
    %3163 = vmatmul.mubr.f32.gmra.mrb[0].mxu0 %v2849
    %v3164 = vpop.f32.mrb[0].mxu0
    %v3165 = vadd.f32 0.0, %v3164
    %v3166 = vpop.f32.mrb[0].mxu0
    %3167 = vmatprep.mubr.f32.mxu0 0.0
    %3168 = vmatmul.mubr.f32.gmra.mrb[0].mxu0 %v2852
    %v3169 = vpop.f32.mrb[0].mxu0
    %v3170 = vadd.f32 0.0, %v3169
    %v3171 = vpop.f32.mrb[0].mxu0
    %3172 = vmatprep.mubr.f32.mxu0 0.0
    %3173 = vmatmul.mubr.f32.gmra.mrb[0].mxu0 %v2855
    %v3174 = vpop.f32.mrb[0].mxu0
    %v3175 = vadd.f32 0.0, %v3174
    %v3176 = vpop.f32.mrb[0].mxu0
    %3177 = vmatprep.mubr.f32.mxu0 0.0
    %3178 = vmatmul.mubr.f32.gmra.mrb[0].mxu0 %v2858
    %v3179 = vpop.f32.mrb[0].mxu0
    %v3180 = vadd.f32 0.0, %v3179
    %v3181 = vpop.f32.mrb[0].mxu0
    %3182 = vmatprep.mubr.f32.mxu0 0.0
    %3183 = vmatmul.mubr.f32.gmra.mrb[0].mxu0 %v2861
    %v3184 = vpop.f32.mrb[0].mxu0
    %v3185 = vadd.f32 0.0, %v3184
    %v3186 = vpop.f32.mrb[0].mxu0
    %3187 = vmatprep.mubr.f32.mxu0 0.0
    %3188 = vmatmul.mubr.f32.gmra.mrb[0].mxu0 %v2864
    %v3189 = vpop.f32.mrb[0].mxu0
    %v3190 = vadd.f32 0.0, %v3189
    %v3191 = vpop.f32.mrb[0].mxu0
    %3192 = vmatprep.mubr.f32.mxu0 0.0
    %3193 = vmatmul.mubr.f32.gmra.mrb[0].mxu0 %v2867
    %v3194 = vpop.f32.mrb[0].mxu0
    %v3195 = vadd.f32 0.0, %v3194
    %v3196 = vpop.f32.mrb[0].mxu0
    %3197 = vmatprep.mubr.f32.mxu0 0.0
    %3198 = vmatmul.mubr.f32.gmra.mrb[0].mxu0 %v2870
    %v3199 = vpop.f32.mrb[0].mxu0
    %v3200 = vadd.f32 0.0, %v3199
    %v3201 = vpop.f32.mrb[0].mxu0
    %3202 = vmatprep.mubr.f32.mxu0 0.0
    %3203 = vmatmul.mubr.f32.gmra.mrb[0].mxu0 %v2873
    %v3204 = vpop.f32.mrb[0].mxu0
    %v3205 = vadd.f32 0.0, %v3204
    %v3206 = vpop.f32.mrb[0].mxu0
    %3207 = vmatprep.mubr.f32.mxu0 0.0
    %3208 = vmatmul.mubr.f32.gmra.mrb[0].mxu0 %v2876
    %v3209 = vpop.f32.mrb[0].mxu0
    %v3210 = vadd.f32 0.0, %v3209
    %v3211 = vpop.f32.mrb[0].mxu0
    %3212 = vmatprep.mubr.f32.mxu0 0.0
    %3213 = vmatmul.mubr.f32.gmra.mrb[0].mxu0 %v2879
    %v3214 = vpop.f32.mrb[0].mxu0
    %v3215 = vadd.f32 0.0, %v3214
    %v3216 = vpop.f32.mrb[0].mxu0
    %3217 = vmatprep.mubr.f32.mxu0 0.0
    %3218 = vmatmul.mubr.f32.gmra.mrb[0].mxu0 %v2882
    %v3219 = vpop.f32.mrb[0].mxu0
    %v3220 = vadd.f32 0.0, %v3219
    %v3221 = vpop.f32.mrb[0].mxu0
    %3222 = vmatprep.mubr.f32.mxu0 0.0
    %3223 = vmatmul.mubr.f32.gmra.mrb[0].mxu0 %v2885
    %v3224 = vpop.f32.mrb[0].mxu0
    %v3225 = vadd.f32 0.0, %v3224
    %v3226 = vpop.f32.mrb[0].mxu0
    %3227 = vmatprep.mubr.f32.mxu0 0.0
    %3228 = vmatmul.mubr.f32.gmra.mrb[0].mxu0 %v2888
    %v3229 = vpop.f32.mrb[0].mxu0
    %v3230 = vadd.f32 0.0, %v3229
    %v3231 = vpop.f32.mrb[0].mxu0
    %3232 = vmatprep.mubr.f32.mxu0 0.0
    %3233 = vmatmul.mubr.f32.gmra.mrb[0].mxu0 %v2891
    %v3234 = vpop.f32.mrb[0].mxu0
    %v3235 = vadd.f32 0.0, %v3234
    %v3236 = vpop.f32.mrb[0].mxu0
    %3237 = vmatprep.mubr.f32.mxu0 0.0
    %3238 = vmatmul.mubr.f32.gmra.mrb[0].mxu0 %v2894
    %v3239 = vpop.f32.mrb[0].mxu0
    %v3240 = vadd.f32 0.0, %v3239
    %v3241 = vpop.f32.mrb[0].mxu0
    %3242 = vmatprep.mubr.f32.mxu0 0.0
    %3243 = vmatmul.mubr.f32.gmra.mrb[0].mxu0 %v2897
    %v3244 = vpop.f32.mrb[0].mxu0
    %v3245 = vadd.f32 0.0, %v3244
    %v3246 = vpop.f32.mrb[0].mxu0
    %3247 = vmatprep.mubr.f32.mxu0 0.0
    %3248 = vmatmul.mubr.f32.gmra.mrb[0].mxu0 %v2900
    %v3249 = vpop.f32.mrb[0].mxu0
    %v3250 = vadd.f32 0.0, %v3249
    %v3251 = vpop.f32.mrb[0].mxu0
    %3252 = vmatprep.mubr.f32.mxu0 0.0
    %3253 = vmatmul.mubr.f32.gmra.mrb[0].mxu0 %v2903
    %v3254 = vpop.f32.mrb[0].mxu0
    %v3255 = vadd.f32 0.0, %v3254
    %v3256 = vpop.f32.mrb[0].mxu0
    %3257 = vmatprep.mubr.f32.mxu0 0.0
    %3258 = vmatmul.mubr.f32.gmra.mrb[0].mxu0 %v2906
    %v3259 = vpop.f32.mrb[0].mxu0
    %v3260 = vadd.f32 0.0, %v3259
    %v3261 = vpop.f32.mrb[0].mxu0
    %3262 = vmatprep.mubr.f32.mxu0 0.0
    %3263 = vmatmul.mubr.f32.gmra.mrb[0].mxu0 %v2909
    %v3264 = vpop.f32.mrb[0].mxu0
    %v3265 = vadd.f32 0.0, %v3264
    %v3266 = vpop.f32.mrb[0].mxu0
    %3267 = vmatprep.mubr.f32.mxu0 0.0
    %3268 = vmatmul.mubr.f32.gmra.mrb[0].mxu0 %v2912
    %v3269 = vpop.f32.mrb[0].mxu0
    %v3270 = vadd.f32 0.0, %v3269
    %v3271 = vpop.f32.mrb[0].mxu0
    %3272 = vmatprep.mubr.f32.mxu0 0.0
    %3273 = vmatmul.mubr.f32.gmra.mrb[0].mxu0 %v2915
    %v3274 = vpop.f32.mrb[0].mxu0
    %v3275 = vadd.f32 0.0, %v3274
    %v3276 = vpop.f32.mrb[0].mxu0
    %3277 = vmatprep.mubr.f32.mxu0 0.0
    %3278 = vmatmul.mubr.f32.gmra.mrb[0].mxu0 %v2918
    %v3279 = vpop.f32.mrb[0].mxu0
    %v3280 = vadd.f32 0.0, %v3279
    %v3281 = vpop.f32.mrb[0].mxu0
    %3282 = vmatprep.mubr.f32.mxu0 0.0
    %3283 = vmatmul.mubr.f32.gmra.mrb[0].mxu0 %v2921
    %v3284 = vpop.f32.mrb[0].mxu0
    %v3285 = vadd.f32 0.0, %v3284
    %v3286 = vpop.f32.mrb[0].mxu0
    %3287 = vmatprep.mubr.f32.mxu0 0.0
    %3288 = vmatmul.mubr.f32.gmra.mrb[0].mxu0 %v2924
    %v3289 = vpop.f32.mrb[0].mxu0
    %v3290 = vadd.f32 0.0, %v3289
    %v3291 = vpop.f32.mrb[0].mxu0
    %3292 = vmatprep.mubr.f32.mxu0 0.0
    %3293 = vmatmul.mubr.f32.gmra.mrb[0].mxu0 %v2927
    %v3294 = vpop.f32.mrb[0].mxu0
    %v3295 = vadd.f32 0.0, %v3294
    %v3296 = vpop.f32.mrb[0].mxu0
    %3297 = vmatprep.mubr.f32.mxu0 0.0
    %3298 = vmatmul.mubr.f32.gmra.mrb[0].mxu0 %v2930
    %v3299 = vpop.f32.mrb[0].mxu0
    %v3300 = vadd.f32 0.0, %v3299
    %v3301 = vpop.f32.mrb[0].mxu0
    %3302 = vmatprep.mubr.f32.mxu0 0.0
    %3303 = vmatmul.mubr.f32.gmra.mrb[0].mxu0 %v2933
    %v3304 = vpop.f32.mrb[0].mxu0
    %v3305 = vadd.f32 0.0, %v3304
    %v3306 = vpop.f32.mrb[0].mxu0
    %3307 = vmatprep.mubr.f32.mxu0 0.0
    %3308 = vmatmul.mubr.f32.gmra.mrb[0].mxu0 %v2936
    %v3309 = vpop.f32.mrb[0].mxu0
    %v3310 = vadd.f32 0.0, %v3309
    %v3311 = vpop.f32.mrb[0].mxu0
    %3312 = vdwg.mxu0
    %v3313 = vadd.f32 %v2626, %v3005
    %v3314 = vadd.f32 %v2627, %v3010
    %v3315 = vadd.f32 %v2628, %v3015
    %v3316 = vadd.f32 %v2629, %v3020
    %v3317 = vadd.f32 %v2630, %v3025
    %v3318 = vadd.f32 %v2631, %v3030
    %v3319 = vadd.f32 %v2632, %v3035
    %v3320 = vadd.f32 %v2633, %v3040
    %v3321 = vadd.f32 %v2634, %v3045
    %v3322 = vadd.f32 %v2635, %v3050
    %v3323 = vadd.f32 %v2636, %v3055
    %v3324 = vadd.f32 %v2637, %v3060
    %v3325 = vadd.f32 %v2638, %v3065
    %v3326 = vadd.f32 %v2639, %v3070
    %v3327 = vadd.f32 %v2640, %v3075
    %v3328 = vadd.f32 %v2641, %v3080
    %v3329 = vadd.f32 %v2642, %v3085
    %v3330 = vadd.f32 %v2643, %v3090
    %v3331 = vadd.f32 %v2644, %v3095
    %v3332 = vadd.f32 %v2645, %v3100
    %v3333 = vadd.f32 %v2646, %v3105
    %v3334 = vadd.f32 %v2647, %v3110
    %v3335 = vadd.f32 %v2648, %v3115
    %v3336 = vadd.f32 %v2649, %v3120
    %v3337 = vadd.f32 %v2650, %v3125
    %v3338 = vadd.f32 %v2651, %v3130
    %v3339 = vadd.f32 %v2652, %v3135
    %v3340 = vadd.f32 %v2653, %v3140
    %v3341 = vadd.f32 %v2654, %v3145
    %v3342 = vadd.f32 %v2655, %v3150
    %v3343 = vadd.f32 %v2656, %v3155
    %v3344 = vadd.f32 %v2657, %v3160
    %v3345 = vadd.f32 %v2658, %v3165
    %v3346 = vadd.f32 %v2659, %v3170
    %v3347 = vadd.f32 %v2660, %v3175
    %v3348 = vadd.f32 %v2661, %v3180
    %v3349 = vadd.f32 %v2662, %v3185
    %v3350 = vadd.f32 %v2663, %v3190
    %v3351 = vadd.f32 %v2664, %v3195
    %v3352 = vadd.f32 %v2665, %v3200
    %v3353 = vadd.f32 %v2666, %v3205
    %v3354 = vadd.f32 %v2667, %v3210
    %v3355 = vadd.f32 %v2668, %v3215
    %v3356 = vadd.f32 %v2669, %v3220
    %v3357 = vadd.f32 %v2670, %v3225
    %v3358 = vadd.f32 %v2671, %v3230
    %v3359 = vadd.f32 %v2672, %v3235
    %v3360 = vadd.f32 %v2673, %v3240
    %v3361 = vadd.f32 %v2674, %v3245
    %v3362 = vadd.f32 %v2675, %v3250
    %v3363 = vadd.f32 %v2676, %v3255
    %v3364 = vadd.f32 %v2677, %v3260
    %v3365 = vadd.f32 %v2678, %v3265
    %v3366 = vadd.f32 %v2679, %v3270
    %v3367 = vadd.f32 %v2680, %v3275
    %v3368 = vadd.f32 %v2681, %v3280
    %v3369 = vadd.f32 %v2682, %v3285
    %v3370 = vadd.f32 %v2683, %v3290
    %v3371 = vadd.f32 %v2684, %v3295
    %v3372 = vadd.f32 %v2685, %v3300
    %v3373 = vadd.f32 %v2686, %v3305
    %v3374 = vadd.f32 %v2687, %v3310
    %v3375 = vld [vmem:[%s2] sm:$0x1]
    %v3377 = vlaneseq
    %v3378 = vshrl.u32 %v3377, 7
    %v3379 = vsub.s32 0, %v3378
    %v3380 = vrot.slane %v3375, %v3379
    %v3382 = vadd.f32 %v3313, %v3380
    %v3383 = vadd.f32 %v3314, %v3380
    %v3384 = vadd.f32 %v3315, %v3380
    %v3385 = vadd.f32 %v3316, %v3380
    %v3386 = vadd.f32 %v3317, %v3380
    %v3387 = vadd.f32 %v3318, %v3380
    %v3388 = vadd.f32 %v3319, %v3380
    %v3389 = vadd.f32 %v3320, %v3380
    %v3390 = vadd.f32 %v3321, %v3380
    %v3391 = vadd.f32 %v3322, %v3380
    %v3392 = vadd.f32 %v3323, %v3380
    %v3393 = vadd.f32 %v3324, %v3380
    %v3394 = vadd.f32 %v3325, %v3380
    %v3395 = vadd.f32 %v3326, %v3380
    %v3396 = vadd.f32 %v3327, %v3380
    %v3397 = vadd.f32 %v3328, %v3380
    %v3398 = vadd.f32 %v3329, %v3380
    %v3399 = vadd.f32 %v3330, %v3380
    %v3400 = vadd.f32 %v3331, %v3380
    %v3401 = vadd.f32 %v3332, %v3380
    %v3402 = vadd.f32 %v3333, %v3380
    %v3403 = vadd.f32 %v3334, %v3380
    %v3404 = vadd.f32 %v3335, %v3380
    %v3405 = vadd.f32 %v3336, %v3380
    %v3406 = vadd.f32 %v3337, %v3380
    %v3407 = vadd.f32 %v3338, %v3380
    %v3408 = vadd.f32 %v3339, %v3380
    %v3409 = vadd.f32 %v3340, %v3380
    %v3410 = vadd.f32 %v3341, %v3380
    %v3411 = vadd.f32 %v3342, %v3380
    %v3412 = vadd.f32 %v3343, %v3380
    %v3413 = vadd.f32 %v3344, %v3380
    %v3414 = vadd.f32 %v3345, %v3380
    %v3415 = vadd.f32 %v3346, %v3380
    %v3416 = vadd.f32 %v3347, %v3380
    %v3417 = vadd.f32 %v3348, %v3380
    %v3418 = vadd.f32 %v3349, %v3380
    %v3419 = vadd.f32 %v3350, %v3380
    %v3420 = vadd.f32 %v3351, %v3380
    %v3421 = vadd.f32 %v3352, %v3380
    %v3422 = vadd.f32 %v3353, %v3380
    %v3423 = vadd.f32 %v3354, %v3380
    %v3424 = vadd.f32 %v3355, %v3380
    %v3425 = vadd.f32 %v3356, %v3380
    %v3426 = vadd.f32 %v3357, %v3380
    %v3427 = vadd.f32 %v3358, %v3380
    %v3428 = vadd.f32 %v3359, %v3380
    %v3429 = vadd.f32 %v3360, %v3380
    %v3430 = vadd.f32 %v3361, %v3380
    %v3431 = vadd.f32 %v3362, %v3380
    %v3432 = vadd.f32 %v3363, %v3380
    %v3433 = vadd.f32 %v3364, %v3380
    %v3434 = vadd.f32 %v3365, %v3380
    %v3435 = vadd.f32 %v3366, %v3380
    %v3436 = vadd.f32 %v3367, %v3380
    %v3437 = vadd.f32 %v3368, %v3380
    %v3438 = vadd.f32 %v3369, %v3380
    %v3439 = vadd.f32 %v3370, %v3380
    %v3440 = vadd.f32 %v3371, %v3380
    %v3441 = vadd.f32 %v3372, %v3380
    %v3442 = vadd.f32 %v3373, %v3380
    %v3443 = vadd.f32 %v3374, %v3380
    %vm3444 = vcmask 261120
    %v3445 = vsel %vm3444, %v3382, 0.0
    %v3446 = vsel %vm3444, %v3383, 0.0
    %v3447 = vadd.f32 %v3445, %v3446
    %v3448 = vsel %vm3444, %v3384, 0.0
    %v3449 = vadd.f32 %v3447, %v3448
    %v3450 = vsel %vm3444, %v3385, 0.0
    %v3451 = vadd.f32 %v3449, %v3450
    %v3452 = vsel %vm3444, %v3386, 0.0
    %v3453 = vadd.f32 %v3451, %v3452
    %v3454 = vsel %vm3444, %v3387, 0.0
    %v3455 = vadd.f32 %v3453, %v3454
    %v3456 = vsel %vm3444, %v3388, 0.0
    %v3457 = vadd.f32 %v3455, %v3456
    %v3458 = vsel %vm3444, %v3389, 0.0
    %v3459 = vadd.f32 %v3457, %v3458
    %v3460 = vsel %vm3444, %v3390, 0.0
    %v3461 = vadd.f32 %v3459, %v3460
    %v3462 = vsel %vm3444, %v3391, 0.0
    %v3463 = vadd.f32 %v3461, %v3462
    %v3464 = vsel %vm3444, %v3392, 0.0
    %v3465 = vadd.f32 %v3463, %v3464
    %v3466 = vsel %vm3444, %v3393, 0.0
    %v3467 = vadd.f32 %v3465, %v3466
    %v3468 = vsel %vm3444, %v3394, 0.0
    %v3469 = vadd.f32 %v3467, %v3468
    %v3470 = vsel %vm3444, %v3395, 0.0
    %v3471 = vadd.f32 %v3469, %v3470
    %v3472 = vsel %vm3444, %v3396, 0.0
    %v3473 = vadd.f32 %v3471, %v3472
    %v3474 = vsel %vm3444, %v3397, 0.0
    %v3475 = vadd.f32 %v3473, %v3474
    %v3476 = vsel %vm3444, %v3398, 0.0
    %v3477 = vadd.f32 %v3475, %v3476
    %v3478 = vsel %vm3444, %v3399, 0.0
    %v3479 = vadd.f32 %v3477, %v3478
    %v3480 = vsel %vm3444, %v3400, 0.0
    %v3481 = vadd.f32 %v3479, %v3480
    %v3482 = vsel %vm3444, %v3401, 0.0
    %v3483 = vadd.f32 %v3481, %v3482
    %v3484 = vsel %vm3444, %v3402, 0.0
    %v3485 = vadd.f32 %v3483, %v3484
    %v3486 = vsel %vm3444, %v3403, 0.0
    %v3487 = vadd.f32 %v3485, %v3486
    %v3488 = vsel %vm3444, %v3404, 0.0
    %v3489 = vadd.f32 %v3487, %v3488
    %v3490 = vsel %vm3444, %v3405, 0.0
    %v3491 = vadd.f32 %v3489, %v3490
    %v3492 = vsel %vm3444, %v3406, 0.0
    %v3493 = vadd.f32 %v3491, %v3492
    %v3494 = vsel %vm3444, %v3407, 0.0
    %v3495 = vadd.f32 %v3493, %v3494
    %v3496 = vsel %vm3444, %v3408, 0.0
    %v3497 = vadd.f32 %v3495, %v3496
    %v3498 = vsel %vm3444, %v3409, 0.0
    %v3499 = vadd.f32 %v3497, %v3498
    %v3500 = vsel %vm3444, %v3410, 0.0
    %v3501 = vadd.f32 %v3499, %v3500
    %v3502 = vsel %vm3444, %v3411, 0.0
    %v3503 = vadd.f32 %v3501, %v3502
    %v3504 = vsel %vm3444, %v3412, 0.0
    %v3505 = vadd.f32 %v3503, %v3504
    %v3506 = vsel %vm3444, %v3413, 0.0
    %v3507 = vadd.f32 %v3505, %v3506
    %v3508 = vsel %vm3444, %v3414, 0.0
    %v3509 = vadd.f32 %v3507, %v3508
    %v3510 = vsel %vm3444, %v3415, 0.0
    %v3511 = vadd.f32 %v3509, %v3510
    %v3512 = vsel %vm3444, %v3416, 0.0
    %v3513 = vadd.f32 %v3511, %v3512
    %v3514 = vsel %vm3444, %v3417, 0.0
    %v3515 = vadd.f32 %v3513, %v3514
    %v3516 = vsel %vm3444, %v3418, 0.0
    %v3517 = vadd.f32 %v3515, %v3516
    %v3518 = vsel %vm3444, %v3419, 0.0
    %v3519 = vadd.f32 %v3517, %v3518
    %v3520 = vsel %vm3444, %v3420, 0.0
    %v3521 = vadd.f32 %v3519, %v3520
    %v3522 = vsel %vm3444, %v3421, 0.0
    %v3523 = vadd.f32 %v3521, %v3522
    %v3524 = vsel %vm3444, %v3422, 0.0
    %v3525 = vadd.f32 %v3523, %v3524
    %v3526 = vsel %vm3444, %v3423, 0.0
    %v3527 = vadd.f32 %v3525, %v3526
    %v3528 = vsel %vm3444, %v3424, 0.0
    %v3529 = vadd.f32 %v3527, %v3528
    %v3530 = vsel %vm3444, %v3425, 0.0
    %v3531 = vadd.f32 %v3529, %v3530
    %v3532 = vsel %vm3444, %v3426, 0.0
    %v3533 = vadd.f32 %v3531, %v3532
    %v3534 = vsel %vm3444, %v3427, 0.0
    %v3535 = vadd.f32 %v3533, %v3534
    %v3536 = vsel %vm3444, %v3428, 0.0
    %v3537 = vadd.f32 %v3535, %v3536
    %v3538 = vsel %vm3444, %v3429, 0.0
    %v3539 = vadd.f32 %v3537, %v3538
    %v3540 = vsel %vm3444, %v3430, 0.0
    %v3541 = vadd.f32 %v3539, %v3540
    %v3542 = vsel %vm3444, %v3431, 0.0
    %v3543 = vadd.f32 %v3541, %v3542
    %v3544 = vsel %vm3444, %v3432, 0.0
    %v3545 = vadd.f32 %v3543, %v3544
    %v3546 = vsel %vm3444, %v3433, 0.0
    %v3547 = vadd.f32 %v3545, %v3546
    %v3548 = vsel %vm3444, %v3434, 0.0
    %v3549 = vadd.f32 %v3547, %v3548
    %v3550 = vsel %vm3444, %v3435, 0.0
    %v3551 = vadd.f32 %v3549, %v3550
    %v3552 = vsel %vm3444, %v3436, 0.0
    %v3553 = vadd.f32 %v3551, %v3552
    %v3554 = vsel %vm3444, %v3437, 0.0
    %v3555 = vadd.f32 %v3553, %v3554
    %v3556 = vsel %vm3444, %v3438, 0.0
    %v3557 = vadd.f32 %v3555, %v3556
    %v3558 = vsel %vm3444, %v3439, 0.0
    %v3559 = vadd.f32 %v3557, %v3558
    %v3560 = vsel %vm3444, %v3440, 0.0
    %v3561 = vadd.f32 %v3559, %v3560
    %v3562 = vsel %vm3444, %v3441, 0.0
    %v3563 = vadd.f32 %v3561, %v3562
    %v3564 = vsel %vm3444, %v3442, 0.0
    %v3565 = vadd.f32 %v3563, %v3564
    %v3566 = vsel %vm3444, %v3443, 0.0
    %v3567 = vadd.f32 %v3565, %v3566
    %v3568 = vrot.slane %v3567, 4
    %v3569 = vadd.f32 %v3567, %v3568
    %v3570 = vrot.slane %v3569, 2
    %v3571 = vadd.f32 %v3569, %v3570
    %v3572 = vrot.slane %v3571, 1
    %v3573 = vadd.f32 %v3571, %v3572
    %v3574 = vadd.f32 %v3573, 0.0
    %v3575 = vmul.f32 %v3382, %v3382
    %v3576 = vmul.f32 %v3383, %v3383
    %v3577 = vmul.f32 %v3384, %v3384
    %v3578 = vmul.f32 %v3385, %v3385
    %v3579 = vmul.f32 %v3386, %v3386
    %v3580 = vmul.f32 %v3387, %v3387
    %v3581 = vmul.f32 %v3388, %v3388
    %v3582 = vmul.f32 %v3389, %v3389
    %v3583 = vmul.f32 %v3390, %v3390
    %v3584 = vmul.f32 %v3391, %v3391
    %v3585 = vmul.f32 %v3392, %v3392
    %v3586 = vmul.f32 %v3393, %v3393
    %v3587 = vmul.f32 %v3394, %v3394
    %v3588 = vmul.f32 %v3395, %v3395
    %v3589 = vmul.f32 %v3396, %v3396
    %v3590 = vmul.f32 %v3397, %v3397
    %v3591 = vmul.f32 %v3398, %v3398
    %v3592 = vmul.f32 %v3399, %v3399
    %v3593 = vmul.f32 %v3400, %v3400
    %v3594 = vmul.f32 %v3401, %v3401
    %v3595 = vmul.f32 %v3402, %v3402
    %v3596 = vmul.f32 %v3403, %v3403
    %v3597 = vmul.f32 %v3404, %v3404
    %v3598 = vmul.f32 %v3405, %v3405
    %v3599 = vmul.f32 %v3406, %v3406
    %v3600 = vmul.f32 %v3407, %v3407
    %v3601 = vmul.f32 %v3408, %v3408
    %v3602 = vmul.f32 %v3409, %v3409
    %v3603 = vmul.f32 %v3410, %v3410
    %v3604 = vmul.f32 %v3411, %v3411
    %v3605 = vmul.f32 %v3412, %v3412
    %v3606 = vmul.f32 %v3413, %v3413
    %v3607 = vmul.f32 %v3414, %v3414
    %v3608 = vmul.f32 %v3415, %v3415
    %v3609 = vmul.f32 %v3416, %v3416
    %v3610 = vmul.f32 %v3417, %v3417
    %v3611 = vmul.f32 %v3418, %v3418
    %v3612 = vmul.f32 %v3419, %v3419
    %v3613 = vmul.f32 %v3420, %v3420
    %v3614 = vmul.f32 %v3421, %v3421
    %v3615 = vmul.f32 %v3422, %v3422
    %v3616 = vmul.f32 %v3423, %v3423
    %v3617 = vmul.f32 %v3424, %v3424
    %v3618 = vmul.f32 %v3425, %v3425
    %v3619 = vmul.f32 %v3426, %v3426
    %v3620 = vmul.f32 %v3427, %v3427
    %v3621 = vmul.f32 %v3428, %v3428
    %v3622 = vmul.f32 %v3429, %v3429
    %v3623 = vmul.f32 %v3430, %v3430
    %v3624 = vmul.f32 %v3431, %v3431
    %v3625 = vmul.f32 %v3432, %v3432
    %v3626 = vmul.f32 %v3433, %v3433
    %v3627 = vmul.f32 %v3434, %v3434
    %v3628 = vmul.f32 %v3435, %v3435
    %v3629 = vmul.f32 %v3436, %v3436
    %v3630 = vmul.f32 %v3437, %v3437
    %v3631 = vmul.f32 %v3438, %v3438
    %v3632 = vmul.f32 %v3439, %v3439
    %v3633 = vmul.f32 %v3440, %v3440
    %v3634 = vmul.f32 %v3441, %v3441
    %v3635 = vmul.f32 %v3442, %v3442
    %v3636 = vmul.f32 %v3443, %v3443
    %v3637 = vsel %vm3444, %v3575, 0.0
    %v3638 = vsel %vm3444, %v3576, 0.0
    %v3639 = vadd.f32 %v3637, %v3638
    %v3640 = vsel %vm3444, %v3577, 0.0
    %v3641 = vadd.f32 %v3639, %v3640
    %v3642 = vsel %vm3444, %v3578, 0.0
    %v3643 = vadd.f32 %v3641, %v3642
    %v3644 = vsel %vm3444, %v3579, 0.0
    %v3645 = vadd.f32 %v3643, %v3644
    %v3646 = vsel %vm3444, %v3580, 0.0
    %v3647 = vadd.f32 %v3645, %v3646
    %v3648 = vsel %vm3444, %v3581, 0.0
    %v3649 = vadd.f32 %v3647, %v3648
    %v3650 = vsel %vm3444, %v3582, 0.0
    %v3651 = vadd.f32 %v3649, %v3650
    %v3652 = vsel %vm3444, %v3583, 0.0
    %v3653 = vadd.f32 %v3651, %v3652
    %v3654 = vsel %vm3444, %v3584, 0.0
    %v3655 = vadd.f32 %v3653, %v3654
    %v3656 = vsel %vm3444, %v3585, 0.0
    %v3657 = vadd.f32 %v3655, %v3656
    %v3658 = vsel %vm3444, %v3586, 0.0
    %v3659 = vadd.f32 %v3657, %v3658
    %v3660 = vsel %vm3444, %v3587, 0.0
    %v3661 = vadd.f32 %v3659, %v3660
    %v3662 = vsel %vm3444, %v3588, 0.0
    %v3663 = vadd.f32 %v3661, %v3662
    %v3664 = vsel %vm3444, %v3589, 0.0
    %v3665 = vadd.f32 %v3663, %v3664
    %v3666 = vsel %vm3444, %v3590, 0.0
    %v3667 = vadd.f32 %v3665, %v3666
    %v3668 = vsel %vm3444, %v3591, 0.0
    %v3669 = vadd.f32 %v3667, %v3668
    %v3670 = vsel %vm3444, %v3592, 0.0
    %v3671 = vadd.f32 %v3669, %v3670
    %v3672 = vsel %vm3444, %v3593, 0.0
    %v3673 = vadd.f32 %v3671, %v3672
    %v3674 = vsel %vm3444, %v3594, 0.0
    %v3675 = vadd.f32 %v3673, %v3674
    %v3676 = vsel %vm3444, %v3595, 0.0
    %v3677 = vadd.f32 %v3675, %v3676
    %v3678 = vsel %vm3444, %v3596, 0.0
    %v3679 = vadd.f32 %v3677, %v3678
    %v3680 = vsel %vm3444, %v3597, 0.0
    %v3681 = vadd.f32 %v3679, %v3680
    %v3682 = vsel %vm3444, %v3598, 0.0
    %v3683 = vadd.f32 %v3681, %v3682
    %v3684 = vsel %vm3444, %v3599, 0.0
    %v3685 = vadd.f32 %v3683, %v3684
    %v3686 = vsel %vm3444, %v3600, 0.0
    %v3687 = vadd.f32 %v3685, %v3686
    %v3688 = vsel %vm3444, %v3601, 0.0
    %v3689 = vadd.f32 %v3687, %v3688
    %v3690 = vsel %vm3444, %v3602, 0.0
    %v3691 = vadd.f32 %v3689, %v3690
    %v3692 = vsel %vm3444, %v3603, 0.0
    %v3693 = vadd.f32 %v3691, %v3692
    %v3694 = vsel %vm3444, %v3604, 0.0
    %v3695 = vadd.f32 %v3693, %v3694
    %v3696 = vsel %vm3444, %v3605, 0.0
    %v3697 = vadd.f32 %v3695, %v3696
    %v3698 = vsel %vm3444, %v3606, 0.0
    %v3699 = vadd.f32 %v3697, %v3698
    %v3700 = vsel %vm3444, %v3607, 0.0
    %v3701 = vadd.f32 %v3699, %v3700
    %v3702 = vsel %vm3444, %v3608, 0.0
    %v3703 = vadd.f32 %v3701, %v3702
    %v3704 = vsel %vm3444, %v3609, 0.0
    %v3705 = vadd.f32 %v3703, %v3704
    %v3706 = vsel %vm3444, %v3610, 0.0
    %v3707 = vadd.f32 %v3705, %v3706
    %v3708 = vsel %vm3444, %v3611, 0.0
    %v3709 = vadd.f32 %v3707, %v3708
    %v3710 = vsel %vm3444, %v3612, 0.0
    %v3711 = vadd.f32 %v3709, %v3710
    %v3712 = vsel %vm3444, %v3613, 0.0
    %v3713 = vadd.f32 %v3711, %v3712
    %v3714 = vsel %vm3444, %v3614, 0.0
    %v3715 = vadd.f32 %v3713, %v3714
    %v3716 = vsel %vm3444, %v3615, 0.0
    %v3717 = vadd.f32 %v3715, %v3716
    %v3718 = vsel %vm3444, %v3616, 0.0
    %v3719 = vadd.f32 %v3717, %v3718
    %v3720 = vsel %vm3444, %v3617, 0.0
    %v3721 = vadd.f32 %v3719, %v3720
    %v3722 = vsel %vm3444, %v3618, 0.0
    %v3723 = vadd.f32 %v3721, %v3722
    %v3724 = vsel %vm3444, %v3619, 0.0
    %v3725 = vadd.f32 %v3723, %v3724
    %v3726 = vsel %vm3444, %v3620, 0.0
    %v3727 = vadd.f32 %v3725, %v3726
    %v3728 = vsel %vm3444, %v3621, 0.0
    %v3729 = vadd.f32 %v3727, %v3728
    %v3730 = vsel %vm3444, %v3622, 0.0
    %v3731 = vadd.f32 %v3729, %v3730
    %v3732 = vsel %vm3444, %v3623, 0.0
    %v3733 = vadd.f32 %v3731, %v3732
    %v3734 = vsel %vm3444, %v3624, 0.0
    %v3735 = vadd.f32 %v3733, %v3734
    %v3736 = vsel %vm3444, %v3625, 0.0
    %v3737 = vadd.f32 %v3735, %v3736
    %v3738 = vsel %vm3444, %v3626, 0.0
    %v3739 = vadd.f32 %v3737, %v3738
    %v3740 = vsel %vm3444, %v3627, 0.0
    %v3741 = vadd.f32 %v3739, %v3740
    %v3742 = vsel %vm3444, %v3628, 0.0
    %v3743 = vadd.f32 %v3741, %v3742
    %v3744 = vsel %vm3444, %v3629, 0.0
    %v3745 = vadd.f32 %v3743, %v3744
    %v3746 = vsel %vm3444, %v3630, 0.0
    %v3747 = vadd.f32 %v3745, %v3746
    %v3748 = vsel %vm3444, %v3631, 0.0
    %v3749 = vadd.f32 %v3747, %v3748
    %v3750 = vsel %vm3444, %v3632, 0.0
    %v3751 = vadd.f32 %v3749, %v3750
    %v3752 = vsel %vm3444, %v3633, 0.0
    %v3753 = vadd.f32 %v3751, %v3752
    %v3754 = vsel %vm3444, %v3634, 0.0
    %v3755 = vadd.f32 %v3753, %v3754
    %v3756 = vsel %vm3444, %v3635, 0.0
    %v3757 = vadd.f32 %v3755, %v3756
    %v3758 = vsel %vm3444, %v3636, 0.0
    %v3759 = vadd.f32 %v3757, %v3758
    %v3760 = vrot.slane %v3759, 4
    %v3761 = vadd.f32 %v3759, %v3760
    %v3762 = vrot.slane %v3761, 2
    %v3763 = vadd.f32 %v3761, %v3762
    %v3764 = vrot.slane %v3763, 1
    %v3765 = vadd.f32 %v3763, %v3764
    %v3766 = vadd.f32 %v3765, 0.0
    %3767 = vst.msk [vmem:[#allocation2] sm:$0xff] %vm3444, %v3382
    %3768 = vst.msk [vmem:[#allocation2 + $0x8] sm:$0xff] %vm3444, %v3383
    %3769 = vst.msk [vmem:[#allocation2 + $0x10] sm:$0xff] %vm3444, %v3384
    %3770 = vst.msk [vmem:[#allocation2 + $0x18] sm:$0xff] %vm3444, %v3385
    %3771 = vst.msk [vmem:[#allocation2 + $0x20] sm:$0xff] %vm3444, %v3386
    %3772 = vst.msk [vmem:[#allocation2 + $0x28] sm:$0xff] %vm3444, %v3387
    %3773 = vst.msk [vmem:[#allocation2 + $0x30] sm:$0xff] %vm3444, %v3388
    %3774 = vst.msk [vmem:[#allocation2 + $0x38] sm:$0xff] %vm3444, %v3389
    %3775 = vst.msk [vmem:[#allocation2 + $0x40] sm:$0xff] %vm3444, %v3390
    %3776 = vst.msk [vmem:[#allocation2 + $0x48] sm:$0xff] %vm3444, %v3391
    %3777 = vst.msk [vmem:[#allocation2 + $0x50] sm:$0xff] %vm3444, %v3392
    %3778 = vst.msk [vmem:[#allocation2 + $0x58] sm:$0xff] %vm3444, %v3393
    %3779 = vst.msk [vmem:[#allocation2 + $0x60] sm:$0xff] %vm3444, %v3394
    %3780 = vst.msk [vmem:[#allocation2 + $0x68] sm:$0xff] %vm3444, %v3395
    %3781 = vst.msk [vmem:[#allocation2 + $0x70] sm:$0xff] %vm3444, %v3396
    %3782 = vst.msk [vmem:[#allocation2 + $0x78] sm:$0xff] %vm3444, %v3397
    %3783 = vst.msk [vmem:[#allocation2 + $0x80] sm:$0xff] %vm3444, %v3398
    %3784 = vst.msk [vmem:[#allocation2 + $0x88] sm:$0xff] %vm3444, %v3399
    %3785 = vst.msk [vmem:[#allocation2 + $0x90] sm:$0xff] %vm3444, %v3400
    %3786 = vst.msk [vmem:[#allocation2 + $0x98] sm:$0xff] %vm3444, %v3401
    %3787 = vst.msk [vmem:[#allocation2 + $0xa0] sm:$0xff] %vm3444, %v3402
    %3788 = vst.msk [vmem:[#allocation2 + $0xa8] sm:$0xff] %vm3444, %v3403
    %3789 = vst.msk [vmem:[#allocation2 + $0xb0] sm:$0xff] %vm3444, %v3404
    %3790 = vst.msk [vmem:[#allocation2 + $0xb8] sm:$0xff] %vm3444, %v3405
    %3791 = vst.msk [vmem:[#allocation2 + $0xc0] sm:$0xff] %vm3444, %v3406
    %3792 = vst.msk [vmem:[#allocation2 + $0xc8] sm:$0xff] %vm3444, %v3407
    %3793 = vst.msk [vmem:[#allocation2 + $0xd0] sm:$0xff] %vm3444, %v3408
    %3794 = vst.msk [vmem:[#allocation2 + $0xd8] sm:$0xff] %vm3444, %v3409
    %3795 = vst.msk [vmem:[#allocation2 + $0xe0] sm:$0xff] %vm3444, %v3410
    %3796 = vst.msk [vmem:[#allocation2 + $0xe8] sm:$0xff] %vm3444, %v3411
    %3797 = vst.msk [vmem:[#allocation2 + $0xf0] sm:$0xff] %vm3444, %v3412
    %3798 = vst.msk [vmem:[#allocation2 + $0xf8] sm:$0xff] %vm3444, %v3413
    %3799 = vst.msk [vmem:[#allocation2 + $0x100] sm:$0xff] %vm3444, %v3414
    %3800 = vst.msk [vmem:[#allocation2 + $0x108] sm:$0xff] %vm3444, %v3415
    %3801 = vst.msk [vmem:[#allocation2 + $0x110] sm:$0xff] %vm3444, %v3416
    %3802 = vst.msk [vmem:[#allocation2 + $0x118] sm:$0xff] %vm3444, %v3417
    %3803 = vst.msk [vmem:[#allocation2 + $0x120] sm:$0xff] %vm3444, %v3418
    %3804 = vst.msk [vmem:[#allocation2 + $0x128] sm:$0xff] %vm3444, %v3419
    %3805 = vst.msk [vmem:[#allocation2 + $0x130] sm:$0xff] %vm3444, %v3420
    %3806 = vst.msk [vmem:[#allocation2 + $0x138] sm:$0xff] %vm3444, %v3421
    %3807 = vst.msk [vmem:[#allocation2 + $0x140] sm:$0xff] %vm3444, %v3422
    %3808 = vst.msk [vmem:[#allocation2 + $0x148] sm:$0xff] %vm3444, %v3423
    %3809 = vst.msk [vmem:[#allocation2 + $0x150] sm:$0xff] %vm3444, %v3424
    %3810 = vst.msk [vmem:[#allocation2 + $0x158] sm:$0xff] %vm3444, %v3425
    %3811 = vst.msk [vmem:[#allocation2 + $0x160] sm:$0xff] %vm3444, %v3426
    %3812 = vst.msk [vmem:[#allocation2 + $0x168] sm:$0xff] %vm3444, %v3427
    %3813 = vst.msk [vmem:[#allocation2 + $0x170] sm:$0xff] %vm3444, %v3428
    %3814 = vst.msk [vmem:[#allocation2 + $0x178] sm:$0xff] %vm3444, %v3429
    %3815 = vst.msk [vmem:[#allocation2 + $0x180] sm:$0xff] %vm3444, %v3430
    %3816 = vst.msk [vmem:[#allocation2 + $0x188] sm:$0xff] %vm3444, %v3431
    %3817 = vst.msk [vmem:[#allocation2 + $0x190] sm:$0xff] %vm3444, %v3432
    %3818 = vst.msk [vmem:[#allocation2 + $0x198] sm:$0xff] %vm3444, %v3433
    %3819 = vst.msk [vmem:[#allocation2 + $0x1a0] sm:$0xff] %vm3444, %v3434
    %3820 = vst.msk [vmem:[#allocation2 + $0x1a8] sm:$0xff] %vm3444, %v3435
    %3821 = vst.msk [vmem:[#allocation2 + $0x1b0] sm:$0xff] %vm3444, %v3436
    %3822 = vst.msk [vmem:[#allocation2 + $0x1b8] sm:$0xff] %vm3444, %v3437
    %3823 = vst.msk [vmem:[#allocation2 + $0x1c0] sm:$0xff] %vm3444, %v3438
    %3824 = vst.msk [vmem:[#allocation2 + $0x1c8] sm:$0xff] %vm3444, %v3439
    %3825 = vst.msk [vmem:[#allocation2 + $0x1d0] sm:$0xff] %vm3444, %v3440
    %3826 = vst.msk [vmem:[#allocation2 + $0x1d8] sm:$0xff] %vm3444, %v3441
    %3827 = vst.msk [vmem:[#allocation2 + $0x1e0] sm:$0xff] %vm3444, %v3442
    %3828 = vst.msk [vmem:[#allocation2 + $0x1e8] sm:$0xff] %vm3444, %v3443
    %s3829 = scalar_lea.vmem %s0, 504
    %v3830 = vld [vmem:[%s3829] sm:$0xff]
    %v3831 = vld [vmem:[%s3829 + $0x8] sm:$0xff]
    %v3832 = vld [vmem:[%s3829 + $0x10] sm:$0xff]
    %v3833 = vld [vmem:[%s3829 + $0x18] sm:$0xff]
    %v3834 = vld [vmem:[%s3829 + $0x20] sm:$0xff]
    %v3835 = vld [vmem:[%s3829 + $0x28] sm:$0xff]
    %v3836 = vld [vmem:[%s3829 + $0x30] sm:$0xff]
    %v3837 = vld [vmem:[%s3829 + $0x38] sm:$0xff]
    %v3838 = vld [vmem:[%s3829 + $0x40] sm:$0xff]
    %v3839 = vld [vmem:[%s3829 + $0x48] sm:$0xff]
    %v3840 = vld [vmem:[%s3829 + $0x50] sm:$0xff]
    %v3841 = vld [vmem:[%s3829 + $0x58] sm:$0xff]
    %v3842 = vld [vmem:[%s3829 + $0x60] sm:$0xff]
    %v3843 = vld [vmem:[%s3829 + $0x68] sm:$0xff]
    %v3844 = vld [vmem:[%s3829 + $0x70] sm:$0xff]
    %v3845 = vld [vmem:[%s3829 + $0x78] sm:$0xff]
    %v3846 = vld [vmem:[%s3829 + $0x80] sm:$0xff]
    %v3847 = vld [vmem:[%s3829 + $0x88] sm:$0xff]
    %v3848 = vld [vmem:[%s3829 + $0x90] sm:$0xff]
    %v3849 = vld [vmem:[%s3829 + $0x98] sm:$0xff]
    %v3850 = vld [vmem:[%s3829 + $0xa0] sm:$0xff]
    %v3851 = vld [vmem:[%s3829 + $0xa8] sm:$0xff]
    %v3852 = vld [vmem:[%s3829 + $0xb0] sm:$0xff]
    %v3853 = vld [vmem:[%s3829 + $0xb8] sm:$0xff]
    %v3854 = vld [vmem:[%s3829 + $0xc0] sm:$0xff]
    %v3855 = vld [vmem:[%s3829 + $0xc8] sm:$0xff]
    %v3856 = vld [vmem:[%s3829 + $0xd0] sm:$0xff]
    %v3857 = vld [vmem:[%s3829 + $0xd8] sm:$0xff]
    %v3858 = vld [vmem:[%s3829 + $0xe0] sm:$0xff]
    %v3859 = vld [vmem:[%s3829 + $0xe8] sm:$0xff]
    %v3860 = vld [vmem:[%s3829 + $0xf0] sm:$0xff]
    %v3861 = vld [vmem:[%s3829 + $0xf8] sm:$0xff]
    %v3862 = vld [vmem:[%s3829 + $0x100] sm:$0xff]
    %v3863 = vld [vmem:[%s3829 + $0x108] sm:$0xff]
    %v3864 = vld [vmem:[%s3829 + $0x110] sm:$0xff]
    %v3865 = vld [vmem:[%s3829 + $0x118] sm:$0xff]
    %v3866 = vld [vmem:[%s3829 + $0x120] sm:$0xff]
    %v3867 = vld [vmem:[%s3829 + $0x128] sm:$0xff]
    %v3868 = vld [vmem:[%s3829 + $0x130] sm:$0xff]
    %v3869 = vld [vmem:[%s3829 + $0x138] sm:$0xff]
    %v3870 = vld [vmem:[%s3829 + $0x140] sm:$0xff]
    %v3871 = vld [vmem:[%s3829 + $0x148] sm:$0xff]
    %v3872 = vld [vmem:[%s3829 + $0x150] sm:$0xff]
    %v3873 = vld [vmem:[%s3829 + $0x158] sm:$0xff]
    %v3874 = vld [vmem:[%s3829 + $0x160] sm:$0xff]
    %v3875 = vld [vmem:[%s3829 + $0x168] sm:$0xff]
    %v3876 = vld [vmem:[%s3829 + $0x170] sm:$0xff]
    %v3877 = vld [vmem:[%s3829 + $0x178] sm:$0xff]
    %v3878 = vld [vmem:[%s3829 + $0x180] sm:$0xff]
    %v3879 = vld [vmem:[%s3829 + $0x188] sm:$0xff]
    %v3880 = vld [vmem:[%s3829 + $0x190] sm:$0xff]
    %v3881 = vld [vmem:[%s3829 + $0x198] sm:$0xff]
    %v3882 = vld [vmem:[%s3829 + $0x1a0] sm:$0xff]
    %v3883 = vld [vmem:[%s3829 + $0x1a8] sm:$0xff]
    %v3884 = vld [vmem:[%s3829 + $0x1b0] sm:$0xff]
    %v3885 = vld [vmem:[%s3829 + $0x1b8] sm:$0xff]
    %v3886 = vld [vmem:[%s3829 + $0x1c0] sm:$0xff]
    %v3887 = vld [vmem:[%s3829 + $0x1c8] sm:$0xff]
    %v3888 = vld [vmem:[%s3829 + $0x1d0] sm:$0xff]
    %v3889 = vld [vmem:[%s3829 + $0x1d8] sm:$0xff]
    %v3890 = vld [vmem:[%s3829 + $0x1e0] sm:$0xff]
    %v3891 = vld [vmem:[%s3829 + $0x1e8] sm:$0xff]
    %v3892 = vld [vmem:[%s1] sm:$0xff]
    %v3893 = vld [vmem:[%s1 + $0x8] sm:$0xff]
    %v3894 = vld [vmem:[%s3829 + $0x1] sm:$0xff]
    %v3895 = vld [vmem:[%s3829 + $0x9] sm:$0xff]
    %v3896 = vld [vmem:[%s3829 + $0x11] sm:$0xff]
    %v3897 = vld [vmem:[%s3829 + $0x19] sm:$0xff]
    %v3898 = vld [vmem:[%s3829 + $0x21] sm:$0xff]
    %v3899 = vld [vmem:[%s3829 + $0x29] sm:$0xff]
    %v3900 = vld [vmem:[%s3829 + $0x31] sm:$0xff]
    %v3901 = vld [vmem:[%s3829 + $0x39] sm:$0xff]
    %v3902 = vld [vmem:[%s3829 + $0x41] sm:$0xff]
    %v3903 = vld [vmem:[%s3829 + $0x49] sm:$0xff]
    %v3904 = vld [vmem:[%s3829 + $0x51] sm:$0xff]
    %v3905 = vld [vmem:[%s3829 + $0x59] sm:$0xff]
    %v3906 = vld [vmem:[%s3829 + $0x61] sm:$0xff]
    %v3907 = vld [vmem:[%s3829 + $0x69] sm:$0xff]
    %v3908 = vld [vmem:[%s3829 + $0x71] sm:$0xff]
    %v3909 = vld [vmem:[%s3829 + $0x79] sm:$0xff]
    %v3910 = vld [vmem:[%s3829 + $0x81] sm:$0xff]
    %v3911 = vld [vmem:[%s3829 + $0x89] sm:$0xff]
    %v3912 = vld [vmem:[%s3829 + $0x91] sm:$0xff]
    %v3913 = vld [vmem:[%s3829 + $0x99] sm:$0xff]
    %v3914 = vld [vmem:[%s3829 + $0xa1] sm:$0xff]
    %v3915 = vld [vmem:[%s3829 + $0xa9] sm:$0xff]
    %v3916 = vld [vmem:[%s3829 + $0xb1] sm:$0xff]
    %v3917 = vld [vmem:[%s3829 + $0xb9] sm:$0xff]
    %v3918 = vld [vmem:[%s3829 + $0xc1] sm:$0xff]
    %v3919 = vld [vmem:[%s3829 + $0xc9] sm:$0xff]
    %v3920 = vld [vmem:[%s3829 + $0xd1] sm:$0xff]
    %v3921 = vld [vmem:[%s3829 + $0xd9] sm:$0xff]
    %v3922 = vld [vmem:[%s3829 + $0xe1] sm:$0xff]
    %v3923 = vld [vmem:[%s3829 + $0xe9] sm:$0xff]
    %v3924 = vld [vmem:[%s3829 + $0xf1] sm:$0xff]
    %v3925 = vld [vmem:[%s3829 + $0xf9] sm:$0xff]
    %v3926 = vld [vmem:[%s3829 + $0x101] sm:$0xff]
    %v3927 = vld [vmem:[%s3829 + $0x109] sm:$0xff]
    %v3928 = vld [vmem:[%s3829 + $0x111] sm:$0xff]
    %v3929 = vld [vmem:[%s3829 + $0x119] sm:$0xff]
    %v3930 = vld [vmem:[%s3829 + $0x121] sm:$0xff]
    %v3931 = vld [vmem:[%s3829 + $0x129] sm:$0xff]
    %v3932 = vld [vmem:[%s3829 + $0x131] sm:$0xff]
    %v3933 = vld [vmem:[%s3829 + $0x139] sm:$0xff]
    %v3934 = vld [vmem:[%s3829 + $0x141] sm:$0xff]
    %v3935 = vld [vmem:[%s3829 + $0x149] sm:$0xff]
    %v3936 = vld [vmem:[%s3829 + $0x151] sm:$0xff]
    %v3937 = vld [vmem:[%s3829 + $0x159] sm:$0xff]
    %v3938 = vld [vmem:[%s3829 + $0x161] sm:$0xff]
    %v3939 = vld [vmem:[%s3829 + $0x169] sm:$0xff]
    %v3940 = vld [vmem:[%s3829 + $0x171] sm:$0xff]
    %v3941 = vld [vmem:[%s3829 + $0x179] sm:$0xff]
    %v3942 = vld [vmem:[%s3829 + $0x181] sm:$0xff]
    %v3943 = vld [vmem:[%s3829 + $0x189] sm:$0xff]
    %v3944 = vld [vmem:[%s3829 + $0x191] sm:$0xff]
    %v3945 = vld [vmem:[%s3829 + $0x199] sm:$0xff]
    %v3946 = vld [vmem:[%s3829 + $0x1a1] sm:$0xff]
    %v3947 = vld [vmem:[%s3829 + $0x1a9] sm:$0xff]
    %v3948 = vld [vmem:[%s3829 + $0x1b1] sm:$0xff]
    %v3949 = vld [vmem:[%s3829 + $0x1b9] sm:$0xff]
    %v3950 = vld [vmem:[%s3829 + $0x1c1] sm:$0xff]
    %v3951 = vld [vmem:[%s3829 + $0x1c9] sm:$0xff]
    %v3952 = vld [vmem:[%s3829 + $0x1d1] sm:$0xff]
    %v3953 = vld [vmem:[%s3829 + $0x1d9] sm:$0xff]
    %v3954 = vld [vmem:[%s3829 + $0x1e1] sm:$0xff]
    %v3955 = vld [vmem:[%s3829 + $0x1e9] sm:$0xff]
    %v3956 = vld [vmem:[%s1 + $0x10] sm:$0xff]
    %v3957 = vld [vmem:[%s1 + $0x18] sm:$0xff]
    %v3959 = vsel %vm191, %v3894, 0
    %v3962 = vsel %vm191, %v3895, 0
    %v3965 = vsel %vm191, %v3896, 0
    %v3968 = vsel %vm191, %v3897, 0
    %v3971 = vsel %vm191, %v3898, 0
    %v3974 = vsel %vm191, %v3899, 0
    %v3977 = vsel %vm191, %v3900, 0
    %v3980 = vsel %vm191, %v3901, 0
    %v3983 = vsel %vm191, %v3902, 0
    %v3986 = vsel %vm191, %v3903, 0
    %v3989 = vsel %vm191, %v3904, 0
    %v3992 = vsel %vm191, %v3905, 0
    %v3995 = vsel %vm191, %v3906, 0
    %v3998 = vsel %vm191, %v3907, 0
    %v4001 = vsel %vm191, %v3908, 0
    %v4004 = vsel %vm191, %v3909, 0
    %v4007 = vsel %vm191, %v3910, 0
    %v4010 = vsel %vm191, %v3911, 0
    %v4013 = vsel %vm191, %v3912, 0
    %v4016 = vsel %vm191, %v3913, 0
    %v4019 = vsel %vm191, %v3914, 0
    %v4022 = vsel %vm191, %v3915, 0
    %v4025 = vsel %vm191, %v3916, 0
    %v4028 = vsel %vm191, %v3917, 0
    %v4031 = vsel %vm191, %v3918, 0
    %v4034 = vsel %vm191, %v3919, 0
    %v4037 = vsel %vm191, %v3920, 0
    %v4040 = vsel %vm191, %v3921, 0
    %v4043 = vsel %vm191, %v3922, 0
    %v4046 = vsel %vm191, %v3923, 0
    %v4049 = vsel %vm191, %v3924, 0
    %v4052 = vsel %vm191, %v3925, 0
    %v4055 = vsel %vm191, %v3926, 0
    %v4058 = vsel %vm191, %v3927, 0
    %v4061 = vsel %vm191, %v3928, 0
    %v4064 = vsel %vm191, %v3929, 0
    %v4067 = vsel %vm191, %v3930, 0
    %v4070 = vsel %vm191, %v3931, 0
    %v4073 = vsel %vm191, %v3932, 0
    %v4076 = vsel %vm191, %v3933, 0
    %v4079 = vsel %vm191, %v3934, 0
    %v4082 = vsel %vm191, %v3935, 0
    %v4085 = vsel %vm191, %v3936, 0
    %v4088 = vsel %vm191, %v3937, 0
    %v4091 = vsel %vm191, %v3938, 0
    %v4094 = vsel %vm191, %v3939, 0
    %v4097 = vsel %vm191, %v3940, 0
    %v4100 = vsel %vm191, %v3941, 0
    %v4103 = vsel %vm191, %v3942, 0
    %v4106 = vsel %vm191, %v3943, 0
    %v4109 = vsel %vm191, %v3944, 0
    %v4112 = vsel %vm191, %v3945, 0
    %v4115 = vsel %vm191, %v3946, 0
    %v4118 = vsel %vm191, %v3947, 0
    %v4121 = vsel %vm191, %v3948, 0
    %v4124 = vsel %vm191, %v3949, 0
    %v4127 = vsel %vm191, %v3950, 0
    %v4130 = vsel %vm191, %v3951, 0
    %v4133 = vsel %vm191, %v3952, 0
    %v4136 = vsel %vm191, %v3953, 0
    %v4139 = vsel %vm191, %v3954, 0
    %v4142 = vsel %vm191, %v3955, 0
    %4144 = vmatprep.subr.mxu0 0.0
    %4145 = vmatpush1.msra.mxu0 %v3956
    %4146 = vmatprep.subr.mxu0 0.0
    %4147 = vmatpush1.msra.mxu0 %v3957
    %4148 = vmatprep.subr.mxu0 0.0
    %4149 = vmatpush1.msra.mxu0 0.0
    %4150 = vmatprep.subr.mxu0 0.0
    %4151 = vmatpush1.msra.mxu0 0.0
    %4152 = vmatprep.subr.mxu0 0.0
    %4153 = vmatpush1.msra.mxu0 0.0
    %4154 = vmatprep.subr.mxu0 0.0
    %4155 = vmatpush1.msra.mxu0 0.0
    %4156 = vmatprep.subr.mxu0 0.0
    %4157 = vmatpush1.msra.mxu0 0.0
    %4158 = vmatprep.subr.mxu0 0.0
    %4159 = vmatpush1.msra.mxu0 0.0
    %4160 = vmatprep.subr.mxu0 0.0
    %4161 = vmatpush1.msra.mxu0 0.0
    %4162 = vmatprep.subr.mxu0 0.0
    %4163 = vmatpush1.msra.mxu0 0.0
    %4164 = vmatprep.subr.mxu0 0.0
    %4165 = vmatpush1.msra.mxu0 0.0
    %4166 = vmatprep.subr.mxu0 0.0
    %4167 = vmatpush1.msra.mxu0 0.0
    %4168 = vmatprep.subr.mxu0 0.0
    %4169 = vmatpush1.msra.mxu0 0.0
    %4170 = vmatprep.subr.mxu0 0.0
    %4171 = vmatpush1.msra.mxu0 0.0
    %4172 = vmatprep.subr.mxu0 0.0
    %4173 = vmatpush1.msra.mxu0 0.0
    %4174 = vmatprep.subr.mxu0 0.0
    %4175 = vmatpush1.msra.mxu0 0.0
    %4176 = vmatprep.subr.mxu0 0.0
    %4177 = vmatpush1.msra.mxu0 0.0
    %4178 = vmatprep.subr.mxu0 0.0
    %4179 = vmatpush1.msra.mxu0 0.0
    %4180 = vmatprep.subr.mxu0 0.0
    %4181 = vmatpush1.msra.mxu0 0.0
    %4182 = vmatprep.subr.mxu0 0.0
    %4183 = vmatpush1.msra.mxu0 0.0
    %4184 = vmatprep.subr.mxu0 0.0
    %4185 = vmatpush1.msra.mxu0 0.0
    %4186 = vmatprep.subr.mxu0 0.0
    %4187 = vmatpush1.msra.mxu0 0.0
    %4188 = vmatprep.subr.mxu0 0.0
    %4189 = vmatpush1.msra.mxu0 0.0
    %4190 = vmatprep.subr.mxu0 0.0
    %4191 = vmatpush1.msra.mxu0 0.0
    %4192 = vmatprep.subr.mxu0 0.0
    %4193 = vmatpush1.msra.mxu0 0.0
    %4194 = vmatprep.subr.mxu0 0.0
    %4195 = vmatpush1.msra.mxu0 0.0
    %4196 = vmatprep.subr.mxu0 0.0
    %4197 = vmatpush1.msra.mxu0 0.0
    %4198 = vmatprep.subr.mxu0 0.0
    %4199 = vmatpush1.msra.mxu0 0.0
    %4200 = vmatprep.subr.mxu0 0.0
    %4201 = vmatpush1.msra.mxu0 0.0
    %4202 = vmatprep.subr.mxu0 0.0
    %4203 = vmatpush1.msra.mxu0 0.0
    %4204 = vmatprep.subr.mxu0 0.0
    %4205 = vmatpush1.msra.mxu0 0.0
    %4206 = vmatprep.subr.mxu0 0.0
    %4207 = vmatpush1.msra.mxu0 0.0
    %4208 = vmatprep.mubr.f32.mxu0 0.0
    %4209 = vmatmul.mubr.f32.gmra.mrb[0].mxu0 %v3959
    %v4210 = vpop.f32.mrb[0].mxu0
    %v4211 = vadd.f32 0.0, %v4210
    %v4212 = vpop.f32.mrb[0].mxu0
    %4213 = vmatprep.mubr.f32.mxu0 0.0
    %4214 = vmatmul.mubr.f32.gmra.mrb[0].mxu0 %v3962
    %v4215 = vpop.f32.mrb[0].mxu0
    %v4216 = vadd.f32 0.0, %v4215
    %v4217 = vpop.f32.mrb[0].mxu0
    %4218 = vmatprep.mubr.f32.mxu0 0.0
    %4219 = vmatmul.mubr.f32.gmra.mrb[0].mxu0 %v3965
    %v4220 = vpop.f32.mrb[0].mxu0
    %v4221 = vadd.f32 0.0, %v4220
    %v4222 = vpop.f32.mrb[0].mxu0
    %4223 = vmatprep.mubr.f32.mxu0 0.0
    %4224 = vmatmul.mubr.f32.gmra.mrb[0].mxu0 %v3968
    %v4225 = vpop.f32.mrb[0].mxu0
    %v4226 = vadd.f32 0.0, %v4225
    %v4227 = vpop.f32.mrb[0].mxu0
    %4228 = vmatprep.mubr.f32.mxu0 0.0
    %4229 = vmatmul.mubr.f32.gmra.mrb[0].mxu0 %v3971
    %v4230 = vpop.f32.mrb[0].mxu0
    %v4231 = vadd.f32 0.0, %v4230
    %v4232 = vpop.f32.mrb[0].mxu0
    %4233 = vmatprep.mubr.f32.mxu0 0.0
    %4234 = vmatmul.mubr.f32.gmra.mrb[0].mxu0 %v3974
    %v4235 = vpop.f32.mrb[0].mxu0
    %v4236 = vadd.f32 0.0, %v4235
    %v4237 = vpop.f32.mrb[0].mxu0
    %4238 = vmatprep.mubr.f32.mxu0 0.0
    %4239 = vmatmul.mubr.f32.gmra.mrb[0].mxu0 %v3977
    %v4240 = vpop.f32.mrb[0].mxu0
    %v4241 = vadd.f32 0.0, %v4240
    %v4242 = vpop.f32.mrb[0].mxu0
    %4243 = vmatprep.mubr.f32.mxu0 0.0
    %4244 = vmatmul.mubr.f32.gmra.mrb[0].mxu0 %v3980
    %v4245 = vpop.f32.mrb[0].mxu0
    %v4246 = vadd.f32 0.0, %v4245
    %v4247 = vpop.f32.mrb[0].mxu0
    %4248 = vmatprep.mubr.f32.mxu0 0.0
    %4249 = vmatmul.mubr.f32.gmra.mrb[0].mxu0 %v3983
    %v4250 = vpop.f32.mrb[0].mxu0
    %v4251 = vadd.f32 0.0, %v4250
    %v4252 = vpop.f32.mrb[0].mxu0
    %4253 = vmatprep.mubr.f32.mxu0 0.0
    %4254 = vmatmul.mubr.f32.gmra.mrb[0].mxu0 %v3986
    %v4255 = vpop.f32.mrb[0].mxu0
    %v4256 = vadd.f32 0.0, %v4255
    %v4257 = vpop.f32.mrb[0].mxu0
    %4258 = vmatprep.mubr.f32.mxu0 0.0
    %4259 = vmatmul.mubr.f32.gmra.mrb[0].mxu0 %v3989
    %v4260 = vpop.f32.mrb[0].mxu0
    %v4261 = vadd.f32 0.0, %v4260
    %v4262 = vpop.f32.mrb[0].mxu0
    %4263 = vmatprep.mubr.f32.mxu0 0.0
    %4264 = vmatmul.mubr.f32.gmra.mrb[0].mxu0 %v3992
    %v4265 = vpop.f32.mrb[0].mxu0
    %v4266 = vadd.f32 0.0, %v4265
    %v4267 = vpop.f32.mrb[0].mxu0
    %4268 = vmatprep.mubr.f32.mxu0 0.0
    %4269 = vmatmul.mubr.f32.gmra.mrb[0].mxu0 %v3995
    %v4270 = vpop.f32.mrb[0].mxu0
    %v4271 = vadd.f32 0.0, %v4270
    %v4272 = vpop.f32.mrb[0].mxu0
    %4273 = vmatprep.mubr.f32.mxu0 0.0
    %4274 = vmatmul.mubr.f32.gmra.mrb[0].mxu0 %v3998
    %v4275 = vpop.f32.mrb[0].mxu0
    %v4276 = vadd.f32 0.0, %v4275
    %v4277 = vpop.f32.mrb[0].mxu0
    %4278 = vmatprep.mubr.f32.mxu0 0.0
    %4279 = vmatmul.mubr.f32.gmra.mrb[0].mxu0 %v4001
    %v4280 = vpop.f32.mrb[0].mxu0
    %v4281 = vadd.f32 0.0, %v4280
    %v4282 = vpop.f32.mrb[0].mxu0
    %4283 = vmatprep.mubr.f32.mxu0 0.0
    %4284 = vmatmul.mubr.f32.gmra.mrb[0].mxu0 %v4004
    %v4285 = vpop.f32.mrb[0].mxu0
    %v4286 = vadd.f32 0.0, %v4285
    %v4287 = vpop.f32.mrb[0].mxu0
    %4288 = vmatprep.mubr.f32.mxu0 0.0
    %4289 = vmatmul.mubr.f32.gmra.mrb[0].mxu0 %v4007
    %v4290 = vpop.f32.mrb[0].mxu0
    %v4291 = vadd.f32 0.0, %v4290
    %v4292 = vpop.f32.mrb[0].mxu0
    %4293 = vmatprep.mubr.f32.mxu0 0.0
    %4294 = vmatmul.mubr.f32.gmra.mrb[0].mxu0 %v4010
    %v4295 = vpop.f32.mrb[0].mxu0
    %v4296 = vadd.f32 0.0, %v4295
    %v4297 = vpop.f32.mrb[0].mxu0
    %4298 = vmatprep.mubr.f32.mxu0 0.0
    %4299 = vmatmul.mubr.f32.gmra.mrb[0].mxu0 %v4013
    %v4300 = vpop.f32.mrb[0].mxu0
    %v4301 = vadd.f32 0.0, %v4300
    %v4302 = vpop.f32.mrb[0].mxu0
    %4303 = vmatprep.mubr.f32.mxu0 0.0
    %4304 = vmatmul.mubr.f32.gmra.mrb[0].mxu0 %v4016
    %v4305 = vpop.f32.mrb[0].mxu0
    %v4306 = vadd.f32 0.0, %v4305
    %v4307 = vpop.f32.mrb[0].mxu0
    %4308 = vmatprep.mubr.f32.mxu0 0.0
    %4309 = vmatmul.mubr.f32.gmra.mrb[0].mxu0 %v4019
    %v4310 = vpop.f32.mrb[0].mxu0
    %v4311 = vadd.f32 0.0, %v4310
    %v4312 = vpop.f32.mrb[0].mxu0
    %4313 = vmatprep.mubr.f32.mxu0 0.0
    %4314 = vmatmul.mubr.f32.gmra.mrb[0].mxu0 %v4022
    %v4315 = vpop.f32.mrb[0].mxu0
    %v4316 = vadd.f32 0.0, %v4315
    %v4317 = vpop.f32.mrb[0].mxu0
    %4318 = vmatprep.mubr.f32.mxu0 0.0
    %4319 = vmatmul.mubr.f32.gmra.mrb[0].mxu0 %v4025
    %v4320 = vpop.f32.mrb[0].mxu0
    %v4321 = vadd.f32 0.0, %v4320
    %v4322 = vpop.f32.mrb[0].mxu0
    %4323 = vmatprep.mubr.f32.mxu0 0.0
    %4324 = vmatmul.mubr.f32.gmra.mrb[0].mxu0 %v4028
    %v4325 = vpop.f32.mrb[0].mxu0
    %v4326 = vadd.f32 0.0, %v4325
    %v4327 = vpop.f32.mrb[0].mxu0
    %4328 = vmatprep.mubr.f32.mxu0 0.0
    %4329 = vmatmul.mubr.f32.gmra.mrb[0].mxu0 %v4031
    %v4330 = vpop.f32.mrb[0].mxu0
    %v4331 = vadd.f32 0.0, %v4330
    %v4332 = vpop.f32.mrb[0].mxu0
    %4333 = vmatprep.mubr.f32.mxu0 0.0
    %4334 = vmatmul.mubr.f32.gmra.mrb[0].mxu0 %v4034
    %v4335 = vpop.f32.mrb[0].mxu0
    %v4336 = vadd.f32 0.0, %v4335
    %v4337 = vpop.f32.mrb[0].mxu0
    %4338 = vmatprep.mubr.f32.mxu0 0.0
    %4339 = vmatmul.mubr.f32.gmra.mrb[0].mxu0 %v4037
    %v4340 = vpop.f32.mrb[0].mxu0
    %v4341 = vadd.f32 0.0, %v4340
    %v4342 = vpop.f32.mrb[0].mxu0
    %4343 = vmatprep.mubr.f32.mxu0 0.0
    %4344 = vmatmul.mubr.f32.gmra.mrb[0].mxu0 %v4040
    %v4345 = vpop.f32.mrb[0].mxu0
    %v4346 = vadd.f32 0.0, %v4345
    %v4347 = vpop.f32.mrb[0].mxu0
    %4348 = vmatprep.mubr.f32.mxu0 0.0
    %4349 = vmatmul.mubr.f32.gmra.mrb[0].mxu0 %v4043
    %v4350 = vpop.f32.mrb[0].mxu0
    %v4351 = vadd.f32 0.0, %v4350
    %v4352 = vpop.f32.mrb[0].mxu0
    %4353 = vmatprep.mubr.f32.mxu0 0.0
    %4354 = vmatmul.mubr.f32.gmra.mrb[0].mxu0 %v4046
    %v4355 = vpop.f32.mrb[0].mxu0
    %v4356 = vadd.f32 0.0, %v4355
    %v4357 = vpop.f32.mrb[0].mxu0
    %4358 = vmatprep.mubr.f32.mxu0 0.0
    %4359 = vmatmul.mubr.f32.gmra.mrb[0].mxu0 %v4049
    %v4360 = vpop.f32.mrb[0].mxu0
    %v4361 = vadd.f32 0.0, %v4360
    %v4362 = vpop.f32.mrb[0].mxu0
    %4363 = vmatprep.mubr.f32.mxu0 0.0
    %4364 = vmatmul.mubr.f32.gmra.mrb[0].mxu0 %v4052
    %v4365 = vpop.f32.mrb[0].mxu0
    %v4366 = vadd.f32 0.0, %v4365
    %v4367 = vpop.f32.mrb[0].mxu0
    %4368 = vmatprep.mubr.f32.mxu0 0.0
    %4369 = vmatmul.mubr.f32.gmra.mrb[0].mxu0 %v4055
    %v4370 = vpop.f32.mrb[0].mxu0
    %v4371 = vadd.f32 0.0, %v4370
    %v4372 = vpop.f32.mrb[0].mxu0
    %4373 = vmatprep.mubr.f32.mxu0 0.0
    %4374 = vmatmul.mubr.f32.gmra.mrb[0].mxu0 %v4058
    %v4375 = vpop.f32.mrb[0].mxu0
    %v4376 = vadd.f32 0.0, %v4375
    %v4377 = vpop.f32.mrb[0].mxu0
    %4378 = vmatprep.mubr.f32.mxu0 0.0
    %4379 = vmatmul.mubr.f32.gmra.mrb[0].mxu0 %v4061
    %v4380 = vpop.f32.mrb[0].mxu0
    %v4381 = vadd.f32 0.0, %v4380
    %v4382 = vpop.f32.mrb[0].mxu0
    %4383 = vmatprep.mubr.f32.mxu0 0.0
    %4384 = vmatmul.mubr.f32.gmra.mrb[0].mxu0 %v4064
    %v4385 = vpop.f32.mrb[0].mxu0
    %v4386 = vadd.f32 0.0, %v4385
    %v4387 = vpop.f32.mrb[0].mxu0
    %4388 = vmatprep.mubr.f32.mxu0 0.0
    %4389 = vmatmul.mubr.f32.gmra.mrb[0].mxu0 %v4067
    %v4390 = vpop.f32.mrb[0].mxu0
    %v4391 = vadd.f32 0.0, %v4390
    %v4392 = vpop.f32.mrb[0].mxu0
    %4393 = vmatprep.mubr.f32.mxu0 0.0
    %4394 = vmatmul.mubr.f32.gmra.mrb[0].mxu0 %v4070
    %v4395 = vpop.f32.mrb[0].mxu0
    %v4396 = vadd.f32 0.0, %v4395
    %v4397 = vpop.f32.mrb[0].mxu0
    %4398 = vmatprep.mubr.f32.mxu0 0.0
    %4399 = vmatmul.mubr.f32.gmra.mrb[0].mxu0 %v4073
    %v4400 = vpop.f32.mrb[0].mxu0
    %v4401 = vadd.f32 0.0, %v4400
    %v4402 = vpop.f32.mrb[0].mxu0
    %4403 = vmatprep.mubr.f32.mxu0 0.0
    %4404 = vmatmul.mubr.f32.gmra.mrb[0].mxu0 %v4076
    %v4405 = vpop.f32.mrb[0].mxu0
    %v4406 = vadd.f32 0.0, %v4405
    %v4407 = vpop.f32.mrb[0].mxu0
    %4408 = vmatprep.mubr.f32.mxu0 0.0
    %4409 = vmatmul.mubr.f32.gmra.mrb[0].mxu0 %v4079
    %v4410 = vpop.f32.mrb[0].mxu0
    %v4411 = vadd.f32 0.0, %v4410
    %v4412 = vpop.f32.mrb[0].mxu0
    %4413 = vmatprep.mubr.f32.mxu0 0.0
    %4414 = vmatmul.mubr.f32.gmra.mrb[0].mxu0 %v4082
    %v4415 = vpop.f32.mrb[0].mxu0
    %v4416 = vadd.f32 0.0, %v4415
    %v4417 = vpop.f32.mrb[0].mxu0
    %4418 = vmatprep.mubr.f32.mxu0 0.0
    %4419 = vmatmul.mubr.f32.gmra.mrb[0].mxu0 %v4085
    %v4420 = vpop.f32.mrb[0].mxu0
    %v4421 = vadd.f32 0.0, %v4420
    %v4422 = vpop.f32.mrb[0].mxu0
    %4423 = vmatprep.mubr.f32.mxu0 0.0
    %4424 = vmatmul.mubr.f32.gmra.mrb[0].mxu0 %v4088
    %v4425 = vpop.f32.mrb[0].mxu0
    %v4426 = vadd.f32 0.0, %v4425
    %v4427 = vpop.f32.mrb[0].mxu0
    %4428 = vmatprep.mubr.f32.mxu0 0.0
    %4429 = vmatmul.mubr.f32.gmra.mrb[0].mxu0 %v4091
    %v4430 = vpop.f32.mrb[0].mxu0
    %v4431 = vadd.f32 0.0, %v4430
    %v4432 = vpop.f32.mrb[0].mxu0
    %4433 = vmatprep.mubr.f32.mxu0 0.0
    %4434 = vmatmul.mubr.f32.gmra.mrb[0].mxu0 %v4094
    %v4435 = vpop.f32.mrb[0].mxu0
    %v4436 = vadd.f32 0.0, %v4435
    %v4437 = vpop.f32.mrb[0].mxu0
    %4438 = vmatprep.mubr.f32.mxu0 0.0
    %4439 = vmatmul.mubr.f32.gmra.mrb[0].mxu0 %v4097
    %v4440 = vpop.f32.mrb[0].mxu0
    %v4441 = vadd.f32 0.0, %v4440
    %v4442 = vpop.f32.mrb[0].mxu0
    %4443 = vmatprep.mubr.f32.mxu0 0.0
    %4444 = vmatmul.mubr.f32.gmra.mrb[0].mxu0 %v4100
    %v4445 = vpop.f32.mrb[0].mxu0
    %v4446 = vadd.f32 0.0, %v4445
    %v4447 = vpop.f32.mrb[0].mxu0
    %4448 = vmatprep.mubr.f32.mxu0 0.0
    %4449 = vmatmul.mubr.f32.gmra.mrb[0].mxu0 %v4103
    %v4450 = vpop.f32.mrb[0].mxu0
    %v4451 = vadd.f32 0.0, %v4450
    %v4452 = vpop.f32.mrb[0].mxu0
    %4453 = vmatprep.mubr.f32.mxu0 0.0
    %4454 = vmatmul.mubr.f32.gmra.mrb[0].mxu0 %v4106
    %v4455 = vpop.f32.mrb[0].mxu0
    %v4456 = vadd.f32 0.0, %v4455
    %v4457 = vpop.f32.mrb[0].mxu0
    %4458 = vmatprep.mubr.f32.mxu0 0.0
    %4459 = vmatmul.mubr.f32.gmra.mrb[0].mxu0 %v4109
    %v4460 = vpop.f32.mrb[0].mxu0
    %v4461 = vadd.f32 0.0, %v4460
    %v4462 = vpop.f32.mrb[0].mxu0
    %4463 = vmatprep.mubr.f32.mxu0 0.0
    %4464 = vmatmul.mubr.f32.gmra.mrb[0].mxu0 %v4112
    %v4465 = vpop.f32.mrb[0].mxu0
    %v4466 = vadd.f32 0.0, %v4465
    %v4467 = vpop.f32.mrb[0].mxu0
    %4468 = vmatprep.mubr.f32.mxu0 0.0
    %4469 = vmatmul.mubr.f32.gmra.mrb[0].mxu0 %v4115
    %v4470 = vpop.f32.mrb[0].mxu0
    %v4471 = vadd.f32 0.0, %v4470
    %v4472 = vpop.f32.mrb[0].mxu0
    %4473 = vmatprep.mubr.f32.mxu0 0.0
    %4474 = vmatmul.mubr.f32.gmra.mrb[0].mxu0 %v4118
    %v4475 = vpop.f32.mrb[0].mxu0
    %v4476 = vadd.f32 0.0, %v4475
    %v4477 = vpop.f32.mrb[0].mxu0
    %4478 = vmatprep.mubr.f32.mxu0 0.0
    %4479 = vmatmul.mubr.f32.gmra.mrb[0].mxu0 %v4121
    %v4480 = vpop.f32.mrb[0].mxu0
    %v4481 = vadd.f32 0.0, %v4480
    %v4482 = vpop.f32.mrb[0].mxu0
    %4483 = vmatprep.mubr.f32.mxu0 0.0
    %4484 = vmatmul.mubr.f32.gmra.mrb[0].mxu0 %v4124
    %v4485 = vpop.f32.mrb[0].mxu0
    %v4486 = vadd.f32 0.0, %v4485
    %v4487 = vpop.f32.mrb[0].mxu0
    %4488 = vmatprep.mubr.f32.mxu0 0.0
    %4489 = vmatmul.mubr.f32.gmra.mrb[0].mxu0 %v4127
    %v4490 = vpop.f32.mrb[0].mxu0
    %v4491 = vadd.f32 0.0, %v4490
    %v4492 = vpop.f32.mrb[0].mxu0
    %4493 = vmatprep.mubr.f32.mxu0 0.0
    %4494 = vmatmul.mubr.f32.gmra.mrb[0].mxu0 %v4130
    %v4495 = vpop.f32.mrb[0].mxu0
    %v4496 = vadd.f32 0.0, %v4495
    %v4497 = vpop.f32.mrb[0].mxu0
    %4498 = vmatprep.mubr.f32.mxu0 0.0
    %4499 = vmatmul.mubr.f32.gmra.mrb[0].mxu0 %v4133
    %v4500 = vpop.f32.mrb[0].mxu0
    %v4501 = vadd.f32 0.0, %v4500
    %v4502 = vpop.f32.mrb[0].mxu0
    %4503 = vmatprep.mubr.f32.mxu0 0.0
    %4504 = vmatmul.mubr.f32.gmra.mrb[0].mxu0 %v4136
    %v4505 = vpop.f32.mrb[0].mxu0
    %v4506 = vadd.f32 0.0, %v4505
    %v4507 = vpop.f32.mrb[0].mxu0
    %4508 = vmatprep.mubr.f32.mxu0 0.0
    %4509 = vmatmul.mubr.f32.gmra.mrb[0].mxu0 %v4139
    %v4510 = vpop.f32.mrb[0].mxu0
    %v4511 = vadd.f32 0.0, %v4510
    %v4512 = vpop.f32.mrb[0].mxu0
    %4513 = vmatprep.mubr.f32.mxu0 0.0
    %4514 = vmatmul.mubr.f32.gmra.mrb[0].mxu0 %v4142
    %v4515 = vpop.f32.mrb[0].mxu0
    %v4516 = vadd.f32 0.0, %v4515
    %v4517 = vpop.f32.mrb[0].mxu0
    %4518 = vdwg.mxu0
    %v4520 = vsel %vm191, %v3830, 0
    %v4523 = vsel %vm191, %v3831, 0
    %v4526 = vsel %vm191, %v3832, 0
    %v4529 = vsel %vm191, %v3833, 0
    %v4532 = vsel %vm191, %v3834, 0
    %v4535 = vsel %vm191, %v3835, 0
    %v4538 = vsel %vm191, %v3836, 0
    %v4541 = vsel %vm191, %v3837, 0
    %v4544 = vsel %vm191, %v3838, 0
    %v4547 = vsel %vm191, %v3839, 0
    %v4550 = vsel %vm191, %v3840, 0
    %v4553 = vsel %vm191, %v3841, 0
    %v4556 = vsel %vm191, %v3842, 0
    %v4559 = vsel %vm191, %v3843, 0
    %v4562 = vsel %vm191, %v3844, 0
    %v4565 = vsel %vm191, %v3845, 0
    %v4568 = vsel %vm191, %v3846, 0
    %v4571 = vsel %vm191, %v3847, 0
    %v4574 = vsel %vm191, %v3848, 0
    %v4577 = vsel %vm191, %v3849, 0
    %v4580 = vsel %vm191, %v3850, 0
    %v4583 = vsel %vm191, %v3851, 0
    %v4586 = vsel %vm191, %v3852, 0
    %v4589 = vsel %vm191, %v3853, 0
    %v4592 = vsel %vm191, %v3854, 0
    %v4595 = vsel %vm191, %v3855, 0
    %v4598 = vsel %vm191, %v3856, 0
    %v4601 = vsel %vm191, %v3857, 0
    %v4604 = vsel %vm191, %v3858, 0
    %v4607 = vsel %vm191, %v3859, 0
    %v4610 = vsel %vm191, %v3860, 0
    %v4613 = vsel %vm191, %v3861, 0
    %v4616 = vsel %vm191, %v3862, 0
    %v4619 = vsel %vm191, %v3863, 0
    %v4622 = vsel %vm191, %v3864, 0
    %v4625 = vsel %vm191, %v3865, 0
    %v4628 = vsel %vm191, %v3866, 0
    %v4631 = vsel %vm191, %v3867, 0
    %v4634 = vsel %vm191, %v3868, 0
    %v4637 = vsel %vm191, %v3869, 0
    %v4640 = vsel %vm191, %v3870, 0
    %v4643 = vsel %vm191, %v3871, 0
    %v4646 = vsel %vm191, %v3872, 0
    %v4649 = vsel %vm191, %v3873, 0
    %v4652 = vsel %vm191, %v3874, 0
    %v4655 = vsel %vm191, %v3875, 0
    %v4658 = vsel %vm191, %v3876, 0
    %v4661 = vsel %vm191, %v3877, 0
    %v4664 = vsel %vm191, %v3878, 0
    %v4667 = vsel %vm191, %v3879, 0
    %v4670 = vsel %vm191, %v3880, 0
    %v4673 = vsel %vm191, %v3881, 0
    %v4676 = vsel %vm191, %v3882, 0
    %v4679 = vsel %vm191, %v3883, 0
    %v4682 = vsel %vm191, %v3884, 0
    %v4685 = vsel %vm191, %v3885, 0
    %v4688 = vsel %vm191, %v3886, 0
    %v4691 = vsel %vm191, %v3887, 0
    %v4694 = vsel %vm191, %v3888, 0
    %v4697 = vsel %vm191, %v3889, 0
    %v4700 = vsel %vm191, %v3890, 0
    %v4703 = vsel %vm191, %v3891, 0
    %4705 = vmatprep.subr.mxu0 0.0
    %4706 = vmatpush1.msra.mxu0 %v3892
    %4707 = vmatprep.subr.mxu0 0.0
    %4708 = vmatpush1.msra.mxu0 %v3893
    %4709 = vmatprep.subr.mxu0 0.0
    %4710 = vmatpush1.msra.mxu0 0.0
    %4711 = vmatprep.subr.mxu0 0.0
    %4712 = vmatpush1.msra.mxu0 0.0
    %4713 = vmatprep.subr.mxu0 0.0
    %4714 = vmatpush1.msra.mxu0 0.0
    %4715 = vmatprep.subr.mxu0 0.0
    %4716 = vmatpush1.msra.mxu0 0.0
    %4717 = vmatprep.subr.mxu0 0.0
    %4718 = vmatpush1.msra.mxu0 0.0
    %4719 = vmatprep.subr.mxu0 0.0
    %4720 = vmatpush1.msra.mxu0 0.0
    %4721 = vmatprep.subr.mxu0 0.0
    %4722 = vmatpush1.msra.mxu0 0.0
    %4723 = vmatprep.subr.mxu0 0.0
    %4724 = vmatpush1.msra.mxu0 0.0
    %4725 = vmatprep.subr.mxu0 0.0
    %4726 = vmatpush1.msra.mxu0 0.0
    %4727 = vmatprep.subr.mxu0 0.0
    %4728 = vmatpush1.msra.mxu0 0.0
    %4729 = vmatprep.subr.mxu0 0.0
    %4730 = vmatpush1.msra.mxu0 0.0
    %4731 = vmatprep.subr.mxu0 0.0
    %4732 = vmatpush1.msra.mxu0 0.0
    %4733 = vmatprep.subr.mxu0 0.0
    %4734 = vmatpush1.msra.mxu0 0.0
    %4735 = vmatprep.subr.mxu0 0.0
    %4736 = vmatpush1.msra.mxu0 0.0
    %4737 = vmatprep.subr.mxu0 0.0
    %4738 = vmatpush1.msra.mxu0 0.0
    %4739 = vmatprep.subr.mxu0 0.0
    %4740 = vmatpush1.msra.mxu0 0.0
    %4741 = vmatprep.subr.mxu0 0.0
    %4742 = vmatpush1.msra.mxu0 0.0
    %4743 = vmatprep.subr.mxu0 0.0
    %4744 = vmatpush1.msra.mxu0 0.0
    %4745 = vmatprep.subr.mxu0 0.0
    %4746 = vmatpush1.msra.mxu0 0.0
    %4747 = vmatprep.subr.mxu0 0.0
    %4748 = vmatpush1.msra.mxu0 0.0
    %4749 = vmatprep.subr.mxu0 0.0
    %4750 = vmatpush1.msra.mxu0 0.0
    %4751 = vmatprep.subr.mxu0 0.0
    %4752 = vmatpush1.msra.mxu0 0.0
    %4753 = vmatprep.subr.mxu0 0.0
    %4754 = vmatpush1.msra.mxu0 0.0
    %4755 = vmatprep.subr.mxu0 0.0
    %4756 = vmatpush1.msra.mxu0 0.0
    %4757 = vmatprep.subr.mxu0 0.0
    %4758 = vmatpush1.msra.mxu0 0.0
    %4759 = vmatprep.subr.mxu0 0.0
    %4760 = vmatpush1.msra.mxu0 0.0
    %4761 = vmatprep.subr.mxu0 0.0
    %4762 = vmatpush1.msra.mxu0 0.0
    %4763 = vmatprep.subr.mxu0 0.0
    %4764 = vmatpush1.msra.mxu0 0.0
    %4765 = vmatprep.subr.mxu0 0.0
    %4766 = vmatpush1.msra.mxu0 0.0
    %4767 = vmatprep.subr.mxu0 0.0
    %4768 = vmatpush1.msra.mxu0 0.0
    %4769 = vmatprep.mubr.f32.mxu0 0.0
    %4770 = vmatmul.mubr.f32.gmra.mrb[0].mxu0 %v4520
    %v4771 = vpop.f32.mrb[0].mxu0
    %v4772 = vadd.f32 %v4211, %v4771
    %v4773 = vpop.f32.mrb[0].mxu0
    %4774 = vmatprep.mubr.f32.mxu0 0.0
    %4775 = vmatmul.mubr.f32.gmra.mrb[0].mxu0 %v4523
    %v4776 = vpop.f32.mrb[0].mxu0
    %v4777 = vadd.f32 %v4216, %v4776
    %v4778 = vpop.f32.mrb[0].mxu0
    %4779 = vmatprep.mubr.f32.mxu0 0.0
    %4780 = vmatmul.mubr.f32.gmra.mrb[0].mxu0 %v4526
    %v4781 = vpop.f32.mrb[0].mxu0
    %v4782 = vadd.f32 %v4221, %v4781
    %v4783 = vpop.f32.mrb[0].mxu0
    %4784 = vmatprep.mubr.f32.mxu0 0.0
    %4785 = vmatmul.mubr.f32.gmra.mrb[0].mxu0 %v4529
    %v4786 = vpop.f32.mrb[0].mxu0
    %v4787 = vadd.f32 %v4226, %v4786
    %v4788 = vpop.f32.mrb[0].mxu0
    %4789 = vmatprep.mubr.f32.mxu0 0.0
    %4790 = vmatmul.mubr.f32.gmra.mrb[0].mxu0 %v4532
    %v4791 = vpop.f32.mrb[0].mxu0
    %v4792 = vadd.f32 %v4231, %v4791
    %v4793 = vpop.f32.mrb[0].mxu0
    %4794 = vmatprep.mubr.f32.mxu0 0.0
    %4795 = vmatmul.mubr.f32.gmra.mrb[0].mxu0 %v4535
    %v4796 = vpop.f32.mrb[0].mxu0
    %v4797 = vadd.f32 %v4236, %v4796
    %v4798 = vpop.f32.mrb[0].mxu0
    %4799 = vmatprep.mubr.f32.mxu0 0.0
    %4800 = vmatmul.mubr.f32.gmra.mrb[0].mxu0 %v4538
    %v4801 = vpop.f32.mrb[0].mxu0
    %v4802 = vadd.f32 %v4241, %v4801
    %v4803 = vpop.f32.mrb[0].mxu0
    %4804 = vmatprep.mubr.f32.mxu0 0.0
    %4805 = vmatmul.mubr.f32.gmra.mrb[0].mxu0 %v4541
    %v4806 = vpop.f32.mrb[0].mxu0
    %v4807 = vadd.f32 %v4246, %v4806
    %v4808 = vpop.f32.mrb[0].mxu0
    %4809 = vmatprep.mubr.f32.mxu0 0.0
    %4810 = vmatmul.mubr.f32.gmra.mrb[0].mxu0 %v4544
    %v4811 = vpop.f32.mrb[0].mxu0
    %v4812 = vadd.f32 %v4251, %v4811
    %v4813 = vpop.f32.mrb[0].mxu0
    %4814 = vmatprep.mubr.f32.mxu0 0.0
    %4815 = vmatmul.mubr.f32.gmra.mrb[0].mxu0 %v4547
    %v4816 = vpop.f32.mrb[0].mxu0
    %v4817 = vadd.f32 %v4256, %v4816
    %v4818 = vpop.f32.mrb[0].mxu0
    %4819 = vmatprep.mubr.f32.mxu0 0.0
    %4820 = vmatmul.mubr.f32.gmra.mrb[0].mxu0 %v4550
    %v4821 = vpop.f32.mrb[0].mxu0
    %v4822 = vadd.f32 %v4261, %v4821
    %v4823 = vpop.f32.mrb[0].mxu0
    %4824 = vmatprep.mubr.f32.mxu0 0.0
    %4825 = vmatmul.mubr.f32.gmra.mrb[0].mxu0 %v4553
    %v4826 = vpop.f32.mrb[0].mxu0
    %v4827 = vadd.f32 %v4266, %v4826
    %v4828 = vpop.f32.mrb[0].mxu0
    %4829 = vmatprep.mubr.f32.mxu0 0.0
    %4830 = vmatmul.mubr.f32.gmra.mrb[0].mxu0 %v4556
    %v4831 = vpop.f32.mrb[0].mxu0
    %v4832 = vadd.f32 %v4271, %v4831
    %v4833 = vpop.f32.mrb[0].mxu0
    %4834 = vmatprep.mubr.f32.mxu0 0.0
    %4835 = vmatmul.mubr.f32.gmra.mrb[0].mxu0 %v4559
    %v4836 = vpop.f32.mrb[0].mxu0
    %v4837 = vadd.f32 %v4276, %v4836
    %v4838 = vpop.f32.mrb[0].mxu0
    %4839 = vmatprep.mubr.f32.mxu0 0.0
    %4840 = vmatmul.mubr.f32.gmra.mrb[0].mxu0 %v4562
    %v4841 = vpop.f32.mrb[0].mxu0
    %v4842 = vadd.f32 %v4281, %v4841
    %v4843 = vpop.f32.mrb[0].mxu0
    %4844 = vmatprep.mubr.f32.mxu0 0.0
    %4845 = vmatmul.mubr.f32.gmra.mrb[0].mxu0 %v4565
    %v4846 = vpop.f32.mrb[0].mxu0
    %v4847 = vadd.f32 %v4286, %v4846
    %v4848 = vpop.f32.mrb[0].mxu0
    %4849 = vmatprep.mubr.f32.mxu0 0.0
    %4850 = vmatmul.mubr.f32.gmra.mrb[0].mxu0 %v4568
    %v4851 = vpop.f32.mrb[0].mxu0
    %v4852 = vadd.f32 %v4291, %v4851
    %v4853 = vpop.f32.mrb[0].mxu0
    %4854 = vmatprep.mubr.f32.mxu0 0.0
    %4855 = vmatmul.mubr.f32.gmra.mrb[0].mxu0 %v4571
    %v4856 = vpop.f32.mrb[0].mxu0
    %v4857 = vadd.f32 %v4296, %v4856
    %v4858 = vpop.f32.mrb[0].mxu0
    %4859 = vmatprep.mubr.f32.mxu0 0.0
    %4860 = vmatmul.mubr.f32.gmra.mrb[0].mxu0 %v4574
    %v4861 = vpop.f32.mrb[0].mxu0
    %v4862 = vadd.f32 %v4301, %v4861
    %v4863 = vpop.f32.mrb[0].mxu0
    %4864 = vmatprep.mubr.f32.mxu0 0.0
    %4865 = vmatmul.mubr.f32.gmra.mrb[0].mxu0 %v4577
    %v4866 = vpop.f32.mrb[0].mxu0
    %v4867 = vadd.f32 %v4306, %v4866
    %v4868 = vpop.f32.mrb[0].mxu0
    %4869 = vmatprep.mubr.f32.mxu0 0.0
    %4870 = vmatmul.mubr.f32.gmra.mrb[0].mxu0 %v4580
    %v4871 = vpop.f32.mrb[0].mxu0
    %v4872 = vadd.f32 %v4311, %v4871
    %v4873 = vpop.f32.mrb[0].mxu0
    %4874 = vmatprep.mubr.f32.mxu0 0.0
    %4875 = vmatmul.mubr.f32.gmra.mrb[0].mxu0 %v4583
    %v4876 = vpop.f32.mrb[0].mxu0
    %v4877 = vadd.f32 %v4316, %v4876
    %v4878 = vpop.f32.mrb[0].mxu0
    %4879 = vmatprep.mubr.f32.mxu0 0.0
    %4880 = vmatmul.mubr.f32.gmra.mrb[0].mxu0 %v4586
    %v4881 = vpop.f32.mrb[0].mxu0
    %v4882 = vadd.f32 %v4321, %v4881
    %v4883 = vpop.f32.mrb[0].mxu0
    %4884 = vmatprep.mubr.f32.mxu0 0.0
    %4885 = vmatmul.mubr.f32.gmra.mrb[0].mxu0 %v4589
    %v4886 = vpop.f32.mrb[0].mxu0
    %v4887 = vadd.f32 %v4326, %v4886
    %v4888 = vpop.f32.mrb[0].mxu0
    %4889 = vmatprep.mubr.f32.mxu0 0.0
    %4890 = vmatmul.mubr.f32.gmra.mrb[0].mxu0 %v4592
    %v4891 = vpop.f32.mrb[0].mxu0
    %v4892 = vadd.f32 %v4331, %v4891
    %v4893 = vpop.f32.mrb[0].mxu0
    %4894 = vmatprep.mubr.f32.mxu0 0.0
    %4895 = vmatmul.mubr.f32.gmra.mrb[0].mxu0 %v4595
    %v4896 = vpop.f32.mrb[0].mxu0
    %v4897 = vadd.f32 %v4336, %v4896
    %v4898 = vpop.f32.mrb[0].mxu0
    %4899 = vmatprep.mubr.f32.mxu0 0.0
    %4900 = vmatmul.mubr.f32.gmra.mrb[0].mxu0 %v4598
    %v4901 = vpop.f32.mrb[0].mxu0
    %v4902 = vadd.f32 %v4341, %v4901
    %v4903 = vpop.f32.mrb[0].mxu0
    %4904 = vmatprep.mubr.f32.mxu0 0.0
    %4905 = vmatmul.mubr.f32.gmra.mrb[0].mxu0 %v4601
    %v4906 = vpop.f32.mrb[0].mxu0
    %v4907 = vadd.f32 %v4346, %v4906
    %v4908 = vpop.f32.mrb[0].mxu0
    %4909 = vmatprep.mubr.f32.mxu0 0.0
    %4910 = vmatmul.mubr.f32.gmra.mrb[0].mxu0 %v4604
    %v4911 = vpop.f32.mrb[0].mxu0
    %v4912 = vadd.f32 %v4351, %v4911
    %v4913 = vpop.f32.mrb[0].mxu0
    %4914 = vmatprep.mubr.f32.mxu0 0.0
    %4915 = vmatmul.mubr.f32.gmra.mrb[0].mxu0 %v4607
    %v4916 = vpop.f32.mrb[0].mxu0
    %v4917 = vadd.f32 %v4356, %v4916
    %v4918 = vpop.f32.mrb[0].mxu0
    %4919 = vmatprep.mubr.f32.mxu0 0.0
    %4920 = vmatmul.mubr.f32.gmra.mrb[0].mxu0 %v4610
    %v4921 = vpop.f32.mrb[0].mxu0
    %v4922 = vadd.f32 %v4361, %v4921
    %v4923 = vpop.f32.mrb[0].mxu0
    %4924 = vmatprep.mubr.f32.mxu0 0.0
    %4925 = vmatmul.mubr.f32.gmra.mrb[0].mxu0 %v4613
    %v4926 = vpop.f32.mrb[0].mxu0
    %v4927 = vadd.f32 %v4366, %v4926
    %v4928 = vpop.f32.mrb[0].mxu0
    %4929 = vmatprep.mubr.f32.mxu0 0.0
    %4930 = vmatmul.mubr.f32.gmra.mrb[0].mxu0 %v4616
    %v4931 = vpop.f32.mrb[0].mxu0
    %v4932 = vadd.f32 %v4371, %v4931
    %v4933 = vpop.f32.mrb[0].mxu0
    %4934 = vmatprep.mubr.f32.mxu0 0.0
    %4935 = vmatmul.mubr.f32.gmra.mrb[0].mxu0 %v4619
    %v4936 = vpop.f32.mrb[0].mxu0
    %v4937 = vadd.f32 %v4376, %v4936
    %v4938 = vpop.f32.mrb[0].mxu0
    %4939 = vmatprep.mubr.f32.mxu0 0.0
    %4940 = vmatmul.mubr.f32.gmra.mrb[0].mxu0 %v4622
    %v4941 = vpop.f32.mrb[0].mxu0
    %v4942 = vadd.f32 %v4381, %v4941
    %v4943 = vpop.f32.mrb[0].mxu0
    %4944 = vmatprep.mubr.f32.mxu0 0.0
    %4945 = vmatmul.mubr.f32.gmra.mrb[0].mxu0 %v4625
    %v4946 = vpop.f32.mrb[0].mxu0
    %v4947 = vadd.f32 %v4386, %v4946
    %v4948 = vpop.f32.mrb[0].mxu0
    %4949 = vmatprep.mubr.f32.mxu0 0.0
    %4950 = vmatmul.mubr.f32.gmra.mrb[0].mxu0 %v4628
    %v4951 = vpop.f32.mrb[0].mxu0
    %v4952 = vadd.f32 %v4391, %v4951
    %v4953 = vpop.f32.mrb[0].mxu0
    %4954 = vmatprep.mubr.f32.mxu0 0.0
    %4955 = vmatmul.mubr.f32.gmra.mrb[0].mxu0 %v4631
    %v4956 = vpop.f32.mrb[0].mxu0
    %v4957 = vadd.f32 %v4396, %v4956
    %v4958 = vpop.f32.mrb[0].mxu0
    %4959 = vmatprep.mubr.f32.mxu0 0.0
    %4960 = vmatmul.mubr.f32.gmra.mrb[0].mxu0 %v4634
    %v4961 = vpop.f32.mrb[0].mxu0
    %v4962 = vadd.f32 %v4401, %v4961
    %v4963 = vpop.f32.mrb[0].mxu0
    %4964 = vmatprep.mubr.f32.mxu0 0.0
    %4965 = vmatmul.mubr.f32.gmra.mrb[0].mxu0 %v4637
    %v4966 = vpop.f32.mrb[0].mxu0
    %v4967 = vadd.f32 %v4406, %v4966
    %v4968 = vpop.f32.mrb[0].mxu0
    %4969 = vmatprep.mubr.f32.mxu0 0.0
    %4970 = vmatmul.mubr.f32.gmra.mrb[0].mxu0 %v4640
    %v4971 = vpop.f32.mrb[0].mxu0
    %v4972 = vadd.f32 %v4411, %v4971
    %v4973 = vpop.f32.mrb[0].mxu0
    %4974 = vmatprep.mubr.f32.mxu0 0.0
    %4975 = vmatmul.mubr.f32.gmra.mrb[0].mxu0 %v4643
    %v4976 = vpop.f32.mrb[0].mxu0
    %v4977 = vadd.f32 %v4416, %v4976
    %v4978 = vpop.f32.mrb[0].mxu0
    %4979 = vmatprep.mubr.f32.mxu0 0.0
    %4980 = vmatmul.mubr.f32.gmra.mrb[0].mxu0 %v4646
    %v4981 = vpop.f32.mrb[0].mxu0
    %v4982 = vadd.f32 %v4421, %v4981
    %v4983 = vpop.f32.mrb[0].mxu0
    %4984 = vmatprep.mubr.f32.mxu0 0.0
    %4985 = vmatmul.mubr.f32.gmra.mrb[0].mxu0 %v4649
    %v4986 = vpop.f32.mrb[0].mxu0
    %v4987 = vadd.f32 %v4426, %v4986
    %v4988 = vpop.f32.mrb[0].mxu0
    %4989 = vmatprep.mubr.f32.mxu0 0.0
    %4990 = vmatmul.mubr.f32.gmra.mrb[0].mxu0 %v4652
    %v4991 = vpop.f32.mrb[0].mxu0
    %v4992 = vadd.f32 %v4431, %v4991
    %v4993 = vpop.f32.mrb[0].mxu0
    %4994 = vmatprep.mubr.f32.mxu0 0.0
    %4995 = vmatmul.mubr.f32.gmra.mrb[0].mxu0 %v4655
    %v4996 = vpop.f32.mrb[0].mxu0
    %v4997 = vadd.f32 %v4436, %v4996
    %v4998 = vpop.f32.mrb[0].mxu0
    %4999 = vmatprep.mubr.f32.mxu0 0.0
    %5000 = vmatmul.mubr.f32.gmra.mrb[0].mxu0 %v4658
    %v5001 = vpop.f32.mrb[0].mxu0
    %v5002 = vadd.f32 %v4441, %v5001
    %v5003 = vpop.f32.mrb[0].mxu0
    %5004 = vmatprep.mubr.f32.mxu0 0.0
    %5005 = vmatmul.mubr.f32.gmra.mrb[0].mxu0 %v4661
    %v5006 = vpop.f32.mrb[0].mxu0
    %v5007 = vadd.f32 %v4446, %v5006
    %v5008 = vpop.f32.mrb[0].mxu0
    %5009 = vmatprep.mubr.f32.mxu0 0.0
    %5010 = vmatmul.mubr.f32.gmra.mrb[0].mxu0 %v4664
    %v5011 = vpop.f32.mrb[0].mxu0
    %v5012 = vadd.f32 %v4451, %v5011
    %v5013 = vpop.f32.mrb[0].mxu0
    %5014 = vmatprep.mubr.f32.mxu0 0.0
    %5015 = vmatmul.mubr.f32.gmra.mrb[0].mxu0 %v4667
    %v5016 = vpop.f32.mrb[0].mxu0
    %v5017 = vadd.f32 %v4456, %v5016
    %v5018 = vpop.f32.mrb[0].mxu0
    %5019 = vmatprep.mubr.f32.mxu0 0.0
    %5020 = vmatmul.mubr.f32.gmra.mrb[0].mxu0 %v4670
    %v5021 = vpop.f32.mrb[0].mxu0
    %v5022 = vadd.f32 %v4461, %v5021
    %v5023 = vpop.f32.mrb[0].mxu0
    %5024 = vmatprep.mubr.f32.mxu0 0.0
    %5025 = vmatmul.mubr.f32.gmra.mrb[0].mxu0 %v4673
    %v5026 = vpop.f32.mrb[0].mxu0
    %v5027 = vadd.f32 %v4466, %v5026
    %v5028 = vpop.f32.mrb[0].mxu0
    %5029 = vmatprep.mubr.f32.mxu0 0.0
    %5030 = vmatmul.mubr.f32.gmra.mrb[0].mxu0 %v4676
    %v5031 = vpop.f32.mrb[0].mxu0
    %v5032 = vadd.f32 %v4471, %v5031
    %v5033 = vpop.f32.mrb[0].mxu0
    %5034 = vmatprep.mubr.f32.mxu0 0.0
    %5035 = vmatmul.mubr.f32.gmra.mrb[0].mxu0 %v4679
    %v5036 = vpop.f32.mrb[0].mxu0
    %v5037 = vadd.f32 %v4476, %v5036
    %v5038 = vpop.f32.mrb[0].mxu0
    %5039 = vmatprep.mubr.f32.mxu0 0.0
    %5040 = vmatmul.mubr.f32.gmra.mrb[0].mxu0 %v4682
    %v5041 = vpop.f32.mrb[0].mxu0
    %v5042 = vadd.f32 %v4481, %v5041
    %v5043 = vpop.f32.mrb[0].mxu0
    %5044 = vmatprep.mubr.f32.mxu0 0.0
    %5045 = vmatmul.mubr.f32.gmra.mrb[0].mxu0 %v4685
    %v5046 = vpop.f32.mrb[0].mxu0
    %v5047 = vadd.f32 %v4486, %v5046
    %v5048 = vpop.f32.mrb[0].mxu0
    %5049 = vmatprep.mubr.f32.mxu0 0.0
    %5050 = vmatmul.mubr.f32.gmra.mrb[0].mxu0 %v4688
    %v5051 = vpop.f32.mrb[0].mxu0
    %v5052 = vadd.f32 %v4491, %v5051
    %v5053 = vpop.f32.mrb[0].mxu0
    %5054 = vmatprep.mubr.f32.mxu0 0.0
    %5055 = vmatmul.mubr.f32.gmra.mrb[0].mxu0 %v4691
    %v5056 = vpop.f32.mrb[0].mxu0
    %v5057 = vadd.f32 %v4496, %v5056
    %v5058 = vpop.f32.mrb[0].mxu0
    %5059 = vmatprep.mubr.f32.mxu0 0.0
    %5060 = vmatmul.mubr.f32.gmra.mrb[0].mxu0 %v4694
    %v5061 = vpop.f32.mrb[0].mxu0
    %v5062 = vadd.f32 %v4501, %v5061
    %v5063 = vpop.f32.mrb[0].mxu0
    %5064 = vmatprep.mubr.f32.mxu0 0.0
    %5065 = vmatmul.mubr.f32.gmra.mrb[0].mxu0 %v4697
    %v5066 = vpop.f32.mrb[0].mxu0
    %v5067 = vadd.f32 %v4506, %v5066
    %v5068 = vpop.f32.mrb[0].mxu0
    %5069 = vmatprep.mubr.f32.mxu0 0.0
    %5070 = vmatmul.mubr.f32.gmra.mrb[0].mxu0 %v4700
    %v5071 = vpop.f32.mrb[0].mxu0
    %v5072 = vadd.f32 %v4511, %v5071
    %v5073 = vpop.f32.mrb[0].mxu0
    %5074 = vmatprep.mubr.f32.mxu0 0.0
    %5075 = vmatmul.mubr.f32.gmra.mrb[0].mxu0 %v4703
    %v5076 = vpop.f32.mrb[0].mxu0
    %v5077 = vadd.f32 %v4516, %v5076
    %v5078 = vpop.f32.mrb[0].mxu0
    %5079 = vdwg.mxu0
    %v5080 = vld [vmem:[%s3829 + $0x2] sm:$0xff]
    %v5081 = vld [vmem:[%s3829 + $0xa] sm:$0xff]
    %v5082 = vld [vmem:[%s3829 + $0x12] sm:$0xff]
    %v5083 = vld [vmem:[%s3829 + $0x1a] sm:$0xff]
    %v5084 = vld [vmem:[%s3829 + $0x22] sm:$0xff]
    %v5085 = vld [vmem:[%s3829 + $0x2a] sm:$0xff]
    %v5086 = vld [vmem:[%s3829 + $0x32] sm:$0xff]
    %v5087 = vld [vmem:[%s3829 + $0x3a] sm:$0xff]
    %v5088 = vld [vmem:[%s3829 + $0x42] sm:$0xff]
    %v5089 = vld [vmem:[%s3829 + $0x4a] sm:$0xff]
    %v5090 = vld [vmem:[%s3829 + $0x52] sm:$0xff]
    %v5091 = vld [vmem:[%s3829 + $0x5a] sm:$0xff]
    %v5092 = vld [vmem:[%s3829 + $0x62] sm:$0xff]
    %v5093 = vld [vmem:[%s3829 + $0x6a] sm:$0xff]
    %v5094 = vld [vmem:[%s3829 + $0x72] sm:$0xff]
    %v5095 = vld [vmem:[%s3829 + $0x7a] sm:$0xff]
    %v5096 = vld [vmem:[%s3829 + $0x82] sm:$0xff]
    %v5097 = vld [vmem:[%s3829 + $0x8a] sm:$0xff]
    %v5098 = vld [vmem:[%s3829 + $0x92] sm:$0xff]
    %v5099 = vld [vmem:[%s3829 + $0x9a] sm:$0xff]
    %v5100 = vld [vmem:[%s3829 + $0xa2] sm:$0xff]
    %v5101 = vld [vmem:[%s3829 + $0xaa] sm:$0xff]
    %v5102 = vld [vmem:[%s3829 + $0xb2] sm:$0xff]
    %v5103 = vld [vmem:[%s3829 + $0xba] sm:$0xff]
    %v5104 = vld [vmem:[%s3829 + $0xc2] sm:$0xff]
    %v5105 = vld [vmem:[%s3829 + $0xca] sm:$0xff]
    %v5106 = vld [vmem:[%s3829 + $0xd2] sm:$0xff]
    %v5107 = vld [vmem:[%s3829 + $0xda] sm:$0xff]
    %v5108 = vld [vmem:[%s3829 + $0xe2] sm:$0xff]
    %v5109 = vld [vmem:[%s3829 + $0xea] sm:$0xff]
    %v5110 = vld [vmem:[%s3829 + $0xf2] sm:$0xff]
    %v5111 = vld [vmem:[%s3829 + $0xfa] sm:$0xff]
    %v5112 = vld [vmem:[%s3829 + $0x102] sm:$0xff]
    %v5113 = vld [vmem:[%s3829 + $0x10a] sm:$0xff]
    %v5114 = vld [vmem:[%s3829 + $0x112] sm:$0xff]
    %v5115 = vld [vmem:[%s3829 + $0x11a] sm:$0xff]
    %v5116 = vld [vmem:[%s3829 + $0x122] sm:$0xff]
    %v5117 = vld [vmem:[%s3829 + $0x12a] sm:$0xff]
    %v5118 = vld [vmem:[%s3829 + $0x132] sm:$0xff]
    %v5119 = vld [vmem:[%s3829 + $0x13a] sm:$0xff]
    %v5120 = vld [vmem:[%s3829 + $0x142] sm:$0xff]
    %v5121 = vld [vmem:[%s3829 + $0x14a] sm:$0xff]
    %v5122 = vld [vmem:[%s3829 + $0x152] sm:$0xff]
    %v5123 = vld [vmem:[%s3829 + $0x15a] sm:$0xff]
    %v5124 = vld [vmem:[%s3829 + $0x162] sm:$0xff]
    %v5125 = vld [vmem:[%s3829 + $0x16a] sm:$0xff]
    %v5126 = vld [vmem:[%s3829 + $0x172] sm:$0xff]
    %v5127 = vld [vmem:[%s3829 + $0x17a] sm:$0xff]
    %v5128 = vld [vmem:[%s3829 + $0x182] sm:$0xff]
    %v5129 = vld [vmem:[%s3829 + $0x18a] sm:$0xff]
    %v5130 = vld [vmem:[%s3829 + $0x192] sm:$0xff]
    %v5131 = vld [vmem:[%s3829 + $0x19a] sm:$0xff]
    %v5132 = vld [vmem:[%s3829 + $0x1a2] sm:$0xff]
    %v5133 = vld [vmem:[%s3829 + $0x1aa] sm:$0xff]
    %v5134 = vld [vmem:[%s3829 + $0x1b2] sm:$0xff]
    %v5135 = vld [vmem:[%s3829 + $0x1ba] sm:$0xff]
    %v5136 = vld [vmem:[%s3829 + $0x1c2] sm:$0xff]
    %v5137 = vld [vmem:[%s3829 + $0x1ca] sm:$0xff]
    %v5138 = vld [vmem:[%s3829 + $0x1d2] sm:$0xff]
    %v5139 = vld [vmem:[%s3829 + $0x1da] sm:$0xff]
    %v5140 = vld [vmem:[%s3829 + $0x1e2] sm:$0xff]
    %v5141 = vld [vmem:[%s3829 + $0x1ea] sm:$0xff]
    %v5142 = vld [vmem:[%s1 + $0x20] sm:$0xff]
    %v5143 = vld [vmem:[%s1 + $0x28] sm:$0xff]
    %v5145 = vsel %vm191, %v5080, 0
    %v5148 = vsel %vm191, %v5081, 0
    %v5151 = vsel %vm191, %v5082, 0
    %v5154 = vsel %vm191, %v5083, 0
    %v5157 = vsel %vm191, %v5084, 0
    %v5160 = vsel %vm191, %v5085, 0
    %v5163 = vsel %vm191, %v5086, 0
    %v5166 = vsel %vm191, %v5087, 0
    %v5169 = vsel %vm191, %v5088, 0
    %v5172 = vsel %vm191, %v5089, 0
    %v5175 = vsel %vm191, %v5090, 0
    %v5178 = vsel %vm191, %v5091, 0
    %v5181 = vsel %vm191, %v5092, 0
    %v5184 = vsel %vm191, %v5093, 0
    %v5187 = vsel %vm191, %v5094, 0
    %v5190 = vsel %vm191, %v5095, 0
    %v5193 = vsel %vm191, %v5096, 0
    %v5196 = vsel %vm191, %v5097, 0
    %v5199 = vsel %vm191, %v5098, 0
    %v5202 = vsel %vm191, %v5099, 0
    %v5205 = vsel %vm191, %v5100, 0
    %v5208 = vsel %vm191, %v5101, 0
    %v5211 = vsel %vm191, %v5102, 0
    %v5214 = vsel %vm191, %v5103, 0
    %v5217 = vsel %vm191, %v5104, 0
    %v5220 = vsel %vm191, %v5105, 0
    %v5223 = vsel %vm191, %v5106, 0
    %v5226 = vsel %vm191, %v5107, 0
    %v5229 = vsel %vm191, %v5108, 0
    %v5232 = vsel %vm191, %v5109, 0
    %v5235 = vsel %vm191, %v5110, 0
    %v5238 = vsel %vm191, %v5111, 0
    %v5241 = vsel %vm191, %v5112, 0
    %v5244 = vsel %vm191, %v5113, 0
    %v5247 = vsel %vm191, %v5114, 0
    %v5250 = vsel %vm191, %v5115, 0
    %v5253 = vsel %vm191, %v5116, 0
    %v5256 = vsel %vm191, %v5117, 0
    %v5259 = vsel %vm191, %v5118, 0
    %v5262 = vsel %vm191, %v5119, 0
    %v5265 = vsel %vm191, %v5120, 0
    %v5268 = vsel %vm191, %v5121, 0
    %v5271 = vsel %vm191, %v5122, 0
    %v5274 = vsel %vm191, %v5123, 0
    %v5277 = vsel %vm191, %v5124, 0
    %v5280 = vsel %vm191, %v5125, 0
    %v5283 = vsel %vm191, %v5126, 0
    %v5286 = vsel %vm191, %v5127, 0
    %v5289 = vsel %vm191, %v5128, 0
    %v5292 = vsel %vm191, %v5129, 0
    %v5295 = vsel %vm191, %v5130, 0
    %v5298 = vsel %vm191, %v5131, 0
    %v5301 = vsel %vm191, %v5132, 0
    %v5304 = vsel %vm191, %v5133, 0
    %v5307 = vsel %vm191, %v5134, 0
    %v5310 = vsel %vm191, %v5135, 0
    %v5313 = vsel %vm191, %v5136, 0
    %v5316 = vsel %vm191, %v5137, 0
    %v5319 = vsel %vm191, %v5138, 0
    %v5322 = vsel %vm191, %v5139, 0
    %v5325 = vsel %vm191, %v5140, 0
    %v5328 = vsel %vm191, %v5141, 0
    %5330 = vmatprep.subr.mxu0 0.0
    %5331 = vmatpush1.msra.mxu0 %v5142
    %5332 = vmatprep.subr.mxu0 0.0
    %5333 = vmatpush1.msra.mxu0 %v5143
    %5334 = vmatprep.subr.mxu0 0.0
    %5335 = vmatpush1.msra.mxu0 0.0
    %5336 = vmatprep.subr.mxu0 0.0
    %5337 = vmatpush1.msra.mxu0 0.0
    %5338 = vmatprep.subr.mxu0 0.0
    %5339 = vmatpush1.msra.mxu0 0.0
    %5340 = vmatprep.subr.mxu0 0.0
    %5341 = vmatpush1.msra.mxu0 0.0
    %5342 = vmatprep.subr.mxu0 0.0
    %5343 = vmatpush1.msra.mxu0 0.0
    %5344 = vmatprep.subr.mxu0 0.0
    %5345 = vmatpush1.msra.mxu0 0.0
    %5346 = vmatprep.subr.mxu0 0.0
    %5347 = vmatpush1.msra.mxu0 0.0
    %5348 = vmatprep.subr.mxu0 0.0
    %5349 = vmatpush1.msra.mxu0 0.0
    %5350 = vmatprep.subr.mxu0 0.0
    %5351 = vmatpush1.msra.mxu0 0.0
    %5352 = vmatprep.subr.mxu0 0.0
    %5353 = vmatpush1.msra.mxu0 0.0
    %5354 = vmatprep.subr.mxu0 0.0
    %5355 = vmatpush1.msra.mxu0 0.0
    %5356 = vmatprep.subr.mxu0 0.0
    %5357 = vmatpush1.msra.mxu0 0.0
    %5358 = vmatprep.subr.mxu0 0.0
    %5359 = vmatpush1.msra.mxu0 0.0
    %5360 = vmatprep.subr.mxu0 0.0
    %5361 = vmatpush1.msra.mxu0 0.0
    %5362 = vmatprep.subr.mxu0 0.0
    %5363 = vmatpush1.msra.mxu0 0.0
    %5364 = vmatprep.subr.mxu0 0.0
    %5365 = vmatpush1.msra.mxu0 0.0
    %5366 = vmatprep.subr.mxu0 0.0
    %5367 = vmatpush1.msra.mxu0 0.0
    %5368 = vmatprep.subr.mxu0 0.0
    %5369 = vmatpush1.msra.mxu0 0.0
    %5370 = vmatprep.subr.mxu0 0.0
    %5371 = vmatpush1.msra.mxu0 0.0
    %5372 = vmatprep.subr.mxu0 0.0
    %5373 = vmatpush1.msra.mxu0 0.0
    %5374 = vmatprep.subr.mxu0 0.0
    %5375 = vmatpush1.msra.mxu0 0.0
    %5376 = vmatprep.subr.mxu0 0.0
    %5377 = vmatpush1.msra.mxu0 0.0
    %5378 = vmatprep.subr.mxu0 0.0
    %5379 = vmatpush1.msra.mxu0 0.0
    %5380 = vmatprep.subr.mxu0 0.0
    %5381 = vmatpush1.msra.mxu0 0.0
    %5382 = vmatprep.subr.mxu0 0.0
    %5383 = vmatpush1.msra.mxu0 0.0
    %5384 = vmatprep.subr.mxu0 0.0
    %5385 = vmatpush1.msra.mxu0 0.0
    %5386 = vmatprep.subr.mxu0 0.0
    %5387 = vmatpush1.msra.mxu0 0.0
    %5388 = vmatprep.subr.mxu0 0.0
    %5389 = vmatpush1.msra.mxu0 0.0
    %5390 = vmatprep.subr.mxu0 0.0
    %5391 = vmatpush1.msra.mxu0 0.0
    %5392 = vmatprep.subr.mxu0 0.0
    %5393 = vmatpush1.msra.mxu0 0.0
    %5394 = vmatprep.mubr.f32.mxu0 0.0
    %5395 = vmatmul.mubr.f32.gmra.mrb[0].mxu0 %v5145
    %v5396 = vpop.f32.mrb[0].mxu0
    %v5397 = vadd.f32 0.0, %v5396
    %v5398 = vpop.f32.mrb[0].mxu0
    %5399 = vmatprep.mubr.f32.mxu0 0.0
    %5400 = vmatmul.mubr.f32.gmra.mrb[0].mxu0 %v5148
    %v5401 = vpop.f32.mrb[0].mxu0
    %v5402 = vadd.f32 0.0, %v5401
    %v5403 = vpop.f32.mrb[0].mxu0
    %5404 = vmatprep.mubr.f32.mxu0 0.0
    %5405 = vmatmul.mubr.f32.gmra.mrb[0].mxu0 %v5151
    %v5406 = vpop.f32.mrb[0].mxu0
    %v5407 = vadd.f32 0.0, %v5406
    %v5408 = vpop.f32.mrb[0].mxu0
    %5409 = vmatprep.mubr.f32.mxu0 0.0
    %5410 = vmatmul.mubr.f32.gmra.mrb[0].mxu0 %v5154
    %v5411 = vpop.f32.mrb[0].mxu0
    %v5412 = vadd.f32 0.0, %v5411
    %v5413 = vpop.f32.mrb[0].mxu0
    %5414 = vmatprep.mubr.f32.mxu0 0.0
    %5415 = vmatmul.mubr.f32.gmra.mrb[0].mxu0 %v5157
    %v5416 = vpop.f32.mrb[0].mxu0
    %v5417 = vadd.f32 0.0, %v5416
    %v5418 = vpop.f32.mrb[0].mxu0
    %5419 = vmatprep.mubr.f32.mxu0 0.0
    %5420 = vmatmul.mubr.f32.gmra.mrb[0].mxu0 %v5160
    %v5421 = vpop.f32.mrb[0].mxu0
    %v5422 = vadd.f32 0.0, %v5421
    %v5423 = vpop.f32.mrb[0].mxu0
    %5424 = vmatprep.mubr.f32.mxu0 0.0
    %5425 = vmatmul.mubr.f32.gmra.mrb[0].mxu0 %v5163
    %v5426 = vpop.f32.mrb[0].mxu0
    %v5427 = vadd.f32 0.0, %v5426
    %v5428 = vpop.f32.mrb[0].mxu0
    %5429 = vmatprep.mubr.f32.mxu0 0.0
    %5430 = vmatmul.mubr.f32.gmra.mrb[0].mxu0 %v5166
    %v5431 = vpop.f32.mrb[0].mxu0
    %v5432 = vadd.f32 0.0, %v5431
    %v5433 = vpop.f32.mrb[0].mxu0
    %5434 = vmatprep.mubr.f32.mxu0 0.0
    %5435 = vmatmul.mubr.f32.gmra.mrb[0].mxu0 %v5169
    %v5436 = vpop.f32.mrb[0].mxu0
    %v5437 = vadd.f32 0.0, %v5436
    %v5438 = vpop.f32.mrb[0].mxu0
    %5439 = vmatprep.mubr.f32.mxu0 0.0
    %5440 = vmatmul.mubr.f32.gmra.mrb[0].mxu0 %v5172
    %v5441 = vpop.f32.mrb[0].mxu0
    %v5442 = vadd.f32 0.0, %v5441
    %v5443 = vpop.f32.mrb[0].mxu0
    %5444 = vmatprep.mubr.f32.mxu0 0.0
    %5445 = vmatmul.mubr.f32.gmra.mrb[0].mxu0 %v5175
    %v5446 = vpop.f32.mrb[0].mxu0
    %v5447 = vadd.f32 0.0, %v5446
    %v5448 = vpop.f32.mrb[0].mxu0
    %5449 = vmatprep.mubr.f32.mxu0 0.0
    %5450 = vmatmul.mubr.f32.gmra.mrb[0].mxu0 %v5178
    %v5451 = vpop.f32.mrb[0].mxu0
    %v5452 = vadd.f32 0.0, %v5451
    %v5453 = vpop.f32.mrb[0].mxu0
    %5454 = vmatprep.mubr.f32.mxu0 0.0
    %5455 = vmatmul.mubr.f32.gmra.mrb[0].mxu0 %v5181
    %v5456 = vpop.f32.mrb[0].mxu0
    %v5457 = vadd.f32 0.0, %v5456
    %v5458 = vpop.f32.mrb[0].mxu0
    %5459 = vmatprep.mubr.f32.mxu0 0.0
    %5460 = vmatmul.mubr.f32.gmra.mrb[0].mxu0 %v5184
    %v5461 = vpop.f32.mrb[0].mxu0
    %v5462 = vadd.f32 0.0, %v5461
    %v5463 = vpop.f32.mrb[0].mxu0
    %5464 = vmatprep.mubr.f32.mxu0 0.0
    %5465 = vmatmul.mubr.f32.gmra.mrb[0].mxu0 %v5187
    %v5466 = vpop.f32.mrb[0].mxu0
    %v5467 = vadd.f32 0.0, %v5466
    %v5468 = vpop.f32.mrb[0].mxu0
    %5469 = vmatprep.mubr.f32.mxu0 0.0
    %5470 = vmatmul.mubr.f32.gmra.mrb[0].mxu0 %v5190
    %v5471 = vpop.f32.mrb[0].mxu0
    %v5472 = vadd.f32 0.0, %v5471
    %v5473 = vpop.f32.mrb[0].mxu0
    %5474 = vmatprep.mubr.f32.mxu0 0.0
    %5475 = vmatmul.mubr.f32.gmra.mrb[0].mxu0 %v5193
    %v5476 = vpop.f32.mrb[0].mxu0
    %v5477 = vadd.f32 0.0, %v5476
    %v5478 = vpop.f32.mrb[0].mxu0
    %5479 = vmatprep.mubr.f32.mxu0 0.0
    %5480 = vmatmul.mubr.f32.gmra.mrb[0].mxu0 %v5196
    %v5481 = vpop.f32.mrb[0].mxu0
    %v5482 = vadd.f32 0.0, %v5481
    %v5483 = vpop.f32.mrb[0].mxu0
    %5484 = vmatprep.mubr.f32.mxu0 0.0
    %5485 = vmatmul.mubr.f32.gmra.mrb[0].mxu0 %v5199
    %v5486 = vpop.f32.mrb[0].mxu0
    %v5487 = vadd.f32 0.0, %v5486
    %v5488 = vpop.f32.mrb[0].mxu0
    %5489 = vmatprep.mubr.f32.mxu0 0.0
    %5490 = vmatmul.mubr.f32.gmra.mrb[0].mxu0 %v5202
    %v5491 = vpop.f32.mrb[0].mxu0
    %v5492 = vadd.f32 0.0, %v5491
    %v5493 = vpop.f32.mrb[0].mxu0
    %5494 = vmatprep.mubr.f32.mxu0 0.0
    %5495 = vmatmul.mubr.f32.gmra.mrb[0].mxu0 %v5205
    %v5496 = vpop.f32.mrb[0].mxu0
    %v5497 = vadd.f32 0.0, %v5496
    %v5498 = vpop.f32.mrb[0].mxu0
    %5499 = vmatprep.mubr.f32.mxu0 0.0
    %5500 = vmatmul.mubr.f32.gmra.mrb[0].mxu0 %v5208
    %v5501 = vpop.f32.mrb[0].mxu0
    %v5502 = vadd.f32 0.0, %v5501
    %v5503 = vpop.f32.mrb[0].mxu0
    %5504 = vmatprep.mubr.f32.mxu0 0.0
    %5505 = vmatmul.mubr.f32.gmra.mrb[0].mxu0 %v5211
    %v5506 = vpop.f32.mrb[0].mxu0
    %v5507 = vadd.f32 0.0, %v5506
    %v5508 = vpop.f32.mrb[0].mxu0
    %5509 = vmatprep.mubr.f32.mxu0 0.0
    %5510 = vmatmul.mubr.f32.gmra.mrb[0].mxu0 %v5214
    %v5511 = vpop.f32.mrb[0].mxu0
    %v5512 = vadd.f32 0.0, %v5511
    %v5513 = vpop.f32.mrb[0].mxu0
    %5514 = vmatprep.mubr.f32.mxu0 0.0
    %5515 = vmatmul.mubr.f32.gmra.mrb[0].mxu0 %v5217
    %v5516 = vpop.f32.mrb[0].mxu0
    %v5517 = vadd.f32 0.0, %v5516
    %v5518 = vpop.f32.mrb[0].mxu0
    %5519 = vmatprep.mubr.f32.mxu0 0.0
    %5520 = vmatmul.mubr.f32.gmra.mrb[0].mxu0 %v5220
    %v5521 = vpop.f32.mrb[0].mxu0
    %v5522 = vadd.f32 0.0, %v5521
    %v5523 = vpop.f32.mrb[0].mxu0
    %5524 = vmatprep.mubr.f32.mxu0 0.0
    %5525 = vmatmul.mubr.f32.gmra.mrb[0].mxu0 %v5223
    %v5526 = vpop.f32.mrb[0].mxu0
    %v5527 = vadd.f32 0.0, %v5526
    %v5528 = vpop.f32.mrb[0].mxu0
    %5529 = vmatprep.mubr.f32.mxu0 0.0
    %5530 = vmatmul.mubr.f32.gmra.mrb[0].mxu0 %v5226
    %v5531 = vpop.f32.mrb[0].mxu0
    %v5532 = vadd.f32 0.0, %v5531
    %v5533 = vpop.f32.mrb[0].mxu0
    %5534 = vmatprep.mubr.f32.mxu0 0.0
    %5535 = vmatmul.mubr.f32.gmra.mrb[0].mxu0 %v5229
    %v5536 = vpop.f32.mrb[0].mxu0
    %v5537 = vadd.f32 0.0, %v5536
    %v5538 = vpop.f32.mrb[0].mxu0
    %5539 = vmatprep.mubr.f32.mxu0 0.0
    %5540 = vmatmul.mubr.f32.gmra.mrb[0].mxu0 %v5232
    %v5541 = vpop.f32.mrb[0].mxu0
    %v5542 = vadd.f32 0.0, %v5541
    %v5543 = vpop.f32.mrb[0].mxu0
    %5544 = vmatprep.mubr.f32.mxu0 0.0
    %5545 = vmatmul.mubr.f32.gmra.mrb[0].mxu0 %v5235
    %v5546 = vpop.f32.mrb[0].mxu0
    %v5547 = vadd.f32 0.0, %v5546
    %v5548 = vpop.f32.mrb[0].mxu0
    %5549 = vmatprep.mubr.f32.mxu0 0.0
    %5550 = vmatmul.mubr.f32.gmra.mrb[0].mxu0 %v5238
    %v5551 = vpop.f32.mrb[0].mxu0
    %v5552 = vadd.f32 0.0, %v5551
    %v5553 = vpop.f32.mrb[0].mxu0
    %5554 = vmatprep.mubr.f32.mxu0 0.0
    %5555 = vmatmul.mubr.f32.gmra.mrb[0].mxu0 %v5241
    %v5556 = vpop.f32.mrb[0].mxu0
    %v5557 = vadd.f32 0.0, %v5556
    %v5558 = vpop.f32.mrb[0].mxu0
    %5559 = vmatprep.mubr.f32.mxu0 0.0
    %5560 = vmatmul.mubr.f32.gmra.mrb[0].mxu0 %v5244
    %v5561 = vpop.f32.mrb[0].mxu0
    %v5562 = vadd.f32 0.0, %v5561
    %v5563 = vpop.f32.mrb[0].mxu0
    %5564 = vmatprep.mubr.f32.mxu0 0.0
    %5565 = vmatmul.mubr.f32.gmra.mrb[0].mxu0 %v5247
    %v5566 = vpop.f32.mrb[0].mxu0
    %v5567 = vadd.f32 0.0, %v5566
    %v5568 = vpop.f32.mrb[0].mxu0
    %5569 = vmatprep.mubr.f32.mxu0 0.0
    %5570 = vmatmul.mubr.f32.gmra.mrb[0].mxu0 %v5250
    %v5571 = vpop.f32.mrb[0].mxu0
    %v5572 = vadd.f32 0.0, %v5571
    %v5573 = vpop.f32.mrb[0].mxu0
    %5574 = vmatprep.mubr.f32.mxu0 0.0
    %5575 = vmatmul.mubr.f32.gmra.mrb[0].mxu0 %v5253
    %v5576 = vpop.f32.mrb[0].mxu0
    %v5577 = vadd.f32 0.0, %v5576
    %v5578 = vpop.f32.mrb[0].mxu0
    %5579 = vmatprep.mubr.f32.mxu0 0.0
    %5580 = vmatmul.mubr.f32.gmra.mrb[0].mxu0 %v5256
    %v5581 = vpop.f32.mrb[0].mxu0
    %v5582 = vadd.f32 0.0, %v5581
    %v5583 = vpop.f32.mrb[0].mxu0
    %5584 = vmatprep.mubr.f32.mxu0 0.0
    %5585 = vmatmul.mubr.f32.gmra.mrb[0].mxu0 %v5259
    %v5586 = vpop.f32.mrb[0].mxu0
    %v5587 = vadd.f32 0.0, %v5586
    %v5588 = vpop.f32.mrb[0].mxu0
    %5589 = vmatprep.mubr.f32.mxu0 0.0
    %5590 = vmatmul.mubr.f32.gmra.mrb[0].mxu0 %v5262
    %v5591 = vpop.f32.mrb[0].mxu0
    %v5592 = vadd.f32 0.0, %v5591
    %v5593 = vpop.f32.mrb[0].mxu0
    %5594 = vmatprep.mubr.f32.mxu0 0.0
    %5595 = vmatmul.mubr.f32.gmra.mrb[0].mxu0 %v5265
    %v5596 = vpop.f32.mrb[0].mxu0
    %v5597 = vadd.f32 0.0, %v5596
    %v5598 = vpop.f32.mrb[0].mxu0
    %5599 = vmatprep.mubr.f32.mxu0 0.0
    %5600 = vmatmul.mubr.f32.gmra.mrb[0].mxu0 %v5268
    %v5601 = vpop.f32.mrb[0].mxu0
    %v5602 = vadd.f32 0.0, %v5601
    %v5603 = vpop.f32.mrb[0].mxu0
    %5604 = vmatprep.mubr.f32.mxu0 0.0
    %5605 = vmatmul.mubr.f32.gmra.mrb[0].mxu0 %v5271
    %v5606 = vpop.f32.mrb[0].mxu0
    %v5607 = vadd.f32 0.0, %v5606
    %v5608 = vpop.f32.mrb[0].mxu0
    %5609 = vmatprep.mubr.f32.mxu0 0.0
    %5610 = vmatmul.mubr.f32.gmra.mrb[0].mxu0 %v5274
    %v5611 = vpop.f32.mrb[0].mxu0
    %v5612 = vadd.f32 0.0, %v5611
    %v5613 = vpop.f32.mrb[0].mxu0
    %5614 = vmatprep.mubr.f32.mxu0 0.0
    %5615 = vmatmul.mubr.f32.gmra.mrb[0].mxu0 %v5277
    %v5616 = vpop.f32.mrb[0].mxu0
    %v5617 = vadd.f32 0.0, %v5616
    %v5618 = vpop.f32.mrb[0].mxu0
    %5619 = vmatprep.mubr.f32.mxu0 0.0
    %5620 = vmatmul.mubr.f32.gmra.mrb[0].mxu0 %v5280
    %v5621 = vpop.f32.mrb[0].mxu0
    %v5622 = vadd.f32 0.0, %v5621
    %v5623 = vpop.f32.mrb[0].mxu0
    %5624 = vmatprep.mubr.f32.mxu0 0.0
    %5625 = vmatmul.mubr.f32.gmra.mrb[0].mxu0 %v5283
    %v5626 = vpop.f32.mrb[0].mxu0
    %v5627 = vadd.f32 0.0, %v5626
    %v5628 = vpop.f32.mrb[0].mxu0
    %5629 = vmatprep.mubr.f32.mxu0 0.0
    %5630 = vmatmul.mubr.f32.gmra.mrb[0].mxu0 %v5286
    %v5631 = vpop.f32.mrb[0].mxu0
    %v5632 = vadd.f32 0.0, %v5631
    %v5633 = vpop.f32.mrb[0].mxu0
    %5634 = vmatprep.mubr.f32.mxu0 0.0
    %5635 = vmatmul.mubr.f32.gmra.mrb[0].mxu0 %v5289
    %v5636 = vpop.f32.mrb[0].mxu0
    %v5637 = vadd.f32 0.0, %v5636
    %v5638 = vpop.f32.mrb[0].mxu0
    %5639 = vmatprep.mubr.f32.mxu0 0.0
    %5640 = vmatmul.mubr.f32.gmra.mrb[0].mxu0 %v5292
    %v5641 = vpop.f32.mrb[0].mxu0
    %v5642 = vadd.f32 0.0, %v5641
    %v5643 = vpop.f32.mrb[0].mxu0
    %5644 = vmatprep.mubr.f32.mxu0 0.0
    %5645 = vmatmul.mubr.f32.gmra.mrb[0].mxu0 %v5295
    %v5646 = vpop.f32.mrb[0].mxu0
    %v5647 = vadd.f32 0.0, %v5646
    %v5648 = vpop.f32.mrb[0].mxu0
    %5649 = vmatprep.mubr.f32.mxu0 0.0
    %5650 = vmatmul.mubr.f32.gmra.mrb[0].mxu0 %v5298
    %v5651 = vpop.f32.mrb[0].mxu0
    %v5652 = vadd.f32 0.0, %v5651
    %v5653 = vpop.f32.mrb[0].mxu0
    %5654 = vmatprep.mubr.f32.mxu0 0.0
    %5655 = vmatmul.mubr.f32.gmra.mrb[0].mxu0 %v5301
    %v5656 = vpop.f32.mrb[0].mxu0
    %v5657 = vadd.f32 0.0, %v5656
    %v5658 = vpop.f32.mrb[0].mxu0
    %5659 = vmatprep.mubr.f32.mxu0 0.0
    %5660 = vmatmul.mubr.f32.gmra.mrb[0].mxu0 %v5304
    %v5661 = vpop.f32.mrb[0].mxu0
    %v5662 = vadd.f32 0.0, %v5661
    %v5663 = vpop.f32.mrb[0].mxu0
    %5664 = vmatprep.mubr.f32.mxu0 0.0
    %5665 = vmatmul.mubr.f32.gmra.mrb[0].mxu0 %v5307
    %v5666 = vpop.f32.mrb[0].mxu0
    %v5667 = vadd.f32 0.0, %v5666
    %v5668 = vpop.f32.mrb[0].mxu0
    %5669 = vmatprep.mubr.f32.mxu0 0.0
    %5670 = vmatmul.mubr.f32.gmra.mrb[0].mxu0 %v5310
    %v5671 = vpop.f32.mrb[0].mxu0
    %v5672 = vadd.f32 0.0, %v5671
    %v5673 = vpop.f32.mrb[0].mxu0
    %5674 = vmatprep.mubr.f32.mxu0 0.0
    %5675 = vmatmul.mubr.f32.gmra.mrb[0].mxu0 %v5313
    %v5676 = vpop.f32.mrb[0].mxu0
    %v5677 = vadd.f32 0.0, %v5676
    %v5678 = vpop.f32.mrb[0].mxu0
    %5679 = vmatprep.mubr.f32.mxu0 0.0
    %5680 = vmatmul.mubr.f32.gmra.mrb[0].mxu0 %v5316
    %v5681 = vpop.f32.mrb[0].mxu0
    %v5682 = vadd.f32 0.0, %v5681
    %v5683 = vpop.f32.mrb[0].mxu0
    %5684 = vmatprep.mubr.f32.mxu0 0.0
    %5685 = vmatmul.mubr.f32.gmra.mrb[0].mxu0 %v5319
    %v5686 = vpop.f32.mrb[0].mxu0
    %v5687 = vadd.f32 0.0, %v5686
    %v5688 = vpop.f32.mrb[0].mxu0
    %5689 = vmatprep.mubr.f32.mxu0 0.0
    %5690 = vmatmul.mubr.f32.gmra.mrb[0].mxu0 %v5322
    %v5691 = vpop.f32.mrb[0].mxu0
    %v5692 = vadd.f32 0.0, %v5691
    %v5693 = vpop.f32.mrb[0].mxu0
    %5694 = vmatprep.mubr.f32.mxu0 0.0
    %5695 = vmatmul.mubr.f32.gmra.mrb[0].mxu0 %v5325
    %v5696 = vpop.f32.mrb[0].mxu0
    %v5697 = vadd.f32 0.0, %v5696
    %v5698 = vpop.f32.mrb[0].mxu0
    %5699 = vmatprep.mubr.f32.mxu0 0.0
    %5700 = vmatmul.mubr.f32.gmra.mrb[0].mxu0 %v5328
    %v5701 = vpop.f32.mrb[0].mxu0
    %v5702 = vadd.f32 0.0, %v5701
    %v5703 = vpop.f32.mrb[0].mxu0
    %5704 = vdwg.mxu0
    %v5705 = vadd.f32 %v4772, %v5397
    %v5706 = vadd.f32 %v4777, %v5402
    %v5707 = vadd.f32 %v4782, %v5407
    %v5708 = vadd.f32 %v4787, %v5412
    %v5709 = vadd.f32 %v4792, %v5417
    %v5710 = vadd.f32 %v4797, %v5422
    %v5711 = vadd.f32 %v4802, %v5427
    %v5712 = vadd.f32 %v4807, %v5432
    %v5713 = vadd.f32 %v4812, %v5437
    %v5714 = vadd.f32 %v4817, %v5442
    %v5715 = vadd.f32 %v4822, %v5447
    %v5716 = vadd.f32 %v4827, %v5452
    %v5717 = vadd.f32 %v4832, %v5457
    %v5718 = vadd.f32 %v4837, %v5462
    %v5719 = vadd.f32 %v4842, %v5467
    %v5720 = vadd.f32 %v4847, %v5472
    %v5721 = vadd.f32 %v4852, %v5477
    %v5722 = vadd.f32 %v4857, %v5482
    %v5723 = vadd.f32 %v4862, %v5487
    %v5724 = vadd.f32 %v4867, %v5492
    %v5725 = vadd.f32 %v4872, %v5497
    %v5726 = vadd.f32 %v4877, %v5502
    %v5727 = vadd.f32 %v4882, %v5507
    %v5728 = vadd.f32 %v4887, %v5512
    %v5729 = vadd.f32 %v4892, %v5517
    %v5730 = vadd.f32 %v4897, %v5522
    %v5731 = vadd.f32 %v4902, %v5527
    %v5732 = vadd.f32 %v4907, %v5532
    %v5733 = vadd.f32 %v4912, %v5537
    %v5734 = vadd.f32 %v4917, %v5542
    %v5735 = vadd.f32 %v4922, %v5547
    %v5736 = vadd.f32 %v4927, %v5552
    %v5737 = vadd.f32 %v4932, %v5557
    %v5738 = vadd.f32 %v4937, %v5562
    %v5739 = vadd.f32 %v4942, %v5567
    %v5740 = vadd.f32 %v4947, %v5572
    %v5741 = vadd.f32 %v4952, %v5577
    %v5742 = vadd.f32 %v4957, %v5582
    %v5743 = vadd.f32 %v4962, %v5587
    %v5744 = vadd.f32 %v4967, %v5592
    %v5745 = vadd.f32 %v4972, %v5597
    %v5746 = vadd.f32 %v4977, %v5602
    %v5747 = vadd.f32 %v4982, %v5607
    %v5748 = vadd.f32 %v4987, %v5612
    %v5749 = vadd.f32 %v4992, %v5617
    %v5750 = vadd.f32 %v4997, %v5622
    %v5751 = vadd.f32 %v5002, %v5627
    %v5752 = vadd.f32 %v5007, %v5632
    %v5753 = vadd.f32 %v5012, %v5637
    %v5754 = vadd.f32 %v5017, %v5642
    %v5755 = vadd.f32 %v5022, %v5647
    %v5756 = vadd.f32 %v5027, %v5652
    %v5757 = vadd.f32 %v5032, %v5657
    %v5758 = vadd.f32 %v5037, %v5662
    %v5759 = vadd.f32 %v5042, %v5667
    %v5760 = vadd.f32 %v5047, %v5672
    %v5761 = vadd.f32 %v5052, %v5677
    %v5762 = vadd.f32 %v5057, %v5682
    %v5763 = vadd.f32 %v5062, %v5687
    %v5764 = vadd.f32 %v5067, %v5692
    %v5765 = vadd.f32 %v5072, %v5697
    %v5766 = vadd.f32 %v5077, %v5702
    %v5767 = vld [vmem:[%s3829 + $0x3] sm:$0xff]
    %v5768 = vld [vmem:[%s3829 + $0xb] sm:$0xff]
    %v5769 = vld [vmem:[%s3829 + $0x13] sm:$0xff]
    %v5770 = vld [vmem:[%s3829 + $0x1b] sm:$0xff]
    %v5771 = vld [vmem:[%s3829 + $0x23] sm:$0xff]
    %v5772 = vld [vmem:[%s3829 + $0x2b] sm:$0xff]
    %v5773 = vld [vmem:[%s3829 + $0x33] sm:$0xff]
    %v5774 = vld [vmem:[%s3829 + $0x3b] sm:$0xff]
    %v5775 = vld [vmem:[%s3829 + $0x43] sm:$0xff]
    %v5776 = vld [vmem:[%s3829 + $0x4b] sm:$0xff]
    %v5777 = vld [vmem:[%s3829 + $0x53] sm:$0xff]
    %v5778 = vld [vmem:[%s3829 + $0x5b] sm:$0xff]
    %v5779 = vld [vmem:[%s3829 + $0x63] sm:$0xff]
    %v5780 = vld [vmem:[%s3829 + $0x6b] sm:$0xff]
    %v5781 = vld [vmem:[%s3829 + $0x73] sm:$0xff]
    %v5782 = vld [vmem:[%s3829 + $0x7b] sm:$0xff]
    %v5783 = vld [vmem:[%s3829 + $0x83] sm:$0xff]
    %v5784 = vld [vmem:[%s3829 + $0x8b] sm:$0xff]
    %v5785 = vld [vmem:[%s3829 + $0x93] sm:$0xff]
    %v5786 = vld [vmem:[%s3829 + $0x9b] sm:$0xff]
    %v5787 = vld [vmem:[%s3829 + $0xa3] sm:$0xff]
    %v5788 = vld [vmem:[%s3829 + $0xab] sm:$0xff]
    %v5789 = vld [vmem:[%s3829 + $0xb3] sm:$0xff]
    %v5790 = vld [vmem:[%s3829 + $0xbb] sm:$0xff]
    %v5791 = vld [vmem:[%s3829 + $0xc3] sm:$0xff]
    %v5792 = vld [vmem:[%s3829 + $0xcb] sm:$0xff]
    %v5793 = vld [vmem:[%s3829 + $0xd3] sm:$0xff]
    %v5794 = vld [vmem:[%s3829 + $0xdb] sm:$0xff]
    %v5795 = vld [vmem:[%s3829 + $0xe3] sm:$0xff]
    %v5796 = vld [vmem:[%s3829 + $0xeb] sm:$0xff]
    %v5797 = vld [vmem:[%s3829 + $0xf3] sm:$0xff]
    %v5798 = vld [vmem:[%s3829 + $0xfb] sm:$0xff]
    %v5799 = vld [vmem:[%s3829 + $0x103] sm:$0xff]
    %v5800 = vld [vmem:[%s3829 + $0x10b] sm:$0xff]
    %v5801 = vld [vmem:[%s3829 + $0x113] sm:$0xff]
    %v5802 = vld [vmem:[%s3829 + $0x11b] sm:$0xff]
    %v5803 = vld [vmem:[%s3829 + $0x123] sm:$0xff]
    %v5804 = vld [vmem:[%s3829 + $0x12b] sm:$0xff]
    %v5805 = vld [vmem:[%s3829 + $0x133] sm:$0xff]
    %v5806 = vld [vmem:[%s3829 + $0x13b] sm:$0xff]
    %v5807 = vld [vmem:[%s3829 + $0x143] sm:$0xff]
    %v5808 = vld [vmem:[%s3829 + $0x14b] sm:$0xff]
    %v5809 = vld [vmem:[%s3829 + $0x153] sm:$0xff]
    %v5810 = vld [vmem:[%s3829 + $0x15b] sm:$0xff]
    %v5811 = vld [vmem:[%s3829 + $0x163] sm:$0xff]
    %v5812 = vld [vmem:[%s3829 + $0x16b] sm:$0xff]
    %v5813 = vld [vmem:[%s3829 + $0x173] sm:$0xff]
    %v5814 = vld [vmem:[%s3829 + $0x17b] sm:$0xff]
    %v5815 = vld [vmem:[%s3829 + $0x183] sm:$0xff]
    %v5816 = vld [vmem:[%s3829 + $0x18b] sm:$0xff]
    %v5817 = vld [vmem:[%s3829 + $0x193] sm:$0xff]
    %v5818 = vld [vmem:[%s3829 + $0x19b] sm:$0xff]
    %v5819 = vld [vmem:[%s3829 + $0x1a3] sm:$0xff]
    %v5820 = vld [vmem:[%s3829 + $0x1ab] sm:$0xff]
    %v5821 = vld [vmem:[%s3829 + $0x1b3] sm:$0xff]
    %v5822 = vld [vmem:[%s3829 + $0x1bb] sm:$0xff]
    %v5823 = vld [vmem:[%s3829 + $0x1c3] sm:$0xff]
    %v5824 = vld [vmem:[%s3829 + $0x1cb] sm:$0xff]
    %v5825 = vld [vmem:[%s3829 + $0x1d3] sm:$0xff]
    %v5826 = vld [vmem:[%s3829 + $0x1db] sm:$0xff]
    %v5827 = vld [vmem:[%s3829 + $0x1e3] sm:$0xff]
    %v5828 = vld [vmem:[%s3829 + $0x1eb] sm:$0xff]
    %v5829 = vld [vmem:[%s1 + $0x30] sm:$0xff]
    %v5830 = vld [vmem:[%s1 + $0x38] sm:$0xff]
    %v5832 = vsel %vm191, %v5767, 0
    %v5835 = vsel %vm191, %v5768, 0
    %v5838 = vsel %vm191, %v5769, 0
    %v5841 = vsel %vm191, %v5770, 0
    %v5844 = vsel %vm191, %v5771, 0
    %v5847 = vsel %vm191, %v5772, 0
    %v5850 = vsel %vm191, %v5773, 0
    %v5853 = vsel %vm191, %v5774, 0
    %v5856 = vsel %vm191, %v5775, 0
    %v5859 = vsel %vm191, %v5776, 0
    %v5862 = vsel %vm191, %v5777, 0
    %v5865 = vsel %vm191, %v5778, 0
    %v5868 = vsel %vm191, %v5779, 0
    %v5871 = vsel %vm191, %v5780, 0
    %v5874 = vsel %vm191, %v5781, 0
    %v5877 = vsel %vm191, %v5782, 0
    %v5880 = vsel %vm191, %v5783, 0
    %v5883 = vsel %vm191, %v5784, 0
    %v5886 = vsel %vm191, %v5785, 0
    %v5889 = vsel %vm191, %v5786, 0
    %v5892 = vsel %vm191, %v5787, 0
    %v5895 = vsel %vm191, %v5788, 0
    %v5898 = vsel %vm191, %v5789, 0
    %v5901 = vsel %vm191, %v5790, 0
    %v5904 = vsel %vm191, %v5791, 0
    %v5907 = vsel %vm191, %v5792, 0
    %v5910 = vsel %vm191, %v5793, 0
    %v5913 = vsel %vm191, %v5794, 0
    %v5916 = vsel %vm191, %v5795, 0
    %v5919 = vsel %vm191, %v5796, 0
    %v5922 = vsel %vm191, %v5797, 0
    %v5925 = vsel %vm191, %v5798, 0
    %v5928 = vsel %vm191, %v5799, 0
    %v5931 = vsel %vm191, %v5800, 0
    %v5934 = vsel %vm191, %v5801, 0
    %v5937 = vsel %vm191, %v5802, 0
    %v5940 = vsel %vm191, %v5803, 0
    %v5943 = vsel %vm191, %v5804, 0
    %v5946 = vsel %vm191, %v5805, 0
    %v5949 = vsel %vm191, %v5806, 0
    %v5952 = vsel %vm191, %v5807, 0
    %v5955 = vsel %vm191, %v5808, 0
    %v5958 = vsel %vm191, %v5809, 0
    %v5961 = vsel %vm191, %v5810, 0
    %v5964 = vsel %vm191, %v5811, 0
    %v5967 = vsel %vm191, %v5812, 0
    %v5970 = vsel %vm191, %v5813, 0
    %v5973 = vsel %vm191, %v5814, 0
    %v5976 = vsel %vm191, %v5815, 0
    %v5979 = vsel %vm191, %v5816, 0
    %v5982 = vsel %vm191, %v5817, 0
    %v5985 = vsel %vm191, %v5818, 0
    %v5988 = vsel %vm191, %v5819, 0
    %v5991 = vsel %vm191, %v5820, 0
    %v5994 = vsel %vm191, %v5821, 0
    %v5997 = vsel %vm191, %v5822, 0
    %v6000 = vsel %vm191, %v5823, 0
    %v6003 = vsel %vm191, %v5824, 0
    %v6006 = vsel %vm191, %v5825, 0
    %v6009 = vsel %vm191, %v5826, 0
    %v6012 = vsel %vm191, %v5827, 0
    %v6015 = vsel %vm191, %v5828, 0
    %6017 = vmatprep.subr.mxu0 0.0
    %6018 = vmatpush1.msra.mxu0 %v5829
    %6019 = vmatprep.subr.mxu0 0.0
    %6020 = vmatpush1.msra.mxu0 %v5830
    %6021 = vmatprep.subr.mxu0 0.0
    %6022 = vmatpush1.msra.mxu0 0.0
    %6023 = vmatprep.subr.mxu0 0.0
    %6024 = vmatpush1.msra.mxu0 0.0
    %6025 = vmatprep.subr.mxu0 0.0
    %6026 = vmatpush1.msra.mxu0 0.0
    %6027 = vmatprep.subr.mxu0 0.0
    %6028 = vmatpush1.msra.mxu0 0.0
    %6029 = vmatprep.subr.mxu0 0.0
    %6030 = vmatpush1.msra.mxu0 0.0
    %6031 = vmatprep.subr.mxu0 0.0
    %6032 = vmatpush1.msra.mxu0 0.0
    %6033 = vmatprep.subr.mxu0 0.0
    %6034 = vmatpush1.msra.mxu0 0.0
    %6035 = vmatprep.subr.mxu0 0.0
    %6036 = vmatpush1.msra.mxu0 0.0
    %6037 = vmatprep.subr.mxu0 0.0
    %6038 = vmatpush1.msra.mxu0 0.0
    %6039 = vmatprep.subr.mxu0 0.0
    %6040 = vmatpush1.msra.mxu0 0.0
    %6041 = vmatprep.subr.mxu0 0.0
    %6042 = vmatpush1.msra.mxu0 0.0
    %6043 = vmatprep.subr.mxu0 0.0
    %6044 = vmatpush1.msra.mxu0 0.0
    %6045 = vmatprep.subr.mxu0 0.0
    %6046 = vmatpush1.msra.mxu0 0.0
    %6047 = vmatprep.subr.mxu0 0.0
    %6048 = vmatpush1.msra.mxu0 0.0
    %6049 = vmatprep.subr.mxu0 0.0
    %6050 = vmatpush1.msra.mxu0 0.0
    %6051 = vmatprep.subr.mxu0 0.0
    %6052 = vmatpush1.msra.mxu0 0.0
    %6053 = vmatprep.subr.mxu0 0.0
    %6054 = vmatpush1.msra.mxu0 0.0
    %6055 = vmatprep.subr.mxu0 0.0
    %6056 = vmatpush1.msra.mxu0 0.0
    %6057 = vmatprep.subr.mxu0 0.0
    %6058 = vmatpush1.msra.mxu0 0.0
    %6059 = vmatprep.subr.mxu0 0.0
    %6060 = vmatpush1.msra.mxu0 0.0
    %6061 = vmatprep.subr.mxu0 0.0
    %6062 = vmatpush1.msra.mxu0 0.0
    %6063 = vmatprep.subr.mxu0 0.0
    %6064 = vmatpush1.msra.mxu0 0.0
    %6065 = vmatprep.subr.mxu0 0.0
    %6066 = vmatpush1.msra.mxu0 0.0
    %6067 = vmatprep.subr.mxu0 0.0
    %6068 = vmatpush1.msra.mxu0 0.0
    %6069 = vmatprep.subr.mxu0 0.0
    %6070 = vmatpush1.msra.mxu0 0.0
    %6071 = vmatprep.subr.mxu0 0.0
    %6072 = vmatpush1.msra.mxu0 0.0
    %6073 = vmatprep.subr.mxu0 0.0
    %6074 = vmatpush1.msra.mxu0 0.0
    %6075 = vmatprep.subr.mxu0 0.0
    %6076 = vmatpush1.msra.mxu0 0.0
    %6077 = vmatprep.subr.mxu0 0.0
    %6078 = vmatpush1.msra.mxu0 0.0
    %6079 = vmatprep.subr.mxu0 0.0
    %6080 = vmatpush1.msra.mxu0 0.0
    %6081 = vmatprep.mubr.f32.mxu0 0.0
    %6082 = vmatmul.mubr.f32.gmra.mrb[0].mxu0 %v5832
    %v6083 = vpop.f32.mrb[0].mxu0
    %v6084 = vadd.f32 0.0, %v6083
    %v6085 = vpop.f32.mrb[0].mxu0
    %6086 = vmatprep.mubr.f32.mxu0 0.0
    %6087 = vmatmul.mubr.f32.gmra.mrb[0].mxu0 %v5835
    %v6088 = vpop.f32.mrb[0].mxu0
    %v6089 = vadd.f32 0.0, %v6088
    %v6090 = vpop.f32.mrb[0].mxu0
    %6091 = vmatprep.mubr.f32.mxu0 0.0
    %6092 = vmatmul.mubr.f32.gmra.mrb[0].mxu0 %v5838
    %v6093 = vpop.f32.mrb[0].mxu0
    %v6094 = vadd.f32 0.0, %v6093
    %v6095 = vpop.f32.mrb[0].mxu0
    %6096 = vmatprep.mubr.f32.mxu0 0.0
    %6097 = vmatmul.mubr.f32.gmra.mrb[0].mxu0 %v5841
    %v6098 = vpop.f32.mrb[0].mxu0
    %v6099 = vadd.f32 0.0, %v6098
    %v6100 = vpop.f32.mrb[0].mxu0
    %6101 = vmatprep.mubr.f32.mxu0 0.0
    %6102 = vmatmul.mubr.f32.gmra.mrb[0].mxu0 %v5844
    %v6103 = vpop.f32.mrb[0].mxu0
    %v6104 = vadd.f32 0.0, %v6103
    %v6105 = vpop.f32.mrb[0].mxu0
    %6106 = vmatprep.mubr.f32.mxu0 0.0
    %6107 = vmatmul.mubr.f32.gmra.mrb[0].mxu0 %v5847
    %v6108 = vpop.f32.mrb[0].mxu0
    %v6109 = vadd.f32 0.0, %v6108
    %v6110 = vpop.f32.mrb[0].mxu0
    %6111 = vmatprep.mubr.f32.mxu0 0.0
    %6112 = vmatmul.mubr.f32.gmra.mrb[0].mxu0 %v5850
    %v6113 = vpop.f32.mrb[0].mxu0
    %v6114 = vadd.f32 0.0, %v6113
    %v6115 = vpop.f32.mrb[0].mxu0
    %6116 = vmatprep.mubr.f32.mxu0 0.0
    %6117 = vmatmul.mubr.f32.gmra.mrb[0].mxu0 %v5853
    %v6118 = vpop.f32.mrb[0].mxu0
    %v6119 = vadd.f32 0.0, %v6118
    %v6120 = vpop.f32.mrb[0].mxu0
    %6121 = vmatprep.mubr.f32.mxu0 0.0
    %6122 = vmatmul.mubr.f32.gmra.mrb[0].mxu0 %v5856
    %v6123 = vpop.f32.mrb[0].mxu0
    %v6124 = vadd.f32 0.0, %v6123
    %v6125 = vpop.f32.mrb[0].mxu0
    %6126 = vmatprep.mubr.f32.mxu0 0.0
    %6127 = vmatmul.mubr.f32.gmra.mrb[0].mxu0 %v5859
    %v6128 = vpop.f32.mrb[0].mxu0
    %v6129 = vadd.f32 0.0, %v6128
    %v6130 = vpop.f32.mrb[0].mxu0
    %6131 = vmatprep.mubr.f32.mxu0 0.0
    %6132 = vmatmul.mubr.f32.gmra.mrb[0].mxu0 %v5862
    %v6133 = vpop.f32.mrb[0].mxu0
    %v6134 = vadd.f32 0.0, %v6133
    %v6135 = vpop.f32.mrb[0].mxu0
    %6136 = vmatprep.mubr.f32.mxu0 0.0
    %6137 = vmatmul.mubr.f32.gmra.mrb[0].mxu0 %v5865
    %v6138 = vpop.f32.mrb[0].mxu0
    %v6139 = vadd.f32 0.0, %v6138
    %v6140 = vpop.f32.mrb[0].mxu0
    %6141 = vmatprep.mubr.f32.mxu0 0.0
    %6142 = vmatmul.mubr.f32.gmra.mrb[0].mxu0 %v5868
    %v6143 = vpop.f32.mrb[0].mxu0
    %v6144 = vadd.f32 0.0, %v6143
    %v6145 = vpop.f32.mrb[0].mxu0
    %6146 = vmatprep.mubr.f32.mxu0 0.0
    %6147 = vmatmul.mubr.f32.gmra.mrb[0].mxu0 %v5871
    %v6148 = vpop.f32.mrb[0].mxu0
    %v6149 = vadd.f32 0.0, %v6148
    %v6150 = vpop.f32.mrb[0].mxu0
    %6151 = vmatprep.mubr.f32.mxu0 0.0
    %6152 = vmatmul.mubr.f32.gmra.mrb[0].mxu0 %v5874
    %v6153 = vpop.f32.mrb[0].mxu0
    %v6154 = vadd.f32 0.0, %v6153
    %v6155 = vpop.f32.mrb[0].mxu0
    %6156 = vmatprep.mubr.f32.mxu0 0.0
    %6157 = vmatmul.mubr.f32.gmra.mrb[0].mxu0 %v5877
    %v6158 = vpop.f32.mrb[0].mxu0
    %v6159 = vadd.f32 0.0, %v6158
    %v6160 = vpop.f32.mrb[0].mxu0
    %6161 = vmatprep.mubr.f32.mxu0 0.0
    %6162 = vmatmul.mubr.f32.gmra.mrb[0].mxu0 %v5880
    %v6163 = vpop.f32.mrb[0].mxu0
    %v6164 = vadd.f32 0.0, %v6163
    %v6165 = vpop.f32.mrb[0].mxu0
    %6166 = vmatprep.mubr.f32.mxu0 0.0
    %6167 = vmatmul.mubr.f32.gmra.mrb[0].mxu0 %v5883
    %v6168 = vpop.f32.mrb[0].mxu0
    %v6169 = vadd.f32 0.0, %v6168
    %v6170 = vpop.f32.mrb[0].mxu0
    %6171 = vmatprep.mubr.f32.mxu0 0.0
    %6172 = vmatmul.mubr.f32.gmra.mrb[0].mxu0 %v5886
    %v6173 = vpop.f32.mrb[0].mxu0
    %v6174 = vadd.f32 0.0, %v6173
    %v6175 = vpop.f32.mrb[0].mxu0
    %6176 = vmatprep.mubr.f32.mxu0 0.0
    %6177 = vmatmul.mubr.f32.gmra.mrb[0].mxu0 %v5889
    %v6178 = vpop.f32.mrb[0].mxu0
    %v6179 = vadd.f32 0.0, %v6178
    %v6180 = vpop.f32.mrb[0].mxu0
    %6181 = vmatprep.mubr.f32.mxu0 0.0
    %6182 = vmatmul.mubr.f32.gmra.mrb[0].mxu0 %v5892
    %v6183 = vpop.f32.mrb[0].mxu0
    %v6184 = vadd.f32 0.0, %v6183
    %v6185 = vpop.f32.mrb[0].mxu0
    %6186 = vmatprep.mubr.f32.mxu0 0.0
    %6187 = vmatmul.mubr.f32.gmra.mrb[0].mxu0 %v5895
    %v6188 = vpop.f32.mrb[0].mxu0
    %v6189 = vadd.f32 0.0, %v6188
    %v6190 = vpop.f32.mrb[0].mxu0
    %6191 = vmatprep.mubr.f32.mxu0 0.0
    %6192 = vmatmul.mubr.f32.gmra.mrb[0].mxu0 %v5898
    %v6193 = vpop.f32.mrb[0].mxu0
    %v6194 = vadd.f32 0.0, %v6193
    %v6195 = vpop.f32.mrb[0].mxu0
    %6196 = vmatprep.mubr.f32.mxu0 0.0
    %6197 = vmatmul.mubr.f32.gmra.mrb[0].mxu0 %v5901
    %v6198 = vpop.f32.mrb[0].mxu0
    %v6199 = vadd.f32 0.0, %v6198
    %v6200 = vpop.f32.mrb[0].mxu0
    %6201 = vmatprep.mubr.f32.mxu0 0.0
    %6202 = vmatmul.mubr.f32.gmra.mrb[0].mxu0 %v5904
    %v6203 = vpop.f32.mrb[0].mxu0
    %v6204 = vadd.f32 0.0, %v6203
    %v6205 = vpop.f32.mrb[0].mxu0
    %6206 = vmatprep.mubr.f32.mxu0 0.0
    %6207 = vmatmul.mubr.f32.gmra.mrb[0].mxu0 %v5907
    %v6208 = vpop.f32.mrb[0].mxu0
    %v6209 = vadd.f32 0.0, %v6208
    %v6210 = vpop.f32.mrb[0].mxu0
    %6211 = vmatprep.mubr.f32.mxu0 0.0
    %6212 = vmatmul.mubr.f32.gmra.mrb[0].mxu0 %v5910
    %v6213 = vpop.f32.mrb[0].mxu0
    %v6214 = vadd.f32 0.0, %v6213
    %v6215 = vpop.f32.mrb[0].mxu0
    %6216 = vmatprep.mubr.f32.mxu0 0.0
    %6217 = vmatmul.mubr.f32.gmra.mrb[0].mxu0 %v5913
    %v6218 = vpop.f32.mrb[0].mxu0
    %v6219 = vadd.f32 0.0, %v6218
    %v6220 = vpop.f32.mrb[0].mxu0
    %6221 = vmatprep.mubr.f32.mxu0 0.0
    %6222 = vmatmul.mubr.f32.gmra.mrb[0].mxu0 %v5916
    %v6223 = vpop.f32.mrb[0].mxu0
    %v6224 = vadd.f32 0.0, %v6223
    %v6225 = vpop.f32.mrb[0].mxu0
    %6226 = vmatprep.mubr.f32.mxu0 0.0
    %6227 = vmatmul.mubr.f32.gmra.mrb[0].mxu0 %v5919
    %v6228 = vpop.f32.mrb[0].mxu0
    %v6229 = vadd.f32 0.0, %v6228
    %v6230 = vpop.f32.mrb[0].mxu0
    %6231 = vmatprep.mubr.f32.mxu0 0.0
    %6232 = vmatmul.mubr.f32.gmra.mrb[0].mxu0 %v5922
    %v6233 = vpop.f32.mrb[0].mxu0
    %v6234 = vadd.f32 0.0, %v6233
    %v6235 = vpop.f32.mrb[0].mxu0
    %6236 = vmatprep.mubr.f32.mxu0 0.0
    %6237 = vmatmul.mubr.f32.gmra.mrb[0].mxu0 %v5925
    %v6238 = vpop.f32.mrb[0].mxu0
    %v6239 = vadd.f32 0.0, %v6238
    %v6240 = vpop.f32.mrb[0].mxu0
    %6241 = vmatprep.mubr.f32.mxu0 0.0
    %6242 = vmatmul.mubr.f32.gmra.mrb[0].mxu0 %v5928
    %v6243 = vpop.f32.mrb[0].mxu0
    %v6244 = vadd.f32 0.0, %v6243
    %v6245 = vpop.f32.mrb[0].mxu0
    %6246 = vmatprep.mubr.f32.mxu0 0.0
    %6247 = vmatmul.mubr.f32.gmra.mrb[0].mxu0 %v5931
    %v6248 = vpop.f32.mrb[0].mxu0
    %v6249 = vadd.f32 0.0, %v6248
    %v6250 = vpop.f32.mrb[0].mxu0
    %6251 = vmatprep.mubr.f32.mxu0 0.0
    %6252 = vmatmul.mubr.f32.gmra.mrb[0].mxu0 %v5934
    %v6253 = vpop.f32.mrb[0].mxu0
    %v6254 = vadd.f32 0.0, %v6253
    %v6255 = vpop.f32.mrb[0].mxu0
    %6256 = vmatprep.mubr.f32.mxu0 0.0
    %6257 = vmatmul.mubr.f32.gmra.mrb[0].mxu0 %v5937
    %v6258 = vpop.f32.mrb[0].mxu0
    %v6259 = vadd.f32 0.0, %v6258
    %v6260 = vpop.f32.mrb[0].mxu0
    %6261 = vmatprep.mubr.f32.mxu0 0.0
    %6262 = vmatmul.mubr.f32.gmra.mrb[0].mxu0 %v5940
    %v6263 = vpop.f32.mrb[0].mxu0
    %v6264 = vadd.f32 0.0, %v6263
    %v6265 = vpop.f32.mrb[0].mxu0
    %6266 = vmatprep.mubr.f32.mxu0 0.0
    %6267 = vmatmul.mubr.f32.gmra.mrb[0].mxu0 %v5943
    %v6268 = vpop.f32.mrb[0].mxu0
    %v6269 = vadd.f32 0.0, %v6268
    %v6270 = vpop.f32.mrb[0].mxu0
    %6271 = vmatprep.mubr.f32.mxu0 0.0
    %6272 = vmatmul.mubr.f32.gmra.mrb[0].mxu0 %v5946
    %v6273 = vpop.f32.mrb[0].mxu0
    %v6274 = vadd.f32 0.0, %v6273
    %v6275 = vpop.f32.mrb[0].mxu0
    %6276 = vmatprep.mubr.f32.mxu0 0.0
    %6277 = vmatmul.mubr.f32.gmra.mrb[0].mxu0 %v5949
    %v6278 = vpop.f32.mrb[0].mxu0
    %v6279 = vadd.f32 0.0, %v6278
    %v6280 = vpop.f32.mrb[0].mxu0
    %6281 = vmatprep.mubr.f32.mxu0 0.0
    %6282 = vmatmul.mubr.f32.gmra.mrb[0].mxu0 %v5952
    %v6283 = vpop.f32.mrb[0].mxu0
    %v6284 = vadd.f32 0.0, %v6283
    %v6285 = vpop.f32.mrb[0].mxu0
    %6286 = vmatprep.mubr.f32.mxu0 0.0
    %6287 = vmatmul.mubr.f32.gmra.mrb[0].mxu0 %v5955
    %v6288 = vpop.f32.mrb[0].mxu0
    %v6289 = vadd.f32 0.0, %v6288
    %v6290 = vpop.f32.mrb[0].mxu0
    %6291 = vmatprep.mubr.f32.mxu0 0.0
    %6292 = vmatmul.mubr.f32.gmra.mrb[0].mxu0 %v5958
    %v6293 = vpop.f32.mrb[0].mxu0
    %v6294 = vadd.f32 0.0, %v6293
    %v6295 = vpop.f32.mrb[0].mxu0
    %6296 = vmatprep.mubr.f32.mxu0 0.0
    %6297 = vmatmul.mubr.f32.gmra.mrb[0].mxu0 %v5961
    %v6298 = vpop.f32.mrb[0].mxu0
    %v6299 = vadd.f32 0.0, %v6298
    %v6300 = vpop.f32.mrb[0].mxu0
    %6301 = vmatprep.mubr.f32.mxu0 0.0
    %6302 = vmatmul.mubr.f32.gmra.mrb[0].mxu0 %v5964
    %v6303 = vpop.f32.mrb[0].mxu0
    %v6304 = vadd.f32 0.0, %v6303
    %v6305 = vpop.f32.mrb[0].mxu0
    %6306 = vmatprep.mubr.f32.mxu0 0.0
    %6307 = vmatmul.mubr.f32.gmra.mrb[0].mxu0 %v5967
    %v6308 = vpop.f32.mrb[0].mxu0
    %v6309 = vadd.f32 0.0, %v6308
    %v6310 = vpop.f32.mrb[0].mxu0
    %6311 = vmatprep.mubr.f32.mxu0 0.0
    %6312 = vmatmul.mubr.f32.gmra.mrb[0].mxu0 %v5970
    %v6313 = vpop.f32.mrb[0].mxu0
    %v6314 = vadd.f32 0.0, %v6313
    %v6315 = vpop.f32.mrb[0].mxu0
    %6316 = vmatprep.mubr.f32.mxu0 0.0
    %6317 = vmatmul.mubr.f32.gmra.mrb[0].mxu0 %v5973
    %v6318 = vpop.f32.mrb[0].mxu0
    %v6319 = vadd.f32 0.0, %v6318
    %v6320 = vpop.f32.mrb[0].mxu0
    %6321 = vmatprep.mubr.f32.mxu0 0.0
    %6322 = vmatmul.mubr.f32.gmra.mrb[0].mxu0 %v5976
    %v6323 = vpop.f32.mrb[0].mxu0
    %v6324 = vadd.f32 0.0, %v6323
    %v6325 = vpop.f32.mrb[0].mxu0
    %6326 = vmatprep.mubr.f32.mxu0 0.0
    %6327 = vmatmul.mubr.f32.gmra.mrb[0].mxu0 %v5979
    %v6328 = vpop.f32.mrb[0].mxu0
    %v6329 = vadd.f32 0.0, %v6328
    %v6330 = vpop.f32.mrb[0].mxu0
    %6331 = vmatprep.mubr.f32.mxu0 0.0
    %6332 = vmatmul.mubr.f32.gmra.mrb[0].mxu0 %v5982
    %v6333 = vpop.f32.mrb[0].mxu0
    %v6334 = vadd.f32 0.0, %v6333
    %v6335 = vpop.f32.mrb[0].mxu0
    %6336 = vmatprep.mubr.f32.mxu0 0.0
    %6337 = vmatmul.mubr.f32.gmra.mrb[0].mxu0 %v5985
    %v6338 = vpop.f32.mrb[0].mxu0
    %v6339 = vadd.f32 0.0, %v6338
    %v6340 = vpop.f32.mrb[0].mxu0
    %6341 = vmatprep.mubr.f32.mxu0 0.0
    %6342 = vmatmul.mubr.f32.gmra.mrb[0].mxu0 %v5988
    %v6343 = vpop.f32.mrb[0].mxu0
    %v6344 = vadd.f32 0.0, %v6343
    %v6345 = vpop.f32.mrb[0].mxu0
    %6346 = vmatprep.mubr.f32.mxu0 0.0
    %6347 = vmatmul.mubr.f32.gmra.mrb[0].mxu0 %v5991
    %v6348 = vpop.f32.mrb[0].mxu0
    %v6349 = vadd.f32 0.0, %v6348
    %v6350 = vpop.f32.mrb[0].mxu0
    %6351 = vmatprep.mubr.f32.mxu0 0.0
    %6352 = vmatmul.mubr.f32.gmra.mrb[0].mxu0 %v5994
    %v6353 = vpop.f32.mrb[0].mxu0
    %v6354 = vadd.f32 0.0, %v6353
    %v6355 = vpop.f32.mrb[0].mxu0
    %6356 = vmatprep.mubr.f32.mxu0 0.0
    %6357 = vmatmul.mubr.f32.gmra.mrb[0].mxu0 %v5997
    %v6358 = vpop.f32.mrb[0].mxu0
    %v6359 = vadd.f32 0.0, %v6358
    %v6360 = vpop.f32.mrb[0].mxu0
    %6361 = vmatprep.mubr.f32.mxu0 0.0
    %6362 = vmatmul.mubr.f32.gmra.mrb[0].mxu0 %v6000
    %v6363 = vpop.f32.mrb[0].mxu0
    %v6364 = vadd.f32 0.0, %v6363
    %v6365 = vpop.f32.mrb[0].mxu0
    %6366 = vmatprep.mubr.f32.mxu0 0.0
    %6367 = vmatmul.mubr.f32.gmra.mrb[0].mxu0 %v6003
    %v6368 = vpop.f32.mrb[0].mxu0
    %v6369 = vadd.f32 0.0, %v6368
    %v6370 = vpop.f32.mrb[0].mxu0
    %6371 = vmatprep.mubr.f32.mxu0 0.0
    %6372 = vmatmul.mubr.f32.gmra.mrb[0].mxu0 %v6006
    %v6373 = vpop.f32.mrb[0].mxu0
    %v6374 = vadd.f32 0.0, %v6373
    %v6375 = vpop.f32.mrb[0].mxu0
    %6376 = vmatprep.mubr.f32.mxu0 0.0
    %6377 = vmatmul.mubr.f32.gmra.mrb[0].mxu0 %v6009
    %v6378 = vpop.f32.mrb[0].mxu0
    %v6379 = vadd.f32 0.0, %v6378
    %v6380 = vpop.f32.mrb[0].mxu0
    %6381 = vmatprep.mubr.f32.mxu0 0.0
    %6382 = vmatmul.mubr.f32.gmra.mrb[0].mxu0 %v6012
    %v6383 = vpop.f32.mrb[0].mxu0
    %v6384 = vadd.f32 0.0, %v6383
    %v6385 = vpop.f32.mrb[0].mxu0
    %6386 = vmatprep.mubr.f32.mxu0 0.0
    %6387 = vmatmul.mubr.f32.gmra.mrb[0].mxu0 %v6015
    %v6388 = vpop.f32.mrb[0].mxu0
    %v6389 = vadd.f32 0.0, %v6388
    %v6390 = vpop.f32.mrb[0].mxu0
    %6391 = vdwg.mxu0
    %v6392 = vadd.f32 %v5705, %v6084
    %v6393 = vadd.f32 %v5706, %v6089
    %v6394 = vadd.f32 %v5707, %v6094
    %v6395 = vadd.f32 %v5708, %v6099
    %v6396 = vadd.f32 %v5709, %v6104
    %v6397 = vadd.f32 %v5710, %v6109
    %v6398 = vadd.f32 %v5711, %v6114
    %v6399 = vadd.f32 %v5712, %v6119
    %v6400 = vadd.f32 %v5713, %v6124
    %v6401 = vadd.f32 %v5714, %v6129
    %v6402 = vadd.f32 %v5715, %v6134
    %v6403 = vadd.f32 %v5716, %v6139
    %v6404 = vadd.f32 %v5717, %v6144
    %v6405 = vadd.f32 %v5718, %v6149
    %v6406 = vadd.f32 %v5719, %v6154
    %v6407 = vadd.f32 %v5720, %v6159
    %v6408 = vadd.f32 %v5721, %v6164
    %v6409 = vadd.f32 %v5722, %v6169
    %v6410 = vadd.f32 %v5723, %v6174
    %v6411 = vadd.f32 %v5724, %v6179
    %v6412 = vadd.f32 %v5725, %v6184
    %v6413 = vadd.f32 %v5726, %v6189
    %v6414 = vadd.f32 %v5727, %v6194
    %v6415 = vadd.f32 %v5728, %v6199
    %v6416 = vadd.f32 %v5729, %v6204
    %v6417 = vadd.f32 %v5730, %v6209
    %v6418 = vadd.f32 %v5731, %v6214
    %v6419 = vadd.f32 %v5732, %v6219
    %v6420 = vadd.f32 %v5733, %v6224
    %v6421 = vadd.f32 %v5734, %v6229
    %v6422 = vadd.f32 %v5735, %v6234
    %v6423 = vadd.f32 %v5736, %v6239
    %v6424 = vadd.f32 %v5737, %v6244
    %v6425 = vadd.f32 %v5738, %v6249
    %v6426 = vadd.f32 %v5739, %v6254
    %v6427 = vadd.f32 %v5740, %v6259
    %v6428 = vadd.f32 %v5741, %v6264
    %v6429 = vadd.f32 %v5742, %v6269
    %v6430 = vadd.f32 %v5743, %v6274
    %v6431 = vadd.f32 %v5744, %v6279
    %v6432 = vadd.f32 %v5745, %v6284
    %v6433 = vadd.f32 %v5746, %v6289
    %v6434 = vadd.f32 %v5747, %v6294
    %v6435 = vadd.f32 %v5748, %v6299
    %v6436 = vadd.f32 %v5749, %v6304
    %v6437 = vadd.f32 %v5750, %v6309
    %v6438 = vadd.f32 %v5751, %v6314
    %v6439 = vadd.f32 %v5752, %v6319
    %v6440 = vadd.f32 %v5753, %v6324
    %v6441 = vadd.f32 %v5754, %v6329
    %v6442 = vadd.f32 %v5755, %v6334
    %v6443 = vadd.f32 %v5756, %v6339
    %v6444 = vadd.f32 %v5757, %v6344
    %v6445 = vadd.f32 %v5758, %v6349
    %v6446 = vadd.f32 %v5759, %v6354
    %v6447 = vadd.f32 %v5760, %v6359
    %v6448 = vadd.f32 %v5761, %v6364
    %v6449 = vadd.f32 %v5762, %v6369
    %v6450 = vadd.f32 %v5763, %v6374
    %v6451 = vadd.f32 %v5764, %v6379
    %v6452 = vadd.f32 %v5765, %v6384
    %v6453 = vadd.f32 %v5766, %v6389
    %v6454 = vld [vmem:[%s3829 + $0x4] sm:$0xff]
    %v6455 = vld [vmem:[%s3829 + $0xc] sm:$0xff]
    %v6456 = vld [vmem:[%s3829 + $0x14] sm:$0xff]
    %v6457 = vld [vmem:[%s3829 + $0x1c] sm:$0xff]
    %v6458 = vld [vmem:[%s3829 + $0x24] sm:$0xff]
    %v6459 = vld [vmem:[%s3829 + $0x2c] sm:$0xff]
    %v6460 = vld [vmem:[%s3829 + $0x34] sm:$0xff]
    %v6461 = vld [vmem:[%s3829 + $0x3c] sm:$0xff]
    %v6462 = vld [vmem:[%s3829 + $0x44] sm:$0xff]
    %v6463 = vld [vmem:[%s3829 + $0x4c] sm:$0xff]
    %v6464 = vld [vmem:[%s3829 + $0x54] sm:$0xff]
    %v6465 = vld [vmem:[%s3829 + $0x5c] sm:$0xff]
    %v6466 = vld [vmem:[%s3829 + $0x64] sm:$0xff]
    %v6467 = vld [vmem:[%s3829 + $0x6c] sm:$0xff]
    %v6468 = vld [vmem:[%s3829 + $0x74] sm:$0xff]
    %v6469 = vld [vmem:[%s3829 + $0x7c] sm:$0xff]
    %v6470 = vld [vmem:[%s3829 + $0x84] sm:$0xff]
    %v6471 = vld [vmem:[%s3829 + $0x8c] sm:$0xff]
    %v6472 = vld [vmem:[%s3829 + $0x94] sm:$0xff]
    %v6473 = vld [vmem:[%s3829 + $0x9c] sm:$0xff]
    %v6474 = vld [vmem:[%s3829 + $0xa4] sm:$0xff]
    %v6475 = vld [vmem:[%s3829 + $0xac] sm:$0xff]
    %v6476 = vld [vmem:[%s3829 + $0xb4] sm:$0xff]
    %v6477 = vld [vmem:[%s3829 + $0xbc] sm:$0xff]
    %v6478 = vld [vmem:[%s3829 + $0xc4] sm:$0xff]
    %v6479 = vld [vmem:[%s3829 + $0xcc] sm:$0xff]
    %v6480 = vld [vmem:[%s3829 + $0xd4] sm:$0xff]
    %v6481 = vld [vmem:[%s3829 + $0xdc] sm:$0xff]
    %v6482 = vld [vmem:[%s3829 + $0xe4] sm:$0xff]
    %v6483 = vld [vmem:[%s3829 + $0xec] sm:$0xff]
    %v6484 = vld [vmem:[%s3829 + $0xf4] sm:$0xff]
    %v6485 = vld [vmem:[%s3829 + $0xfc] sm:$0xff]
    %v6486 = vld [vmem:[%s3829 + $0x104] sm:$0xff]
    %v6487 = vld [vmem:[%s3829 + $0x10c] sm:$0xff]
    %v6488 = vld [vmem:[%s3829 + $0x114] sm:$0xff]
    %v6489 = vld [vmem:[%s3829 + $0x11c] sm:$0xff]
    %v6490 = vld [vmem:[%s3829 + $0x124] sm:$0xff]
    %v6491 = vld [vmem:[%s3829 + $0x12c] sm:$0xff]
    %v6492 = vld [vmem:[%s3829 + $0x134] sm:$0xff]
    %v6493 = vld [vmem:[%s3829 + $0x13c] sm:$0xff]
    %v6494 = vld [vmem:[%s3829 + $0x144] sm:$0xff]
    %v6495 = vld [vmem:[%s3829 + $0x14c] sm:$0xff]
    %v6496 = vld [vmem:[%s3829 + $0x154] sm:$0xff]
    %v6497 = vld [vmem:[%s3829 + $0x15c] sm:$0xff]
    %v6498 = vld [vmem:[%s3829 + $0x164] sm:$0xff]
    %v6499 = vld [vmem:[%s3829 + $0x16c] sm:$0xff]
    %v6500 = vld [vmem:[%s3829 + $0x174] sm:$0xff]
    %v6501 = vld [vmem:[%s3829 + $0x17c] sm:$0xff]
    %v6502 = vld [vmem:[%s3829 + $0x184] sm:$0xff]
    %v6503 = vld [vmem:[%s3829 + $0x18c] sm:$0xff]
    %v6504 = vld [vmem:[%s3829 + $0x194] sm:$0xff]
    %v6505 = vld [vmem:[%s3829 + $0x19c] sm:$0xff]
    %v6506 = vld [vmem:[%s3829 + $0x1a4] sm:$0xff]
    %v6507 = vld [vmem:[%s3829 + $0x1ac] sm:$0xff]
    %v6508 = vld [vmem:[%s3829 + $0x1b4] sm:$0xff]
    %v6509 = vld [vmem:[%s3829 + $0x1bc] sm:$0xff]
    %v6510 = vld [vmem:[%s3829 + $0x1c4] sm:$0xff]
    %v6511 = vld [vmem:[%s3829 + $0x1cc] sm:$0xff]
    %v6512 = vld [vmem:[%s3829 + $0x1d4] sm:$0xff]
    %v6513 = vld [vmem:[%s3829 + $0x1dc] sm:$0xff]
    %v6514 = vld [vmem:[%s3829 + $0x1e4] sm:$0xff]
    %v6515 = vld [vmem:[%s3829 + $0x1ec] sm:$0xff]
    %v6516 = vld [vmem:[%s1 + $0x40] sm:$0xff]
    %v6517 = vld [vmem:[%s1 + $0x48] sm:$0xff]
    %v6519 = vsel %vm191, %v6454, 0
    %v6522 = vsel %vm191, %v6455, 0
    %v6525 = vsel %vm191, %v6456, 0
    %v6528 = vsel %vm191, %v6457, 0
    %v6531 = vsel %vm191, %v6458, 0
    %v6534 = vsel %vm191, %v6459, 0
    %v6537 = vsel %vm191, %v6460, 0
    %v6540 = vsel %vm191, %v6461, 0
    %v6543 = vsel %vm191, %v6462, 0
    %v6546 = vsel %vm191, %v6463, 0
    %v6549 = vsel %vm191, %v6464, 0
    %v6552 = vsel %vm191, %v6465, 0
    %v6555 = vsel %vm191, %v6466, 0
    %v6558 = vsel %vm191, %v6467, 0
    %v6561 = vsel %vm191, %v6468, 0
    %v6564 = vsel %vm191, %v6469, 0
    %v6567 = vsel %vm191, %v6470, 0
    %v6570 = vsel %vm191, %v6471, 0
    %v6573 = vsel %vm191, %v6472, 0
    %v6576 = vsel %vm191, %v6473, 0
    %v6579 = vsel %vm191, %v6474, 0
    %v6582 = vsel %vm191, %v6475, 0
    %v6585 = vsel %vm191, %v6476, 0
    %v6588 = vsel %vm191, %v6477, 0
    %v6591 = vsel %vm191, %v6478, 0
    %v6594 = vsel %vm191, %v6479, 0
    %v6597 = vsel %vm191, %v6480, 0
    %v6600 = vsel %vm191, %v6481, 0
    %v6603 = vsel %vm191, %v6482, 0
    %v6606 = vsel %vm191, %v6483, 0
    %v6609 = vsel %vm191, %v6484, 0
    %v6612 = vsel %vm191, %v6485, 0
    %v6615 = vsel %vm191, %v6486, 0
    %v6618 = vsel %vm191, %v6487, 0
    %v6621 = vsel %vm191, %v6488, 0
    %v6624 = vsel %vm191, %v6489, 0
    %v6627 = vsel %vm191, %v6490, 0
    %v6630 = vsel %vm191, %v6491, 0
    %v6633 = vsel %vm191, %v6492, 0
    %v6636 = vsel %vm191, %v6493, 0
    %v6639 = vsel %vm191, %v6494, 0
    %v6642 = vsel %vm191, %v6495, 0
    %v6645 = vsel %vm191, %v6496, 0
    %v6648 = vsel %vm191, %v6497, 0
    %v6651 = vsel %vm191, %v6498, 0
    %v6654 = vsel %vm191, %v6499, 0
    %v6657 = vsel %vm191, %v6500, 0
    %v6660 = vsel %vm191, %v6501, 0
    %v6663 = vsel %vm191, %v6502, 0
    %v6666 = vsel %vm191, %v6503, 0
    %v6669 = vsel %vm191, %v6504, 0
    %v6672 = vsel %vm191, %v6505, 0
    %v6675 = vsel %vm191, %v6506, 0
    %v6678 = vsel %vm191, %v6507, 0
    %v6681 = vsel %vm191, %v6508, 0
    %v6684 = vsel %vm191, %v6509, 0
    %v6687 = vsel %vm191, %v6510, 0
    %v6690 = vsel %vm191, %v6511, 0
    %v6693 = vsel %vm191, %v6512, 0
    %v6696 = vsel %vm191, %v6513, 0
    %v6699 = vsel %vm191, %v6514, 0
    %v6702 = vsel %vm191, %v6515, 0
    %6704 = vmatprep.subr.mxu0 0.0
    %6705 = vmatpush1.msra.mxu0 %v6516
    %6706 = vmatprep.subr.mxu0 0.0
    %6707 = vmatpush1.msra.mxu0 %v6517
    %6708 = vmatprep.subr.mxu0 0.0
    %6709 = vmatpush1.msra.mxu0 0.0
    %6710 = vmatprep.subr.mxu0 0.0
    %6711 = vmatpush1.msra.mxu0 0.0
    %6712 = vmatprep.subr.mxu0 0.0
    %6713 = vmatpush1.msra.mxu0 0.0
    %6714 = vmatprep.subr.mxu0 0.0
    %6715 = vmatpush1.msra.mxu0 0.0
    %6716 = vmatprep.subr.mxu0 0.0
    %6717 = vmatpush1.msra.mxu0 0.0
    %6718 = vmatprep.subr.mxu0 0.0
    %6719 = vmatpush1.msra.mxu0 0.0
    %6720 = vmatprep.subr.mxu0 0.0
    %6721 = vmatpush1.msra.mxu0 0.0
    %6722 = vmatprep.subr.mxu0 0.0
    %6723 = vmatpush1.msra.mxu0 0.0
    %6724 = vmatprep.subr.mxu0 0.0
    %6725 = vmatpush1.msra.mxu0 0.0
    %6726 = vmatprep.subr.mxu0 0.0
    %6727 = vmatpush1.msra.mxu0 0.0
    %6728 = vmatprep.subr.mxu0 0.0
    %6729 = vmatpush1.msra.mxu0 0.0
    %6730 = vmatprep.subr.mxu0 0.0
    %6731 = vmatpush1.msra.mxu0 0.0
    %6732 = vmatprep.subr.mxu0 0.0
    %6733 = vmatpush1.msra.mxu0 0.0
    %6734 = vmatprep.subr.mxu0 0.0
    %6735 = vmatpush1.msra.mxu0 0.0
    %6736 = vmatprep.subr.mxu0 0.0
    %6737 = vmatpush1.msra.mxu0 0.0
    %6738 = vmatprep.subr.mxu0 0.0
    %6739 = vmatpush1.msra.mxu0 0.0
    %6740 = vmatprep.subr.mxu0 0.0
    %6741 = vmatpush1.msra.mxu0 0.0
    %6742 = vmatprep.subr.mxu0 0.0
    %6743 = vmatpush1.msra.mxu0 0.0
    %6744 = vmatprep.subr.mxu0 0.0
    %6745 = vmatpush1.msra.mxu0 0.0
    %6746 = vmatprep.subr.mxu0 0.0
    %6747 = vmatpush1.msra.mxu0 0.0
    %6748 = vmatprep.subr.mxu0 0.0
    %6749 = vmatpush1.msra.mxu0 0.0
    %6750 = vmatprep.subr.mxu0 0.0
    %6751 = vmatpush1.msra.mxu0 0.0
    %6752 = vmatprep.subr.mxu0 0.0
    %6753 = vmatpush1.msra.mxu0 0.0
    %6754 = vmatprep.subr.mxu0 0.0
    %6755 = vmatpush1.msra.mxu0 0.0
    %6756 = vmatprep.subr.mxu0 0.0
    %6757 = vmatpush1.msra.mxu0 0.0
    %6758 = vmatprep.subr.mxu0 0.0
    %6759 = vmatpush1.msra.mxu0 0.0
    %6760 = vmatprep.subr.mxu0 0.0
    %6761 = vmatpush1.msra.mxu0 0.0
    %6762 = vmatprep.subr.mxu0 0.0
    %6763 = vmatpush1.msra.mxu0 0.0
    %6764 = vmatprep.subr.mxu0 0.0
    %6765 = vmatpush1.msra.mxu0 0.0
    %6766 = vmatprep.subr.mxu0 0.0
    %6767 = vmatpush1.msra.mxu0 0.0
    %6768 = vmatprep.mubr.f32.mxu0 0.0
    %6769 = vmatmul.mubr.f32.gmra.mrb[0].mxu0 %v6519
    %v6770 = vpop.f32.mrb[0].mxu0
    %v6771 = vadd.f32 0.0, %v6770
    %v6772 = vpop.f32.mrb[0].mxu0
    %6773 = vmatprep.mubr.f32.mxu0 0.0
    %6774 = vmatmul.mubr.f32.gmra.mrb[0].mxu0 %v6522
    %v6775 = vpop.f32.mrb[0].mxu0
    %v6776 = vadd.f32 0.0, %v6775
    %v6777 = vpop.f32.mrb[0].mxu0
    %6778 = vmatprep.mubr.f32.mxu0 0.0
    %6779 = vmatmul.mubr.f32.gmra.mrb[0].mxu0 %v6525
    %v6780 = vpop.f32.mrb[0].mxu0
    %v6781 = vadd.f32 0.0, %v6780
    %v6782 = vpop.f32.mrb[0].mxu0
    %6783 = vmatprep.mubr.f32.mxu0 0.0
    %6784 = vmatmul.mubr.f32.gmra.mrb[0].mxu0 %v6528
    %v6785 = vpop.f32.mrb[0].mxu0
    %v6786 = vadd.f32 0.0, %v6785
    %v6787 = vpop.f32.mrb[0].mxu0
    %6788 = vmatprep.mubr.f32.mxu0 0.0
    %6789 = vmatmul.mubr.f32.gmra.mrb[0].mxu0 %v6531
    %v6790 = vpop.f32.mrb[0].mxu0
    %v6791 = vadd.f32 0.0, %v6790
    %v6792 = vpop.f32.mrb[0].mxu0
    %6793 = vmatprep.mubr.f32.mxu0 0.0
    %6794 = vmatmul.mubr.f32.gmra.mrb[0].mxu0 %v6534
    %v6795 = vpop.f32.mrb[0].mxu0
    %v6796 = vadd.f32 0.0, %v6795
    %v6797 = vpop.f32.mrb[0].mxu0
    %6798 = vmatprep.mubr.f32.mxu0 0.0
    %6799 = vmatmul.mubr.f32.gmra.mrb[0].mxu0 %v6537
    %v6800 = vpop.f32.mrb[0].mxu0
    %v6801 = vadd.f32 0.0, %v6800
    %v6802 = vpop.f32.mrb[0].mxu0
    %6803 = vmatprep.mubr.f32.mxu0 0.0
    %6804 = vmatmul.mubr.f32.gmra.mrb[0].mxu0 %v6540
    %v6805 = vpop.f32.mrb[0].mxu0
    %v6806 = vadd.f32 0.0, %v6805
    %v6807 = vpop.f32.mrb[0].mxu0
    %6808 = vmatprep.mubr.f32.mxu0 0.0
    %6809 = vmatmul.mubr.f32.gmra.mrb[0].mxu0 %v6543
    %v6810 = vpop.f32.mrb[0].mxu0
    %v6811 = vadd.f32 0.0, %v6810
    %v6812 = vpop.f32.mrb[0].mxu0
    %6813 = vmatprep.mubr.f32.mxu0 0.0
    %6814 = vmatmul.mubr.f32.gmra.mrb[0].mxu0 %v6546
    %v6815 = vpop.f32.mrb[0].mxu0
    %v6816 = vadd.f32 0.0, %v6815
    %v6817 = vpop.f32.mrb[0].mxu0
    %6818 = vmatprep.mubr.f32.mxu0 0.0
    %6819 = vmatmul.mubr.f32.gmra.mrb[0].mxu0 %v6549
    %v6820 = vpop.f32.mrb[0].mxu0
    %v6821 = vadd.f32 0.0, %v6820
    %v6822 = vpop.f32.mrb[0].mxu0
    %6823 = vmatprep.mubr.f32.mxu0 0.0
    %6824 = vmatmul.mubr.f32.gmra.mrb[0].mxu0 %v6552
    %v6825 = vpop.f32.mrb[0].mxu0
    %v6826 = vadd.f32 0.0, %v6825
    %v6827 = vpop.f32.mrb[0].mxu0
    %6828 = vmatprep.mubr.f32.mxu0 0.0
    %6829 = vmatmul.mubr.f32.gmra.mrb[0].mxu0 %v6555
    %v6830 = vpop.f32.mrb[0].mxu0
    %v6831 = vadd.f32 0.0, %v6830
    %v6832 = vpop.f32.mrb[0].mxu0
    %6833 = vmatprep.mubr.f32.mxu0 0.0
    %6834 = vmatmul.mubr.f32.gmra.mrb[0].mxu0 %v6558
    %v6835 = vpop.f32.mrb[0].mxu0
    %v6836 = vadd.f32 0.0, %v6835
    %v6837 = vpop.f32.mrb[0].mxu0
    %6838 = vmatprep.mubr.f32.mxu0 0.0
    %6839 = vmatmul.mubr.f32.gmra.mrb[0].mxu0 %v6561
    %v6840 = vpop.f32.mrb[0].mxu0
    %v6841 = vadd.f32 0.0, %v6840
    %v6842 = vpop.f32.mrb[0].mxu0
    %6843 = vmatprep.mubr.f32.mxu0 0.0
    %6844 = vmatmul.mubr.f32.gmra.mrb[0].mxu0 %v6564
    %v6845 = vpop.f32.mrb[0].mxu0
    %v6846 = vadd.f32 0.0, %v6845
    %v6847 = vpop.f32.mrb[0].mxu0
    %6848 = vmatprep.mubr.f32.mxu0 0.0
    %6849 = vmatmul.mubr.f32.gmra.mrb[0].mxu0 %v6567
    %v6850 = vpop.f32.mrb[0].mxu0
    %v6851 = vadd.f32 0.0, %v6850
    %v6852 = vpop.f32.mrb[0].mxu0
    %6853 = vmatprep.mubr.f32.mxu0 0.0
    %6854 = vmatmul.mubr.f32.gmra.mrb[0].mxu0 %v6570
    %v6855 = vpop.f32.mrb[0].mxu0
    %v6856 = vadd.f32 0.0, %v6855
    %v6857 = vpop.f32.mrb[0].mxu0
    %6858 = vmatprep.mubr.f32.mxu0 0.0
    %6859 = vmatmul.mubr.f32.gmra.mrb[0].mxu0 %v6573
    %v6860 = vpop.f32.mrb[0].mxu0
    %v6861 = vadd.f32 0.0, %v6860
    %v6862 = vpop.f32.mrb[0].mxu0
    %6863 = vmatprep.mubr.f32.mxu0 0.0
    %6864 = vmatmul.mubr.f32.gmra.mrb[0].mxu0 %v6576
    %v6865 = vpop.f32.mrb[0].mxu0
    %v6866 = vadd.f32 0.0, %v6865
    %v6867 = vpop.f32.mrb[0].mxu0
    %6868 = vmatprep.mubr.f32.mxu0 0.0
    %6869 = vmatmul.mubr.f32.gmra.mrb[0].mxu0 %v6579
    %v6870 = vpop.f32.mrb[0].mxu0
    %v6871 = vadd.f32 0.0, %v6870
    %v6872 = vpop.f32.mrb[0].mxu0
    %6873 = vmatprep.mubr.f32.mxu0 0.0
    %6874 = vmatmul.mubr.f32.gmra.mrb[0].mxu0 %v6582
    %v6875 = vpop.f32.mrb[0].mxu0
    %v6876 = vadd.f32 0.0, %v6875
    %v6877 = vpop.f32.mrb[0].mxu0
    %6878 = vmatprep.mubr.f32.mxu0 0.0
    %6879 = vmatmul.mubr.f32.gmra.mrb[0].mxu0 %v6585
    %v6880 = vpop.f32.mrb[0].mxu0
    %v6881 = vadd.f32 0.0, %v6880
    %v6882 = vpop.f32.mrb[0].mxu0
    %6883 = vmatprep.mubr.f32.mxu0 0.0
    %6884 = vmatmul.mubr.f32.gmra.mrb[0].mxu0 %v6588
    %v6885 = vpop.f32.mrb[0].mxu0
    %v6886 = vadd.f32 0.0, %v6885
    %v6887 = vpop.f32.mrb[0].mxu0
    %6888 = vmatprep.mubr.f32.mxu0 0.0
    %6889 = vmatmul.mubr.f32.gmra.mrb[0].mxu0 %v6591
    %v6890 = vpop.f32.mrb[0].mxu0
    %v6891 = vadd.f32 0.0, %v6890
    %v6892 = vpop.f32.mrb[0].mxu0
    %6893 = vmatprep.mubr.f32.mxu0 0.0
    %6894 = vmatmul.mubr.f32.gmra.mrb[0].mxu0 %v6594
    %v6895 = vpop.f32.mrb[0].mxu0
    %v6896 = vadd.f32 0.0, %v6895
    %v6897 = vpop.f32.mrb[0].mxu0
    %6898 = vmatprep.mubr.f32.mxu0 0.0
    %6899 = vmatmul.mubr.f32.gmra.mrb[0].mxu0 %v6597
    %v6900 = vpop.f32.mrb[0].mxu0
    %v6901 = vadd.f32 0.0, %v6900
    %v6902 = vpop.f32.mrb[0].mxu0
    %6903 = vmatprep.mubr.f32.mxu0 0.0
    %6904 = vmatmul.mubr.f32.gmra.mrb[0].mxu0 %v6600
    %v6905 = vpop.f32.mrb[0].mxu0
    %v6906 = vadd.f32 0.0, %v6905
    %v6907 = vpop.f32.mrb[0].mxu0
    %6908 = vmatprep.mubr.f32.mxu0 0.0
    %6909 = vmatmul.mubr.f32.gmra.mrb[0].mxu0 %v6603
    %v6910 = vpop.f32.mrb[0].mxu0
    %v6911 = vadd.f32 0.0, %v6910
    %v6912 = vpop.f32.mrb[0].mxu0
    %6913 = vmatprep.mubr.f32.mxu0 0.0
    %6914 = vmatmul.mubr.f32.gmra.mrb[0].mxu0 %v6606
    %v6915 = vpop.f32.mrb[0].mxu0
    %v6916 = vadd.f32 0.0, %v6915
    %v6917 = vpop.f32.mrb[0].mxu0
    %6918 = vmatprep.mubr.f32.mxu0 0.0
    %6919 = vmatmul.mubr.f32.gmra.mrb[0].mxu0 %v6609
    %v6920 = vpop.f32.mrb[0].mxu0
    %v6921 = vadd.f32 0.0, %v6920
    %v6922 = vpop.f32.mrb[0].mxu0
    %6923 = vmatprep.mubr.f32.mxu0 0.0
    %6924 = vmatmul.mubr.f32.gmra.mrb[0].mxu0 %v6612
    %v6925 = vpop.f32.mrb[0].mxu0
    %v6926 = vadd.f32 0.0, %v6925
    %v6927 = vpop.f32.mrb[0].mxu0
    %6928 = vmatprep.mubr.f32.mxu0 0.0
    %6929 = vmatmul.mubr.f32.gmra.mrb[0].mxu0 %v6615
    %v6930 = vpop.f32.mrb[0].mxu0
    %v6931 = vadd.f32 0.0, %v6930
    %v6932 = vpop.f32.mrb[0].mxu0
    %6933 = vmatprep.mubr.f32.mxu0 0.0
    %6934 = vmatmul.mubr.f32.gmra.mrb[0].mxu0 %v6618
    %v6935 = vpop.f32.mrb[0].mxu0
    %v6936 = vadd.f32 0.0, %v6935
    %v6937 = vpop.f32.mrb[0].mxu0
    %6938 = vmatprep.mubr.f32.mxu0 0.0
    %6939 = vmatmul.mubr.f32.gmra.mrb[0].mxu0 %v6621
    %v6940 = vpop.f32.mrb[0].mxu0
    %v6941 = vadd.f32 0.0, %v6940
    %v6942 = vpop.f32.mrb[0].mxu0
    %6943 = vmatprep.mubr.f32.mxu0 0.0
    %6944 = vmatmul.mubr.f32.gmra.mrb[0].mxu0 %v6624
    %v6945 = vpop.f32.mrb[0].mxu0
    %v6946 = vadd.f32 0.0, %v6945
    %v6947 = vpop.f32.mrb[0].mxu0
    %6948 = vmatprep.mubr.f32.mxu0 0.0
    %6949 = vmatmul.mubr.f32.gmra.mrb[0].mxu0 %v6627
    %v6950 = vpop.f32.mrb[0].mxu0
    %v6951 = vadd.f32 0.0, %v6950
    %v6952 = vpop.f32.mrb[0].mxu0
    %6953 = vmatprep.mubr.f32.mxu0 0.0
    %6954 = vmatmul.mubr.f32.gmra.mrb[0].mxu0 %v6630
    %v6955 = vpop.f32.mrb[0].mxu0
    %v6956 = vadd.f32 0.0, %v6955
    %v6957 = vpop.f32.mrb[0].mxu0
    %6958 = vmatprep.mubr.f32.mxu0 0.0
    %6959 = vmatmul.mubr.f32.gmra.mrb[0].mxu0 %v6633
    %v6960 = vpop.f32.mrb[0].mxu0
    %v6961 = vadd.f32 0.0, %v6960
    %v6962 = vpop.f32.mrb[0].mxu0
    %6963 = vmatprep.mubr.f32.mxu0 0.0
    %6964 = vmatmul.mubr.f32.gmra.mrb[0].mxu0 %v6636
    %v6965 = vpop.f32.mrb[0].mxu0
    %v6966 = vadd.f32 0.0, %v6965
    %v6967 = vpop.f32.mrb[0].mxu0
    %6968 = vmatprep.mubr.f32.mxu0 0.0
    %6969 = vmatmul.mubr.f32.gmra.mrb[0].mxu0 %v6639
    %v6970 = vpop.f32.mrb[0].mxu0
    %v6971 = vadd.f32 0.0, %v6970
    %v6972 = vpop.f32.mrb[0].mxu0
    %6973 = vmatprep.mubr.f32.mxu0 0.0
    %6974 = vmatmul.mubr.f32.gmra.mrb[0].mxu0 %v6642
    %v6975 = vpop.f32.mrb[0].mxu0
    %v6976 = vadd.f32 0.0, %v6975
    %v6977 = vpop.f32.mrb[0].mxu0
    %6978 = vmatprep.mubr.f32.mxu0 0.0
    %6979 = vmatmul.mubr.f32.gmra.mrb[0].mxu0 %v6645
    %v6980 = vpop.f32.mrb[0].mxu0
    %v6981 = vadd.f32 0.0, %v6980
    %v6982 = vpop.f32.mrb[0].mxu0
    %6983 = vmatprep.mubr.f32.mxu0 0.0
    %6984 = vmatmul.mubr.f32.gmra.mrb[0].mxu0 %v6648
    %v6985 = vpop.f32.mrb[0].mxu0
    %v6986 = vadd.f32 0.0, %v6985
    %v6987 = vpop.f32.mrb[0].mxu0
    %6988 = vmatprep.mubr.f32.mxu0 0.0
    %6989 = vmatmul.mubr.f32.gmra.mrb[0].mxu0 %v6651
    %v6990 = vpop.f32.mrb[0].mxu0
    %v6991 = vadd.f32 0.0, %v6990
    %v6992 = vpop.f32.mrb[0].mxu0
    %6993 = vmatprep.mubr.f32.mxu0 0.0
    %6994 = vmatmul.mubr.f32.gmra.mrb[0].mxu0 %v6654
    %v6995 = vpop.f32.mrb[0].mxu0
    %v6996 = vadd.f32 0.0, %v6995
    %v6997 = vpop.f32.mrb[0].mxu0
    %6998 = vmatprep.mubr.f32.mxu0 0.0
    %6999 = vmatmul.mubr.f32.gmra.mrb[0].mxu0 %v6657
    %v7000 = vpop.f32.mrb[0].mxu0
    %v7001 = vadd.f32 0.0, %v7000
    %v7002 = vpop.f32.mrb[0].mxu0
    %7003 = vmatprep.mubr.f32.mxu0 0.0
    %7004 = vmatmul.mubr.f32.gmra.mrb[0].mxu0 %v6660
    %v7005 = vpop.f32.mrb[0].mxu0
    %v7006 = vadd.f32 0.0, %v7005
    %v7007 = vpop.f32.mrb[0].mxu0
    %7008 = vmatprep.mubr.f32.mxu0 0.0
    %7009 = vmatmul.mubr.f32.gmra.mrb[0].mxu0 %v6663
    %v7010 = vpop.f32.mrb[0].mxu0
    %v7011 = vadd.f32 0.0, %v7010
    %v7012 = vpop.f32.mrb[0].mxu0
    %7013 = vmatprep.mubr.f32.mxu0 0.0
    %7014 = vmatmul.mubr.f32.gmra.mrb[0].mxu0 %v6666
    %v7015 = vpop.f32.mrb[0].mxu0
    %v7016 = vadd.f32 0.0, %v7015
    %v7017 = vpop.f32.mrb[0].mxu0
    %7018 = vmatprep.mubr.f32.mxu0 0.0
    %7019 = vmatmul.mubr.f32.gmra.mrb[0].mxu0 %v6669
    %v7020 = vpop.f32.mrb[0].mxu0
    %v7021 = vadd.f32 0.0, %v7020
    %v7022 = vpop.f32.mrb[0].mxu0
    %7023 = vmatprep.mubr.f32.mxu0 0.0
    %7024 = vmatmul.mubr.f32.gmra.mrb[0].mxu0 %v6672
    %v7025 = vpop.f32.mrb[0].mxu0
    %v7026 = vadd.f32 0.0, %v7025
    %v7027 = vpop.f32.mrb[0].mxu0
    %7028 = vmatprep.mubr.f32.mxu0 0.0
    %7029 = vmatmul.mubr.f32.gmra.mrb[0].mxu0 %v6675
    %v7030 = vpop.f32.mrb[0].mxu0
    %v7031 = vadd.f32 0.0, %v7030
    %v7032 = vpop.f32.mrb[0].mxu0
    %7033 = vmatprep.mubr.f32.mxu0 0.0
    %7034 = vmatmul.mubr.f32.gmra.mrb[0].mxu0 %v6678
    %v7035 = vpop.f32.mrb[0].mxu0
    %v7036 = vadd.f32 0.0, %v7035
    %v7037 = vpop.f32.mrb[0].mxu0
    %7038 = vmatprep.mubr.f32.mxu0 0.0
    %7039 = vmatmul.mubr.f32.gmra.mrb[0].mxu0 %v6681
    %v7040 = vpop.f32.mrb[0].mxu0
    %v7041 = vadd.f32 0.0, %v7040
    %v7042 = vpop.f32.mrb[0].mxu0
    %7043 = vmatprep.mubr.f32.mxu0 0.0
    %7044 = vmatmul.mubr.f32.gmra.mrb[0].mxu0 %v6684
    %v7045 = vpop.f32.mrb[0].mxu0
    %v7046 = vadd.f32 0.0, %v7045
    %v7047 = vpop.f32.mrb[0].mxu0
    %7048 = vmatprep.mubr.f32.mxu0 0.0
    %7049 = vmatmul.mubr.f32.gmra.mrb[0].mxu0 %v6687
    %v7050 = vpop.f32.mrb[0].mxu0
    %v7051 = vadd.f32 0.0, %v7050
    %v7052 = vpop.f32.mrb[0].mxu0
    %7053 = vmatprep.mubr.f32.mxu0 0.0
    %7054 = vmatmul.mubr.f32.gmra.mrb[0].mxu0 %v6690
    %v7055 = vpop.f32.mrb[0].mxu0
    %v7056 = vadd.f32 0.0, %v7055
    %v7057 = vpop.f32.mrb[0].mxu0
    %7058 = vmatprep.mubr.f32.mxu0 0.0
    %7059 = vmatmul.mubr.f32.gmra.mrb[0].mxu0 %v6693
    %v7060 = vpop.f32.mrb[0].mxu0
    %v7061 = vadd.f32 0.0, %v7060
    %v7062 = vpop.f32.mrb[0].mxu0
    %7063 = vmatprep.mubr.f32.mxu0 0.0
    %7064 = vmatmul.mubr.f32.gmra.mrb[0].mxu0 %v6696
    %v7065 = vpop.f32.mrb[0].mxu0
    %v7066 = vadd.f32 0.0, %v7065
    %v7067 = vpop.f32.mrb[0].mxu0
    %7068 = vmatprep.mubr.f32.mxu0 0.0
    %7069 = vmatmul.mubr.f32.gmra.mrb[0].mxu0 %v6699
    %v7070 = vpop.f32.mrb[0].mxu0
    %v7071 = vadd.f32 0.0, %v7070
    %v7072 = vpop.f32.mrb[0].mxu0
    %7073 = vmatprep.mubr.f32.mxu0 0.0
    %7074 = vmatmul.mubr.f32.gmra.mrb[0].mxu0 %v6702
    %v7075 = vpop.f32.mrb[0].mxu0
    %v7076 = vadd.f32 0.0, %v7075
    %v7077 = vpop.f32.mrb[0].mxu0
    %7078 = vdwg.mxu0
    %v7079 = vadd.f32 %v6392, %v6771
    %v7080 = vadd.f32 %v6393, %v6776
    %v7081 = vadd.f32 %v6394, %v6781
    %v7082 = vadd.f32 %v6395, %v6786
    %v7083 = vadd.f32 %v6396, %v6791
    %v7084 = vadd.f32 %v6397, %v6796
    %v7085 = vadd.f32 %v6398, %v6801
    %v7086 = vadd.f32 %v6399, %v6806
    %v7087 = vadd.f32 %v6400, %v6811
    %v7088 = vadd.f32 %v6401, %v6816
    %v7089 = vadd.f32 %v6402, %v6821
    %v7090 = vadd.f32 %v6403, %v6826
    %v7091 = vadd.f32 %v6404, %v6831
    %v7092 = vadd.f32 %v6405, %v6836
    %v7093 = vadd.f32 %v6406, %v6841
    %v7094 = vadd.f32 %v6407, %v6846
    %v7095 = vadd.f32 %v6408, %v6851
    %v7096 = vadd.f32 %v6409, %v6856
    %v7097 = vadd.f32 %v6410, %v6861
    %v7098 = vadd.f32 %v6411, %v6866
    %v7099 = vadd.f32 %v6412, %v6871
    %v7100 = vadd.f32 %v6413, %v6876
    %v7101 = vadd.f32 %v6414, %v6881
    %v7102 = vadd.f32 %v6415, %v6886
    %v7103 = vadd.f32 %v6416, %v6891
    %v7104 = vadd.f32 %v6417, %v6896
    %v7105 = vadd.f32 %v6418, %v6901
    %v7106 = vadd.f32 %v6419, %v6906
    %v7107 = vadd.f32 %v6420, %v6911
    %v7108 = vadd.f32 %v6421, %v6916
    %v7109 = vadd.f32 %v6422, %v6921
    %v7110 = vadd.f32 %v6423, %v6926
    %v7111 = vadd.f32 %v6424, %v6931
    %v7112 = vadd.f32 %v6425, %v6936
    %v7113 = vadd.f32 %v6426, %v6941
    %v7114 = vadd.f32 %v6427, %v6946
    %v7115 = vadd.f32 %v6428, %v6951
    %v7116 = vadd.f32 %v6429, %v6956
    %v7117 = vadd.f32 %v6430, %v6961
    %v7118 = vadd.f32 %v6431, %v6966
    %v7119 = vadd.f32 %v6432, %v6971
    %v7120 = vadd.f32 %v6433, %v6976
    %v7121 = vadd.f32 %v6434, %v6981
    %v7122 = vadd.f32 %v6435, %v6986
    %v7123 = vadd.f32 %v6436, %v6991
    %v7124 = vadd.f32 %v6437, %v6996
    %v7125 = vadd.f32 %v6438, %v7001
    %v7126 = vadd.f32 %v6439, %v7006
    %v7127 = vadd.f32 %v6440, %v7011
    %v7128 = vadd.f32 %v6441, %v7016
    %v7129 = vadd.f32 %v6442, %v7021
    %v7130 = vadd.f32 %v6443, %v7026
    %v7131 = vadd.f32 %v6444, %v7031
    %v7132 = vadd.f32 %v6445, %v7036
    %v7133 = vadd.f32 %v6446, %v7041
    %v7134 = vadd.f32 %v6447, %v7046
    %v7135 = vadd.f32 %v6448, %v7051
    %v7136 = vadd.f32 %v6449, %v7056
    %v7137 = vadd.f32 %v6450, %v7061
    %v7138 = vadd.f32 %v6451, %v7066
    %v7139 = vadd.f32 %v6452, %v7071
    %v7140 = vadd.f32 %v6453, %v7076
    %v7141 = vld [vmem:[%s2] sm:$0x1]
    %v7143 = vlaneseq
    %v7144 = vshrl.u32 %v7143, 7
    %v7145 = vsub.s32 0, %v7144
    %v7146 = vrot.slane %v7141, %v7145
    %v7148 = vadd.f32 %v7079, %v7146
    %v7149 = vadd.f32 %v7080, %v7146
    %v7150 = vadd.f32 %v7081, %v7146
    %v7151 = vadd.f32 %v7082, %v7146
    %v7152 = vadd.f32 %v7083, %v7146
    %v7153 = vadd.f32 %v7084, %v7146
    %v7154 = vadd.f32 %v7085, %v7146
    %v7155 = vadd.f32 %v7086, %v7146
    %v7156 = vadd.f32 %v7087, %v7146
    %v7157 = vadd.f32 %v7088, %v7146
    %v7158 = vadd.f32 %v7089, %v7146
    %v7159 = vadd.f32 %v7090, %v7146
    %v7160 = vadd.f32 %v7091, %v7146
    %v7161 = vadd.f32 %v7092, %v7146
    %v7162 = vadd.f32 %v7093, %v7146
    %v7163 = vadd.f32 %v7094, %v7146
    %v7164 = vadd.f32 %v7095, %v7146
    %v7165 = vadd.f32 %v7096, %v7146
    %v7166 = vadd.f32 %v7097, %v7146
    %v7167 = vadd.f32 %v7098, %v7146
    %v7168 = vadd.f32 %v7099, %v7146
    %v7169 = vadd.f32 %v7100, %v7146
    %v7170 = vadd.f32 %v7101, %v7146
    %v7171 = vadd.f32 %v7102, %v7146
    %v7172 = vadd.f32 %v7103, %v7146
    %v7173 = vadd.f32 %v7104, %v7146
    %v7174 = vadd.f32 %v7105, %v7146
    %v7175 = vadd.f32 %v7106, %v7146
    %v7176 = vadd.f32 %v7107, %v7146
    %v7177 = vadd.f32 %v7108, %v7146
    %v7178 = vadd.f32 %v7109, %v7146
    %v7179 = vadd.f32 %v7110, %v7146
    %v7180 = vadd.f32 %v7111, %v7146
    %v7181 = vadd.f32 %v7112, %v7146
    %v7182 = vadd.f32 %v7113, %v7146
    %v7183 = vadd.f32 %v7114, %v7146
    %v7184 = vadd.f32 %v7115, %v7146
    %v7185 = vadd.f32 %v7116, %v7146
    %v7186 = vadd.f32 %v7117, %v7146
    %v7187 = vadd.f32 %v7118, %v7146
    %v7188 = vadd.f32 %v7119, %v7146
    %v7189 = vadd.f32 %v7120, %v7146
    %v7190 = vadd.f32 %v7121, %v7146
    %v7191 = vadd.f32 %v7122, %v7146
    %v7192 = vadd.f32 %v7123, %v7146
    %v7193 = vadd.f32 %v7124, %v7146
    %v7194 = vadd.f32 %v7125, %v7146
    %v7195 = vadd.f32 %v7126, %v7146
    %v7196 = vadd.f32 %v7127, %v7146
    %v7197 = vadd.f32 %v7128, %v7146
    %v7198 = vadd.f32 %v7129, %v7146
    %v7199 = vadd.f32 %v7130, %v7146
    %v7200 = vadd.f32 %v7131, %v7146
    %v7201 = vadd.f32 %v7132, %v7146
    %v7202 = vadd.f32 %v7133, %v7146
    %v7203 = vadd.f32 %v7134, %v7146
    %v7204 = vadd.f32 %v7135, %v7146
    %v7205 = vadd.f32 %v7136, %v7146
    %v7206 = vadd.f32 %v7137, %v7146
    %v7207 = vadd.f32 %v7138, %v7146
    %v7208 = vadd.f32 %v7139, %v7146
    %v7209 = vadd.f32 %v7140, %v7146
    %v7210 = vsel %vm3444, %v7148, 0.0
    %v7211 = vsel %vm3444, %v7149, 0.0
    %v7212 = vadd.f32 %v7210, %v7211
    %v7213 = vsel %vm3444, %v7150, 0.0
    %v7214 = vadd.f32 %v7212, %v7213
    %v7215 = vsel %vm3444, %v7151, 0.0
    %v7216 = vadd.f32 %v7214, %v7215
    %v7217 = vsel %vm3444, %v7152, 0.0
    %v7218 = vadd.f32 %v7216, %v7217
    %v7219 = vsel %vm3444, %v7153, 0.0
    %v7220 = vadd.f32 %v7218, %v7219
    %v7221 = vsel %vm3444, %v7154, 0.0
    %v7222 = vadd.f32 %v7220, %v7221
    %v7223 = vsel %vm3444, %v7155, 0.0
    %v7224 = vadd.f32 %v7222, %v7223
    %v7225 = vsel %vm3444, %v7156, 0.0
    %v7226 = vadd.f32 %v7224, %v7225
    %v7227 = vsel %vm3444, %v7157, 0.0
    %v7228 = vadd.f32 %v7226, %v7227
    %v7229 = vsel %vm3444, %v7158, 0.0
    %v7230 = vadd.f32 %v7228, %v7229
    %v7231 = vsel %vm3444, %v7159, 0.0
    %v7232 = vadd.f32 %v7230, %v7231
    %v7233 = vsel %vm3444, %v7160, 0.0
    %v7234 = vadd.f32 %v7232, %v7233
    %v7235 = vsel %vm3444, %v7161, 0.0
    %v7236 = vadd.f32 %v7234, %v7235
    %v7237 = vsel %vm3444, %v7162, 0.0
    %v7238 = vadd.f32 %v7236, %v7237
    %v7239 = vsel %vm3444, %v7163, 0.0
    %v7240 = vadd.f32 %v7238, %v7239
    %v7241 = vsel %vm3444, %v7164, 0.0
    %v7242 = vadd.f32 %v7240, %v7241
    %v7243 = vsel %vm3444, %v7165, 0.0
    %v7244 = vadd.f32 %v7242, %v7243
    %v7245 = vsel %vm3444, %v7166, 0.0
    %v7246 = vadd.f32 %v7244, %v7245
    %v7247 = vsel %vm3444, %v7167, 0.0
    %v7248 = vadd.f32 %v7246, %v7247
    %v7249 = vsel %vm3444, %v7168, 0.0
    %v7250 = vadd.f32 %v7248, %v7249
    %v7251 = vsel %vm3444, %v7169, 0.0
    %v7252 = vadd.f32 %v7250, %v7251
    %v7253 = vsel %vm3444, %v7170, 0.0
    %v7254 = vadd.f32 %v7252, %v7253
    %v7255 = vsel %vm3444, %v7171, 0.0
    %v7256 = vadd.f32 %v7254, %v7255
    %v7257 = vsel %vm3444, %v7172, 0.0
    %v7258 = vadd.f32 %v7256, %v7257
    %v7259 = vsel %vm3444, %v7173, 0.0
    %v7260 = vadd.f32 %v7258, %v7259
    %v7261 = vsel %vm3444, %v7174, 0.0
    %v7262 = vadd.f32 %v7260, %v7261
    %v7263 = vsel %vm3444, %v7175, 0.0
    %v7264 = vadd.f32 %v7262, %v7263
    %v7265 = vsel %vm3444, %v7176, 0.0
    %v7266 = vadd.f32 %v7264, %v7265
    %v7267 = vsel %vm3444, %v7177, 0.0
    %v7268 = vadd.f32 %v7266, %v7267
    %v7269 = vsel %vm3444, %v7178, 0.0
    %v7270 = vadd.f32 %v7268, %v7269
    %v7271 = vsel %vm3444, %v7179, 0.0
    %v7272 = vadd.f32 %v7270, %v7271
    %v7273 = vsel %vm3444, %v7180, 0.0
    %v7274 = vadd.f32 %v7272, %v7273
    %v7275 = vsel %vm3444, %v7181, 0.0
    %v7276 = vadd.f32 %v7274, %v7275
    %v7277 = vsel %vm3444, %v7182, 0.0
    %v7278 = vadd.f32 %v7276, %v7277
    %v7279 = vsel %vm3444, %v7183, 0.0
    %v7280 = vadd.f32 %v7278, %v7279
    %v7281 = vsel %vm3444, %v7184, 0.0
    %v7282 = vadd.f32 %v7280, %v7281
    %v7283 = vsel %vm3444, %v7185, 0.0
    %v7284 = vadd.f32 %v7282, %v7283
    %v7285 = vsel %vm3444, %v7186, 0.0
    %v7286 = vadd.f32 %v7284, %v7285
    %v7287 = vsel %vm3444, %v7187, 0.0
    %v7288 = vadd.f32 %v7286, %v7287
    %v7289 = vsel %vm3444, %v7188, 0.0
    %v7290 = vadd.f32 %v7288, %v7289
    %v7291 = vsel %vm3444, %v7189, 0.0
    %v7292 = vadd.f32 %v7290, %v7291
    %v7293 = vsel %vm3444, %v7190, 0.0
    %v7294 = vadd.f32 %v7292, %v7293
    %v7295 = vsel %vm3444, %v7191, 0.0
    %v7296 = vadd.f32 %v7294, %v7295
    %v7297 = vsel %vm3444, %v7192, 0.0
    %v7298 = vadd.f32 %v7296, %v7297
    %v7299 = vsel %vm3444, %v7193, 0.0
    %v7300 = vadd.f32 %v7298, %v7299
    %v7301 = vsel %vm3444, %v7194, 0.0
    %v7302 = vadd.f32 %v7300, %v7301
    %v7303 = vsel %vm3444, %v7195, 0.0
    %v7304 = vadd.f32 %v7302, %v7303
    %v7305 = vsel %vm3444, %v7196, 0.0
    %v7306 = vadd.f32 %v7304, %v7305
    %v7307 = vsel %vm3444, %v7197, 0.0
    %v7308 = vadd.f32 %v7306, %v7307
    %v7309 = vsel %vm3444, %v7198, 0.0
    %v7310 = vadd.f32 %v7308, %v7309
    %v7311 = vsel %vm3444, %v7199, 0.0
    %v7312 = vadd.f32 %v7310, %v7311
    %v7313 = vsel %vm3444, %v7200, 0.0
    %v7314 = vadd.f32 %v7312, %v7313
    %v7315 = vsel %vm3444, %v7201, 0.0
    %v7316 = vadd.f32 %v7314, %v7315
    %v7317 = vsel %vm3444, %v7202, 0.0
    %v7318 = vadd.f32 %v7316, %v7317
    %v7319 = vsel %vm3444, %v7203, 0.0
    %v7320 = vadd.f32 %v7318, %v7319
    %v7321 = vsel %vm3444, %v7204, 0.0
    %v7322 = vadd.f32 %v7320, %v7321
    %v7323 = vsel %vm3444, %v7205, 0.0
    %v7324 = vadd.f32 %v7322, %v7323
    %v7325 = vsel %vm3444, %v7206, 0.0
    %v7326 = vadd.f32 %v7324, %v7325
    %v7327 = vsel %vm3444, %v7207, 0.0
    %v7328 = vadd.f32 %v7326, %v7327
    %v7329 = vsel %vm3444, %v7208, 0.0
    %v7330 = vadd.f32 %v7328, %v7329
    %v7331 = vsel %vm3444, %v7209, 0.0
    %v7332 = vadd.f32 %v7330, %v7331
    %v7333 = vrot.slane %v7332, 4
    %v7334 = vadd.f32 %v7332, %v7333
    %v7335 = vrot.slane %v7334, 2
    %v7336 = vadd.f32 %v7334, %v7335
    %v7337 = vrot.slane %v7336, 1
    %v7338 = vadd.f32 %v7336, %v7337
    %v7339 = vadd.f32 %v3574, %v7338
    %v7340 = vmul.f32 %v7148, %v7148
    %v7341 = vmul.f32 %v7149, %v7149
    %v7342 = vmul.f32 %v7150, %v7150
    %v7343 = vmul.f32 %v7151, %v7151
    %v7344 = vmul.f32 %v7152, %v7152
    %v7345 = vmul.f32 %v7153, %v7153
    %v7346 = vmul.f32 %v7154, %v7154
    %v7347 = vmul.f32 %v7155, %v7155
    %v7348 = vmul.f32 %v7156, %v7156
    %v7349 = vmul.f32 %v7157, %v7157
    %v7350 = vmul.f32 %v7158, %v7158
    %v7351 = vmul.f32 %v7159, %v7159
    %v7352 = vmul.f32 %v7160, %v7160
    %v7353 = vmul.f32 %v7161, %v7161
    %v7354 = vmul.f32 %v7162, %v7162
    %v7355 = vmul.f32 %v7163, %v7163
    %v7356 = vmul.f32 %v7164, %v7164
    %v7357 = vmul.f32 %v7165, %v7165
    %v7358 = vmul.f32 %v7166, %v7166
    %v7359 = vmul.f32 %v7167, %v7167
    %v7360 = vmul.f32 %v7168, %v7168
    %v7361 = vmul.f32 %v7169, %v7169
    %v7362 = vmul.f32 %v7170, %v7170
    %v7363 = vmul.f32 %v7171, %v7171
    %v7364 = vmul.f32 %v7172, %v7172
    %v7365 = vmul.f32 %v7173, %v7173
    %v7366 = vmul.f32 %v7174, %v7174
    %v7367 = vmul.f32 %v7175, %v7175
    %v7368 = vmul.f32 %v7176, %v7176
    %v7369 = vmul.f32 %v7177, %v7177
    %v7370 = vmul.f32 %v7178, %v7178
    %v7371 = vmul.f32 %v7179, %v7179
    %v7372 = vmul.f32 %v7180, %v7180
    %v7373 = vmul.f32 %v7181, %v7181
    %v7374 = vmul.f32 %v7182, %v7182
    %v7375 = vmul.f32 %v7183, %v7183
    %v7376 = vmul.f32 %v7184, %v7184
    %v7377 = vmul.f32 %v7185, %v7185
    %v7378 = vmul.f32 %v7186, %v7186
    %v7379 = vmul.f32 %v7187, %v7187
    %v7380 = vmul.f32 %v7188, %v7188
    %v7381 = vmul.f32 %v7189, %v7189
    %v7382 = vmul.f32 %v7190, %v7190
    %v7383 = vmul.f32 %v7191, %v7191
    %v7384 = vmul.f32 %v7192, %v7192
    %v7385 = vmul.f32 %v7193, %v7193
    %v7386 = vmul.f32 %v7194, %v7194
    %v7387 = vmul.f32 %v7195, %v7195
    %v7388 = vmul.f32 %v7196, %v7196
    %v7389 = vmul.f32 %v7197, %v7197
    %v7390 = vmul.f32 %v7198, %v7198
    %v7391 = vmul.f32 %v7199, %v7199
    %v7392 = vmul.f32 %v7200, %v7200
    %v7393 = vmul.f32 %v7201, %v7201
    %v7394 = vmul.f32 %v7202, %v7202
    %v7395 = vmul.f32 %v7203, %v7203
    %v7396 = vmul.f32 %v7204, %v7204
    %v7397 = vmul.f32 %v7205, %v7205
    %v7398 = vmul.f32 %v7206, %v7206
    %v7399 = vmul.f32 %v7207, %v7207
    %v7400 = vmul.f32 %v7208, %v7208
    %v7401 = vmul.f32 %v7209, %v7209
    %v7402 = vsel %vm3444, %v7340, 0.0
    %v7403 = vsel %vm3444, %v7341, 0.0
    %v7404 = vadd.f32 %v7402, %v7403
    %v7405 = vsel %vm3444, %v7342, 0.0
    %v7406 = vadd.f32 %v7404, %v7405
    %v7407 = vsel %vm3444, %v7343, 0.0
    %v7408 = vadd.f32 %v7406, %v7407
    %v7409 = vsel %vm3444, %v7344, 0.0
    %v7410 = vadd.f32 %v7408, %v7409
    %v7411 = vsel %vm3444, %v7345, 0.0
    %v7412 = vadd.f32 %v7410, %v7411
    %v7413 = vsel %vm3444, %v7346, 0.0
    %v7414 = vadd.f32 %v7412, %v7413
    %v7415 = vsel %vm3444, %v7347, 0.0
    %v7416 = vadd.f32 %v7414, %v7415
    %v7417 = vsel %vm3444, %v7348, 0.0
    %v7418 = vadd.f32 %v7416, %v7417
    %v7419 = vsel %vm3444, %v7349, 0.0
    %v7420 = vadd.f32 %v7418, %v7419
    %v7421 = vsel %vm3444, %v7350, 0.0
    %v7422 = vadd.f32 %v7420, %v7421
    %v7423 = vsel %vm3444, %v7351, 0.0
    %v7424 = vadd.f32 %v7422, %v7423
    %v7425 = vsel %vm3444, %v7352, 0.0
    %v7426 = vadd.f32 %v7424, %v7425
    %v7427 = vsel %vm3444, %v7353, 0.0
    %v7428 = vadd.f32 %v7426, %v7427
    %v7429 = vsel %vm3444, %v7354, 0.0
    %v7430 = vadd.f32 %v7428, %v7429
    %v7431 = vsel %vm3444, %v7355, 0.0
    %v7432 = vadd.f32 %v7430, %v7431
    %v7433 = vsel %vm3444, %v7356, 0.0
    %v7434 = vadd.f32 %v7432, %v7433
    %v7435 = vsel %vm3444, %v7357, 0.0
    %v7436 = vadd.f32 %v7434, %v7435
    %v7437 = vsel %vm3444, %v7358, 0.0
    %v7438 = vadd.f32 %v7436, %v7437
    %v7439 = vsel %vm3444, %v7359, 0.0
    %v7440 = vadd.f32 %v7438, %v7439
    %v7441 = vsel %vm3444, %v7360, 0.0
    %v7442 = vadd.f32 %v7440, %v7441
    %v7443 = vsel %vm3444, %v7361, 0.0
    %v7444 = vadd.f32 %v7442, %v7443
    %v7445 = vsel %vm3444, %v7362, 0.0
    %v7446 = vadd.f32 %v7444, %v7445
    %v7447 = vsel %vm3444, %v7363, 0.0
    %v7448 = vadd.f32 %v7446, %v7447
    %v7449 = vsel %vm3444, %v7364, 0.0
    %v7450 = vadd.f32 %v7448, %v7449
    %v7451 = vsel %vm3444, %v7365, 0.0
    %v7452 = vadd.f32 %v7450, %v7451
    %v7453 = vsel %vm3444, %v7366, 0.0
    %v7454 = vadd.f32 %v7452, %v7453
    %v7455 = vsel %vm3444, %v7367, 0.0
    %v7456 = vadd.f32 %v7454, %v7455
    %v7457 = vsel %vm3444, %v7368, 0.0
    %v7458 = vadd.f32 %v7456, %v7457
    %v7459 = vsel %vm3444, %v7369, 0.0
    %v7460 = vadd.f32 %v7458, %v7459
    %v7461 = vsel %vm3444, %v7370, 0.0
    %v7462 = vadd.f32 %v7460, %v7461
    %v7463 = vsel %vm3444, %v7371, 0.0
    %v7464 = vadd.f32 %v7462, %v7463
    %v7465 = vsel %vm3444, %v7372, 0.0
    %v7466 = vadd.f32 %v7464, %v7465
    %v7467 = vsel %vm3444, %v7373, 0.0
    %v7468 = vadd.f32 %v7466, %v7467
    %v7469 = vsel %vm3444, %v7374, 0.0
    %v7470 = vadd.f32 %v7468, %v7469
    %v7471 = vsel %vm3444, %v7375, 0.0
    %v7472 = vadd.f32 %v7470, %v7471
    %v7473 = vsel %vm3444, %v7376, 0.0
    %v7474 = vadd.f32 %v7472, %v7473
    %v7475 = vsel %vm3444, %v7377, 0.0
    %v7476 = vadd.f32 %v7474, %v7475
    %v7477 = vsel %vm3444, %v7378, 0.0
    %v7478 = vadd.f32 %v7476, %v7477
    %v7479 = vsel %vm3444, %v7379, 0.0
    %v7480 = vadd.f32 %v7478, %v7479
    %v7481 = vsel %vm3444, %v7380, 0.0
    %v7482 = vadd.f32 %v7480, %v7481
    %v7483 = vsel %vm3444, %v7381, 0.0
    %v7484 = vadd.f32 %v7482, %v7483
    %v7485 = vsel %vm3444, %v7382, 0.0
    %v7486 = vadd.f32 %v7484, %v7485
    %v7487 = vsel %vm3444, %v7383, 0.0
    %v7488 = vadd.f32 %v7486, %v7487
    %v7489 = vsel %vm3444, %v7384, 0.0
    %v7490 = vadd.f32 %v7488, %v7489
    %v7491 = vsel %vm3444, %v7385, 0.0
    %v7492 = vadd.f32 %v7490, %v7491
    %v7493 = vsel %vm3444, %v7386, 0.0
    %v7494 = vadd.f32 %v7492, %v7493
    %v7495 = vsel %vm3444, %v7387, 0.0
    %v7496 = vadd.f32 %v7494, %v7495
    %v7497 = vsel %vm3444, %v7388, 0.0
    %v7498 = vadd.f32 %v7496, %v7497
    %v7499 = vsel %vm3444, %v7389, 0.0
    %v7500 = vadd.f32 %v7498, %v7499
    %v7501 = vsel %vm3444, %v7390, 0.0
    %v7502 = vadd.f32 %v7500, %v7501
    %v7503 = vsel %vm3444, %v7391, 0.0
    %v7504 = vadd.f32 %v7502, %v7503
    %v7505 = vsel %vm3444, %v7392, 0.0
    %v7506 = vadd.f32 %v7504, %v7505
    %v7507 = vsel %vm3444, %v7393, 0.0
    %v7508 = vadd.f32 %v7506, %v7507
    %v7509 = vsel %vm3444, %v7394, 0.0
    %v7510 = vadd.f32 %v7508, %v7509
    %v7511 = vsel %vm3444, %v7395, 0.0
    %v7512 = vadd.f32 %v7510, %v7511
    %v7513 = vsel %vm3444, %v7396, 0.0
    %v7514 = vadd.f32 %v7512, %v7513
    %v7515 = vsel %vm3444, %v7397, 0.0
    %v7516 = vadd.f32 %v7514, %v7515
    %v7517 = vsel %vm3444, %v7398, 0.0
    %v7518 = vadd.f32 %v7516, %v7517
    %v7519 = vsel %vm3444, %v7399, 0.0
    %v7520 = vadd.f32 %v7518, %v7519
    %v7521 = vsel %vm3444, %v7400, 0.0
    %v7522 = vadd.f32 %v7520, %v7521
    %v7523 = vsel %vm3444, %v7401, 0.0
    %v7524 = vadd.f32 %v7522, %v7523
    %v7525 = vrot.slane %v7524, 4
    %v7526 = vadd.f32 %v7524, %v7525
    %v7527 = vrot.slane %v7526, 2
    %v7528 = vadd.f32 %v7526, %v7527
    %v7529 = vrot.slane %v7528, 1
    %v7530 = vadd.f32 %v7528, %v7529
    %v7531 = vadd.f32 %v3766, %v7530
    %7532 = vst.msk [vmem:[#allocation2 + $0x1f0] sm:$0xff] %vm3444, %v7148
    %7533 = vst.msk [vmem:[#allocation2 + $0x1f8] sm:$0xff] %vm3444, %v7149
    %7534 = vst.msk [vmem:[#allocation2 + $0x200] sm:$0xff] %vm3444, %v7150
    %7535 = vst.msk [vmem:[#allocation2 + $0x208] sm:$0xff] %vm3444, %v7151
    %7536 = vst.msk [vmem:[#allocation2 + $0x210] sm:$0xff] %vm3444, %v7152
    %7537 = vst.msk [vmem:[#allocation2 + $0x218] sm:$0xff] %vm3444, %v7153
    %7538 = vst.msk [vmem:[#allocation2 + $0x220] sm:$0xff] %vm3444, %v7154
    %7539 = vst.msk [vmem:[#allocation2 + $0x228] sm:$0xff] %vm3444, %v7155
    %7540 = vst.msk [vmem:[#allocation2 + $0x230] sm:$0xff] %vm3444, %v7156
    %7541 = vst.msk [vmem:[#allocation2 + $0x238] sm:$0xff] %vm3444, %v7157
    %7542 = vst.msk [vmem:[#allocation2 + $0x240] sm:$0xff] %vm3444, %v7158
    %7543 = vst.msk [vmem:[#allocation2 + $0x248] sm:$0xff] %vm3444, %v7159
    %7544 = vst.msk [vmem:[#allocation2 + $0x250] sm:$0xff] %vm3444, %v7160
    %7545 = vst.msk [vmem:[#allocation2 + $0x258] sm:$0xff] %vm3444, %v7161
    %7546 = vst.msk [vmem:[#allocation2 + $0x260] sm:$0xff] %vm3444, %v7162
    %7547 = vst.msk [vmem:[#allocation2 + $0x268] sm:$0xff] %vm3444, %v7163
    %7548 = vst.msk [vmem:[#allocation2 + $0x270] sm:$0xff] %vm3444, %v7164
    %7549 = vst.msk [vmem:[#allocation2 + $0x278] sm:$0xff] %vm3444, %v7165
    %7550 = vst.msk [vmem:[#allocation2 + $0x280] sm:$0xff] %vm3444, %v7166
    %7551 = vst.msk [vmem:[#allocation2 + $0x288] sm:$0xff] %vm3444, %v7167
    %7552 = vst.msk [vmem:[#allocation2 + $0x290] sm:$0xff] %vm3444, %v7168
    %7553 = vst.msk [vmem:[#allocation2 + $0x298] sm:$0xff] %vm3444, %v7169
    %7554 = vst.msk [vmem:[#allocation2 + $0x2a0] sm:$0xff] %vm3444, %v7170
    %7555 = vst.msk [vmem:[#allocation2 + $0x2a8] sm:$0xff] %vm3444, %v7171
    %7556 = vst.msk [vmem:[#allocation2 + $0x2b0] sm:$0xff] %vm3444, %v7172
    %7557 = vst.msk [vmem:[#allocation2 + $0x2b8] sm:$0xff] %vm3444, %v7173
    %7558 = vst.msk [vmem:[#allocation2 + $0x2c0] sm:$0xff] %vm3444, %v7174
    %7559 = vst.msk [vmem:[#allocation2 + $0x2c8] sm:$0xff] %vm3444, %v7175
    %7560 = vst.msk [vmem:[#allocation2 + $0x2d0] sm:$0xff] %vm3444, %v7176
    %7561 = vst.msk [vmem:[#allocation2 + $0x2d8] sm:$0xff] %vm3444, %v7177
    %7562 = vst.msk [vmem:[#allocation2 + $0x2e0] sm:$0xff] %vm3444, %v7178
    %7563 = vst.msk [vmem:[#allocation2 + $0x2e8] sm:$0xff] %vm3444, %v7179
    %7564 = vst.msk [vmem:[#allocation2 + $0x2f0] sm:$0xff] %vm3444, %v7180
    %7565 = vst.msk [vmem:[#allocation2 + $0x2f8] sm:$0xff] %vm3444, %v7181
    %7566 = vst.msk [vmem:[#allocation2 + $0x300] sm:$0xff] %vm3444, %v7182
    %7567 = vst.msk [vmem:[#allocation2 + $0x308] sm:$0xff] %vm3444, %v7183
    %7568 = vst.msk [vmem:[#allocation2 + $0x310] sm:$0xff] %vm3444, %v7184
    %7569 = vst.msk [vmem:[#allocation2 + $0x318] sm:$0xff] %vm3444, %v7185
    %7570 = vst.msk [vmem:[#allocation2 + $0x320] sm:$0xff] %vm3444, %v7186
    %7571 = vst.msk [vmem:[#allocation2 + $0x328] sm:$0xff] %vm3444, %v7187
    %7572 = vst.msk [vmem:[#allocation2 + $0x330] sm:$0xff] %vm3444, %v7188
    %7573 = vst.msk [vmem:[#allocation2 + $0x338] sm:$0xff] %vm3444, %v7189
    %7574 = vst.msk [vmem:[#allocation2 + $0x340] sm:$0xff] %vm3444, %v7190
    %7575 = vst.msk [vmem:[#allocation2 + $0x348] sm:$0xff] %vm3444, %v7191
    %7576 = vst.msk [vmem:[#allocation2 + $0x350] sm:$0xff] %vm3444, %v7192
    %7577 = vst.msk [vmem:[#allocation2 + $0x358] sm:$0xff] %vm3444, %v7193
    %7578 = vst.msk [vmem:[#allocation2 + $0x360] sm:$0xff] %vm3444, %v7194
    %7579 = vst.msk [vmem:[#allocation2 + $0x368] sm:$0xff] %vm3444, %v7195
    %7580 = vst.msk [vmem:[#allocation2 + $0x370] sm:$0xff] %vm3444, %v7196
    %7581 = vst.msk [vmem:[#allocation2 + $0x378] sm:$0xff] %vm3444, %v7197
    %7582 = vst.msk [vmem:[#allocation2 + $0x380] sm:$0xff] %vm3444, %v7198
    %7583 = vst.msk [vmem:[#allocation2 + $0x388] sm:$0xff] %vm3444, %v7199
    %7584 = vst.msk [vmem:[#allocation2 + $0x390] sm:$0xff] %vm3444, %v7200
    %7585 = vst.msk [vmem:[#allocation2 + $0x398] sm:$0xff] %vm3444, %v7201
    %7586 = vst.msk [vmem:[#allocation2 + $0x3a0] sm:$0xff] %vm3444, %v7202
    %7587 = vst.msk [vmem:[#allocation2 + $0x3a8] sm:$0xff] %vm3444, %v7203
    %7588 = vst.msk [vmem:[#allocation2 + $0x3b0] sm:$0xff] %vm3444, %v7204
    %7589 = vst.msk [vmem:[#allocation2 + $0x3b8] sm:$0xff] %vm3444, %v7205
    %7590 = vst.msk [vmem:[#allocation2 + $0x3c0] sm:$0xff] %vm3444, %v7206
    %7591 = vst.msk [vmem:[#allocation2 + $0x3c8] sm:$0xff] %vm3444, %v7207
    %7592 = vst.msk [vmem:[#allocation2 + $0x3d0] sm:$0xff] %vm3444, %v7208
    %7593 = vst.msk [vmem:[#allocation2 + $0x3d8] sm:$0xff] %vm3444, %v7209
    %v7594 = vmul.f32 %v7339, 0.0010080645
    %v7595 = vmul.f32 %v7531, 0.0010080645
    %v7596 = vmul.f32 %v7594, %v7594
    %v7597 = vsub.f32 %v7595, %v7596
    %v7598 = vld [vmem:[%s3] sm:$0x1]
    %v7599 = vadd.f32 %v7597, 1e-05
    %v7600 = vrsqrt.pop %v7599
    %v7601 = vmul.f32 %v7598, %v7600
    %v7602 = vld [vmem:[%s4] sm:$0x1]
    %v7603 = vmul.f32 %v7594, %v7601
    %v7604 = vsub.f32 %v7602, %v7603
    %v7605 = vld [vmem:[#allocation2] ss:$4 sm:$0xff]
    %s7606 = scalar_lea.vmem [#allocation2], 32
    %v7607 = vld [vmem:[%s7606] ss:$4 sm:$0xff]
    %s7608 = scalar_lea.vmem [#allocation2], 64
    %v7609 = vld [vmem:[%s7608] ss:$4 sm:$0xff]
    %s7610 = scalar_lea.vmem [#allocation2], 96
    %v7611 = vld [vmem:[%s7610] ss:$4 sm:$0xff]
    %s7612 = scalar_lea.vmem [#allocation2], 128
    %v7613 = vld [vmem:[%s7612] ss:$4 sm:$0xff]
    %s7614 = scalar_lea.vmem [#allocation2], 160
    %v7615 = vld [vmem:[%s7614] ss:$4 sm:$0xff]
    %s7616 = scalar_lea.vmem [#allocation2], 192
    %v7617 = vld [vmem:[%s7616] ss:$4 sm:$0xff]
    %s7618 = scalar_lea.vmem [#allocation2], 224
    %v7619 = vld [vmem:[%s7618] ss:$4 sm:$0xff]
    %s7620 = scalar_lea.vmem [#allocation2], 256
    %v7621 = vld [vmem:[%s7620] ss:$4 sm:$0xff]
    %s7622 = scalar_lea.vmem [#allocation2], 288
    %v7623 = vld [vmem:[%s7622] ss:$4 sm:$0xff]
    %s7624 = scalar_lea.vmem [#allocation2], 320
    %v7625 = vld [vmem:[%s7624] ss:$4 sm:$0xff]
    %s7626 = scalar_lea.vmem [#allocation2], 352
    %v7627 = vld [vmem:[%s7626] ss:$4 sm:$0xff]
    %s7628 = scalar_lea.vmem [#allocation2], 384
    %v7629 = vld [vmem:[%s7628] ss:$4 sm:$0xff]
    %s7630 = scalar_lea.vmem [#allocation2], 416
    %v7631 = vld [vmem:[%s7630] ss:$4 sm:$0xff]
    %s7632 = scalar_lea.vmem [#allocation2], 448
    %v7633 = vld [vmem:[%s7632] ss:$4 sm:$0xff]
    %s7634 = scalar_lea.vmem [#allocation2], 480
    %v7635 = vld [vmem:[%s7634] ss:$4 sm:$0xf]
    %v7637 = vlaneseq
    %v7638 = vshrl.u32 %v7637, 7
    %v7639 = vsub.s32 0, %v7638
    %v7640 = vrot.slane %v7601, %v7639
    %v7642 = vmul.f32 %v7605, %v7640
    %v7643 = vmul.f32 %v7607, %v7640
    %v7644 = vmul.f32 %v7609, %v7640
    %v7645 = vmul.f32 %v7611, %v7640
    %v7646 = vmul.f32 %v7613, %v7640
    %v7647 = vmul.f32 %v7615, %v7640
    %v7648 = vmul.f32 %v7617, %v7640
    %v7649 = vmul.f32 %v7619, %v7640
    %v7650 = vmul.f32 %v7621, %v7640
    %v7651 = vmul.f32 %v7623, %v7640
    %v7652 = vmul.f32 %v7625, %v7640
    %v7653 = vmul.f32 %v7627, %v7640
    %v7654 = vmul.f32 %v7629, %v7640
    %v7655 = vmul.f32 %v7631, %v7640
    %v7656 = vmul.f32 %v7633, %v7640
    %v7657 = vmul.f32 %v7635, %v7640
    %v7659 = vlaneseq
    %v7660 = vshrl.u32 %v7659, 7
    %v7661 = vsub.s32 0, %v7660
    %v7662 = vrot.slane %v7604, %v7661
    %v7664 = vadd.f32 %v7642, %v7662
    %v7665 = vadd.f32 %v7643, %v7662
    %v7666 = vadd.f32 %v7644, %v7662
    %v7667 = vadd.f32 %v7645, %v7662
    %v7668 = vadd.f32 %v7646, %v7662
    %v7669 = vadd.f32 %v7647, %v7662
    %v7670 = vadd.f32 %v7648, %v7662
    %v7671 = vadd.f32 %v7649, %v7662
    %v7672 = vadd.f32 %v7650, %v7662
    %v7673 = vadd.f32 %v7651, %v7662
    %v7674 = vadd.f32 %v7652, %v7662
    %v7675 = vadd.f32 %v7653, %v7662
    %v7676 = vadd.f32 %v7654, %v7662
    %v7677 = vadd.f32 %v7655, %v7662
    %v7678 = vadd.f32 %v7656, %v7662
    %v7679 = vadd.f32 %v7657, %v7662
    %s7680 = scalar_lea.vmem [#allocation2], 1
    %v7681 = vld [vmem:[%s7680] ss:$4 sm:$0xff]
    %s7682 = scalar_lea.vmem [#allocation2], 33
    %v7683 = vld [vmem:[%s7682] ss:$4 sm:$0xff]
    %s7684 = scalar_lea.vmem [#allocation2], 65
    %v7685 = vld [vmem:[%s7684] ss:$4 sm:$0xff]
    %s7686 = scalar_lea.vmem [#allocation2], 97
    %v7687 = vld [vmem:[%s7686] ss:$4 sm:$0xff]
    %s7688 = scalar_lea.vmem [#allocation2], 129
    %v7689 = vld [vmem:[%s7688] ss:$4 sm:$0xff]
    %s7690 = scalar_lea.vmem [#allocation2], 161
    %v7691 = vld [vmem:[%s7690] ss:$4 sm:$0xff]
    %s7692 = scalar_lea.vmem [#allocation2], 193
    %v7693 = vld [vmem:[%s7692] ss:$4 sm:$0xff]
    %s7694 = scalar_lea.vmem [#allocation2], 225
    %v7695 = vld [vmem:[%s7694] ss:$4 sm:$0xff]
    %s7696 = scalar_lea.vmem [#allocation2], 257
    %v7697 = vld [vmem:[%s7696] ss:$4 sm:$0xff]
    %s7698 = scalar_lea.vmem [#allocation2], 289
    %v7699 = vld [vmem:[%s7698] ss:$4 sm:$0xff]
    %s7700 = scalar_lea.vmem [#allocation2], 321
    %v7701 = vld [vmem:[%s7700] ss:$4 sm:$0xff]
    %s7702 = scalar_lea.vmem [#allocation2], 353
    %v7703 = vld [vmem:[%s7702] ss:$4 sm:$0xff]
    %s7704 = scalar_lea.vmem [#allocation2], 385
    %v7705 = vld [vmem:[%s7704] ss:$4 sm:$0xff]
    %s7706 = scalar_lea.vmem [#allocation2], 417
    %v7707 = vld [vmem:[%s7706] ss:$4 sm:$0xff]
    %s7708 = scalar_lea.vmem [#allocation2], 449
    %v7709 = vld [vmem:[%s7708] ss:$4 sm:$0xff]
    %s7710 = scalar_lea.vmem [#allocation2], 481
    %v7711 = vld [vmem:[%s7710] ss:$4 sm:$0xf]
    %v7712 = vmul.f32 %v7681, %v7640
    %v7713 = vmul.f32 %v7683, %v7640
    %v7714 = vmul.f32 %v7685, %v7640
    %v7715 = vmul.f32 %v7687, %v7640
    %v7716 = vmul.f32 %v7689, %v7640
    %v7717 = vmul.f32 %v7691, %v7640
    %v7718 = vmul.f32 %v7693, %v7640
    %v7719 = vmul.f32 %v7695, %v7640
    %v7720 = vmul.f32 %v7697, %v7640
    %v7721 = vmul.f32 %v7699, %v7640
    %v7722 = vmul.f32 %v7701, %v7640
    %v7723 = vmul.f32 %v7703, %v7640
    %v7724 = vmul.f32 %v7705, %v7640
    %v7725 = vmul.f32 %v7707, %v7640
    %v7726 = vmul.f32 %v7709, %v7640
    %v7727 = vmul.f32 %v7711, %v7640
    %v7728 = vadd.f32 %v7712, %v7662
    %v7729 = vadd.f32 %v7713, %v7662
    %v7730 = vadd.f32 %v7714, %v7662
    %v7731 = vadd.f32 %v7715, %v7662
    %v7732 = vadd.f32 %v7716, %v7662
    %v7733 = vadd.f32 %v7717, %v7662
    %v7734 = vadd.f32 %v7718, %v7662
    %v7735 = vadd.f32 %v7719, %v7662
    %v7736 = vadd.f32 %v7720, %v7662
    %v7737 = vadd.f32 %v7721, %v7662
    %v7738 = vadd.f32 %v7722, %v7662
    %v7739 = vadd.f32 %v7723, %v7662
    %v7740 = vadd.f32 %v7724, %v7662
    %v7741 = vadd.f32 %v7725, %v7662
    %v7742 = vadd.f32 %v7726, %v7662
    %v7743 = vadd.f32 %v7727, %v7662
    %v7744 = vmax.f32 %v7664, %v7728
    %v7745 = vmax.f32 %v7665, %v7729
    %v7746 = vmax.f32 %v7666, %v7730
    %v7747 = vmax.f32 %v7667, %v7731
    %v7748 = vmax.f32 %v7668, %v7732
    %v7749 = vmax.f32 %v7669, %v7733
    %v7750 = vmax.f32 %v7670, %v7734
    %v7751 = vmax.f32 %v7671, %v7735
    %v7752 = vmax.f32 %v7672, %v7736
    %v7753 = vmax.f32 %v7673, %v7737
    %v7754 = vmax.f32 %v7674, %v7738
    %v7755 = vmax.f32 %v7675, %v7739
    %v7756 = vmax.f32 %v7676, %v7740
    %v7757 = vmax.f32 %v7677, %v7741
    %v7758 = vmax.f32 %v7678, %v7742
    %v7759 = vmax.f32 %v7679, %v7743
    %s7760 = scalar_lea.vmem [#allocation2], 2
    %v7761 = vld [vmem:[%s7760] ss:$4 sm:$0xff]
    %s7762 = scalar_lea.vmem [#allocation2], 34
    %v7763 = vld [vmem:[%s7762] ss:$4 sm:$0xff]
    %s7764 = scalar_lea.vmem [#allocation2], 66
    %v7765 = vld [vmem:[%s7764] ss:$4 sm:$0xff]
    %s7766 = scalar_lea.vmem [#allocation2], 98
    %v7767 = vld [vmem:[%s7766] ss:$4 sm:$0xff]
    %s7768 = scalar_lea.vmem [#allocation2], 130
    %v7769 = vld [vmem:[%s7768] ss:$4 sm:$0xff]
    %s7770 = scalar_lea.vmem [#allocation2], 162
    %v7771 = vld [vmem:[%s7770] ss:$4 sm:$0xff]
    %s7772 = scalar_lea.vmem [#allocation2], 194
    %v7773 = vld [vmem:[%s7772] ss:$4 sm:$0xff]
    %s7774 = scalar_lea.vmem [#allocation2], 226
    %v7775 = vld [vmem:[%s7774] ss:$4 sm:$0xff]
    %s7776 = scalar_lea.vmem [#allocation2], 258
    %v7777 = vld [vmem:[%s7776] ss:$4 sm:$0xff]
    %s7778 = scalar_lea.vmem [#allocation2], 290
    %v7779 = vld [vmem:[%s7778] ss:$4 sm:$0xff]
    %s7780 = scalar_lea.vmem [#allocation2], 322
    %v7781 = vld [vmem:[%s7780] ss:$4 sm:$0xff]
    %s7782 = scalar_lea.vmem [#allocation2], 354
    %v7783 = vld [vmem:[%s7782] ss:$4 sm:$0xff]
    %s7784 = scalar_lea.vmem [#allocation2], 386
    %v7785 = vld [vmem:[%s7784] ss:$4 sm:$0xff]
    %s7786 = scalar_lea.vmem [#allocation2], 418
    %v7787 = vld [vmem:[%s7786] ss:$4 sm:$0xff]
    %s7788 = scalar_lea.vmem [#allocation2], 450
    %v7789 = vld [vmem:[%s7788] ss:$4 sm:$0xff]
    %s7790 = scalar_lea.vmem [#allocation2], 482
    %v7791 = vld [vmem:[%s7790] ss:$4 sm:$0xf]
    %v7792 = vmul.f32 %v7761, %v7640
    %v7793 = vmul.f32 %v7763, %v7640
    %v7794 = vmul.f32 %v7765, %v7640
    %v7795 = vmul.f32 %v7767, %v7640
    %v7796 = vmul.f32 %v7769, %v7640
    %v7797 = vmul.f32 %v7771, %v7640
    %v7798 = vmul.f32 %v7773, %v7640
    %v7799 = vmul.f32 %v7775, %v7640
    %v7800 = vmul.f32 %v7777, %v7640
    %v7801 = vmul.f32 %v7779, %v7640
    %v7802 = vmul.f32 %v7781, %v7640
    %v7803 = vmul.f32 %v7783, %v7640
    %v7804 = vmul.f32 %v7785, %v7640
    %v7805 = vmul.f32 %v7787, %v7640
    %v7806 = vmul.f32 %v7789, %v7640
    %v7807 = vmul.f32 %v7791, %v7640
    %v7808 = vadd.f32 %v7792, %v7662
    %v7809 = vadd.f32 %v7793, %v7662
    %v7810 = vadd.f32 %v7794, %v7662
    %v7811 = vadd.f32 %v7795, %v7662
    %v7812 = vadd.f32 %v7796, %v7662
    %v7813 = vadd.f32 %v7797, %v7662
    %v7814 = vadd.f32 %v7798, %v7662
    %v7815 = vadd.f32 %v7799, %v7662
    %v7816 = vadd.f32 %v7800, %v7662
    %v7817 = vadd.f32 %v7801, %v7662
    %v7818 = vadd.f32 %v7802, %v7662
    %v7819 = vadd.f32 %v7803, %v7662
    %v7820 = vadd.f32 %v7804, %v7662
    %v7821 = vadd.f32 %v7805, %v7662
    %v7822 = vadd.f32 %v7806, %v7662
    %v7823 = vadd.f32 %v7807, %v7662
    %v7824 = vmax.f32 %v7744, %v7808
    %v7825 = vmax.f32 %v7745, %v7809
    %v7826 = vmax.f32 %v7746, %v7810
    %v7827 = vmax.f32 %v7747, %v7811
    %v7828 = vmax.f32 %v7748, %v7812
    %v7829 = vmax.f32 %v7749, %v7813
    %v7830 = vmax.f32 %v7750, %v7814
    %v7831 = vmax.f32 %v7751, %v7815
    %v7832 = vmax.f32 %v7752, %v7816
    %v7833 = vmax.f32 %v7753, %v7817
    %v7834 = vmax.f32 %v7754, %v7818
    %v7835 = vmax.f32 %v7755, %v7819
    %v7836 = vmax.f32 %v7756, %v7820
    %v7837 = vmax.f32 %v7757, %v7821
    %v7838 = vmax.f32 %v7758, %v7822
    %v7839 = vmax.f32 %v7759, %v7823
    %s7840 = scalar_lea.vmem [#allocation2], 3
    %v7841 = vld [vmem:[%s7840] ss:$4 sm:$0xff]
    %s7842 = scalar_lea.vmem [#allocation2], 35
    %v7843 = vld [vmem:[%s7842] ss:$4 sm:$0xff]
    %s7844 = scalar_lea.vmem [#allocation2], 67
    %v7845 = vld [vmem:[%s7844] ss:$4 sm:$0xff]
    %s7846 = scalar_lea.vmem [#allocation2], 99
    %v7847 = vld [vmem:[%s7846] ss:$4 sm:$0xff]
    %s7848 = scalar_lea.vmem [#allocation2], 131
    %v7849 = vld [vmem:[%s7848] ss:$4 sm:$0xff]
    %s7850 = scalar_lea.vmem [#allocation2], 163
    %v7851 = vld [vmem:[%s7850] ss:$4 sm:$0xff]
    %s7852 = scalar_lea.vmem [#allocation2], 195
    %v7853 = vld [vmem:[%s7852] ss:$4 sm:$0xff]
    %s7854 = scalar_lea.vmem [#allocation2], 227
    %v7855 = vld [vmem:[%s7854] ss:$4 sm:$0xff]
    %s7856 = scalar_lea.vmem [#allocation2], 259
    %v7857 = vld [vmem:[%s7856] ss:$4 sm:$0xff]
    %s7858 = scalar_lea.vmem [#allocation2], 291
    %v7859 = vld [vmem:[%s7858] ss:$4 sm:$0xff]
    %s7860 = scalar_lea.vmem [#allocation2], 323
    %v7861 = vld [vmem:[%s7860] ss:$4 sm:$0xff]
    %s7862 = scalar_lea.vmem [#allocation2], 355
    %v7863 = vld [vmem:[%s7862] ss:$4 sm:$0xff]
    %s7864 = scalar_lea.vmem [#allocation2], 387
    %v7865 = vld [vmem:[%s7864] ss:$4 sm:$0xff]
    %s7866 = scalar_lea.vmem [#allocation2], 419
    %v7867 = vld [vmem:[%s7866] ss:$4 sm:$0xff]
    %s7868 = scalar_lea.vmem [#allocation2], 451
    %v7869 = vld [vmem:[%s7868] ss:$4 sm:$0xff]
    %s7870 = scalar_lea.vmem [#allocation2], 483
    %v7871 = vld [vmem:[%s7870] ss:$4 sm:$0xf]
    %v7872 = vmul.f32 %v7841, %v7640
    %v7873 = vmul.f32 %v7843, %v7640
    %v7874 = vmul.f32 %v7845, %v7640
    %v7875 = vmul.f32 %v7847, %v7640
    %v7876 = vmul.f32 %v7849, %v7640
    %v7877 = vmul.f32 %v7851, %v7640
    %v7878 = vmul.f32 %v7853, %v7640
    %v7879 = vmul.f32 %v7855, %v7640
    %v7880 = vmul.f32 %v7857, %v7640
    %v7881 = vmul.f32 %v7859, %v7640
    %v7882 = vmul.f32 %v7861, %v7640
    %v7883 = vmul.f32 %v7863, %v7640
    %v7884 = vmul.f32 %v7865, %v7640
    %v7885 = vmul.f32 %v7867, %v7640
    %v7886 = vmul.f32 %v7869, %v7640
    %v7887 = vmul.f32 %v7871, %v7640
    %v7888 = vadd.f32 %v7872, %v7662
    %v7889 = vadd.f32 %v7873, %v7662
    %v7890 = vadd.f32 %v7874, %v7662
    %v7891 = vadd.f32 %v7875, %v7662
    %v7892 = vadd.f32 %v7876, %v7662
    %v7893 = vadd.f32 %v7877, %v7662
    %v7894 = vadd.f32 %v7878, %v7662
    %v7895 = vadd.f32 %v7879, %v7662
    %v7896 = vadd.f32 %v7880, %v7662
    %v7897 = vadd.f32 %v7881, %v7662
    %v7898 = vadd.f32 %v7882, %v7662
    %v7899 = vadd.f32 %v7883, %v7662
    %v7900 = vadd.f32 %v7884, %v7662
    %v7901 = vadd.f32 %v7885, %v7662
    %v7902 = vadd.f32 %v7886, %v7662
    %v7903 = vadd.f32 %v7887, %v7662
    %v7904 = vmax.f32 %v7824, %v7888
    %v7905 = vmax.f32 %v7825, %v7889
    %v7906 = vmax.f32 %v7826, %v7890
    %v7907 = vmax.f32 %v7827, %v7891
    %v7908 = vmax.f32 %v7828, %v7892
    %v7909 = vmax.f32 %v7829, %v7893
    %v7910 = vmax.f32 %v7830, %v7894
    %v7911 = vmax.f32 %v7831, %v7895
    %v7912 = vmax.f32 %v7832, %v7896
    %v7913 = vmax.f32 %v7833, %v7897
    %v7914 = vmax.f32 %v7834, %v7898
    %v7915 = vmax.f32 %v7835, %v7899
    %v7916 = vmax.f32 %v7836, %v7900
    %v7917 = vmax.f32 %v7837, %v7901
    %v7918 = vmax.f32 %v7838, %v7902
    %v7919 = vmax.f32 %v7839, %v7903
    %v7920 = vmax.f32 %v7904, 0.0
    %v7921 = vmax.f32 %v7905, 0.0
    %v7922 = vmax.f32 %v7906, 0.0
    %v7923 = vmax.f32 %v7907, 0.0
    %v7924 = vmax.f32 %v7908, 0.0
    %v7925 = vmax.f32 %v7909, 0.0
    %v7926 = vmax.f32 %v7910, 0.0
    %v7927 = vmax.f32 %v7911, 0.0
    %v7928 = vmax.f32 %v7912, 0.0
    %v7929 = vmax.f32 %v7913, 0.0
    %v7930 = vmax.f32 %v7914, 0.0
    %v7931 = vmax.f32 %v7915, 0.0
    %v7932 = vmax.f32 %v7916, 0.0
    %v7933 = vmax.f32 %v7917, 0.0
    %v7934 = vmax.f32 %v7918, 0.0
    %v7935 = vmax.f32 %v7919, 0.0
    %7936 = vst.msk [vmem:[#allocation6] sm:$0xff] %vm3444, %v7920
    %7937 = vst.msk [vmem:[#allocation6 + $0x8] sm:$0xff] %vm3444, %v7921
    %7938 = vst.msk [vmem:[#allocation6 + $0x10] sm:$0xff] %vm3444, %v7922
    %7939 = vst.msk [vmem:[#allocation6 + $0x18] sm:$0xff] %vm3444, %v7923
    %7940 = vst.msk [vmem:[#allocation6 + $0x20] sm:$0xff] %vm3444, %v7924
    %7941 = vst.msk [vmem:[#allocation6 + $0x28] sm:$0xff] %vm3444, %v7925
    %7942 = vst.msk [vmem:[#allocation6 + $0x30] sm:$0xff] %vm3444, %v7926
    %7943 = vst.msk [vmem:[#allocation6 + $0x38] sm:$0xff] %vm3444, %v7927
    %7944 = vst.msk [vmem:[#allocation6 + $0x40] sm:$0xff] %vm3444, %v7928
    %7945 = vst.msk [vmem:[#allocation6 + $0x48] sm:$0xff] %vm3444, %v7929
    %7946 = vst.msk [vmem:[#allocation6 + $0x50] sm:$0xff] %vm3444, %v7930
    %7947 = vst.msk [vmem:[#allocation6 + $0x58] sm:$0xff] %vm3444, %v7931
    %7948 = vst.msk [vmem:[#allocation6 + $0x60] sm:$0xff] %vm3444, %v7932
    %7949 = vst.msk [vmem:[#allocation6 + $0x68] sm:$0xff] %vm3444, %v7933
    %7950 = vst.msk [vmem:[#allocation6 + $0x70] sm:$0xff] %vm3444, %v7934
    %vm7951 = vcmask 257024
    %7952 = vst.msk [vmem:[#allocation6 + $0x78] sm:$0xf] %vm7951, %v7935
    %s7953 = scalar_lea.vmem [#allocation2], 496
    %v7954 = vld [vmem:[%s7953] ss:$4 sm:$0xff]
    %s7955 = scalar_lea.vmem [#allocation2], 528
    %v7956 = vld [vmem:[%s7955] ss:$4 sm:$0xff]
    %s7957 = scalar_lea.vmem [#allocation2], 560
    %v7958 = vld [vmem:[%s7957] ss:$4 sm:$0xff]
    %s7959 = scalar_lea.vmem [#allocation2], 592
    %v7960 = vld [vmem:[%s7959] ss:$4 sm:$0xff]
    %s7961 = scalar_lea.vmem [#allocation2], 624
    %v7962 = vld [vmem:[%s7961] ss:$4 sm:$0xff]
    %s7963 = scalar_lea.vmem [#allocation2], 656
    %v7964 = vld [vmem:[%s7963] ss:$4 sm:$0xff]
    %s7965 = scalar_lea.vmem [#allocation2], 688
    %v7966 = vld [vmem:[%s7965] ss:$4 sm:$0xff]
    %s7967 = scalar_lea.vmem [#allocation2], 720
    %v7968 = vld [vmem:[%s7967] ss:$4 sm:$0xff]
    %s7969 = scalar_lea.vmem [#allocation2], 752
    %v7970 = vld [vmem:[%s7969] ss:$4 sm:$0xff]
    %s7971 = scalar_lea.vmem [#allocation2], 784
    %v7972 = vld [vmem:[%s7971] ss:$4 sm:$0xff]
    %s7973 = scalar_lea.vmem [#allocation2], 816
    %v7974 = vld [vmem:[%s7973] ss:$4 sm:$0xff]
    %s7975 = scalar_lea.vmem [#allocation2], 848
    %v7976 = vld [vmem:[%s7975] ss:$4 sm:$0xff]
    %s7977 = scalar_lea.vmem [#allocation2], 880
    %v7978 = vld [vmem:[%s7977] ss:$4 sm:$0xff]
    %s7979 = scalar_lea.vmem [#allocation2], 912
    %v7980 = vld [vmem:[%s7979] ss:$4 sm:$0xff]
    %s7981 = scalar_lea.vmem [#allocation2], 944
    %v7982 = vld [vmem:[%s7981] ss:$4 sm:$0xff]
    %s7983 = scalar_lea.vmem [#allocation2], 976
    %v7984 = vld [vmem:[%s7983] ss:$4 sm:$0xf]
    %v7985 = vmul.f32 %v7954, %v7640
    %v7986 = vmul.f32 %v7956, %v7640
    %v7987 = vmul.f32 %v7958, %v7640
    %v7988 = vmul.f32 %v7960, %v7640
    %v7989 = vmul.f32 %v7962, %v7640
    %v7990 = vmul.f32 %v7964, %v7640
    %v7991 = vmul.f32 %v7966, %v7640
    %v7992 = vmul.f32 %v7968, %v7640
    %v7993 = vmul.f32 %v7970, %v7640
    %v7994 = vmul.f32 %v7972, %v7640
    %v7995 = vmul.f32 %v7974, %v7640
    %v7996 = vmul.f32 %v7976, %v7640
    %v7997 = vmul.f32 %v7978, %v7640
    %v7998 = vmul.f32 %v7980, %v7640
    %v7999 = vmul.f32 %v7982, %v7640
    %v8000 = vmul.f32 %v7984, %v7640
    %v8001 = vadd.f32 %v7985, %v7662
    %v8002 = vadd.f32 %v7986, %v7662
    %v8003 = vadd.f32 %v7987, %v7662
    %v8004 = vadd.f32 %v7988, %v7662
    %v8005 = vadd.f32 %v7989, %v7662
    %v8006 = vadd.f32 %v7990, %v7662
    %v8007 = vadd.f32 %v7991, %v7662
    %v8008 = vadd.f32 %v7992, %v7662
    %v8009 = vadd.f32 %v7993, %v7662
    %v8010 = vadd.f32 %v7994, %v7662
    %v8011 = vadd.f32 %v7995, %v7662
    %v8012 = vadd.f32 %v7996, %v7662
    %v8013 = vadd.f32 %v7997, %v7662
    %v8014 = vadd.f32 %v7998, %v7662
    %v8015 = vadd.f32 %v7999, %v7662
    %v8016 = vadd.f32 %v8000, %v7662
    %s8017 = scalar_lea.vmem [#allocation2], 497
    %v8018 = vld [vmem:[%s8017] ss:$4 sm:$0xff]
    %s8019 = scalar_lea.vmem [#allocation2], 529
    %v8020 = vld [vmem:[%s8019] ss:$4 sm:$0xff]
    %s8021 = scalar_lea.vmem [#allocation2], 561
    %v8022 = vld [vmem:[%s8021] ss:$4 sm:$0xff]
    %s8023 = scalar_lea.vmem [#allocation2], 593
    %v8024 = vld [vmem:[%s8023] ss:$4 sm:$0xff]
    %s8025 = scalar_lea.vmem [#allocation2], 625
    %v8026 = vld [vmem:[%s8025] ss:$4 sm:$0xff]
    %s8027 = scalar_lea.vmem [#allocation2], 657
    %v8028 = vld [vmem:[%s8027] ss:$4 sm:$0xff]
    %s8029 = scalar_lea.vmem [#allocation2], 689
    %v8030 = vld [vmem:[%s8029] ss:$4 sm:$0xff]
    %s8031 = scalar_lea.vmem [#allocation2], 721
    %v8032 = vld [vmem:[%s8031] ss:$4 sm:$0xff]
    %s8033 = scalar_lea.vmem [#allocation2], 753
    %v8034 = vld [vmem:[%s8033] ss:$4 sm:$0xff]
    %s8035 = scalar_lea.vmem [#allocation2], 785
    %v8036 = vld [vmem:[%s8035] ss:$4 sm:$0xff]
    %s8037 = scalar_lea.vmem [#allocation2], 817
    %v8038 = vld [vmem:[%s8037] ss:$4 sm:$0xff]
    %s8039 = scalar_lea.vmem [#allocation2], 849
    %v8040 = vld [vmem:[%s8039] ss:$4 sm:$0xff]
    %s8041 = scalar_lea.vmem [#allocation2], 881
    %v8042 = vld [vmem:[%s8041] ss:$4 sm:$0xff]
    %s8043 = scalar_lea.vmem [#allocation2], 913
    %v8044 = vld [vmem:[%s8043] ss:$4 sm:$0xff]
    %s8045 = scalar_lea.vmem [#allocation2], 945
    %v8046 = vld [vmem:[%s8045] ss:$4 sm:$0xff]
    %s8047 = scalar_lea.vmem [#allocation2], 977
    %v8048 = vld [vmem:[%s8047] ss:$4 sm:$0xf]
    %v8049 = vmul.f32 %v8018, %v7640
    %v8050 = vmul.f32 %v8020, %v7640
    %v8051 = vmul.f32 %v8022, %v7640
    %v8052 = vmul.f32 %v8024, %v7640
    %v8053 = vmul.f32 %v8026, %v7640
    %v8054 = vmul.f32 %v8028, %v7640
    %v8055 = vmul.f32 %v8030, %v7640
    %v8056 = vmul.f32 %v8032, %v7640
    %v8057 = vmul.f32 %v8034, %v7640
    %v8058 = vmul.f32 %v8036, %v7640
    %v8059 = vmul.f32 %v8038, %v7640
    %v8060 = vmul.f32 %v8040, %v7640
    %v8061 = vmul.f32 %v8042, %v7640
    %v8062 = vmul.f32 %v8044, %v7640
    %v8063 = vmul.f32 %v8046, %v7640
    %v8064 = vmul.f32 %v8048, %v7640
    %v8065 = vadd.f32 %v8049, %v7662
    %v8066 = vadd.f32 %v8050, %v7662
    %v8067 = vadd.f32 %v8051, %v7662
    %v8068 = vadd.f32 %v8052, %v7662
    %v8069 = vadd.f32 %v8053, %v7662
    %v8070 = vadd.f32 %v8054, %v7662
    %v8071 = vadd.f32 %v8055, %v7662
    %v8072 = vadd.f32 %v8056, %v7662
    %v8073 = vadd.f32 %v8057, %v7662
    %v8074 = vadd.f32 %v8058, %v7662
    %v8075 = vadd.f32 %v8059, %v7662
    %v8076 = vadd.f32 %v8060, %v7662
    %v8077 = vadd.f32 %v8061, %v7662
    %v8078 = vadd.f32 %v8062, %v7662
    %v8079 = vadd.f32 %v8063, %v7662
    %v8080 = vadd.f32 %v8064, %v7662
    %v8081 = vmax.f32 %v8001, %v8065
    %v8082 = vmax.f32 %v8002, %v8066
    %v8083 = vmax.f32 %v8003, %v8067
    %v8084 = vmax.f32 %v8004, %v8068
    %v8085 = vmax.f32 %v8005, %v8069
    %v8086 = vmax.f32 %v8006, %v8070
    %v8087 = vmax.f32 %v8007, %v8071
    %v8088 = vmax.f32 %v8008, %v8072
    %v8089 = vmax.f32 %v8009, %v8073
    %v8090 = vmax.f32 %v8010, %v8074
    %v8091 = vmax.f32 %v8011, %v8075
    %v8092 = vmax.f32 %v8012, %v8076
    %v8093 = vmax.f32 %v8013, %v8077
    %v8094 = vmax.f32 %v8014, %v8078
    %v8095 = vmax.f32 %v8015, %v8079
    %v8096 = vmax.f32 %v8016, %v8080
    %s8097 = scalar_lea.vmem [#allocation2], 498
    %v8098 = vld [vmem:[%s8097] ss:$4 sm:$0xff]
    %s8099 = scalar_lea.vmem [#allocation2], 530
    %v8100 = vld [vmem:[%s8099] ss:$4 sm:$0xff]
    %s8101 = scalar_lea.vmem [#allocation2], 562
    %v8102 = vld [vmem:[%s8101] ss:$4 sm:$0xff]
    %s8103 = scalar_lea.vmem [#allocation2], 594
    %v8104 = vld [vmem:[%s8103] ss:$4 sm:$0xff]
    %s8105 = scalar_lea.vmem [#allocation2], 626
    %v8106 = vld [vmem:[%s8105] ss:$4 sm:$0xff]
    %s8107 = scalar_lea.vmem [#allocation2], 658
    %v8108 = vld [vmem:[%s8107] ss:$4 sm:$0xff]
    %s8109 = scalar_lea.vmem [#allocation2], 690
    %v8110 = vld [vmem:[%s8109] ss:$4 sm:$0xff]
    %s8111 = scalar_lea.vmem [#allocation2], 722
    %v8112 = vld [vmem:[%s8111] ss:$4 sm:$0xff]
    %s8113 = scalar_lea.vmem [#allocation2], 754
    %v8114 = vld [vmem:[%s8113] ss:$4 sm:$0xff]
    %s8115 = scalar_lea.vmem [#allocation2], 786
    %v8116 = vld [vmem:[%s8115] ss:$4 sm:$0xff]
    %s8117 = scalar_lea.vmem [#allocation2], 818
    %v8118 = vld [vmem:[%s8117] ss:$4 sm:$0xff]
    %s8119 = scalar_lea.vmem [#allocation2], 850
    %v8120 = vld [vmem:[%s8119] ss:$4 sm:$0xff]
    %s8121 = scalar_lea.vmem [#allocation2], 882
    %v8122 = vld [vmem:[%s8121] ss:$4 sm:$0xff]
    %s8123 = scalar_lea.vmem [#allocation2], 914
    %v8124 = vld [vmem:[%s8123] ss:$4 sm:$0xff]
    %s8125 = scalar_lea.vmem [#allocation2], 946
    %v8126 = vld [vmem:[%s8125] ss:$4 sm:$0xff]
    %s8127 = scalar_lea.vmem [#allocation2], 978
    %v8128 = vld [vmem:[%s8127] ss:$4 sm:$0xf]
    %v8129 = vmul.f32 %v8098, %v7640
    %v8130 = vmul.f32 %v8100, %v7640
    %v8131 = vmul.f32 %v8102, %v7640
    %v8132 = vmul.f32 %v8104, %v7640
    %v8133 = vmul.f32 %v8106, %v7640
    %v8134 = vmul.f32 %v8108, %v7640
    %v8135 = vmul.f32 %v8110, %v7640
    %v8136 = vmul.f32 %v8112, %v7640
    %v8137 = vmul.f32 %v8114, %v7640
    %v8138 = vmul.f32 %v8116, %v7640
    %v8139 = vmul.f32 %v8118, %v7640
    %v8140 = vmul.f32 %v8120, %v7640
    %v8141 = vmul.f32 %v8122, %v7640
    %v8142 = vmul.f32 %v8124, %v7640
    %v8143 = vmul.f32 %v8126, %v7640
    %v8144 = vmul.f32 %v8128, %v7640
    %v8145 = vadd.f32 %v8129, %v7662
    %v8146 = vadd.f32 %v8130, %v7662
    %v8147 = vadd.f32 %v8131, %v7662
    %v8148 = vadd.f32 %v8132, %v7662
    %v8149 = vadd.f32 %v8133, %v7662
    %v8150 = vadd.f32 %v8134, %v7662
    %v8151 = vadd.f32 %v8135, %v7662
    %v8152 = vadd.f32 %v8136, %v7662
    %v8153 = vadd.f32 %v8137, %v7662
    %v8154 = vadd.f32 %v8138, %v7662
    %v8155 = vadd.f32 %v8139, %v7662
    %v8156 = vadd.f32 %v8140, %v7662
    %v8157 = vadd.f32 %v8141, %v7662
    %v8158 = vadd.f32 %v8142, %v7662
    %v8159 = vadd.f32 %v8143, %v7662
    %v8160 = vadd.f32 %v8144, %v7662
    %v8161 = vmax.f32 %v8081, %v8145
    %v8162 = vmax.f32 %v8082, %v8146
    %v8163 = vmax.f32 %v8083, %v8147
    %v8164 = vmax.f32 %v8084, %v8148
    %v8165 = vmax.f32 %v8085, %v8149
    %v8166 = vmax.f32 %v8086, %v8150
    %v8167 = vmax.f32 %v8087, %v8151
    %v8168 = vmax.f32 %v8088, %v8152
    %v8169 = vmax.f32 %v8089, %v8153
    %v8170 = vmax.f32 %v8090, %v8154
    %v8171 = vmax.f32 %v8091, %v8155
    %v8172 = vmax.f32 %v8092, %v8156
    %v8173 = vmax.f32 %v8093, %v8157
    %v8174 = vmax.f32 %v8094, %v8158
    %v8175 = vmax.f32 %v8095, %v8159
    %v8176 = vmax.f32 %v8096, %v8160
    %s8177 = scalar_lea.vmem [#allocation2], 499
    %v8178 = vld [vmem:[%s8177] ss:$4 sm:$0xff]
    %s8179 = scalar_lea.vmem [#allocation2], 531
    %v8180 = vld [vmem:[%s8179] ss:$4 sm:$0xff]
    %s8181 = scalar_lea.vmem [#allocation2], 563
    %v8182 = vld [vmem:[%s8181] ss:$4 sm:$0xff]
    %s8183 = scalar_lea.vmem [#allocation2], 595
    %v8184 = vld [vmem:[%s8183] ss:$4 sm:$0xff]
    %s8185 = scalar_lea.vmem [#allocation2], 627
    %v8186 = vld [vmem:[%s8185] ss:$4 sm:$0xff]
    %s8187 = scalar_lea.vmem [#allocation2], 659
    %v8188 = vld [vmem:[%s8187] ss:$4 sm:$0xff]
    %s8189 = scalar_lea.vmem [#allocation2], 691
    %v8190 = vld [vmem:[%s8189] ss:$4 sm:$0xff]
    %s8191 = scalar_lea.vmem [#allocation2], 723
    %v8192 = vld [vmem:[%s8191] ss:$4 sm:$0xff]
    %s8193 = scalar_lea.vmem [#allocation2], 755
    %v8194 = vld [vmem:[%s8193] ss:$4 sm:$0xff]
    %s8195 = scalar_lea.vmem [#allocation2], 787
    %v8196 = vld [vmem:[%s8195] ss:$4 sm:$0xff]
    %s8197 = scalar_lea.vmem [#allocation2], 819
    %v8198 = vld [vmem:[%s8197] ss:$4 sm:$0xff]
    %s8199 = scalar_lea.vmem [#allocation2], 851
    %v8200 = vld [vmem:[%s8199] ss:$4 sm:$0xff]
    %s8201 = scalar_lea.vmem [#allocation2], 883
    %v8202 = vld [vmem:[%s8201] ss:$4 sm:$0xff]
    %s8203 = scalar_lea.vmem [#allocation2], 915
    %v8204 = vld [vmem:[%s8203] ss:$4 sm:$0xff]
    %s8205 = scalar_lea.vmem [#allocation2], 947
    %v8206 = vld [vmem:[%s8205] ss:$4 sm:$0xff]
    %s8207 = scalar_lea.vmem [#allocation2], 979
    %v8208 = vld [vmem:[%s8207] ss:$4 sm:$0xf]
    %v8209 = vmul.f32 %v8178, %v7640
    %v8210 = vmul.f32 %v8180, %v7640
    %v8211 = vmul.f32 %v8182, %v7640
    %v8212 = vmul.f32 %v8184, %v7640
    %v8213 = vmul.f32 %v8186, %v7640
    %v8214 = vmul.f32 %v8188, %v7640
    %v8215 = vmul.f32 %v8190, %v7640
    %v8216 = vmul.f32 %v8192, %v7640
    %v8217 = vmul.f32 %v8194, %v7640
    %v8218 = vmul.f32 %v8196, %v7640
    %v8219 = vmul.f32 %v8198, %v7640
    %v8220 = vmul.f32 %v8200, %v7640
    %v8221 = vmul.f32 %v8202, %v7640
    %v8222 = vmul.f32 %v8204, %v7640
    %v8223 = vmul.f32 %v8206, %v7640
    %v8224 = vmul.f32 %v8208, %v7640
    %v8225 = vadd.f32 %v8209, %v7662
    %v8226 = vadd.f32 %v8210, %v7662
    %v8227 = vadd.f32 %v8211, %v7662
    %v8228 = vadd.f32 %v8212, %v7662
    %v8229 = vadd.f32 %v8213, %v7662
    %v8230 = vadd.f32 %v8214, %v7662
    %v8231 = vadd.f32 %v8215, %v7662
    %v8232 = vadd.f32 %v8216, %v7662
    %v8233 = vadd.f32 %v8217, %v7662
    %v8234 = vadd.f32 %v8218, %v7662
    %v8235 = vadd.f32 %v8219, %v7662
    %v8236 = vadd.f32 %v8220, %v7662
    %v8237 = vadd.f32 %v8221, %v7662
    %v8238 = vadd.f32 %v8222, %v7662
    %v8239 = vadd.f32 %v8223, %v7662
    %v8240 = vadd.f32 %v8224, %v7662
    %v8241 = vmax.f32 %v8161, %v8225
    %v8242 = vmax.f32 %v8162, %v8226
    %v8243 = vmax.f32 %v8163, %v8227
    %v8244 = vmax.f32 %v8164, %v8228
    %v8245 = vmax.f32 %v8165, %v8229
    %v8246 = vmax.f32 %v8166, %v8230
    %v8247 = vmax.f32 %v8167, %v8231
    %v8248 = vmax.f32 %v8168, %v8232
    %v8249 = vmax.f32 %v8169, %v8233
    %v8250 = vmax.f32 %v8170, %v8234
    %v8251 = vmax.f32 %v8171, %v8235
    %v8252 = vmax.f32 %v8172, %v8236
    %v8253 = vmax.f32 %v8173, %v8237
    %v8254 = vmax.f32 %v8174, %v8238
    %v8255 = vmax.f32 %v8175, %v8239
    %v8256 = vmax.f32 %v8176, %v8240
    %v8257 = vmax.f32 %v8241, 0.0
    %v8258 = vmax.f32 %v8242, 0.0
    %v8259 = vmax.f32 %v8243, 0.0
    %v8260 = vmax.f32 %v8244, 0.0
    %v8261 = vmax.f32 %v8245, 0.0
    %v8262 = vmax.f32 %v8246, 0.0
    %v8263 = vmax.f32 %v8247, 0.0
    %v8264 = vmax.f32 %v8248, 0.0
    %v8265 = vmax.f32 %v8249, 0.0
    %v8266 = vmax.f32 %v8250, 0.0
    %v8267 = vmax.f32 %v8251, 0.0
    %v8268 = vmax.f32 %v8252, 0.0
    %v8269 = vmax.f32 %v8253, 0.0
    %v8270 = vmax.f32 %v8254, 0.0
    %v8271 = vmax.f32 %v8255, 0.0
    %v8272 = vmax.f32 %v8256, 0.0
    %s8273 = scalar_lea.vmem [#allocation6], 128
    %8274 = vst.msk [vmem:[%s8273] sm:$0xff] %vm3444, %v8257
    %8275 = vst.msk [vmem:[%s8273 + $0x8] sm:$0xff] %vm3444, %v8258
    %8276 = vst.msk [vmem:[%s8273 + $0x10] sm:$0xff] %vm3444, %v8259
    %8277 = vst.msk [vmem:[%s8273 + $0x18] sm:$0xff] %vm3444, %v8260
    %8278 = vst.msk [vmem:[%s8273 + $0x20] sm:$0xff] %vm3444, %v8261
    %8279 = vst.msk [vmem:[%s8273 + $0x28] sm:$0xff] %vm3444, %v8262
    %8280 = vst.msk [vmem:[%s8273 + $0x30] sm:$0xff] %vm3444, %v8263
    %8281 = vst.msk [vmem:[%s8273 + $0x38] sm:$0xff] %vm3444, %v8264
    %8282 = vst.msk [vmem:[%s8273 + $0x40] sm:$0xff] %vm3444, %v8265
    %8283 = vst.msk [vmem:[%s8273 + $0x48] sm:$0xff] %vm3444, %v8266
    %8284 = vst.msk [vmem:[%s8273 + $0x50] sm:$0xff] %vm3444, %v8267
    %8285 = vst.msk [vmem:[%s8273 + $0x58] sm:$0xff] %vm3444, %v8268
    %8286 = vst.msk [vmem:[%s8273 + $0x60] sm:$0xff] %vm3444, %v8269
    %8287 = vst.msk [vmem:[%s8273 + $0x68] sm:$0xff] %vm3444, %v8270
    %8288 = vst.msk [vmem:[%s8273 + $0x70] sm:$0xff] %vm3444, %v8271
    %8289 = vst.msk [vmem:[%s8273 + $0x78] sm:$0xf] %vm7951, %v8272
    %v8290 = vld [vmem:[#allocation6] sm:$0xff]
    %v8291 = vld [vmem:[#allocation6 + $0x8] sm:$0xff]
    %v8292 = vld [vmem:[#allocation6 + $0x10] sm:$0xff]
    %v8293 = vld [vmem:[#allocation6 + $0x18] sm:$0xff]
    %v8294 = vld [vmem:[#allocation6 + $0x20] sm:$0xff]
    %v8295 = vld [vmem:[#allocation6 + $0x28] sm:$0xff]
    %v8296 = vld [vmem:[#allocation6 + $0x30] sm:$0xff]
    %v8297 = vld [vmem:[#allocation6 + $0x38] sm:$0xff]
    %v8298 = vld [vmem:[#allocation6 + $0x40] sm:$0xff]
    %v8299 = vld [vmem:[#allocation6 + $0x48] sm:$0xff]
    %v8300 = vld [vmem:[#allocation6 + $0x50] sm:$0xff]
    %v8301 = vld [vmem:[#allocation6 + $0x58] sm:$0xff]
    %v8302 = vld [vmem:[#allocation6 + $0x60] sm:$0xff]
    %v8303 = vld [vmem:[#allocation6 + $0x68] sm:$0xff]
    %v8304 = vld [vmem:[#allocation6 + $0x70] sm:$0xff]
    %v8305 = vld [vmem:[#allocation6 + $0x78] sm:$0x3]
    %v8306 = vld [vmem:[%s5] sm:$0xff]
    %v8307 = vld [vmem:[%s5 + $0x8] sm:$0xff]
    %v8308 = vld [vmem:[%s5 + $0x10] sm:$0xff]
    %v8309 = vld [vmem:[%s5 + $0x18] sm:$0xff]
    %v8310 = vld [vmem:[#allocation6 + $0x1] sm:$0xff]
    %v8311 = vld [vmem:[#allocation6 + $0x9] sm:$0xff]
    %v8312 = vld [vmem:[#allocation6 + $0x11] sm:$0xff]
    %v8313 = vld [vmem:[#allocation6 + $0x19] sm:$0xff]
    %v8314 = vld [vmem:[#allocation6 + $0x21] sm:$0xff]
    %v8315 = vld [vmem:[#allocation6 + $0x29] sm:$0xff]
    %v8316 = vld [vmem:[#allocation6 + $0x31] sm:$0xff]
    %v8317 = vld [vmem:[#allocation6 + $0x39] sm:$0xff]
    %v8318 = vld [vmem:[#allocation6 + $0x41] sm:$0xff]
    %v8319 = vld [vmem:[#allocation6 + $0x49] sm:$0xff]
    %v8320 = vld [vmem:[#allocation6 + $0x51] sm:$0xff]
    %v8321 = vld [vmem:[#allocation6 + $0x59] sm:$0xff]
    %v8322 = vld [vmem:[#allocation6 + $0x61] sm:$0xff]
    %v8323 = vld [vmem:[#allocation6 + $0x69] sm:$0xff]
    %v8324 = vld [vmem:[#allocation6 + $0x71] sm:$0xff]
    %v8325 = vld [vmem:[#allocation6 + $0x79] sm:$0x3]
    %v8326 = vld [vmem:[%s5 + $0x20] sm:$0xff]
    %v8327 = vld [vmem:[%s5 + $0x28] sm:$0xff]
    %v8328 = vld [vmem:[%s5 + $0x30] sm:$0xff]
    %v8329 = vld [vmem:[%s5 + $0x38] sm:$0xff]
    %v8331 = vsel %vm3444, %v8310, 0
    %v8334 = vsel %vm3444, %v8311, 0
    %v8337 = vsel %vm3444, %v8312, 0
    %v8340 = vsel %vm3444, %v8313, 0
    %v8343 = vsel %vm3444, %v8314, 0
    %v8346 = vsel %vm3444, %v8315, 0
    %v8349 = vsel %vm3444, %v8316, 0
    %v8352 = vsel %vm3444, %v8317, 0
    %v8355 = vsel %vm3444, %v8318, 0
    %v8358 = vsel %vm3444, %v8319, 0
    %v8361 = vsel %vm3444, %v8320, 0
    %v8364 = vsel %vm3444, %v8321, 0
    %v8367 = vsel %vm3444, %v8322, 0
    %v8370 = vsel %vm3444, %v8323, 0
    %v8373 = vsel %vm3444, %v8324, 0
    %v8376 = vsel %vm3444, %v8325, 0
    %8378 = vmatprep.subr.mxu0 0.0
    %8379 = vmatpush1.msra.mxu0 %v8326
    %8380 = vmatprep.subr.mxu0 0.0
    %8381 = vmatpush1.msra.mxu0 %v8327
    %8382 = vmatprep.subr.mxu0 0.0
    %8383 = vmatpush1.msra.mxu0 %v8328
    %8384 = vmatprep.subr.mxu0 0.0
    %8385 = vmatpush1.msra.mxu0 %v8329
    %8386 = vmatprep.subr.mxu0 0.0
    %8387 = vmatpush1.msra.mxu0 0.0
    %8388 = vmatprep.subr.mxu0 0.0
    %8389 = vmatpush1.msra.mxu0 0.0
    %8390 = vmatprep.subr.mxu0 0.0
    %8391 = vmatpush1.msra.mxu0 0.0
    %8392 = vmatprep.subr.mxu0 0.0
    %8393 = vmatpush1.msra.mxu0 0.0
    %8394 = vmatprep.subr.mxu0 0.0
    %8395 = vmatpush1.msra.mxu0 0.0
    %8396 = vmatprep.subr.mxu0 0.0
    %8397 = vmatpush1.msra.mxu0 0.0
    %8398 = vmatprep.subr.mxu0 0.0
    %8399 = vmatpush1.msra.mxu0 0.0
    %8400 = vmatprep.subr.mxu0 0.0
    %8401 = vmatpush1.msra.mxu0 0.0
    %8402 = vmatprep.subr.mxu0 0.0
    %8403 = vmatpush1.msra.mxu0 0.0
    %8404 = vmatprep.subr.mxu0 0.0
    %8405 = vmatpush1.msra.mxu0 0.0
    %8406 = vmatprep.subr.mxu0 0.0
    %8407 = vmatpush1.msra.mxu0 0.0
    %8408 = vmatprep.subr.mxu0 0.0
    %8409 = vmatpush1.msra.mxu0 0.0
    %8410 = vmatprep.subr.mxu0 0.0
    %8411 = vmatpush1.msra.mxu0 0.0
    %8412 = vmatprep.subr.mxu0 0.0
    %8413 = vmatpush1.msra.mxu0 0.0
    %8414 = vmatprep.subr.mxu0 0.0
    %8415 = vmatpush1.msra.mxu0 0.0
    %8416 = vmatprep.subr.mxu0 0.0
    %8417 = vmatpush1.msra.mxu0 0.0
    %8418 = vmatprep.subr.mxu0 0.0
    %8419 = vmatpush1.msra.mxu0 0.0
    %8420 = vmatprep.subr.mxu0 0.0
    %8421 = vmatpush1.msra.mxu0 0.0
    %8422 = vmatprep.subr.mxu0 0.0
    %8423 = vmatpush1.msra.mxu0 0.0
    %8424 = vmatprep.subr.mxu0 0.0
    %8425 = vmatpush1.msra.mxu0 0.0
    %8426 = vmatprep.subr.mxu0 0.0
    %8427 = vmatpush1.msra.mxu0 0.0
    %8428 = vmatprep.subr.mxu0 0.0
    %8429 = vmatpush1.msra.mxu0 0.0
    %8430 = vmatprep.subr.mxu0 0.0
    %8431 = vmatpush1.msra.mxu0 0.0
    %8432 = vmatprep.subr.mxu0 0.0
    %8433 = vmatpush1.msra.mxu0 0.0
    %8434 = vmatprep.subr.mxu0 0.0
    %8435 = vmatpush1.msra.mxu0 0.0
    %8436 = vmatprep.subr.mxu0 0.0
    %8437 = vmatpush1.msra.mxu0 0.0
    %8438 = vmatprep.subr.mxu0 0.0
    %8439 = vmatpush1.msra.mxu0 0.0
    %8440 = vmatprep.subr.mxu0 0.0
    %8441 = vmatpush1.msra.mxu0 0.0
    %8442 = vmatprep.mubr.f32.mxu0 0.0
    %8443 = vmatmul.mubr.f32.gmra.mrb[0].mxu0 %v8331
    %v8444 = vpop.f32.mrb[0].mxu0
    %v8445 = vadd.f32 0.0, %v8444
    %v8446 = vpop.f32.mrb[0].mxu0
    %8447 = vmatprep.mubr.f32.mxu0 0.0
    %8448 = vmatmul.mubr.f32.gmra.mrb[0].mxu0 %v8334
    %v8449 = vpop.f32.mrb[0].mxu0
    %v8450 = vadd.f32 0.0, %v8449
    %v8451 = vpop.f32.mrb[0].mxu0
    %8452 = vmatprep.mubr.f32.mxu0 0.0
    %8453 = vmatmul.mubr.f32.gmra.mrb[0].mxu0 %v8337
    %v8454 = vpop.f32.mrb[0].mxu0
    %v8455 = vadd.f32 0.0, %v8454
    %v8456 = vpop.f32.mrb[0].mxu0
    %8457 = vmatprep.mubr.f32.mxu0 0.0
    %8458 = vmatmul.mubr.f32.gmra.mrb[0].mxu0 %v8340
    %v8459 = vpop.f32.mrb[0].mxu0
    %v8460 = vadd.f32 0.0, %v8459
    %v8461 = vpop.f32.mrb[0].mxu0
    %8462 = vmatprep.mubr.f32.mxu0 0.0
    %8463 = vmatmul.mubr.f32.gmra.mrb[0].mxu0 %v8343
    %v8464 = vpop.f32.mrb[0].mxu0
    %v8465 = vadd.f32 0.0, %v8464
    %v8466 = vpop.f32.mrb[0].mxu0
    %8467 = vmatprep.mubr.f32.mxu0 0.0
    %8468 = vmatmul.mubr.f32.gmra.mrb[0].mxu0 %v8346
    %v8469 = vpop.f32.mrb[0].mxu0
    %v8470 = vadd.f32 0.0, %v8469
    %v8471 = vpop.f32.mrb[0].mxu0
    %8472 = vmatprep.mubr.f32.mxu0 0.0
    %8473 = vmatmul.mubr.f32.gmra.mrb[0].mxu0 %v8349
    %v8474 = vpop.f32.mrb[0].mxu0
    %v8475 = vadd.f32 0.0, %v8474
    %v8476 = vpop.f32.mrb[0].mxu0
    %8477 = vmatprep.mubr.f32.mxu0 0.0
    %8478 = vmatmul.mubr.f32.gmra.mrb[0].mxu0 %v8352
    %v8479 = vpop.f32.mrb[0].mxu0
    %v8480 = vadd.f32 0.0, %v8479
    %v8481 = vpop.f32.mrb[0].mxu0
    %8482 = vmatprep.mubr.f32.mxu0 0.0
    %8483 = vmatmul.mubr.f32.gmra.mrb[0].mxu0 %v8355
    %v8484 = vpop.f32.mrb[0].mxu0
    %v8485 = vadd.f32 0.0, %v8484
    %v8486 = vpop.f32.mrb[0].mxu0
    %8487 = vmatprep.mubr.f32.mxu0 0.0
    %8488 = vmatmul.mubr.f32.gmra.mrb[0].mxu0 %v8358
    %v8489 = vpop.f32.mrb[0].mxu0
    %v8490 = vadd.f32 0.0, %v8489
    %v8491 = vpop.f32.mrb[0].mxu0
    %8492 = vmatprep.mubr.f32.mxu0 0.0
    %8493 = vmatmul.mubr.f32.gmra.mrb[0].mxu0 %v8361
    %v8494 = vpop.f32.mrb[0].mxu0
    %v8495 = vadd.f32 0.0, %v8494
    %v8496 = vpop.f32.mrb[0].mxu0
    %8497 = vmatprep.mubr.f32.mxu0 0.0
    %8498 = vmatmul.mubr.f32.gmra.mrb[0].mxu0 %v8364
    %v8499 = vpop.f32.mrb[0].mxu0
    %v8500 = vadd.f32 0.0, %v8499
    %v8501 = vpop.f32.mrb[0].mxu0
    %8502 = vmatprep.mubr.f32.mxu0 0.0
    %8503 = vmatmul.mubr.f32.gmra.mrb[0].mxu0 %v8367
    %v8504 = vpop.f32.mrb[0].mxu0
    %v8505 = vadd.f32 0.0, %v8504
    %v8506 = vpop.f32.mrb[0].mxu0
    %8507 = vmatprep.mubr.f32.mxu0 0.0
    %8508 = vmatmul.mubr.f32.gmra.mrb[0].mxu0 %v8370
    %v8509 = vpop.f32.mrb[0].mxu0
    %v8510 = vadd.f32 0.0, %v8509
    %v8511 = vpop.f32.mrb[0].mxu0
    %8512 = vmatprep.mubr.f32.mxu0 0.0
    %8513 = vmatmul.mubr.f32.gmra.mrb[0].mxu0 %v8373
    %v8514 = vpop.f32.mrb[0].mxu0
    %v8515 = vadd.f32 0.0, %v8514
    %v8516 = vpop.f32.mrb[0].mxu0
    %8517 = vmatprep.mubr.f32.mxu0 0.0
    %8518 = vmatmul.mubr.f32.gmra.mrb[0].mxu0 %v8376
    %v8519 = vpop.f32.mrb[0].mxu0
    %v8520 = vadd.f32 0.0, %v8519
    %v8521 = vpop.f32.mrb[0].mxu0
    %8522 = vdwg.mxu0
    %v8524 = vsel %vm3444, %v8290, 0
    %v8527 = vsel %vm3444, %v8291, 0
    %v8530 = vsel %vm3444, %v8292, 0
    %v8533 = vsel %vm3444, %v8293, 0
    %v8536 = vsel %vm3444, %v8294, 0
    %v8539 = vsel %vm3444, %v8295, 0
    %v8542 = vsel %vm3444, %v8296, 0
    %v8545 = vsel %vm3444, %v8297, 0
    %v8548 = vsel %vm3444, %v8298, 0
    %v8551 = vsel %vm3444, %v8299, 0
    %v8554 = vsel %vm3444, %v8300, 0
    %v8557 = vsel %vm3444, %v8301, 0
    %v8560 = vsel %vm3444, %v8302, 0
    %v8563 = vsel %vm3444, %v8303, 0
    %v8566 = vsel %vm3444, %v8304, 0
    %v8569 = vsel %vm3444, %v8305, 0
    %8571 = vmatprep.subr.mxu0 0.0
    %8572 = vmatpush1.msra.mxu0 %v8306
    %8573 = vmatprep.subr.mxu0 0.0
    %8574 = vmatpush1.msra.mxu0 %v8307
    %8575 = vmatprep.subr.mxu0 0.0
    %8576 = vmatpush1.msra.mxu0 %v8308
    %8577 = vmatprep.subr.mxu0 0.0
    %8578 = vmatpush1.msra.mxu0 %v8309
    %8579 = vmatprep.subr.mxu0 0.0
    %8580 = vmatpush1.msra.mxu0 0.0
    %8581 = vmatprep.subr.mxu0 0.0
    %8582 = vmatpush1.msra.mxu0 0.0
    %8583 = vmatprep.subr.mxu0 0.0
    %8584 = vmatpush1.msra.mxu0 0.0
    %8585 = vmatprep.subr.mxu0 0.0
    %8586 = vmatpush1.msra.mxu0 0.0
    %8587 = vmatprep.subr.mxu0 0.0
    %8588 = vmatpush1.msra.mxu0 0.0
    %8589 = vmatprep.subr.mxu0 0.0
    %8590 = vmatpush1.msra.mxu0 0.0
    %8591 = vmatprep.subr.mxu0 0.0
    %8592 = vmatpush1.msra.mxu0 0.0
    %8593 = vmatprep.subr.mxu0 0.0
    %8594 = vmatpush1.msra.mxu0 0.0
    %8595 = vmatprep.subr.mxu0 0.0
    %8596 = vmatpush1.msra.mxu0 0.0
    %8597 = vmatprep.subr.mxu0 0.0
    %8598 = vmatpush1.msra.mxu0 0.0
    %8599 = vmatprep.subr.mxu0 0.0
    %8600 = vmatpush1.msra.mxu0 0.0
    %8601 = vmatprep.subr.mxu0 0.0
    %8602 = vmatpush1.msra.mxu0 0.0
    %8603 = vmatprep.subr.mxu0 0.0
    %8604 = vmatpush1.msra.mxu0 0.0
    %8605 = vmatprep.subr.mxu0 0.0
    %8606 = vmatpush1.msra.mxu0 0.0
    %8607 = vmatprep.subr.mxu0 0.0
    %8608 = vmatpush1.msra.mxu0 0.0
    %8609 = vmatprep.subr.mxu0 0.0
    %8610 = vmatpush1.msra.mxu0 0.0
    %8611 = vmatprep.subr.mxu0 0.0
    %8612 = vmatpush1.msra.mxu0 0.0
    %8613 = vmatprep.subr.mxu0 0.0
    %8614 = vmatpush1.msra.mxu0 0.0
    %8615 = vmatprep.subr.mxu0 0.0
    %8616 = vmatpush1.msra.mxu0 0.0
    %8617 = vmatprep.subr.mxu0 0.0
    %8618 = vmatpush1.msra.mxu0 0.0
    %8619 = vmatprep.subr.mxu0 0.0
    %8620 = vmatpush1.msra.mxu0 0.0
    %8621 = vmatprep.subr.mxu0 0.0
    %8622 = vmatpush1.msra.mxu0 0.0
    %8623 = vmatprep.subr.mxu0 0.0
    %8624 = vmatpush1.msra.mxu0 0.0
    %8625 = vmatprep.subr.mxu0 0.0
    %8626 = vmatpush1.msra.mxu0 0.0
    %8627 = vmatprep.subr.mxu0 0.0
    %8628 = vmatpush1.msra.mxu0 0.0
    %8629 = vmatprep.subr.mxu0 0.0
    %8630 = vmatpush1.msra.mxu0 0.0
    %8631 = vmatprep.subr.mxu0 0.0
    %8632 = vmatpush1.msra.mxu0 0.0
    %8633 = vmatprep.subr.mxu0 0.0
    %8634 = vmatpush1.msra.mxu0 0.0
    %8635 = vmatprep.mubr.f32.mxu0 0.0
    %8636 = vmatmul.mubr.f32.gmra.mrb[0].mxu0 %v8524
    %v8637 = vpop.f32.mrb[0].mxu0
    %v8638 = vadd.f32 %v8445, %v8637
    %v8639 = vpop.f32.mrb[0].mxu0
    %8640 = vmatprep.mubr.f32.mxu0 0.0
    %8641 = vmatmul.mubr.f32.gmra.mrb[0].mxu0 %v8527
    %v8642 = vpop.f32.mrb[0].mxu0
    %v8643 = vadd.f32 %v8450, %v8642
    %v8644 = vpop.f32.mrb[0].mxu0
    %8645 = vmatprep.mubr.f32.mxu0 0.0
    %8646 = vmatmul.mubr.f32.gmra.mrb[0].mxu0 %v8530
    %v8647 = vpop.f32.mrb[0].mxu0
    %v8648 = vadd.f32 %v8455, %v8647
    %v8649 = vpop.f32.mrb[0].mxu0
    %8650 = vmatprep.mubr.f32.mxu0 0.0
    %8651 = vmatmul.mubr.f32.gmra.mrb[0].mxu0 %v8533
    %v8652 = vpop.f32.mrb[0].mxu0
    %v8653 = vadd.f32 %v8460, %v8652
    %v8654 = vpop.f32.mrb[0].mxu0
    %8655 = vmatprep.mubr.f32.mxu0 0.0
    %8656 = vmatmul.mubr.f32.gmra.mrb[0].mxu0 %v8536
    %v8657 = vpop.f32.mrb[0].mxu0
    %v8658 = vadd.f32 %v8465, %v8657
    %v8659 = vpop.f32.mrb[0].mxu0
    %8660 = vmatprep.mubr.f32.mxu0 0.0
    %8661 = vmatmul.mubr.f32.gmra.mrb[0].mxu0 %v8539
    %v8662 = vpop.f32.mrb[0].mxu0
    %v8663 = vadd.f32 %v8470, %v8662
    %v8664 = vpop.f32.mrb[0].mxu0
    %8665 = vmatprep.mubr.f32.mxu0 0.0
    %8666 = vmatmul.mubr.f32.gmra.mrb[0].mxu0 %v8542
    %v8667 = vpop.f32.mrb[0].mxu0
    %v8668 = vadd.f32 %v8475, %v8667
    %v8669 = vpop.f32.mrb[0].mxu0
    %8670 = vmatprep.mubr.f32.mxu0 0.0
    %8671 = vmatmul.mubr.f32.gmra.mrb[0].mxu0 %v8545
    %v8672 = vpop.f32.mrb[0].mxu0
    %v8673 = vadd.f32 %v8480, %v8672
    %v8674 = vpop.f32.mrb[0].mxu0
    %8675 = vmatprep.mubr.f32.mxu0 0.0
    %8676 = vmatmul.mubr.f32.gmra.mrb[0].mxu0 %v8548
    %v8677 = vpop.f32.mrb[0].mxu0
    %v8678 = vadd.f32 %v8485, %v8677
    %v8679 = vpop.f32.mrb[0].mxu0
    %8680 = vmatprep.mubr.f32.mxu0 0.0
    %8681 = vmatmul.mubr.f32.gmra.mrb[0].mxu0 %v8551
    %v8682 = vpop.f32.mrb[0].mxu0
    %v8683 = vadd.f32 %v8490, %v8682
    %v8684 = vpop.f32.mrb[0].mxu0
    %8685 = vmatprep.mubr.f32.mxu0 0.0
    %8686 = vmatmul.mubr.f32.gmra.mrb[0].mxu0 %v8554
    %v8687 = vpop.f32.mrb[0].mxu0
    %v8688 = vadd.f32 %v8495, %v8687
    %v8689 = vpop.f32.mrb[0].mxu0
    %8690 = vmatprep.mubr.f32.mxu0 0.0
    %8691 = vmatmul.mubr.f32.gmra.mrb[0].mxu0 %v8557
    %v8692 = vpop.f32.mrb[0].mxu0
    %v8693 = vadd.f32 %v8500, %v8692
    %v8694 = vpop.f32.mrb[0].mxu0
    %8695 = vmatprep.mubr.f32.mxu0 0.0
    %8696 = vmatmul.mubr.f32.gmra.mrb[0].mxu0 %v8560
    %v8697 = vpop.f32.mrb[0].mxu0
    %v8698 = vadd.f32 %v8505, %v8697
    %v8699 = vpop.f32.mrb[0].mxu0
    %8700 = vmatprep.mubr.f32.mxu0 0.0
    %8701 = vmatmul.mubr.f32.gmra.mrb[0].mxu0 %v8563
    %v8702 = vpop.f32.mrb[0].mxu0
    %v8703 = vadd.f32 %v8510, %v8702
    %v8704 = vpop.f32.mrb[0].mxu0
    %8705 = vmatprep.mubr.f32.mxu0 0.0
    %8706 = vmatmul.mubr.f32.gmra.mrb[0].mxu0 %v8566
    %v8707 = vpop.f32.mrb[0].mxu0
    %v8708 = vadd.f32 %v8515, %v8707
    %v8709 = vpop.f32.mrb[0].mxu0
    %8710 = vmatprep.mubr.f32.mxu0 0.0
    %8711 = vmatmul.mubr.f32.gmra.mrb[0].mxu0 %v8569
    %v8712 = vpop.f32.mrb[0].mxu0
    %v8713 = vadd.f32 %v8520, %v8712
    %v8714 = vpop.f32.mrb[0].mxu0
    %8715 = vdwg.mxu0
    %v8716 = vld [vmem:[#allocation6 + $0x2] sm:$0xff]
    %v8717 = vld [vmem:[#allocation6 + $0xa] sm:$0xff]
    %v8718 = vld [vmem:[#allocation6 + $0x12] sm:$0xff]
    %v8719 = vld [vmem:[#allocation6 + $0x1a] sm:$0xff]
    %v8720 = vld [vmem:[#allocation6 + $0x22] sm:$0xff]
    %v8721 = vld [vmem:[#allocation6 + $0x2a] sm:$0xff]
    %v8722 = vld [vmem:[#allocation6 + $0x32] sm:$0xff]
    %v8723 = vld [vmem:[#allocation6 + $0x3a] sm:$0xff]
    %v8724 = vld [vmem:[#allocation6 + $0x42] sm:$0xff]
    %v8725 = vld [vmem:[#allocation6 + $0x4a] sm:$0xff]
    %v8726 = vld [vmem:[#allocation6 + $0x52] sm:$0xff]
    %v8727 = vld [vmem:[#allocation6 + $0x5a] sm:$0xff]
    %v8728 = vld [vmem:[#allocation6 + $0x62] sm:$0xff]
    %v8729 = vld [vmem:[#allocation6 + $0x6a] sm:$0xff]
    %v8730 = vld [vmem:[#allocation6 + $0x72] sm:$0xff]
    %v8731 = vld [vmem:[#allocation6 + $0x7a] sm:$0x3]
    %v8732 = vld [vmem:[%s5 + $0x40] sm:$0xff]
    %v8733 = vld [vmem:[%s5 + $0x48] sm:$0xff]
    %v8734 = vld [vmem:[%s5 + $0x50] sm:$0xff]
    %v8735 = vld [vmem:[%s5 + $0x58] sm:$0xff]
    %v8737 = vsel %vm3444, %v8716, 0
    %v8740 = vsel %vm3444, %v8717, 0
    %v8743 = vsel %vm3444, %v8718, 0
    %v8746 = vsel %vm3444, %v8719, 0
    %v8749 = vsel %vm3444, %v8720, 0
    %v8752 = vsel %vm3444, %v8721, 0
    %v8755 = vsel %vm3444, %v8722, 0
    %v8758 = vsel %vm3444, %v8723, 0
    %v8761 = vsel %vm3444, %v8724, 0
    %v8764 = vsel %vm3444, %v8725, 0
    %v8767 = vsel %vm3444, %v8726, 0
    %v8770 = vsel %vm3444, %v8727, 0
    %v8773 = vsel %vm3444, %v8728, 0
    %v8776 = vsel %vm3444, %v8729, 0
    %v8779 = vsel %vm3444, %v8730, 0
    %v8782 = vsel %vm3444, %v8731, 0
    %8784 = vmatprep.subr.mxu0 0.0
    %8785 = vmatpush1.msra.mxu0 %v8732
    %8786 = vmatprep.subr.mxu0 0.0
    %8787 = vmatpush1.msra.mxu0 %v8733
    %8788 = vmatprep.subr.mxu0 0.0
    %8789 = vmatpush1.msra.mxu0 %v8734
    %8790 = vmatprep.subr.mxu0 0.0
    %8791 = vmatpush1.msra.mxu0 %v8735
    %8792 = vmatprep.subr.mxu0 0.0
    %8793 = vmatpush1.msra.mxu0 0.0
    %8794 = vmatprep.subr.mxu0 0.0
    %8795 = vmatpush1.msra.mxu0 0.0
    %8796 = vmatprep.subr.mxu0 0.0
    %8797 = vmatpush1.msra.mxu0 0.0
    %8798 = vmatprep.subr.mxu0 0.0
    %8799 = vmatpush1.msra.mxu0 0.0
    %8800 = vmatprep.subr.mxu0 0.0
    %8801 = vmatpush1.msra.mxu0 0.0
    %8802 = vmatprep.subr.mxu0 0.0
    %8803 = vmatpush1.msra.mxu0 0.0
    %8804 = vmatprep.subr.mxu0 0.0
    %8805 = vmatpush1.msra.mxu0 0.0
    %8806 = vmatprep.subr.mxu0 0.0
    %8807 = vmatpush1.msra.mxu0 0.0
    %8808 = vmatprep.subr.mxu0 0.0
    %8809 = vmatpush1.msra.mxu0 0.0
    %8810 = vmatprep.subr.mxu0 0.0
    %8811 = vmatpush1.msra.mxu0 0.0
    %8812 = vmatprep.subr.mxu0 0.0
    %8813 = vmatpush1.msra.mxu0 0.0
    %8814 = vmatprep.subr.mxu0 0.0
    %8815 = vmatpush1.msra.mxu0 0.0
    %8816 = vmatprep.subr.mxu0 0.0
    %8817 = vmatpush1.msra.mxu0 0.0
    %8818 = vmatprep.subr.mxu0 0.0
    %8819 = vmatpush1.msra.mxu0 0.0
    %8820 = vmatprep.subr.mxu0 0.0
    %8821 = vmatpush1.msra.mxu0 0.0
    %8822 = vmatprep.subr.mxu0 0.0
    %8823 = vmatpush1.msra.mxu0 0.0
    %8824 = vmatprep.subr.mxu0 0.0
    %8825 = vmatpush1.msra.mxu0 0.0
    %8826 = vmatprep.subr.mxu0 0.0
    %8827 = vmatpush1.msra.mxu0 0.0
    %8828 = vmatprep.subr.mxu0 0.0
    %8829 = vmatpush1.msra.mxu0 0.0
    %8830 = vmatprep.subr.mxu0 0.0
    %8831 = vmatpush1.msra.mxu0 0.0
    %8832 = vmatprep.subr.mxu0 0.0
    %8833 = vmatpush1.msra.mxu0 0.0
    %8834 = vmatprep.subr.mxu0 0.0
    %8835 = vmatpush1.msra.mxu0 0.0
    %8836 = vmatprep.subr.mxu0 0.0
    %8837 = vmatpush1.msra.mxu0 0.0
    %8838 = vmatprep.subr.mxu0 0.0
    %8839 = vmatpush1.msra.mxu0 0.0
    %8840 = vmatprep.subr.mxu0 0.0
    %8841 = vmatpush1.msra.mxu0 0.0
    %8842 = vmatprep.subr.mxu0 0.0
    %8843 = vmatpush1.msra.mxu0 0.0
    %8844 = vmatprep.subr.mxu0 0.0
    %8845 = vmatpush1.msra.mxu0 0.0
    %8846 = vmatprep.subr.mxu0 0.0
    %8847 = vmatpush1.msra.mxu0 0.0
    %8848 = vmatprep.mubr.f32.mxu0 0.0
    %8849 = vmatmul.mubr.f32.gmra.mrb[0].mxu0 %v8737
    %v8850 = vpop.f32.mrb[0].mxu0
    %v8851 = vadd.f32 0.0, %v8850
    %v8852 = vpop.f32.mrb[0].mxu0
    %8853 = vmatprep.mubr.f32.mxu0 0.0
    %8854 = vmatmul.mubr.f32.gmra.mrb[0].mxu0 %v8740
    %v8855 = vpop.f32.mrb[0].mxu0
    %v8856 = vadd.f32 0.0, %v8855
    %v8857 = vpop.f32.mrb[0].mxu0
    %8858 = vmatprep.mubr.f32.mxu0 0.0
    %8859 = vmatmul.mubr.f32.gmra.mrb[0].mxu0 %v8743
    %v8860 = vpop.f32.mrb[0].mxu0
    %v8861 = vadd.f32 0.0, %v8860
    %v8862 = vpop.f32.mrb[0].mxu0
    %8863 = vmatprep.mubr.f32.mxu0 0.0
    %8864 = vmatmul.mubr.f32.gmra.mrb[0].mxu0 %v8746
    %v8865 = vpop.f32.mrb[0].mxu0
    %v8866 = vadd.f32 0.0, %v8865
    %v8867 = vpop.f32.mrb[0].mxu0
    %8868 = vmatprep.mubr.f32.mxu0 0.0
    %8869 = vmatmul.mubr.f32.gmra.mrb[0].mxu0 %v8749
    %v8870 = vpop.f32.mrb[0].mxu0
    %v8871 = vadd.f32 0.0, %v8870
    %v8872 = vpop.f32.mrb[0].mxu0
    %8873 = vmatprep.mubr.f32.mxu0 0.0
    %8874 = vmatmul.mubr.f32.gmra.mrb[0].mxu0 %v8752
    %v8875 = vpop.f32.mrb[0].mxu0
    %v8876 = vadd.f32 0.0, %v8875
    %v8877 = vpop.f32.mrb[0].mxu0
    %8878 = vmatprep.mubr.f32.mxu0 0.0
    %8879 = vmatmul.mubr.f32.gmra.mrb[0].mxu0 %v8755
    %v8880 = vpop.f32.mrb[0].mxu0
    %v8881 = vadd.f32 0.0, %v8880
    %v8882 = vpop.f32.mrb[0].mxu0
    %8883 = vmatprep.mubr.f32.mxu0 0.0
    %8884 = vmatmul.mubr.f32.gmra.mrb[0].mxu0 %v8758
    %v8885 = vpop.f32.mrb[0].mxu0
    %v8886 = vadd.f32 0.0, %v8885
    %v8887 = vpop.f32.mrb[0].mxu0
    %8888 = vmatprep.mubr.f32.mxu0 0.0
    %8889 = vmatmul.mubr.f32.gmra.mrb[0].mxu0 %v8761
    %v8890 = vpop.f32.mrb[0].mxu0
    %v8891 = vadd.f32 0.0, %v8890
    %v8892 = vpop.f32.mrb[0].mxu0
    %8893 = vmatprep.mubr.f32.mxu0 0.0
    %8894 = vmatmul.mubr.f32.gmra.mrb[0].mxu0 %v8764
    %v8895 = vpop.f32.mrb[0].mxu0
    %v8896 = vadd.f32 0.0, %v8895
    %v8897 = vpop.f32.mrb[0].mxu0
    %8898 = vmatprep.mubr.f32.mxu0 0.0
    %8899 = vmatmul.mubr.f32.gmra.mrb[0].mxu0 %v8767
    %v8900 = vpop.f32.mrb[0].mxu0
    %v8901 = vadd.f32 0.0, %v8900
    %v8902 = vpop.f32.mrb[0].mxu0
    %8903 = vmatprep.mubr.f32.mxu0 0.0
    %8904 = vmatmul.mubr.f32.gmra.mrb[0].mxu0 %v8770
    %v8905 = vpop.f32.mrb[0].mxu0
    %v8906 = vadd.f32 0.0, %v8905
    %v8907 = vpop.f32.mrb[0].mxu0
    %8908 = vmatprep.mubr.f32.mxu0 0.0
    %8909 = vmatmul.mubr.f32.gmra.mrb[0].mxu0 %v8773
    %v8910 = vpop.f32.mrb[0].mxu0
    %v8911 = vadd.f32 0.0, %v8910
    %v8912 = vpop.f32.mrb[0].mxu0
    %8913 = vmatprep.mubr.f32.mxu0 0.0
    %8914 = vmatmul.mubr.f32.gmra.mrb[0].mxu0 %v8776
    %v8915 = vpop.f32.mrb[0].mxu0
    %v8916 = vadd.f32 0.0, %v8915
    %v8917 = vpop.f32.mrb[0].mxu0
    %8918 = vmatprep.mubr.f32.mxu0 0.0
    %8919 = vmatmul.mubr.f32.gmra.mrb[0].mxu0 %v8779
    %v8920 = vpop.f32.mrb[0].mxu0
    %v8921 = vadd.f32 0.0, %v8920
    %v8922 = vpop.f32.mrb[0].mxu0
    %8923 = vmatprep.mubr.f32.mxu0 0.0
    %8924 = vmatmul.mubr.f32.gmra.mrb[0].mxu0 %v8782
    %v8925 = vpop.f32.mrb[0].mxu0
    %v8926 = vadd.f32 0.0, %v8925
    %v8927 = vpop.f32.mrb[0].mxu0
    %8928 = vdwg.mxu0
    %v8929 = vadd.f32 %v8638, %v8851
    %v8930 = vadd.f32 %v8643, %v8856
    %v8931 = vadd.f32 %v8648, %v8861
    %v8932 = vadd.f32 %v8653, %v8866
    %v8933 = vadd.f32 %v8658, %v8871
    %v8934 = vadd.f32 %v8663, %v8876
    %v8935 = vadd.f32 %v8668, %v8881
    %v8936 = vadd.f32 %v8673, %v8886
    %v8937 = vadd.f32 %v8678, %v8891
    %v8938 = vadd.f32 %v8683, %v8896
    %v8939 = vadd.f32 %v8688, %v8901
    %v8940 = vadd.f32 %v8693, %v8906
    %v8941 = vadd.f32 %v8698, %v8911
    %v8942 = vadd.f32 %v8703, %v8916
    %v8943 = vadd.f32 %v8708, %v8921
    %v8944 = vadd.f32 %v8713, %v8926
    %v8945 = vld [vmem:[%s6] sm:$0x1]
    %v8947 = vlaneseq
    %v8948 = vshrl.u32 %v8947, 7
    %v8949 = vsub.s32 0, %v8948
    %v8950 = vrot.slane %v8945, %v8949
    %v8952 = vadd.f32 %v8929, %v8950
    %v8953 = vadd.f32 %v8930, %v8950
    %v8954 = vadd.f32 %v8931, %v8950
    %v8955 = vadd.f32 %v8932, %v8950
    %v8956 = vadd.f32 %v8933, %v8950
    %v8957 = vadd.f32 %v8934, %v8950
    %v8958 = vadd.f32 %v8935, %v8950
    %v8959 = vadd.f32 %v8936, %v8950
    %v8960 = vadd.f32 %v8937, %v8950
    %v8961 = vadd.f32 %v8938, %v8950
    %v8962 = vadd.f32 %v8939, %v8950
    %v8963 = vadd.f32 %v8940, %v8950
    %v8964 = vadd.f32 %v8941, %v8950
    %v8965 = vadd.f32 %v8942, %v8950
    %v8966 = vadd.f32 %v8943, %v8950
    %v8967 = vadd.f32 %v8944, %v8950
    %v8968 = vsel %vm3444, %v8952, 0.0
    %v8969 = vsel %vm3444, %v8953, 0.0
    %v8970 = vadd.f32 %v8968, %v8969
    %v8971 = vsel %vm3444, %v8954, 0.0
    %v8972 = vadd.f32 %v8970, %v8971
    %v8973 = vsel %vm3444, %v8955, 0.0
    %v8974 = vadd.f32 %v8972, %v8973
    %v8975 = vsel %vm3444, %v8956, 0.0
    %v8976 = vadd.f32 %v8974, %v8975
    %v8977 = vsel %vm3444, %v8957, 0.0
    %v8978 = vadd.f32 %v8976, %v8977
    %v8979 = vsel %vm3444, %v8958, 0.0
    %v8980 = vadd.f32 %v8978, %v8979
    %v8981 = vsel %vm3444, %v8959, 0.0
    %v8982 = vadd.f32 %v8980, %v8981
    %v8983 = vsel %vm3444, %v8960, 0.0
    %v8984 = vadd.f32 %v8982, %v8983
    %v8985 = vsel %vm3444, %v8961, 0.0
    %v8986 = vadd.f32 %v8984, %v8985
    %v8987 = vsel %vm3444, %v8962, 0.0
    %v8988 = vadd.f32 %v8986, %v8987
    %v8989 = vsel %vm3444, %v8963, 0.0
    %v8990 = vadd.f32 %v8988, %v8989
    %v8991 = vsel %vm3444, %v8964, 0.0
    %v8992 = vadd.f32 %v8990, %v8991
    %v8993 = vsel %vm3444, %v8965, 0.0
    %v8994 = vadd.f32 %v8992, %v8993
    %v8995 = vsel %vm3444, %v8966, 0.0
    %v8996 = vadd.f32 %v8994, %v8995
    %vm8997 = vcmask 254976
    %v8998 = vsel %vm8997, %v8967, 0.0
    %v8999 = vadd.f32 %v8996, %v8998
    %v9000 = vrot.slane %v8999, 4
    %v9001 = vadd.f32 %v8999, %v9000
    %v9002 = vrot.slane %v9001, 2
    %v9003 = vadd.f32 %v9001, %v9002
    %v9004 = vrot.slane %v9003, 1
    %v9005 = vadd.f32 %v9003, %v9004
    %v9006 = vadd.f32 %v9005, 0.0
    %v9007 = vmul.f32 %v8952, %v8952
    %v9008 = vmul.f32 %v8953, %v8953
    %v9009 = vmul.f32 %v8954, %v8954
    %v9010 = vmul.f32 %v8955, %v8955
    %v9011 = vmul.f32 %v8956, %v8956
    %v9012 = vmul.f32 %v8957, %v8957
    %v9013 = vmul.f32 %v8958, %v8958
    %v9014 = vmul.f32 %v8959, %v8959
    %v9015 = vmul.f32 %v8960, %v8960
    %v9016 = vmul.f32 %v8961, %v8961
    %v9017 = vmul.f32 %v8962, %v8962
    %v9018 = vmul.f32 %v8963, %v8963
    %v9019 = vmul.f32 %v8964, %v8964
    %v9020 = vmul.f32 %v8965, %v8965
    %v9021 = vmul.f32 %v8966, %v8966
    %v9022 = vmul.f32 %v8967, %v8967
    %v9023 = vsel %vm3444, %v9007, 0.0
    %v9024 = vsel %vm3444, %v9008, 0.0
    %v9025 = vadd.f32 %v9023, %v9024
    %v9026 = vsel %vm3444, %v9009, 0.0
    %v9027 = vadd.f32 %v9025, %v9026
    %v9028 = vsel %vm3444, %v9010, 0.0
    %v9029 = vadd.f32 %v9027, %v9028
    %v9030 = vsel %vm3444, %v9011, 0.0
    %v9031 = vadd.f32 %v9029, %v9030
    %v9032 = vsel %vm3444, %v9012, 0.0
    %v9033 = vadd.f32 %v9031, %v9032
    %v9034 = vsel %vm3444, %v9013, 0.0
    %v9035 = vadd.f32 %v9033, %v9034
    %v9036 = vsel %vm3444, %v9014, 0.0
    %v9037 = vadd.f32 %v9035, %v9036
    %v9038 = vsel %vm3444, %v9015, 0.0
    %v9039 = vadd.f32 %v9037, %v9038
    %v9040 = vsel %vm3444, %v9016, 0.0
    %v9041 = vadd.f32 %v9039, %v9040
    %v9042 = vsel %vm3444, %v9017, 0.0
    %v9043 = vadd.f32 %v9041, %v9042
    %v9044 = vsel %vm3444, %v9018, 0.0
    %v9045 = vadd.f32 %v9043, %v9044
    %v9046 = vsel %vm3444, %v9019, 0.0
    %v9047 = vadd.f32 %v9045, %v9046
    %v9048 = vsel %vm3444, %v9020, 0.0
    %v9049 = vadd.f32 %v9047, %v9048
    %v9050 = vsel %vm3444, %v9021, 0.0
    %v9051 = vadd.f32 %v9049, %v9050
    %v9052 = vsel %vm8997, %v9022, 0.0
    %v9053 = vadd.f32 %v9051, %v9052
    %v9054 = vrot.slane %v9053, 4
    %v9055 = vadd.f32 %v9053, %v9054
    %v9056 = vrot.slane %v9055, 2
    %v9057 = vadd.f32 %v9055, %v9056
    %v9058 = vrot.slane %v9057, 1
    %v9059 = vadd.f32 %v9057, %v9058
    %v9060 = vadd.f32 %v9059, 0.0
    %9061 = vst.msk [vmem:[#allocation3] sm:$0xff] %vm3444, %v8952
    %9062 = vst.msk [vmem:[#allocation3 + $0x8] sm:$0xff] %vm3444, %v8953
    %9063 = vst.msk [vmem:[#allocation3 + $0x10] sm:$0xff] %vm3444, %v8954
    %9064 = vst.msk [vmem:[#allocation3 + $0x18] sm:$0xff] %vm3444, %v8955
    %9065 = vst.msk [vmem:[#allocation3 + $0x20] sm:$0xff] %vm3444, %v8956
    %9066 = vst.msk [vmem:[#allocation3 + $0x28] sm:$0xff] %vm3444, %v8957
    %9067 = vst.msk [vmem:[#allocation3 + $0x30] sm:$0xff] %vm3444, %v8958
    %9068 = vst.msk [vmem:[#allocation3 + $0x38] sm:$0xff] %vm3444, %v8959
    %9069 = vst.msk [vmem:[#allocation3 + $0x40] sm:$0xff] %vm3444, %v8960
    %9070 = vst.msk [vmem:[#allocation3 + $0x48] sm:$0xff] %vm3444, %v8961
    %9071 = vst.msk [vmem:[#allocation3 + $0x50] sm:$0xff] %vm3444, %v8962
    %9072 = vst.msk [vmem:[#allocation3 + $0x58] sm:$0xff] %vm3444, %v8963
    %9073 = vst.msk [vmem:[#allocation3 + $0x60] sm:$0xff] %vm3444, %v8964
    %9074 = vst.msk [vmem:[#allocation3 + $0x68] sm:$0xff] %vm3444, %v8965
    %9075 = vst.msk [vmem:[#allocation3 + $0x70] sm:$0xff] %vm3444, %v8966
    %9076 = vst.msk [vmem:[#allocation3 + $0x78] sm:$0x3] %vm8997, %v8967
    %v9077 = vld [vmem:[%s8273] sm:$0xff]
    %v9078 = vld [vmem:[%s8273 + $0x8] sm:$0xff]
    %v9079 = vld [vmem:[%s8273 + $0x10] sm:$0xff]
    %v9080 = vld [vmem:[%s8273 + $0x18] sm:$0xff]
    %v9081 = vld [vmem:[%s8273 + $0x20] sm:$0xff]
    %v9082 = vld [vmem:[%s8273 + $0x28] sm:$0xff]
    %v9083 = vld [vmem:[%s8273 + $0x30] sm:$0xff]
    %v9084 = vld [vmem:[%s8273 + $0x38] sm:$0xff]
    %v9085 = vld [vmem:[%s8273 + $0x40] sm:$0xff]
    %v9086 = vld [vmem:[%s8273 + $0x48] sm:$0xff]
    %v9087 = vld [vmem:[%s8273 + $0x50] sm:$0xff]
    %v9088 = vld [vmem:[%s8273 + $0x58] sm:$0xff]
    %v9089 = vld [vmem:[%s8273 + $0x60] sm:$0xff]
    %v9090 = vld [vmem:[%s8273 + $0x68] sm:$0xff]
    %v9091 = vld [vmem:[%s8273 + $0x70] sm:$0xff]
    %v9092 = vld [vmem:[%s8273 + $0x78] sm:$0x3]
    %v9093 = vld [vmem:[%s5] sm:$0xff]
    %v9094 = vld [vmem:[%s5 + $0x8] sm:$0xff]
    %v9095 = vld [vmem:[%s5 + $0x10] sm:$0xff]
    %v9096 = vld [vmem:[%s5 + $0x18] sm:$0xff]
    %v9097 = vld [vmem:[%s8273 + $0x1] sm:$0xff]
    %v9098 = vld [vmem:[%s8273 + $0x9] sm:$0xff]
    %v9099 = vld [vmem:[%s8273 + $0x11] sm:$0xff]
    %v9100 = vld [vmem:[%s8273 + $0x19] sm:$0xff]
    %v9101 = vld [vmem:[%s8273 + $0x21] sm:$0xff]
    %v9102 = vld [vmem:[%s8273 + $0x29] sm:$0xff]
    %v9103 = vld [vmem:[%s8273 + $0x31] sm:$0xff]
    %v9104 = vld [vmem:[%s8273 + $0x39] sm:$0xff]
    %v9105 = vld [vmem:[%s8273 + $0x41] sm:$0xff]
    %v9106 = vld [vmem:[%s8273 + $0x49] sm:$0xff]
    %v9107 = vld [vmem:[%s8273 + $0x51] sm:$0xff]
    %v9108 = vld [vmem:[%s8273 + $0x59] sm:$0xff]
    %v9109 = vld [vmem:[%s8273 + $0x61] sm:$0xff]
    %v9110 = vld [vmem:[%s8273 + $0x69] sm:$0xff]
    %v9111 = vld [vmem:[%s8273 + $0x71] sm:$0xff]
    %v9112 = vld [vmem:[%s8273 + $0x79] sm:$0x3]
    %v9113 = vld [vmem:[%s5 + $0x20] sm:$0xff]
    %v9114 = vld [vmem:[%s5 + $0x28] sm:$0xff]
    %v9115 = vld [vmem:[%s5 + $0x30] sm:$0xff]
    %v9116 = vld [vmem:[%s5 + $0x38] sm:$0xff]
    %v9118 = vsel %vm3444, %v9097, 0
    %v9121 = vsel %vm3444, %v9098, 0
    %v9124 = vsel %vm3444, %v9099, 0
    %v9127 = vsel %vm3444, %v9100, 0
    %v9130 = vsel %vm3444, %v9101, 0
    %v9133 = vsel %vm3444, %v9102, 0
    %v9136 = vsel %vm3444, %v9103, 0
    %v9139 = vsel %vm3444, %v9104, 0
    %v9142 = vsel %vm3444, %v9105, 0
    %v9145 = vsel %vm3444, %v9106, 0
    %v9148 = vsel %vm3444, %v9107, 0
    %v9151 = vsel %vm3444, %v9108, 0
    %v9154 = vsel %vm3444, %v9109, 0
    %v9157 = vsel %vm3444, %v9110, 0
    %v9160 = vsel %vm3444, %v9111, 0
    %v9163 = vsel %vm3444, %v9112, 0
    %9165 = vmatprep.subr.mxu0 0.0
    %9166 = vmatpush1.msra.mxu0 %v9113
    %9167 = vmatprep.subr.mxu0 0.0
    %9168 = vmatpush1.msra.mxu0 %v9114
    %9169 = vmatprep.subr.mxu0 0.0
    %9170 = vmatpush1.msra.mxu0 %v9115
    %9171 = vmatprep.subr.mxu0 0.0
    %9172 = vmatpush1.msra.mxu0 %v9116
    %9173 = vmatprep.subr.mxu0 0.0
    %9174 = vmatpush1.msra.mxu0 0.0
    %9175 = vmatprep.subr.mxu0 0.0
    %9176 = vmatpush1.msra.mxu0 0.0
    %9177 = vmatprep.subr.mxu0 0.0
    %9178 = vmatpush1.msra.mxu0 0.0
    %9179 = vmatprep.subr.mxu0 0.0
    %9180 = vmatpush1.msra.mxu0 0.0
    %9181 = vmatprep.subr.mxu0 0.0
    %9182 = vmatpush1.msra.mxu0 0.0
    %9183 = vmatprep.subr.mxu0 0.0
    %9184 = vmatpush1.msra.mxu0 0.0
    %9185 = vmatprep.subr.mxu0 0.0
    %9186 = vmatpush1.msra.mxu0 0.0
    %9187 = vmatprep.subr.mxu0 0.0
    %9188 = vmatpush1.msra.mxu0 0.0
    %9189 = vmatprep.subr.mxu0 0.0
    %9190 = vmatpush1.msra.mxu0 0.0
    %9191 = vmatprep.subr.mxu0 0.0
    %9192 = vmatpush1.msra.mxu0 0.0
    %9193 = vmatprep.subr.mxu0 0.0
    %9194 = vmatpush1.msra.mxu0 0.0
    %9195 = vmatprep.subr.mxu0 0.0
    %9196 = vmatpush1.msra.mxu0 0.0
    %9197 = vmatprep.subr.mxu0 0.0
    %9198 = vmatpush1.msra.mxu0 0.0
    %9199 = vmatprep.subr.mxu0 0.0
    %9200 = vmatpush1.msra.mxu0 0.0
    %9201 = vmatprep.subr.mxu0 0.0
    %9202 = vmatpush1.msra.mxu0 0.0
    %9203 = vmatprep.subr.mxu0 0.0
    %9204 = vmatpush1.msra.mxu0 0.0
    %9205 = vmatprep.subr.mxu0 0.0
    %9206 = vmatpush1.msra.mxu0 0.0
    %9207 = vmatprep.subr.mxu0 0.0
    %9208 = vmatpush1.msra.mxu0 0.0
    %9209 = vmatprep.subr.mxu0 0.0
    %9210 = vmatpush1.msra.mxu0 0.0
    %9211 = vmatprep.subr.mxu0 0.0
    %9212 = vmatpush1.msra.mxu0 0.0
    %9213 = vmatprep.subr.mxu0 0.0
    %9214 = vmatpush1.msra.mxu0 0.0
    %9215 = vmatprep.subr.mxu0 0.0
    %9216 = vmatpush1.msra.mxu0 0.0
    %9217 = vmatprep.subr.mxu0 0.0
    %9218 = vmatpush1.msra.mxu0 0.0
    %9219 = vmatprep.subr.mxu0 0.0
    %9220 = vmatpush1.msra.mxu0 0.0
    %9221 = vmatprep.subr.mxu0 0.0
    %9222 = vmatpush1.msra.mxu0 0.0
    %9223 = vmatprep.subr.mxu0 0.0
    %9224 = vmatpush1.msra.mxu0 0.0
    %9225 = vmatprep.subr.mxu0 0.0
    %9226 = vmatpush1.msra.mxu0 0.0
    %9227 = vmatprep.subr.mxu0 0.0
    %9228 = vmatpush1.msra.mxu0 0.0
    %9229 = vmatprep.mubr.f32.mxu0 0.0
    %9230 = vmatmul.mubr.f32.gmra.mrb[0].mxu0 %v9118
    %v9231 = vpop.f32.mrb[0].mxu0
    %v9232 = vadd.f32 0.0, %v9231
    %v9233 = vpop.f32.mrb[0].mxu0
    %9234 = vmatprep.mubr.f32.mxu0 0.0
    %9235 = vmatmul.mubr.f32.gmra.mrb[0].mxu0 %v9121
    %v9236 = vpop.f32.mrb[0].mxu0
    %v9237 = vadd.f32 0.0, %v9236
    %v9238 = vpop.f32.mrb[0].mxu0
    %9239 = vmatprep.mubr.f32.mxu0 0.0
    %9240 = vmatmul.mubr.f32.gmra.mrb[0].mxu0 %v9124
    %v9241 = vpop.f32.mrb[0].mxu0
    %v9242 = vadd.f32 0.0, %v9241
    %v9243 = vpop.f32.mrb[0].mxu0
    %9244 = vmatprep.mubr.f32.mxu0 0.0
    %9245 = vmatmul.mubr.f32.gmra.mrb[0].mxu0 %v9127
    %v9246 = vpop.f32.mrb[0].mxu0
    %v9247 = vadd.f32 0.0, %v9246
    %v9248 = vpop.f32.mrb[0].mxu0
    %9249 = vmatprep.mubr.f32.mxu0 0.0
    %9250 = vmatmul.mubr.f32.gmra.mrb[0].mxu0 %v9130
    %v9251 = vpop.f32.mrb[0].mxu0
    %v9252 = vadd.f32 0.0, %v9251
    %v9253 = vpop.f32.mrb[0].mxu0
    %9254 = vmatprep.mubr.f32.mxu0 0.0
    %9255 = vmatmul.mubr.f32.gmra.mrb[0].mxu0 %v9133
    %v9256 = vpop.f32.mrb[0].mxu0
    %v9257 = vadd.f32 0.0, %v9256
    %v9258 = vpop.f32.mrb[0].mxu0
    %9259 = vmatprep.mubr.f32.mxu0 0.0
    %9260 = vmatmul.mubr.f32.gmra.mrb[0].mxu0 %v9136
    %v9261 = vpop.f32.mrb[0].mxu0
    %v9262 = vadd.f32 0.0, %v9261
    %v9263 = vpop.f32.mrb[0].mxu0
    %9264 = vmatprep.mubr.f32.mxu0 0.0
    %9265 = vmatmul.mubr.f32.gmra.mrb[0].mxu0 %v9139
    %v9266 = vpop.f32.mrb[0].mxu0
    %v9267 = vadd.f32 0.0, %v9266
    %v9268 = vpop.f32.mrb[0].mxu0
    %9269 = vmatprep.mubr.f32.mxu0 0.0
    %9270 = vmatmul.mubr.f32.gmra.mrb[0].mxu0 %v9142
    %v9271 = vpop.f32.mrb[0].mxu0
    %v9272 = vadd.f32 0.0, %v9271
    %v9273 = vpop.f32.mrb[0].mxu0
    %9274 = vmatprep.mubr.f32.mxu0 0.0
    %9275 = vmatmul.mubr.f32.gmra.mrb[0].mxu0 %v9145
    %v9276 = vpop.f32.mrb[0].mxu0
    %v9277 = vadd.f32 0.0, %v9276
    %v9278 = vpop.f32.mrb[0].mxu0
    %9279 = vmatprep.mubr.f32.mxu0 0.0
    %9280 = vmatmul.mubr.f32.gmra.mrb[0].mxu0 %v9148
    %v9281 = vpop.f32.mrb[0].mxu0
    %v9282 = vadd.f32 0.0, %v9281
    %v9283 = vpop.f32.mrb[0].mxu0
    %9284 = vmatprep.mubr.f32.mxu0 0.0
    %9285 = vmatmul.mubr.f32.gmra.mrb[0].mxu0 %v9151
    %v9286 = vpop.f32.mrb[0].mxu0
    %v9287 = vadd.f32 0.0, %v9286
    %v9288 = vpop.f32.mrb[0].mxu0
    %9289 = vmatprep.mubr.f32.mxu0 0.0
    %9290 = vmatmul.mubr.f32.gmra.mrb[0].mxu0 %v9154
    %v9291 = vpop.f32.mrb[0].mxu0
    %v9292 = vadd.f32 0.0, %v9291
    %v9293 = vpop.f32.mrb[0].mxu0
    %9294 = vmatprep.mubr.f32.mxu0 0.0
    %9295 = vmatmul.mubr.f32.gmra.mrb[0].mxu0 %v9157
    %v9296 = vpop.f32.mrb[0].mxu0
    %v9297 = vadd.f32 0.0, %v9296
    %v9298 = vpop.f32.mrb[0].mxu0
    %9299 = vmatprep.mubr.f32.mxu0 0.0
    %9300 = vmatmul.mubr.f32.gmra.mrb[0].mxu0 %v9160
    %v9301 = vpop.f32.mrb[0].mxu0
    %v9302 = vadd.f32 0.0, %v9301
    %v9303 = vpop.f32.mrb[0].mxu0
    %9304 = vmatprep.mubr.f32.mxu0 0.0
    %9305 = vmatmul.mubr.f32.gmra.mrb[0].mxu0 %v9163
    %v9306 = vpop.f32.mrb[0].mxu0
    %v9307 = vadd.f32 0.0, %v9306
    %v9308 = vpop.f32.mrb[0].mxu0
    %9309 = vdwg.mxu0
    %v9311 = vsel %vm3444, %v9077, 0
    %v9314 = vsel %vm3444, %v9078, 0
    %v9317 = vsel %vm3444, %v9079, 0
    %v9320 = vsel %vm3444, %v9080, 0
    %v9323 = vsel %vm3444, %v9081, 0
    %v9326 = vsel %vm3444, %v9082, 0
    %v9329 = vsel %vm3444, %v9083, 0
    %v9332 = vsel %vm3444, %v9084, 0
    %v9335 = vsel %vm3444, %v9085, 0
    %v9338 = vsel %vm3444, %v9086, 0
    %v9341 = vsel %vm3444, %v9087, 0
    %v9344 = vsel %vm3444, %v9088, 0
    %v9347 = vsel %vm3444, %v9089, 0
    %v9350 = vsel %vm3444, %v9090, 0
    %v9353 = vsel %vm3444, %v9091, 0
    %v9356 = vsel %vm3444, %v9092, 0
    %9358 = vmatprep.subr.mxu0 0.0
    %9359 = vmatpush1.msra.mxu0 %v9093
    %9360 = vmatprep.subr.mxu0 0.0
    %9361 = vmatpush1.msra.mxu0 %v9094
    %9362 = vmatprep.subr.mxu0 0.0
    %9363 = vmatpush1.msra.mxu0 %v9095
    %9364 = vmatprep.subr.mxu0 0.0
    %9365 = vmatpush1.msra.mxu0 %v9096
    %9366 = vmatprep.subr.mxu0 0.0
    %9367 = vmatpush1.msra.mxu0 0.0
    %9368 = vmatprep.subr.mxu0 0.0
    %9369 = vmatpush1.msra.mxu0 0.0
    %9370 = vmatprep.subr.mxu0 0.0
    %9371 = vmatpush1.msra.mxu0 0.0
    %9372 = vmatprep.subr.mxu0 0.0
    %9373 = vmatpush1.msra.mxu0 0.0
    %9374 = vmatprep.subr.mxu0 0.0
    %9375 = vmatpush1.msra.mxu0 0.0
    %9376 = vmatprep.subr.mxu0 0.0
    %9377 = vmatpush1.msra.mxu0 0.0
    %9378 = vmatprep.subr.mxu0 0.0
    %9379 = vmatpush1.msra.mxu0 0.0
    %9380 = vmatprep.subr.mxu0 0.0
    %9381 = vmatpush1.msra.mxu0 0.0
    %9382 = vmatprep.subr.mxu0 0.0
    %9383 = vmatpush1.msra.mxu0 0.0
    %9384 = vmatprep.subr.mxu0 0.0
    %9385 = vmatpush1.msra.mxu0 0.0
    %9386 = vmatprep.subr.mxu0 0.0
    %9387 = vmatpush1.msra.mxu0 0.0
    %9388 = vmatprep.subr.mxu0 0.0
    %9389 = vmatpush1.msra.mxu0 0.0
    %9390 = vmatprep.subr.mxu0 0.0
    %9391 = vmatpush1.msra.mxu0 0.0
    %9392 = vmatprep.subr.mxu0 0.0
    %9393 = vmatpush1.msra.mxu0 0.0
    %9394 = vmatprep.subr.mxu0 0.0
    %9395 = vmatpush1.msra.mxu0 0.0
    %9396 = vmatprep.subr.mxu0 0.0
    %9397 = vmatpush1.msra.mxu0 0.0
    %9398 = vmatprep.subr.mxu0 0.0
    %9399 = vmatpush1.msra.mxu0 0.0
    %9400 = vmatprep.subr.mxu0 0.0
    %9401 = vmatpush1.msra.mxu0 0.0
    %9402 = vmatprep.subr.mxu0 0.0
    %9403 = vmatpush1.msra.mxu0 0.0
    %9404 = vmatprep.subr.mxu0 0.0
    %9405 = vmatpush1.msra.mxu0 0.0
    %9406 = vmatprep.subr.mxu0 0.0
    %9407 = vmatpush1.msra.mxu0 0.0
    %9408 = vmatprep.subr.mxu0 0.0
    %9409 = vmatpush1.msra.mxu0 0.0
    %9410 = vmatprep.subr.mxu0 0.0
    %9411 = vmatpush1.msra.mxu0 0.0
    %9412 = vmatprep.subr.mxu0 0.0
    %9413 = vmatpush1.msra.mxu0 0.0
    %9414 = vmatprep.subr.mxu0 0.0
    %9415 = vmatpush1.msra.mxu0 0.0
    %9416 = vmatprep.subr.mxu0 0.0
    %9417 = vmatpush1.msra.mxu0 0.0
    %9418 = vmatprep.subr.mxu0 0.0
    %9419 = vmatpush1.msra.mxu0 0.0
    %9420 = vmatprep.subr.mxu0 0.0
    %9421 = vmatpush1.msra.mxu0 0.0
    %9422 = vmatprep.mubr.f32.mxu0 0.0
    %9423 = vmatmul.mubr.f32.gmra.mrb[0].mxu0 %v9311
    %v9424 = vpop.f32.mrb[0].mxu0
    %v9425 = vadd.f32 %v9232, %v9424
    %v9426 = vpop.f32.mrb[0].mxu0
    %9427 = vmatprep.mubr.f32.mxu0 0.0
    %9428 = vmatmul.mubr.f32.gmra.mrb[0].mxu0 %v9314
    %v9429 = vpop.f32.mrb[0].mxu0
    %v9430 = vadd.f32 %v9237, %v9429
    %v9431 = vpop.f32.mrb[0].mxu0
    %9432 = vmatprep.mubr.f32.mxu0 0.0
    %9433 = vmatmul.mubr.f32.gmra.mrb[0].mxu0 %v9317
    %v9434 = vpop.f32.mrb[0].mxu0
    %v9435 = vadd.f32 %v9242, %v9434
    %v9436 = vpop.f32.mrb[0].mxu0
    %9437 = vmatprep.mubr.f32.mxu0 0.0
    %9438 = vmatmul.mubr.f32.gmra.mrb[0].mxu0 %v9320
    %v9439 = vpop.f32.mrb[0].mxu0
    %v9440 = vadd.f32 %v9247, %v9439
    %v9441 = vpop.f32.mrb[0].mxu0
    %9442 = vmatprep.mubr.f32.mxu0 0.0
    %9443 = vmatmul.mubr.f32.gmra.mrb[0].mxu0 %v9323
    %v9444 = vpop.f32.mrb[0].mxu0
    %v9445 = vadd.f32 %v9252, %v9444
    %v9446 = vpop.f32.mrb[0].mxu0
    %9447 = vmatprep.mubr.f32.mxu0 0.0
    %9448 = vmatmul.mubr.f32.gmra.mrb[0].mxu0 %v9326
    %v9449 = vpop.f32.mrb[0].mxu0
    %v9450 = vadd.f32 %v9257, %v9449
    %v9451 = vpop.f32.mrb[0].mxu0
    %9452 = vmatprep.mubr.f32.mxu0 0.0
    %9453 = vmatmul.mubr.f32.gmra.mrb[0].mxu0 %v9329
    %v9454 = vpop.f32.mrb[0].mxu0
    %v9455 = vadd.f32 %v9262, %v9454
    %v9456 = vpop.f32.mrb[0].mxu0
    %9457 = vmatprep.mubr.f32.mxu0 0.0
    %9458 = vmatmul.mubr.f32.gmra.mrb[0].mxu0 %v9332
    %v9459 = vpop.f32.mrb[0].mxu0
    %v9460 = vadd.f32 %v9267, %v9459
    %v9461 = vpop.f32.mrb[0].mxu0
    %9462 = vmatprep.mubr.f32.mxu0 0.0
    %9463 = vmatmul.mubr.f32.gmra.mrb[0].mxu0 %v9335
    %v9464 = vpop.f32.mrb[0].mxu0
    %v9465 = vadd.f32 %v9272, %v9464
    %v9466 = vpop.f32.mrb[0].mxu0
    %9467 = vmatprep.mubr.f32.mxu0 0.0
    %9468 = vmatmul.mubr.f32.gmra.mrb[0].mxu0 %v9338
    %v9469 = vpop.f32.mrb[0].mxu0
    %v9470 = vadd.f32 %v9277, %v9469
    %v9471 = vpop.f32.mrb[0].mxu0
    %9472 = vmatprep.mubr.f32.mxu0 0.0
    %9473 = vmatmul.mubr.f32.gmra.mrb[0].mxu0 %v9341
    %v9474 = vpop.f32.mrb[0].mxu0
    %v9475 = vadd.f32 %v9282, %v9474
    %v9476 = vpop.f32.mrb[0].mxu0
    %9477 = vmatprep.mubr.f32.mxu0 0.0
    %9478 = vmatmul.mubr.f32.gmra.mrb[0].mxu0 %v9344
    %v9479 = vpop.f32.mrb[0].mxu0
    %v9480 = vadd.f32 %v9287, %v9479
    %v9481 = vpop.f32.mrb[0].mxu0
    %9482 = vmatprep.mubr.f32.mxu0 0.0
    %9483 = vmatmul.mubr.f32.gmra.mrb[0].mxu0 %v9347
    %v9484 = vpop.f32.mrb[0].mxu0
    %v9485 = vadd.f32 %v9292, %v9484
    %v9486 = vpop.f32.mrb[0].mxu0
    %9487 = vmatprep.mubr.f32.mxu0 0.0
    %9488 = vmatmul.mubr.f32.gmra.mrb[0].mxu0 %v9350
    %v9489 = vpop.f32.mrb[0].mxu0
    %v9490 = vadd.f32 %v9297, %v9489
    %v9491 = vpop.f32.mrb[0].mxu0
    %9492 = vmatprep.mubr.f32.mxu0 0.0
    %9493 = vmatmul.mubr.f32.gmra.mrb[0].mxu0 %v9353
    %v9494 = vpop.f32.mrb[0].mxu0
    %v9495 = vadd.f32 %v9302, %v9494
    %v9496 = vpop.f32.mrb[0].mxu0
    %9497 = vmatprep.mubr.f32.mxu0 0.0
    %9498 = vmatmul.mubr.f32.gmra.mrb[0].mxu0 %v9356
    %v9499 = vpop.f32.mrb[0].mxu0
    %v9500 = vadd.f32 %v9307, %v9499
    %v9501 = vpop.f32.mrb[0].mxu0
    %9502 = vdwg.mxu0
    %v9503 = vld [vmem:[%s8273 + $0x2] sm:$0xff]
    %v9504 = vld [vmem:[%s8273 + $0xa] sm:$0xff]
    %v9505 = vld [vmem:[%s8273 + $0x12] sm:$0xff]
    %v9506 = vld [vmem:[%s8273 + $0x1a] sm:$0xff]
    %v9507 = vld [vmem:[%s8273 + $0x22] sm:$0xff]
    %v9508 = vld [vmem:[%s8273 + $0x2a] sm:$0xff]
    %v9509 = vld [vmem:[%s8273 + $0x32] sm:$0xff]
    %v9510 = vld [vmem:[%s8273 + $0x3a] sm:$0xff]
    %v9511 = vld [vmem:[%s8273 + $0x42] sm:$0xff]
    %v9512 = vld [vmem:[%s8273 + $0x4a] sm:$0xff]
    %v9513 = vld [vmem:[%s8273 + $0x52] sm:$0xff]
    %v9514 = vld [vmem:[%s8273 + $0x5a] sm:$0xff]
    %v9515 = vld [vmem:[%s8273 + $0x62] sm:$0xff]
    %v9516 = vld [vmem:[%s8273 + $0x6a] sm:$0xff]
    %v9517 = vld [vmem:[%s8273 + $0x72] sm:$0xff]
    %v9518 = vld [vmem:[%s8273 + $0x7a] sm:$0x3]
    %v9519 = vld [vmem:[%s5 + $0x40] sm:$0xff]
    %v9520 = vld [vmem:[%s5 + $0x48] sm:$0xff]
    %v9521 = vld [vmem:[%s5 + $0x50] sm:$0xff]
    %v9522 = vld [vmem:[%s5 + $0x58] sm:$0xff]
    %v9524 = vsel %vm3444, %v9503, 0
    %v9527 = vsel %vm3444, %v9504, 0
    %v9530 = vsel %vm3444, %v9505, 0
    %v9533 = vsel %vm3444, %v9506, 0
    %v9536 = vsel %vm3444, %v9507, 0
    %v9539 = vsel %vm3444, %v9508, 0
    %v9542 = vsel %vm3444, %v9509, 0
    %v9545 = vsel %vm3444, %v9510, 0
    %v9548 = vsel %vm3444, %v9511, 0
    %v9551 = vsel %vm3444, %v9512, 0
    %v9554 = vsel %vm3444, %v9513, 0
    %v9557 = vsel %vm3444, %v9514, 0
    %v9560 = vsel %vm3444, %v9515, 0
    %v9563 = vsel %vm3444, %v9516, 0
    %v9566 = vsel %vm3444, %v9517, 0
    %v9569 = vsel %vm3444, %v9518, 0
    %9571 = vmatprep.subr.mxu0 0.0
    %9572 = vmatpush1.msra.mxu0 %v9519
    %9573 = vmatprep.subr.mxu0 0.0
    %9574 = vmatpush1.msra.mxu0 %v9520
    %9575 = vmatprep.subr.mxu0 0.0
    %9576 = vmatpush1.msra.mxu0 %v9521
    %9577 = vmatprep.subr.mxu0 0.0
    %9578 = vmatpush1.msra.mxu0 %v9522
    %9579 = vmatprep.subr.mxu0 0.0
    %9580 = vmatpush1.msra.mxu0 0.0
    %9581 = vmatprep.subr.mxu0 0.0
    %9582 = vmatpush1.msra.mxu0 0.0
    %9583 = vmatprep.subr.mxu0 0.0
    %9584 = vmatpush1.msra.mxu0 0.0
    %9585 = vmatprep.subr.mxu0 0.0
    %9586 = vmatpush1.msra.mxu0 0.0
    %9587 = vmatprep.subr.mxu0 0.0
    %9588 = vmatpush1.msra.mxu0 0.0
    %9589 = vmatprep.subr.mxu0 0.0
    %9590 = vmatpush1.msra.mxu0 0.0
    %9591 = vmatprep.subr.mxu0 0.0
    %9592 = vmatpush1.msra.mxu0 0.0
    %9593 = vmatprep.subr.mxu0 0.0
    %9594 = vmatpush1.msra.mxu0 0.0
    %9595 = vmatprep.subr.mxu0 0.0
    %9596 = vmatpush1.msra.mxu0 0.0
    %9597 = vmatprep.subr.mxu0 0.0
    %9598 = vmatpush1.msra.mxu0 0.0
    %9599 = vmatprep.subr.mxu0 0.0
    %9600 = vmatpush1.msra.mxu0 0.0
    %9601 = vmatprep.subr.mxu0 0.0
    %9602 = vmatpush1.msra.mxu0 0.0
    %9603 = vmatprep.subr.mxu0 0.0
    %9604 = vmatpush1.msra.mxu0 0.0
    %9605 = vmatprep.subr.mxu0 0.0
    %9606 = vmatpush1.msra.mxu0 0.0
    %9607 = vmatprep.subr.mxu0 0.0
    %9608 = vmatpush1.msra.mxu0 0.0
    %9609 = vmatprep.subr.mxu0 0.0
    %9610 = vmatpush1.msra.mxu0 0.0
    %9611 = vmatprep.subr.mxu0 0.0
    %9612 = vmatpush1.msra.mxu0 0.0
    %9613 = vmatprep.subr.mxu0 0.0
    %9614 = vmatpush1.msra.mxu0 0.0
    %9615 = vmatprep.subr.mxu0 0.0
    %9616 = vmatpush1.msra.mxu0 0.0
    %9617 = vmatprep.subr.mxu0 0.0
    %9618 = vmatpush1.msra.mxu0 0.0
    %9619 = vmatprep.subr.mxu0 0.0
    %9620 = vmatpush1.msra.mxu0 0.0
    %9621 = vmatprep.subr.mxu0 0.0
    %9622 = vmatpush1.msra.mxu0 0.0
    %9623 = vmatprep.subr.mxu0 0.0
    %9624 = vmatpush1.msra.mxu0 0.0
    %9625 = vmatprep.subr.mxu0 0.0
    %9626 = vmatpush1.msra.mxu0 0.0
    %9627 = vmatprep.subr.mxu0 0.0
    %9628 = vmatpush1.msra.mxu0 0.0
    %9629 = vmatprep.subr.mxu0 0.0
    %9630 = vmatpush1.msra.mxu0 0.0
    %9631 = vmatprep.subr.mxu0 0.0
    %9632 = vmatpush1.msra.mxu0 0.0
    %9633 = vmatprep.subr.mxu0 0.0
    %9634 = vmatpush1.msra.mxu0 0.0
    %9635 = vmatprep.mubr.f32.mxu0 0.0
    %9636 = vmatmul.mubr.f32.gmra.mrb[0].mxu0 %v9524
    %v9637 = vpop.f32.mrb[0].mxu0
    %v9638 = vadd.f32 0.0, %v9637
    %v9639 = vpop.f32.mrb[0].mxu0
    %9640 = vmatprep.mubr.f32.mxu0 0.0
    %9641 = vmatmul.mubr.f32.gmra.mrb[0].mxu0 %v9527
    %v9642 = vpop.f32.mrb[0].mxu0
    %v9643 = vadd.f32 0.0, %v9642
    %v9644 = vpop.f32.mrb[0].mxu0
    %9645 = vmatprep.mubr.f32.mxu0 0.0
    %9646 = vmatmul.mubr.f32.gmra.mrb[0].mxu0 %v9530
    %v9647 = vpop.f32.mrb[0].mxu0
    %v9648 = vadd.f32 0.0, %v9647
    %v9649 = vpop.f32.mrb[0].mxu0
    %9650 = vmatprep.mubr.f32.mxu0 0.0
    %9651 = vmatmul.mubr.f32.gmra.mrb[0].mxu0 %v9533
    %v9652 = vpop.f32.mrb[0].mxu0
    %v9653 = vadd.f32 0.0, %v9652
    %v9654 = vpop.f32.mrb[0].mxu0
    %9655 = vmatprep.mubr.f32.mxu0 0.0
    %9656 = vmatmul.mubr.f32.gmra.mrb[0].mxu0 %v9536
    %v9657 = vpop.f32.mrb[0].mxu0
    %v9658 = vadd.f32 0.0, %v9657
    %v9659 = vpop.f32.mrb[0].mxu0
    %9660 = vmatprep.mubr.f32.mxu0 0.0
    %9661 = vmatmul.mubr.f32.gmra.mrb[0].mxu0 %v9539
    %v9662 = vpop.f32.mrb[0].mxu0
    %v9663 = vadd.f32 0.0, %v9662
    %v9664 = vpop.f32.mrb[0].mxu0
    %9665 = vmatprep.mubr.f32.mxu0 0.0
    %9666 = vmatmul.mubr.f32.gmra.mrb[0].mxu0 %v9542
    %v9667 = vpop.f32.mrb[0].mxu0
    %v9668 = vadd.f32 0.0, %v9667
    %v9669 = vpop.f32.mrb[0].mxu0
    %9670 = vmatprep.mubr.f32.mxu0 0.0
    %9671 = vmatmul.mubr.f32.gmra.mrb[0].mxu0 %v9545
    %v9672 = vpop.f32.mrb[0].mxu0
    %v9673 = vadd.f32 0.0, %v9672
    %v9674 = vpop.f32.mrb[0].mxu0
    %9675 = vmatprep.mubr.f32.mxu0 0.0
    %9676 = vmatmul.mubr.f32.gmra.mrb[0].mxu0 %v9548
    %v9677 = vpop.f32.mrb[0].mxu0
    %v9678 = vadd.f32 0.0, %v9677
    %v9679 = vpop.f32.mrb[0].mxu0
    %9680 = vmatprep.mubr.f32.mxu0 0.0
    %9681 = vmatmul.mubr.f32.gmra.mrb[0].mxu0 %v9551
    %v9682 = vpop.f32.mrb[0].mxu0
    %v9683 = vadd.f32 0.0, %v9682
    %v9684 = vpop.f32.mrb[0].mxu0
    %9685 = vmatprep.mubr.f32.mxu0 0.0
    %9686 = vmatmul.mubr.f32.gmra.mrb[0].mxu0 %v9554
    %v9687 = vpop.f32.mrb[0].mxu0
    %v9688 = vadd.f32 0.0, %v9687
    %v9689 = vpop.f32.mrb[0].mxu0
    %9690 = vmatprep.mubr.f32.mxu0 0.0
    %9691 = vmatmul.mubr.f32.gmra.mrb[0].mxu0 %v9557
    %v9692 = vpop.f32.mrb[0].mxu0
    %v9693 = vadd.f32 0.0, %v9692
    %v9694 = vpop.f32.mrb[0].mxu0
    %9695 = vmatprep.mubr.f32.mxu0 0.0
    %9696 = vmatmul.mubr.f32.gmra.mrb[0].mxu0 %v9560
    %v9697 = vpop.f32.mrb[0].mxu0
    %v9698 = vadd.f32 0.0, %v9697
    %v9699 = vpop.f32.mrb[0].mxu0
    %9700 = vmatprep.mubr.f32.mxu0 0.0
    %9701 = vmatmul.mubr.f32.gmra.mrb[0].mxu0 %v9563
    %v9702 = vpop.f32.mrb[0].mxu0
    %v9703 = vadd.f32 0.0, %v9702
    %v9704 = vpop.f32.mrb[0].mxu0
    %9705 = vmatprep.mubr.f32.mxu0 0.0
    %9706 = vmatmul.mubr.f32.gmra.mrb[0].mxu0 %v9566
    %v9707 = vpop.f32.mrb[0].mxu0
    %v9708 = vadd.f32 0.0, %v9707
    %v9709 = vpop.f32.mrb[0].mxu0
    %9710 = vmatprep.mubr.f32.mxu0 0.0
    %9711 = vmatmul.mubr.f32.gmra.mrb[0].mxu0 %v9569
    %v9712 = vpop.f32.mrb[0].mxu0
    %v9713 = vadd.f32 0.0, %v9712
    %v9714 = vpop.f32.mrb[0].mxu0
    %9715 = vdwg.mxu0
    %v9716 = vadd.f32 %v9425, %v9638
    %v9717 = vadd.f32 %v9430, %v9643
    %v9718 = vadd.f32 %v9435, %v9648
    %v9719 = vadd.f32 %v9440, %v9653
    %v9720 = vadd.f32 %v9445, %v9658
    %v9721 = vadd.f32 %v9450, %v9663
    %v9722 = vadd.f32 %v9455, %v9668
    %v9723 = vadd.f32 %v9460, %v9673
    %v9724 = vadd.f32 %v9465, %v9678
    %v9725 = vadd.f32 %v9470, %v9683
    %v9726 = vadd.f32 %v9475, %v9688
    %v9727 = vadd.f32 %v9480, %v9693
    %v9728 = vadd.f32 %v9485, %v9698
    %v9729 = vadd.f32 %v9490, %v9703
    %v9730 = vadd.f32 %v9495, %v9708
    %v9731 = vadd.f32 %v9500, %v9713
    %v9732 = vld [vmem:[%s6] sm:$0x1]
    %v9734 = vlaneseq
    %v9735 = vshrl.u32 %v9734, 7
    %v9736 = vsub.s32 0, %v9735
    %v9737 = vrot.slane %v9732, %v9736
    %v9739 = vadd.f32 %v9716, %v9737
    %v9740 = vadd.f32 %v9717, %v9737
    %v9741 = vadd.f32 %v9718, %v9737
    %v9742 = vadd.f32 %v9719, %v9737
    %v9743 = vadd.f32 %v9720, %v9737
    %v9744 = vadd.f32 %v9721, %v9737
    %v9745 = vadd.f32 %v9722, %v9737
    %v9746 = vadd.f32 %v9723, %v9737
    %v9747 = vadd.f32 %v9724, %v9737
    %v9748 = vadd.f32 %v9725, %v9737
    %v9749 = vadd.f32 %v9726, %v9737
    %v9750 = vadd.f32 %v9727, %v9737
    %v9751 = vadd.f32 %v9728, %v9737
    %v9752 = vadd.f32 %v9729, %v9737
    %v9753 = vadd.f32 %v9730, %v9737
    %v9754 = vadd.f32 %v9731, %v9737
    %v9755 = vsel %vm3444, %v9739, 0.0
    %v9756 = vsel %vm3444, %v9740, 0.0
    %v9757 = vadd.f32 %v9755, %v9756
    %v9758 = vsel %vm3444, %v9741, 0.0
    %v9759 = vadd.f32 %v9757, %v9758
    %v9760 = vsel %vm3444, %v9742, 0.0
    %v9761 = vadd.f32 %v9759, %v9760
    %v9762 = vsel %vm3444, %v9743, 0.0
    %v9763 = vadd.f32 %v9761, %v9762
    %v9764 = vsel %vm3444, %v9744, 0.0
    %v9765 = vadd.f32 %v9763, %v9764
    %v9766 = vsel %vm3444, %v9745, 0.0
    %v9767 = vadd.f32 %v9765, %v9766
    %v9768 = vsel %vm3444, %v9746, 0.0
    %v9769 = vadd.f32 %v9767, %v9768
    %v9770 = vsel %vm3444, %v9747, 0.0
    %v9771 = vadd.f32 %v9769, %v9770
    %v9772 = vsel %vm3444, %v9748, 0.0
    %v9773 = vadd.f32 %v9771, %v9772
    %v9774 = vsel %vm3444, %v9749, 0.0
    %v9775 = vadd.f32 %v9773, %v9774
    %v9776 = vsel %vm3444, %v9750, 0.0
    %v9777 = vadd.f32 %v9775, %v9776
    %v9778 = vsel %vm3444, %v9751, 0.0
    %v9779 = vadd.f32 %v9777, %v9778
    %v9780 = vsel %vm3444, %v9752, 0.0
    %v9781 = vadd.f32 %v9779, %v9780
    %v9782 = vsel %vm3444, %v9753, 0.0
    %v9783 = vadd.f32 %v9781, %v9782
    %v9784 = vsel %vm8997, %v9754, 0.0
    %v9785 = vadd.f32 %v9783, %v9784
    %v9786 = vrot.slane %v9785, 4
    %v9787 = vadd.f32 %v9785, %v9786
    %v9788 = vrot.slane %v9787, 2
    %v9789 = vadd.f32 %v9787, %v9788
    %v9790 = vrot.slane %v9789, 1
    %v9791 = vadd.f32 %v9789, %v9790
    %v9792 = vadd.f32 %v9006, %v9791
    %v9793 = vmul.f32 %v9739, %v9739
    %v9794 = vmul.f32 %v9740, %v9740
    %v9795 = vmul.f32 %v9741, %v9741
    %v9796 = vmul.f32 %v9742, %v9742
    %v9797 = vmul.f32 %v9743, %v9743
    %v9798 = vmul.f32 %v9744, %v9744
    %v9799 = vmul.f32 %v9745, %v9745
    %v9800 = vmul.f32 %v9746, %v9746
    %v9801 = vmul.f32 %v9747, %v9747
    %v9802 = vmul.f32 %v9748, %v9748
    %v9803 = vmul.f32 %v9749, %v9749
    %v9804 = vmul.f32 %v9750, %v9750
    %v9805 = vmul.f32 %v9751, %v9751
    %v9806 = vmul.f32 %v9752, %v9752
    %v9807 = vmul.f32 %v9753, %v9753
    %v9808 = vmul.f32 %v9754, %v9754
    %v9809 = vsel %vm3444, %v9793, 0.0
    %v9810 = vsel %vm3444, %v9794, 0.0
    %v9811 = vadd.f32 %v9809, %v9810
    %v9812 = vsel %vm3444, %v9795, 0.0
    %v9813 = vadd.f32 %v9811, %v9812
    %v9814 = vsel %vm3444, %v9796, 0.0
    %v9815 = vadd.f32 %v9813, %v9814
    %v9816 = vsel %vm3444, %v9797, 0.0
    %v9817 = vadd.f32 %v9815, %v9816
    %v9818 = vsel %vm3444, %v9798, 0.0
    %v9819 = vadd.f32 %v9817, %v9818
    %v9820 = vsel %vm3444, %v9799, 0.0
    %v9821 = vadd.f32 %v9819, %v9820
    %v9822 = vsel %vm3444, %v9800, 0.0
    %v9823 = vadd.f32 %v9821, %v9822
    %v9824 = vsel %vm3444, %v9801, 0.0
    %v9825 = vadd.f32 %v9823, %v9824
    %v9826 = vsel %vm3444, %v9802, 0.0
    %v9827 = vadd.f32 %v9825, %v9826
    %v9828 = vsel %vm3444, %v9803, 0.0
    %v9829 = vadd.f32 %v9827, %v9828
    %v9830 = vsel %vm3444, %v9804, 0.0
    %v9831 = vadd.f32 %v9829, %v9830
    %v9832 = vsel %vm3444, %v9805, 0.0
    %v9833 = vadd.f32 %v9831, %v9832
    %v9834 = vsel %vm3444, %v9806, 0.0
    %v9835 = vadd.f32 %v9833, %v9834
    %v9836 = vsel %vm3444, %v9807, 0.0
    %v9837 = vadd.f32 %v9835, %v9836
    %v9838 = vsel %vm8997, %v9808, 0.0
    %v9839 = vadd.f32 %v9837, %v9838
    %v9840 = vrot.slane %v9839, 4
    %v9841 = vadd.f32 %v9839, %v9840
    %v9842 = vrot.slane %v9841, 2
    %v9843 = vadd.f32 %v9841, %v9842
    %v9844 = vrot.slane %v9843, 1
    %v9845 = vadd.f32 %v9843, %v9844
    %v9846 = vadd.f32 %v9060, %v9845
    %9847 = vst.msk [vmem:[#allocation3 + $0x7a] sm:$0xff] %vm3444, %v9739
    %9848 = vst.msk [vmem:[#allocation3 + $0x82] sm:$0xff] %vm3444, %v9740
    %9849 = vst.msk [vmem:[#allocation3 + $0x8a] sm:$0xff] %vm3444, %v9741
    %9850 = vst.msk [vmem:[#allocation3 + $0x92] sm:$0xff] %vm3444, %v9742
    %9851 = vst.msk [vmem:[#allocation3 + $0x9a] sm:$0xff] %vm3444, %v9743
    %9852 = vst.msk [vmem:[#allocation3 + $0xa2] sm:$0xff] %vm3444, %v9744
    %9853 = vst.msk [vmem:[#allocation3 + $0xaa] sm:$0xff] %vm3444, %v9745
    %9854 = vst.msk [vmem:[#allocation3 + $0xb2] sm:$0xff] %vm3444, %v9746
    %9855 = vst.msk [vmem:[#allocation3 + $0xba] sm:$0xff] %vm3444, %v9747
    %9856 = vst.msk [vmem:[#allocation3 + $0xc2] sm:$0xff] %vm3444, %v9748
    %9857 = vst.msk [vmem:[#allocation3 + $0xca] sm:$0xff] %vm3444, %v9749
    %9858 = vst.msk [vmem:[#allocation3 + $0xd2] sm:$0xff] %vm3444, %v9750
    %9859 = vst.msk [vmem:[#allocation3 + $0xda] sm:$0xff] %vm3444, %v9751
    %9860 = vst.msk [vmem:[#allocation3 + $0xe2] sm:$0xff] %vm3444, %v9752
    %9861 = vst.msk [vmem:[#allocation3 + $0xea] sm:$0xff] %vm3444, %v9753
    %9862 = vst.msk [vmem:[#allocation3 + $0xf2] sm:$0x3] %vm8997, %v9754
    %v9863 = vmul.f32 %v9792, 0.0040983604
    %v9864 = vmul.f32 %v9846, 0.0040983604
    %v9865 = vmul.f32 %v9863, %v9863
    %v9866 = vsub.f32 %v9864, %v9865
    %v9867 = vld [vmem:[%s7] sm:$0x1]
    %v9868 = vadd.f32 %v9866, 1e-05
    %v9869 = vrsqrt.pop %v9868
    %v9870 = vmul.f32 %v9867, %v9869
    %v9871 = vld [vmem:[%s8] sm:$0x1]
    %v9872 = vmul.f32 %v9863, %v9870
    %v9873 = vsub.f32 %v9871, %v9872
    %v9874 = vld [vmem:[#allocation3] ss:$4 sm:$0xff]
    %s9875 = scalar_lea.vmem [#allocation3], 32
    %v9876 = vld [vmem:[%s9875] ss:$4 sm:$0xff]
    %s9877 = scalar_lea.vmem [#allocation3], 64
    %v9878 = vld [vmem:[%s9877] ss:$4 sm:$0xff]
    %s9879 = scalar_lea.vmem [#allocation3], 96
    %v9880 = vld [vmem:[%s9879] ss:$4 sm:$0x3f]
    %v9882 = vlaneseq
    %v9883 = vshrl.u32 %v9882, 7
    %v9884 = vsub.s32 0, %v9883
    %v9885 = vrot.slane %v9870, %v9884
    %v9887 = vmul.f32 %v9874, %v9885
    %v9888 = vmul.f32 %v9876, %v9885
    %v9889 = vmul.f32 %v9878, %v9885
    %v9890 = vmul.f32 %v9880, %v9885
    %v9892 = vlaneseq
    %v9893 = vshrl.u32 %v9892, 7
    %v9894 = vsub.s32 0, %v9893
    %v9895 = vrot.slane %v9873, %v9894
    %v9897 = vadd.f32 %v9887, %v9895
    %v9898 = vadd.f32 %v9888, %v9895
    %v9899 = vadd.f32 %v9889, %v9895
    %v9900 = vadd.f32 %v9890, %v9895
    %s9901 = scalar_lea.vmem [#allocation3], 1
    %v9902 = vld [vmem:[%s9901] ss:$4 sm:$0xff]
    %s9903 = scalar_lea.vmem [#allocation3], 33
    %v9904 = vld [vmem:[%s9903] ss:$4 sm:$0xff]
    %s9905 = scalar_lea.vmem [#allocation3], 65
    %v9906 = vld [vmem:[%s9905] ss:$4 sm:$0xff]
    %s9907 = scalar_lea.vmem [#allocation3], 97
    %v9908 = vld [vmem:[%s9907] ss:$4 sm:$0x3f]
    %v9909 = vmul.f32 %v9902, %v9885
    %v9910 = vmul.f32 %v9904, %v9885
    %v9911 = vmul.f32 %v9906, %v9885
    %v9912 = vmul.f32 %v9908, %v9885
    %v9913 = vadd.f32 %v9909, %v9895
    %v9914 = vadd.f32 %v9910, %v9895
    %v9915 = vadd.f32 %v9911, %v9895
    %v9916 = vadd.f32 %v9912, %v9895
    %v9917 = vmax.f32 %v9897, %v9913
    %v9918 = vmax.f32 %v9898, %v9914
    %v9919 = vmax.f32 %v9899, %v9915
    %v9920 = vmax.f32 %v9900, %v9916
    %s9921 = scalar_lea.vmem [#allocation3], 2
    %v9922 = vld [vmem:[%s9921] ss:$4 sm:$0xff]
    %s9923 = scalar_lea.vmem [#allocation3], 34
    %v9924 = vld [vmem:[%s9923] ss:$4 sm:$0xff]
    %s9925 = scalar_lea.vmem [#allocation3], 66
    %v9926 = vld [vmem:[%s9925] ss:$4 sm:$0xff]
    %s9927 = scalar_lea.vmem [#allocation3], 98
    %v9928 = vld [vmem:[%s9927] ss:$4 sm:$0x3f]
    %v9929 = vmul.f32 %v9922, %v9885
    %v9930 = vmul.f32 %v9924, %v9885
    %v9931 = vmul.f32 %v9926, %v9885
    %v9932 = vmul.f32 %v9928, %v9885
    %v9933 = vadd.f32 %v9929, %v9895
    %v9934 = vadd.f32 %v9930, %v9895
    %v9935 = vadd.f32 %v9931, %v9895
    %v9936 = vadd.f32 %v9932, %v9895
    %v9937 = vmax.f32 %v9917, %v9933
    %v9938 = vmax.f32 %v9918, %v9934
    %v9939 = vmax.f32 %v9919, %v9935
    %v9940 = vmax.f32 %v9920, %v9936
    %s9941 = scalar_lea.vmem [#allocation3], 3
    %v9942 = vld [vmem:[%s9941] ss:$4 sm:$0xff]
    %s9943 = scalar_lea.vmem [#allocation3], 35
    %v9944 = vld [vmem:[%s9943] ss:$4 sm:$0xff]
    %s9945 = scalar_lea.vmem [#allocation3], 67
    %v9946 = vld [vmem:[%s9945] ss:$4 sm:$0xff]
    %s9947 = scalar_lea.vmem [#allocation3], 99
    %v9948 = vld [vmem:[%s9947] ss:$4 sm:$0x3f]
    %v9949 = vmul.f32 %v9942, %v9885
    %v9950 = vmul.f32 %v9944, %v9885
    %v9951 = vmul.f32 %v9946, %v9885
    %v9952 = vmul.f32 %v9948, %v9885
    %v9953 = vadd.f32 %v9949, %v9895
    %v9954 = vadd.f32 %v9950, %v9895
    %v9955 = vadd.f32 %v9951, %v9895
    %v9956 = vadd.f32 %v9952, %v9895
    %v9957 = vmax.f32 %v9937, %v9953
    %v9958 = vmax.f32 %v9938, %v9954
    %v9959 = vmax.f32 %v9939, %v9955
    %v9960 = vmax.f32 %v9940, %v9956
    %v9961 = vmax.f32 %v9957, 0.0
    %v9962 = vmax.f32 %v9958, 0.0
    %v9963 = vmax.f32 %v9959, 0.0
    %v9964 = vmax.f32 %v9960, 0.0
    %9965 = vst.msk [vmem:[#allocation7] sm:$0xff] %vm3444, %v9961
    %9966 = vst.msk [vmem:[#allocation7 + $0x8] sm:$0xff] %vm3444, %v9962
    %9967 = vst.msk [vmem:[#allocation7 + $0x10] sm:$0xff] %vm3444, %v9963
    %vm9968 = vcmask 259072
    %9969 = vst.msk [vmem:[#allocation7 + $0x18] sm:$0x3f] %vm9968, %v9964
    %s9970 = scalar_lea.vmem [#allocation3], 122
    %v9971 = vld [vmem:[%s9970] ss:$4 sm:$0xff]
    %s9972 = scalar_lea.vmem [#allocation3], 154
    %v9973 = vld [vmem:[%s9972] ss:$4 sm:$0xff]
    %s9974 = scalar_lea.vmem [#allocation3], 186
    %v9975 = vld [vmem:[%s9974] ss:$4 sm:$0xff]
    %s9976 = scalar_lea.vmem [#allocation3], 218
    %v9977 = vld [vmem:[%s9976] ss:$4 sm:$0x3f]
    %v9978 = vmul.f32 %v9971, %v9885
    %v9979 = vmul.f32 %v9973, %v9885
    %v9980 = vmul.f32 %v9975, %v9885
    %v9981 = vmul.f32 %v9977, %v9885
    %v9982 = vadd.f32 %v9978, %v9895
    %v9983 = vadd.f32 %v9979, %v9895
    %v9984 = vadd.f32 %v9980, %v9895
    %v9985 = vadd.f32 %v9981, %v9895
    %s9986 = scalar_lea.vmem [#allocation3], 123
    %v9987 = vld [vmem:[%s9986] ss:$4 sm:$0xff]
    %s9988 = scalar_lea.vmem [#allocation3], 155
    %v9989 = vld [vmem:[%s9988] ss:$4 sm:$0xff]
    %s9990 = scalar_lea.vmem [#allocation3], 187
    %v9991 = vld [vmem:[%s9990] ss:$4 sm:$0xff]
    %s9992 = scalar_lea.vmem [#allocation3], 219
    %v9993 = vld [vmem:[%s9992] ss:$4 sm:$0x3f]
    %v9994 = vmul.f32 %v9987, %v9885
    %v9995 = vmul.f32 %v9989, %v9885
    %v9996 = vmul.f32 %v9991, %v9885
    %v9997 = vmul.f32 %v9993, %v9885
    %v9998 = vadd.f32 %v9994, %v9895
    %v9999 = vadd.f32 %v9995, %v9895
    %v10000 = vadd.f32 %v9996, %v9895
    %v10001 = vadd.f32 %v9997, %v9895
    %v10002 = vmax.f32 %v9982, %v9998
    %v10003 = vmax.f32 %v9983, %v9999
    %v10004 = vmax.f32 %v9984, %v10000
    %v10005 = vmax.f32 %v9985, %v10001
    %s10006 = scalar_lea.vmem [#allocation3], 124
    %v10007 = vld [vmem:[%s10006] ss:$4 sm:$0xff]
    %s10008 = scalar_lea.vmem [#allocation3], 156
    %v10009 = vld [vmem:[%s10008] ss:$4 sm:$0xff]
    %s10010 = scalar_lea.vmem [#allocation3], 188
    %v10011 = vld [vmem:[%s10010] ss:$4 sm:$0xff]
    %s10012 = scalar_lea.vmem [#allocation3], 220
    %v10013 = vld [vmem:[%s10012] ss:$4 sm:$0x3f]
    %v10014 = vmul.f32 %v10007, %v9885
    %v10015 = vmul.f32 %v10009, %v9885
    %v10016 = vmul.f32 %v10011, %v9885
    %v10017 = vmul.f32 %v10013, %v9885
    %v10018 = vadd.f32 %v10014, %v9895
    %v10019 = vadd.f32 %v10015, %v9895
    %v10020 = vadd.f32 %v10016, %v9895
    %v10021 = vadd.f32 %v10017, %v9895
    %v10022 = vmax.f32 %v10002, %v10018
    %v10023 = vmax.f32 %v10003, %v10019
    %v10024 = vmax.f32 %v10004, %v10020
    %v10025 = vmax.f32 %v10005, %v10021
    %s10026 = scalar_lea.vmem [#allocation3], 125
    %v10027 = vld [vmem:[%s10026] ss:$4 sm:$0xff]
    %s10028 = scalar_lea.vmem [#allocation3], 157
    %v10029 = vld [vmem:[%s10028] ss:$4 sm:$0xff]
    %s10030 = scalar_lea.vmem [#allocation3], 189
    %v10031 = vld [vmem:[%s10030] ss:$4 sm:$0xff]
    %s10032 = scalar_lea.vmem [#allocation3], 221
    %v10033 = vld [vmem:[%s10032] ss:$4 sm:$0x3f]
    %v10034 = vmul.f32 %v10027, %v9885
    %v10035 = vmul.f32 %v10029, %v9885
    %v10036 = vmul.f32 %v10031, %v9885
    %v10037 = vmul.f32 %v10033, %v9885
    %v10038 = vadd.f32 %v10034, %v9895
    %v10039 = vadd.f32 %v10035, %v9895
    %v10040 = vadd.f32 %v10036, %v9895
    %v10041 = vadd.f32 %v10037, %v9895
    %v10042 = vmax.f32 %v10022, %v10038
    %v10043 = vmax.f32 %v10023, %v10039
    %v10044 = vmax.f32 %v10024, %v10040
    %v10045 = vmax.f32 %v10025, %v10041
    %v10046 = vmax.f32 %v10042, 0.0
    %v10047 = vmax.f32 %v10043, 0.0
    %v10048 = vmax.f32 %v10044, 0.0
    %v10049 = vmax.f32 %v10045, 0.0
    %s10050 = scalar_lea.vmem [#allocation7], 32
    %10051 = vst.msk [vmem:[%s10050] sm:$0xff] %vm3444, %v10046
    %10052 = vst.msk [vmem:[%s10050 + $0x8] sm:$0xff] %vm3444, %v10047
    %10053 = vst.msk [vmem:[%s10050 + $0x10] sm:$0xff] %vm3444, %v10048
    %10054 = vst.msk [vmem:[%s10050 + $0x18] sm:$0x3f] %vm9968, %v10049
    %v10055 = vld [vmem:[#allocation7] sm:$0xff]
    %v10056 = vld [vmem:[#allocation7 + $0x8] sm:$0xff]
    %v10057 = vld [vmem:[#allocation7 + $0x10] sm:$0xff]
    %v10058 = vld [vmem:[#allocation7 + $0x18] sm:$0xf]
    %v10059 = vld [vmem:[%s9] sm:$0xff]
    %v10060 = vld [vmem:[%s9 + $0x8] sm:$0xff]
    %v10061 = vld [vmem:[%s9 + $0x10] sm:$0xff]
    %v10062 = vld [vmem:[%s9 + $0x18] sm:$0xff]
    %v10063 = vld [vmem:[#allocation7 + $0x1] sm:$0xff]
    %v10064 = vld [vmem:[#allocation7 + $0x9] sm:$0xff]
    %v10065 = vld [vmem:[#allocation7 + $0x11] sm:$0xff]
    %v10066 = vld [vmem:[#allocation7 + $0x19] sm:$0xf]
    %v10067 = vld [vmem:[%s9 + $0x20] sm:$0xff]
    %v10068 = vld [vmem:[%s9 + $0x28] sm:$0xff]
    %v10069 = vld [vmem:[%s9 + $0x30] sm:$0xff]
    %v10070 = vld [vmem:[%s9 + $0x38] sm:$0xff]
    %v10072 = vsel %vm3444, %v10063, 0
    %v10075 = vsel %vm3444, %v10064, 0
    %v10078 = vsel %vm3444, %v10065, 0
    %v10081 = vsel %vm3444, %v10066, 0
    %10083 = vmatprep.subr.mxu0 0.0
    %10084 = vmatpush1.msra.mxu0 %v10067
    %10085 = vmatprep.subr.mxu0 0.0
    %10086 = vmatpush1.msra.mxu0 %v10068
    %10087 = vmatprep.subr.mxu0 0.0
    %10088 = vmatpush1.msra.mxu0 %v10069
    %10089 = vmatprep.subr.mxu0 0.0
    %10090 = vmatpush1.msra.mxu0 %v10070
    %10091 = vmatprep.subr.mxu0 0.0
    %10092 = vmatpush1.msra.mxu0 0.0
    %10093 = vmatprep.subr.mxu0 0.0
    %10094 = vmatpush1.msra.mxu0 0.0
    %10095 = vmatprep.subr.mxu0 0.0
    %10096 = vmatpush1.msra.mxu0 0.0
    %10097 = vmatprep.subr.mxu0 0.0
    %10098 = vmatpush1.msra.mxu0 0.0
    %10099 = vmatprep.subr.mxu0 0.0
    %10100 = vmatpush1.msra.mxu0 0.0
    %10101 = vmatprep.subr.mxu0 0.0
    %10102 = vmatpush1.msra.mxu0 0.0
    %10103 = vmatprep.subr.mxu0 0.0
    %10104 = vmatpush1.msra.mxu0 0.0
    %10105 = vmatprep.subr.mxu0 0.0
    %10106 = vmatpush1.msra.mxu0 0.0
    %10107 = vmatprep.subr.mxu0 0.0
    %10108 = vmatpush1.msra.mxu0 0.0
    %10109 = vmatprep.subr.mxu0 0.0
    %10110 = vmatpush1.msra.mxu0 0.0
    %10111 = vmatprep.subr.mxu0 0.0
    %10112 = vmatpush1.msra.mxu0 0.0
    %10113 = vmatprep.subr.mxu0 0.0
    %10114 = vmatpush1.msra.mxu0 0.0
    %10115 = vmatprep.subr.mxu0 0.0
    %10116 = vmatpush1.msra.mxu0 0.0
    %10117 = vmatprep.subr.mxu0 0.0
    %10118 = vmatpush1.msra.mxu0 0.0
    %10119 = vmatprep.subr.mxu0 0.0
    %10120 = vmatpush1.msra.mxu0 0.0
    %10121 = vmatprep.subr.mxu0 0.0
    %10122 = vmatpush1.msra.mxu0 0.0
    %10123 = vmatprep.subr.mxu0 0.0
    %10124 = vmatpush1.msra.mxu0 0.0
    %10125 = vmatprep.subr.mxu0 0.0
    %10126 = vmatpush1.msra.mxu0 0.0
    %10127 = vmatprep.subr.mxu0 0.0
    %10128 = vmatpush1.msra.mxu0 0.0
    %10129 = vmatprep.subr.mxu0 0.0
    %10130 = vmatpush1.msra.mxu0 0.0
    %10131 = vmatprep.subr.mxu0 0.0
    %10132 = vmatpush1.msra.mxu0 0.0
    %10133 = vmatprep.subr.mxu0 0.0
    %10134 = vmatpush1.msra.mxu0 0.0
    %10135 = vmatprep.subr.mxu0 0.0
    %10136 = vmatpush1.msra.mxu0 0.0
    %10137 = vmatprep.subr.mxu0 0.0
    %10138 = vmatpush1.msra.mxu0 0.0
    %10139 = vmatprep.subr.mxu0 0.0
    %10140 = vmatpush1.msra.mxu0 0.0
    %10141 = vmatprep.subr.mxu0 0.0
    %10142 = vmatpush1.msra.mxu0 0.0
    %10143 = vmatprep.subr.mxu0 0.0
    %10144 = vmatpush1.msra.mxu0 0.0
    %10145 = vmatprep.subr.mxu0 0.0
    %10146 = vmatpush1.msra.mxu0 0.0
    %10147 = vmatprep.mubr.f32.mxu0 0.0
    %10148 = vmatmul.mubr.f32.gmra.mrb[0].mxu0 %v10072
    %v10149 = vpop.f32.mrb[0].mxu0
    %v10150 = vadd.f32 0.0, %v10149
    %v10151 = vpop.f32.mrb[0].mxu0
    %10152 = vmatprep.mubr.f32.mxu0 0.0
    %10153 = vmatmul.mubr.f32.gmra.mrb[0].mxu0 %v10075
    %v10154 = vpop.f32.mrb[0].mxu0
    %v10155 = vadd.f32 0.0, %v10154
    %v10156 = vpop.f32.mrb[0].mxu0
    %10157 = vmatprep.mubr.f32.mxu0 0.0
    %10158 = vmatmul.mubr.f32.gmra.mrb[0].mxu0 %v10078
    %v10159 = vpop.f32.mrb[0].mxu0
    %v10160 = vadd.f32 0.0, %v10159
    %v10161 = vpop.f32.mrb[0].mxu0
    %10162 = vmatprep.mubr.f32.mxu0 0.0
    %10163 = vmatmul.mubr.f32.gmra.mrb[0].mxu0 %v10081
    %v10164 = vpop.f32.mrb[0].mxu0
    %v10165 = vadd.f32 0.0, %v10164
    %v10166 = vpop.f32.mrb[0].mxu0
    %10167 = vdwg.mxu0
    %v10169 = vsel %vm3444, %v10055, 0
    %v10172 = vsel %vm3444, %v10056, 0
    %v10175 = vsel %vm3444, %v10057, 0
    %v10178 = vsel %vm3444, %v10058, 0
    %10180 = vmatprep.subr.mxu0 0.0
    %10181 = vmatpush1.msra.mxu0 %v10059
    %10182 = vmatprep.subr.mxu0 0.0
    %10183 = vmatpush1.msra.mxu0 %v10060
    %10184 = vmatprep.subr.mxu0 0.0
    %10185 = vmatpush1.msra.mxu0 %v10061
    %10186 = vmatprep.subr.mxu0 0.0
    %10187 = vmatpush1.msra.mxu0 %v10062
    %10188 = vmatprep.subr.mxu0 0.0
    %10189 = vmatpush1.msra.mxu0 0.0
    %10190 = vmatprep.subr.mxu0 0.0
    %10191 = vmatpush1.msra.mxu0 0.0
    %10192 = vmatprep.subr.mxu0 0.0
    %10193 = vmatpush1.msra.mxu0 0.0
    %10194 = vmatprep.subr.mxu0 0.0
    %10195 = vmatpush1.msra.mxu0 0.0
    %10196 = vmatprep.subr.mxu0 0.0
    %10197 = vmatpush1.msra.mxu0 0.0
    %10198 = vmatprep.subr.mxu0 0.0
    %10199 = vmatpush1.msra.mxu0 0.0
    %10200 = vmatprep.subr.mxu0 0.0
    %10201 = vmatpush1.msra.mxu0 0.0
    %10202 = vmatprep.subr.mxu0 0.0
    %10203 = vmatpush1.msra.mxu0 0.0
    %10204 = vmatprep.subr.mxu0 0.0
    %10205 = vmatpush1.msra.mxu0 0.0
    %10206 = vmatprep.subr.mxu0 0.0
    %10207 = vmatpush1.msra.mxu0 0.0
    %10208 = vmatprep.subr.mxu0 0.0
    %10209 = vmatpush1.msra.mxu0 0.0
    %10210 = vmatprep.subr.mxu0 0.0
    %10211 = vmatpush1.msra.mxu0 0.0
    %10212 = vmatprep.subr.mxu0 0.0
    %10213 = vmatpush1.msra.mxu0 0.0
    %10214 = vmatprep.subr.mxu0 0.0
    %10215 = vmatpush1.msra.mxu0 0.0
    %10216 = vmatprep.subr.mxu0 0.0
    %10217 = vmatpush1.msra.mxu0 0.0
    %10218 = vmatprep.subr.mxu0 0.0
    %10219 = vmatpush1.msra.mxu0 0.0
    %10220 = vmatprep.subr.mxu0 0.0
    %10221 = vmatpush1.msra.mxu0 0.0
    %10222 = vmatprep.subr.mxu0 0.0
    %10223 = vmatpush1.msra.mxu0 0.0
    %10224 = vmatprep.subr.mxu0 0.0
    %10225 = vmatpush1.msra.mxu0 0.0
    %10226 = vmatprep.subr.mxu0 0.0
    %10227 = vmatpush1.msra.mxu0 0.0
    %10228 = vmatprep.subr.mxu0 0.0
    %10229 = vmatpush1.msra.mxu0 0.0
    %10230 = vmatprep.subr.mxu0 0.0
    %10231 = vmatpush1.msra.mxu0 0.0
    %10232 = vmatprep.subr.mxu0 0.0
    %10233 = vmatpush1.msra.mxu0 0.0
    %10234 = vmatprep.subr.mxu0 0.0
    %10235 = vmatpush1.msra.mxu0 0.0
    %10236 = vmatprep.subr.mxu0 0.0
    %10237 = vmatpush1.msra.mxu0 0.0
    %10238 = vmatprep.subr.mxu0 0.0
    %10239 = vmatpush1.msra.mxu0 0.0
    %10240 = vmatprep.subr.mxu0 0.0
    %10241 = vmatpush1.msra.mxu0 0.0
    %10242 = vmatprep.subr.mxu0 0.0
    %10243 = vmatpush1.msra.mxu0 0.0
    %10244 = vmatprep.mubr.f32.mxu0 0.0
    %10245 = vmatmul.mubr.f32.gmra.mrb[0].mxu0 %v10169
    %v10246 = vpop.f32.mrb[0].mxu0
    %v10247 = vadd.f32 %v10150, %v10246
    %v10248 = vpop.f32.mrb[0].mxu0
    %10249 = vmatprep.mubr.f32.mxu0 0.0
    %10250 = vmatmul.mubr.f32.gmra.mrb[0].mxu0 %v10172
    %v10251 = vpop.f32.mrb[0].mxu0
    %v10252 = vadd.f32 %v10155, %v10251
    %v10253 = vpop.f32.mrb[0].mxu0
    %10254 = vmatprep.mubr.f32.mxu0 0.0
    %10255 = vmatmul.mubr.f32.gmra.mrb[0].mxu0 %v10175
    %v10256 = vpop.f32.mrb[0].mxu0
    %v10257 = vadd.f32 %v10160, %v10256
    %v10258 = vpop.f32.mrb[0].mxu0
    %10259 = vmatprep.mubr.f32.mxu0 0.0
    %10260 = vmatmul.mubr.f32.gmra.mrb[0].mxu0 %v10178
    %v10261 = vpop.f32.mrb[0].mxu0
    %v10262 = vadd.f32 %v10165, %v10261
    %v10263 = vpop.f32.mrb[0].mxu0
    %10264 = vdwg.mxu0
    %v10265 = vld [vmem:[#allocation7 + $0x2] sm:$0xff]
    %v10266 = vld [vmem:[#allocation7 + $0xa] sm:$0xff]
    %v10267 = vld [vmem:[#allocation7 + $0x12] sm:$0xff]
    %v10268 = vld [vmem:[#allocation7 + $0x1a] sm:$0xf]
    %v10269 = vld [vmem:[%s9 + $0x40] sm:$0xff]
    %v10270 = vld [vmem:[%s9 + $0x48] sm:$0xff]
    %v10271 = vld [vmem:[%s9 + $0x50] sm:$0xff]
    %v10272 = vld [vmem:[%s9 + $0x58] sm:$0xff]
    %v10274 = vsel %vm3444, %v10265, 0
    %v10277 = vsel %vm3444, %v10266, 0
    %v10280 = vsel %vm3444, %v10267, 0
    %v10283 = vsel %vm3444, %v10268, 0
    %10285 = vmatprep.subr.mxu0 0.0
    %10286 = vmatpush1.msra.mxu0 %v10269
    %10287 = vmatprep.subr.mxu0 0.0
    %10288 = vmatpush1.msra.mxu0 %v10270
    %10289 = vmatprep.subr.mxu0 0.0
    %10290 = vmatpush1.msra.mxu0 %v10271
    %10291 = vmatprep.subr.mxu0 0.0
    %10292 = vmatpush1.msra.mxu0 %v10272
    %10293 = vmatprep.subr.mxu0 0.0
    %10294 = vmatpush1.msra.mxu0 0.0
    %10295 = vmatprep.subr.mxu0 0.0
    %10296 = vmatpush1.msra.mxu0 0.0
    %10297 = vmatprep.subr.mxu0 0.0
    %10298 = vmatpush1.msra.mxu0 0.0
    %10299 = vmatprep.subr.mxu0 0.0
    %10300 = vmatpush1.msra.mxu0 0.0
    %10301 = vmatprep.subr.mxu0 0.0
    %10302 = vmatpush1.msra.mxu0 0.0
    %10303 = vmatprep.subr.mxu0 0.0
    %10304 = vmatpush1.msra.mxu0 0.0
    %10305 = vmatprep.subr.mxu0 0.0
    %10306 = vmatpush1.msra.mxu0 0.0
    %10307 = vmatprep.subr.mxu0 0.0
    %10308 = vmatpush1.msra.mxu0 0.0
    %10309 = vmatprep.subr.mxu0 0.0
    %10310 = vmatpush1.msra.mxu0 0.0
    %10311 = vmatprep.subr.mxu0 0.0
    %10312 = vmatpush1.msra.mxu0 0.0
    %10313 = vmatprep.subr.mxu0 0.0
    %10314 = vmatpush1.msra.mxu0 0.0
    %10315 = vmatprep.subr.mxu0 0.0
    %10316 = vmatpush1.msra.mxu0 0.0
    %10317 = vmatprep.subr.mxu0 0.0
    %10318 = vmatpush1.msra.mxu0 0.0
    %10319 = vmatprep.subr.mxu0 0.0
    %10320 = vmatpush1.msra.mxu0 0.0
    %10321 = vmatprep.subr.mxu0 0.0
    %10322 = vmatpush1.msra.mxu0 0.0
    %10323 = vmatprep.subr.mxu0 0.0
    %10324 = vmatpush1.msra.mxu0 0.0
    %10325 = vmatprep.subr.mxu0 0.0
    %10326 = vmatpush1.msra.mxu0 0.0
    %10327 = vmatprep.subr.mxu0 0.0
    %10328 = vmatpush1.msra.mxu0 0.0
    %10329 = vmatprep.subr.mxu0 0.0
    %10330 = vmatpush1.msra.mxu0 0.0
    %10331 = vmatprep.subr.mxu0 0.0
    %10332 = vmatpush1.msra.mxu0 0.0
    %10333 = vmatprep.subr.mxu0 0.0
    %10334 = vmatpush1.msra.mxu0 0.0
    %10335 = vmatprep.subr.mxu0 0.0
    %10336 = vmatpush1.msra.mxu0 0.0
    %10337 = vmatprep.subr.mxu0 0.0
    %10338 = vmatpush1.msra.mxu0 0.0
    %10339 = vmatprep.subr.mxu0 0.0
    %10340 = vmatpush1.msra.mxu0 0.0
    %10341 = vmatprep.subr.mxu0 0.0
    %10342 = vmatpush1.msra.mxu0 0.0
    %10343 = vmatprep.subr.mxu0 0.0
    %10344 = vmatpush1.msra.mxu0 0.0
    %10345 = vmatprep.subr.mxu0 0.0
    %10346 = vmatpush1.msra.mxu0 0.0
    %10347 = vmatprep.subr.mxu0 0.0
    %10348 = vmatpush1.msra.mxu0 0.0
    %10349 = vmatprep.mubr.f32.mxu0 0.0
    %10350 = vmatmul.mubr.f32.gmra.mrb[0].mxu0 %v10274
    %v10351 = vpop.f32.mrb[0].mxu0
    %v10352 = vadd.f32 0.0, %v10351
    %v10353 = vpop.f32.mrb[0].mxu0
    %10354 = vmatprep.mubr.f32.mxu0 0.0
    %10355 = vmatmul.mubr.f32.gmra.mrb[0].mxu0 %v10277
    %v10356 = vpop.f32.mrb[0].mxu0
    %v10357 = vadd.f32 0.0, %v10356
    %v10358 = vpop.f32.mrb[0].mxu0
    %10359 = vmatprep.mubr.f32.mxu0 0.0
    %10360 = vmatmul.mubr.f32.gmra.mrb[0].mxu0 %v10280
    %v10361 = vpop.f32.mrb[0].mxu0
    %v10362 = vadd.f32 0.0, %v10361
    %v10363 = vpop.f32.mrb[0].mxu0
    %10364 = vmatprep.mubr.f32.mxu0 0.0
    %10365 = vmatmul.mubr.f32.gmra.mrb[0].mxu0 %v10283
    %v10366 = vpop.f32.mrb[0].mxu0
    %v10367 = vadd.f32 0.0, %v10366
    %v10368 = vpop.f32.mrb[0].mxu0
    %10369 = vdwg.mxu0
    %v10370 = vadd.f32 %v10247, %v10352
    %v10371 = vadd.f32 %v10252, %v10357
    %v10372 = vadd.f32 %v10257, %v10362
    %v10373 = vadd.f32 %v10262, %v10367
    %v10374 = vld [vmem:[%s10] sm:$0x1]
    %v10376 = vlaneseq
    %v10377 = vshrl.u32 %v10376, 7
    %v10378 = vsub.s32 0, %v10377
    %v10379 = vrot.slane %v10374, %v10378
    %v10381 = vadd.f32 %v10370, %v10379
    %v10382 = vadd.f32 %v10371, %v10379
    %v10383 = vadd.f32 %v10372, %v10379
    %v10384 = vadd.f32 %v10373, %v10379
    %vm10385 = vcmask 523264
    %v10386 = vsel %vm10385, %v10381, 0.0
    %v10387 = vsel %vm10385, %v10382, 0.0
    %v10388 = vadd.f32 %v10386, %v10387
    %v10389 = vsel %vm10385, %v10383, 0.0
    %v10390 = vadd.f32 %v10388, %v10389
    %vm10391 = vcmask 519168
    %v10392 = vsel %vm10391, %v10384, 0.0
    %v10393 = vadd.f32 %v10390, %v10392
    %v10394 = vrot.slane %v10393, 4
    %v10395 = vadd.f32 %v10393, %v10394
    %v10396 = vrot.slane %v10395, 2
    %v10397 = vadd.f32 %v10395, %v10396
    %v10398 = vrot.slane %v10397, 1
    %v10399 = vadd.f32 %v10397, %v10398
    %v10400 = vadd.f32 %v10399, 0.0
    %v10401 = vmul.f32 %v10381, %v10381
    %v10402 = vmul.f32 %v10382, %v10382
    %v10403 = vmul.f32 %v10383, %v10383
    %v10404 = vmul.f32 %v10384, %v10384
    %v10405 = vsel %vm10385, %v10401, 0.0
    %v10406 = vsel %vm10385, %v10402, 0.0
    %v10407 = vadd.f32 %v10405, %v10406
    %v10408 = vsel %vm10385, %v10403, 0.0
    %v10409 = vadd.f32 %v10407, %v10408
    %v10410 = vsel %vm10391, %v10404, 0.0
    %v10411 = vadd.f32 %v10409, %v10410
    %v10412 = vrot.slane %v10411, 4
    %v10413 = vadd.f32 %v10411, %v10412
    %v10414 = vrot.slane %v10413, 2
    %v10415 = vadd.f32 %v10413, %v10414
    %v10416 = vrot.slane %v10415, 1
    %v10417 = vadd.f32 %v10415, %v10416
    %v10418 = vadd.f32 %v10417, 0.0
    %10419 = vst.msk [vmem:[#allocation4] sm:$0xff] %vm10385, %v10381
    %10420 = vst.msk [vmem:[#allocation4 + $0x8] sm:$0xff] %vm10385, %v10382
    %10421 = vst.msk [vmem:[#allocation4 + $0x10] sm:$0xff] %vm10385, %v10383
    %10422 = vst.msk [vmem:[#allocation4 + $0x18] sm:$0xf] %vm10391, %v10384
    %v10423 = vld [vmem:[%s10050] sm:$0xff]
    %v10424 = vld [vmem:[%s10050 + $0x8] sm:$0xff]
    %v10425 = vld [vmem:[%s10050 + $0x10] sm:$0xff]
    %v10426 = vld [vmem:[%s10050 + $0x18] sm:$0xf]
    %v10427 = vld [vmem:[%s9] sm:$0xff]
    %v10428 = vld [vmem:[%s9 + $0x8] sm:$0xff]
    %v10429 = vld [vmem:[%s9 + $0x10] sm:$0xff]
    %v10430 = vld [vmem:[%s9 + $0x18] sm:$0xff]
    %v10431 = vld [vmem:[%s10050 + $0x1] sm:$0xff]
    %v10432 = vld [vmem:[%s10050 + $0x9] sm:$0xff]
    %v10433 = vld [vmem:[%s10050 + $0x11] sm:$0xff]
    %v10434 = vld [vmem:[%s10050 + $0x19] sm:$0xf]
    %v10435 = vld [vmem:[%s9 + $0x20] sm:$0xff]
    %v10436 = vld [vmem:[%s9 + $0x28] sm:$0xff]
    %v10437 = vld [vmem:[%s9 + $0x30] sm:$0xff]
    %v10438 = vld [vmem:[%s9 + $0x38] sm:$0xff]
    %v10440 = vsel %vm3444, %v10431, 0
    %v10443 = vsel %vm3444, %v10432, 0
    %v10446 = vsel %vm3444, %v10433, 0
    %v10449 = vsel %vm3444, %v10434, 0
    %10451 = vmatprep.subr.mxu0 0.0
    %10452 = vmatpush1.msra.mxu0 %v10435
    %10453 = vmatprep.subr.mxu0 0.0
    %10454 = vmatpush1.msra.mxu0 %v10436
    %10455 = vmatprep.subr.mxu0 0.0
    %10456 = vmatpush1.msra.mxu0 %v10437
    %10457 = vmatprep.subr.mxu0 0.0
    %10458 = vmatpush1.msra.mxu0 %v10438
    %10459 = vmatprep.subr.mxu0 0.0
    %10460 = vmatpush1.msra.mxu0 0.0
    %10461 = vmatprep.subr.mxu0 0.0
    %10462 = vmatpush1.msra.mxu0 0.0
    %10463 = vmatprep.subr.mxu0 0.0
    %10464 = vmatpush1.msra.mxu0 0.0
    %10465 = vmatprep.subr.mxu0 0.0
    %10466 = vmatpush1.msra.mxu0 0.0
    %10467 = vmatprep.subr.mxu0 0.0
    %10468 = vmatpush1.msra.mxu0 0.0
    %10469 = vmatprep.subr.mxu0 0.0
    %10470 = vmatpush1.msra.mxu0 0.0
    %10471 = vmatprep.subr.mxu0 0.0
    %10472 = vmatpush1.msra.mxu0 0.0
    %10473 = vmatprep.subr.mxu0 0.0
    %10474 = vmatpush1.msra.mxu0 0.0
    %10475 = vmatprep.subr.mxu0 0.0
    %10476 = vmatpush1.msra.mxu0 0.0
    %10477 = vmatprep.subr.mxu0 0.0
    %10478 = vmatpush1.msra.mxu0 0.0
    %10479 = vmatprep.subr.mxu0 0.0
    %10480 = vmatpush1.msra.mxu0 0.0
    %10481 = vmatprep.subr.mxu0 0.0
    %10482 = vmatpush1.msra.mxu0 0.0
    %10483 = vmatprep.subr.mxu0 0.0
    %10484 = vmatpush1.msra.mxu0 0.0
    %10485 = vmatprep.subr.mxu0 0.0
    %10486 = vmatpush1.msra.mxu0 0.0
    %10487 = vmatprep.subr.mxu0 0.0
    %10488 = vmatpush1.msra.mxu0 0.0
    %10489 = vmatprep.subr.mxu0 0.0
    %10490 = vmatpush1.msra.mxu0 0.0
    %10491 = vmatprep.subr.mxu0 0.0
    %10492 = vmatpush1.msra.mxu0 0.0
    %10493 = vmatprep.subr.mxu0 0.0
    %10494 = vmatpush1.msra.mxu0 0.0
    %10495 = vmatprep.subr.mxu0 0.0
    %10496 = vmatpush1.msra.mxu0 0.0
    %10497 = vmatprep.subr.mxu0 0.0
    %10498 = vmatpush1.msra.mxu0 0.0
    %10499 = vmatprep.subr.mxu0 0.0
    %10500 = vmatpush1.msra.mxu0 0.0
    %10501 = vmatprep.subr.mxu0 0.0
    %10502 = vmatpush1.msra.mxu0 0.0
    %10503 = vmatprep.subr.mxu0 0.0
    %10504 = vmatpush1.msra.mxu0 0.0
    %10505 = vmatprep.subr.mxu0 0.0
    %10506 = vmatpush1.msra.mxu0 0.0
    %10507 = vmatprep.subr.mxu0 0.0
    %10508 = vmatpush1.msra.mxu0 0.0
    %10509 = vmatprep.subr.mxu0 0.0
    %10510 = vmatpush1.msra.mxu0 0.0
    %10511 = vmatprep.subr.mxu0 0.0
    %10512 = vmatpush1.msra.mxu0 0.0
    %10513 = vmatprep.subr.mxu0 0.0
    %10514 = vmatpush1.msra.mxu0 0.0
    %10515 = vmatprep.mubr.f32.mxu0 0.0
    %10516 = vmatmul.mubr.f32.gmra.mrb[0].mxu0 %v10440
    %v10517 = vpop.f32.mrb[0].mxu0
    %v10518 = vadd.f32 0.0, %v10517
    %v10519 = vpop.f32.mrb[0].mxu0
    %10520 = vmatprep.mubr.f32.mxu0 0.0
    %10521 = vmatmul.mubr.f32.gmra.mrb[0].mxu0 %v10443
    %v10522 = vpop.f32.mrb[0].mxu0
    %v10523 = vadd.f32 0.0, %v10522
    %v10524 = vpop.f32.mrb[0].mxu0
    %10525 = vmatprep.mubr.f32.mxu0 0.0
    %10526 = vmatmul.mubr.f32.gmra.mrb[0].mxu0 %v10446
    %v10527 = vpop.f32.mrb[0].mxu0
    %v10528 = vadd.f32 0.0, %v10527
    %v10529 = vpop.f32.mrb[0].mxu0
    %10530 = vmatprep.mubr.f32.mxu0 0.0
    %10531 = vmatmul.mubr.f32.gmra.mrb[0].mxu0 %v10449
    %v10532 = vpop.f32.mrb[0].mxu0
    %v10533 = vadd.f32 0.0, %v10532
    %v10534 = vpop.f32.mrb[0].mxu0
    %10535 = vdwg.mxu0
    %v10537 = vsel %vm3444, %v10423, 0
    %v10540 = vsel %vm3444, %v10424, 0
    %v10543 = vsel %vm3444, %v10425, 0
    %v10546 = vsel %vm3444, %v10426, 0
    %10548 = vmatprep.subr.mxu0 0.0
    %10549 = vmatpush1.msra.mxu0 %v10427
    %10550 = vmatprep.subr.mxu0 0.0
    %10551 = vmatpush1.msra.mxu0 %v10428
    %10552 = vmatprep.subr.mxu0 0.0
    %10553 = vmatpush1.msra.mxu0 %v10429
    %10554 = vmatprep.subr.mxu0 0.0
    %10555 = vmatpush1.msra.mxu0 %v10430
    %10556 = vmatprep.subr.mxu0 0.0
    %10557 = vmatpush1.msra.mxu0 0.0
    %10558 = vmatprep.subr.mxu0 0.0
    %10559 = vmatpush1.msra.mxu0 0.0
    %10560 = vmatprep.subr.mxu0 0.0
    %10561 = vmatpush1.msra.mxu0 0.0
    %10562 = vmatprep.subr.mxu0 0.0
    %10563 = vmatpush1.msra.mxu0 0.0
    %10564 = vmatprep.subr.mxu0 0.0
    %10565 = vmatpush1.msra.mxu0 0.0
    %10566 = vmatprep.subr.mxu0 0.0
    %10567 = vmatpush1.msra.mxu0 0.0
    %10568 = vmatprep.subr.mxu0 0.0
    %10569 = vmatpush1.msra.mxu0 0.0
    %10570 = vmatprep.subr.mxu0 0.0
    %10571 = vmatpush1.msra.mxu0 0.0
    %10572 = vmatprep.subr.mxu0 0.0
    %10573 = vmatpush1.msra.mxu0 0.0
    %10574 = vmatprep.subr.mxu0 0.0
    %10575 = vmatpush1.msra.mxu0 0.0
    %10576 = vmatprep.subr.mxu0 0.0
    %10577 = vmatpush1.msra.mxu0 0.0
    %10578 = vmatprep.subr.mxu0 0.0
    %10579 = vmatpush1.msra.mxu0 0.0
    %10580 = vmatprep.subr.mxu0 0.0
    %10581 = vmatpush1.msra.mxu0 0.0
    %10582 = vmatprep.subr.mxu0 0.0
    %10583 = vmatpush1.msra.mxu0 0.0
    %10584 = vmatprep.subr.mxu0 0.0
    %10585 = vmatpush1.msra.mxu0 0.0
    %10586 = vmatprep.subr.mxu0 0.0
    %10587 = vmatpush1.msra.mxu0 0.0
    %10588 = vmatprep.subr.mxu0 0.0
    %10589 = vmatpush1.msra.mxu0 0.0
    %10590 = vmatprep.subr.mxu0 0.0
    %10591 = vmatpush1.msra.mxu0 0.0
    %10592 = vmatprep.subr.mxu0 0.0
    %10593 = vmatpush1.msra.mxu0 0.0
    %10594 = vmatprep.subr.mxu0 0.0
    %10595 = vmatpush1.msra.mxu0 0.0
    %10596 = vmatprep.subr.mxu0 0.0
    %10597 = vmatpush1.msra.mxu0 0.0
    %10598 = vmatprep.subr.mxu0 0.0
    %10599 = vmatpush1.msra.mxu0 0.0
    %10600 = vmatprep.subr.mxu0 0.0
    %10601 = vmatpush1.msra.mxu0 0.0
    %10602 = vmatprep.subr.mxu0 0.0
    %10603 = vmatpush1.msra.mxu0 0.0
    %10604 = vmatprep.subr.mxu0 0.0
    %10605 = vmatpush1.msra.mxu0 0.0
    %10606 = vmatprep.subr.mxu0 0.0
    %10607 = vmatpush1.msra.mxu0 0.0
    %10608 = vmatprep.subr.mxu0 0.0
    %10609 = vmatpush1.msra.mxu0 0.0
    %10610 = vmatprep.subr.mxu0 0.0
    %10611 = vmatpush1.msra.mxu0 0.0
    %10612 = vmatprep.mubr.f32.mxu0 0.0
    %10613 = vmatmul.mubr.f32.gmra.mrb[0].mxu0 %v10537
    %v10614 = vpop.f32.mrb[0].mxu0
    %v10615 = vadd.f32 %v10518, %v10614
    %v10616 = vpop.f32.mrb[0].mxu0
    %10617 = vmatprep.mubr.f32.mxu0 0.0
    %10618 = vmatmul.mubr.f32.gmra.mrb[0].mxu0 %v10540
    %v10619 = vpop.f32.mrb[0].mxu0
    %v10620 = vadd.f32 %v10523, %v10619
    %v10621 = vpop.f32.mrb[0].mxu0
    %10622 = vmatprep.mubr.f32.mxu0 0.0
    %10623 = vmatmul.mubr.f32.gmra.mrb[0].mxu0 %v10543
    %v10624 = vpop.f32.mrb[0].mxu0
    %v10625 = vadd.f32 %v10528, %v10624
    %v10626 = vpop.f32.mrb[0].mxu0
    %10627 = vmatprep.mubr.f32.mxu0 0.0
    %10628 = vmatmul.mubr.f32.gmra.mrb[0].mxu0 %v10546
    %v10629 = vpop.f32.mrb[0].mxu0
    %v10630 = vadd.f32 %v10533, %v10629
    %v10631 = vpop.f32.mrb[0].mxu0
    %10632 = vdwg.mxu0
    %v10633 = vld [vmem:[%s10050 + $0x2] sm:$0xff]
    %v10634 = vld [vmem:[%s10050 + $0xa] sm:$0xff]
    %v10635 = vld [vmem:[%s10050 + $0x12] sm:$0xff]
    %v10636 = vld [vmem:[%s10050 + $0x1a] sm:$0xf]
    %v10637 = vld [vmem:[%s9 + $0x40] sm:$0xff]
    %v10638 = vld [vmem:[%s9 + $0x48] sm:$0xff]
    %v10639 = vld [vmem:[%s9 + $0x50] sm:$0xff]
    %v10640 = vld [vmem:[%s9 + $0x58] sm:$0xff]
    %v10642 = vsel %vm3444, %v10633, 0
    %v10645 = vsel %vm3444, %v10634, 0
    %v10648 = vsel %vm3444, %v10635, 0
    %v10651 = vsel %vm3444, %v10636, 0
    %10653 = vmatprep.subr.mxu0 0.0
    %10654 = vmatpush1.msra.mxu0 %v10637
    %10655 = vmatprep.subr.mxu0 0.0
    %10656 = vmatpush1.msra.mxu0 %v10638
    %10657 = vmatprep.subr.mxu0 0.0
    %10658 = vmatpush1.msra.mxu0 %v10639
    %10659 = vmatprep.subr.mxu0 0.0
    %10660 = vmatpush1.msra.mxu0 %v10640
    %10661 = vmatprep.subr.mxu0 0.0
    %10662 = vmatpush1.msra.mxu0 0.0
    %10663 = vmatprep.subr.mxu0 0.0
    %10664 = vmatpush1.msra.mxu0 0.0
    %10665 = vmatprep.subr.mxu0 0.0
    %10666 = vmatpush1.msra.mxu0 0.0
    %10667 = vmatprep.subr.mxu0 0.0
    %10668 = vmatpush1.msra.mxu0 0.0
    %10669 = vmatprep.subr.mxu0 0.0
    %10670 = vmatpush1.msra.mxu0 0.0
    %10671 = vmatprep.subr.mxu0 0.0
    %10672 = vmatpush1.msra.mxu0 0.0
    %10673 = vmatprep.subr.mxu0 0.0
    %10674 = vmatpush1.msra.mxu0 0.0
    %10675 = vmatprep.subr.mxu0 0.0
    %10676 = vmatpush1.msra.mxu0 0.0
    %10677 = vmatprep.subr.mxu0 0.0
    %10678 = vmatpush1.msra.mxu0 0.0
    %10679 = vmatprep.subr.mxu0 0.0
    %10680 = vmatpush1.msra.mxu0 0.0
    %10681 = vmatprep.subr.mxu0 0.0
    %10682 = vmatpush1.msra.mxu0 0.0
    %10683 = vmatprep.subr.mxu0 0.0
    %10684 = vmatpush1.msra.mxu0 0.0
    %10685 = vmatprep.subr.mxu0 0.0
    %10686 = vmatpush1.msra.mxu0 0.0
    %10687 = vmatprep.subr.mxu0 0.0
    %10688 = vmatpush1.msra.mxu0 0.0
    %10689 = vmatprep.subr.mxu0 0.0
    %10690 = vmatpush1.msra.mxu0 0.0
    %10691 = vmatprep.subr.mxu0 0.0
    %10692 = vmatpush1.msra.mxu0 0.0
    %10693 = vmatprep.subr.mxu0 0.0
    %10694 = vmatpush1.msra.mxu0 0.0
    %10695 = vmatprep.subr.mxu0 0.0
    %10696 = vmatpush1.msra.mxu0 0.0
    %10697 = vmatprep.subr.mxu0 0.0
    %10698 = vmatpush1.msra.mxu0 0.0
    %10699 = vmatprep.subr.mxu0 0.0
    %10700 = vmatpush1.msra.mxu0 0.0
    %10701 = vmatprep.subr.mxu0 0.0
    %10702 = vmatpush1.msra.mxu0 0.0
    %10703 = vmatprep.subr.mxu0 0.0
    %10704 = vmatpush1.msra.mxu0 0.0
    %10705 = vmatprep.subr.mxu0 0.0
    %10706 = vmatpush1.msra.mxu0 0.0
    %10707 = vmatprep.subr.mxu0 0.0
    %10708 = vmatpush1.msra.mxu0 0.0
    %10709 = vmatprep.subr.mxu0 0.0
    %10710 = vmatpush1.msra.mxu0 0.0
    %10711 = vmatprep.subr.mxu0 0.0
    %10712 = vmatpush1.msra.mxu0 0.0
    %10713 = vmatprep.subr.mxu0 0.0
    %10714 = vmatpush1.msra.mxu0 0.0
    %10715 = vmatprep.subr.mxu0 0.0
    %10716 = vmatpush1.msra.mxu0 0.0
    %10717 = vmatprep.mubr.f32.mxu0 0.0
    %10718 = vmatmul.mubr.f32.gmra.mrb[0].mxu0 %v10642
    %v10719 = vpop.f32.mrb[0].mxu0
    %v10720 = vadd.f32 0.0, %v10719
    %v10721 = vpop.f32.mrb[0].mxu0
    %10722 = vmatprep.mubr.f32.mxu0 0.0
    %10723 = vmatmul.mubr.f32.gmra.mrb[0].mxu0 %v10645
    %v10724 = vpop.f32.mrb[0].mxu0
    %v10725 = vadd.f32 0.0, %v10724
    %v10726 = vpop.f32.mrb[0].mxu0
    %10727 = vmatprep.mubr.f32.mxu0 0.0
    %10728 = vmatmul.mubr.f32.gmra.mrb[0].mxu0 %v10648
    %v10729 = vpop.f32.mrb[0].mxu0
    %v10730 = vadd.f32 0.0, %v10729
    %v10731 = vpop.f32.mrb[0].mxu0
    %10732 = vmatprep.mubr.f32.mxu0 0.0
    %10733 = vmatmul.mubr.f32.gmra.mrb[0].mxu0 %v10651
    %v10734 = vpop.f32.mrb[0].mxu0
    %v10735 = vadd.f32 0.0, %v10734
    %v10736 = vpop.f32.mrb[0].mxu0
    %10737 = vdwg.mxu0
    %v10738 = vadd.f32 %v10615, %v10720
    %v10739 = vadd.f32 %v10620, %v10725
    %v10740 = vadd.f32 %v10625, %v10730
    %v10741 = vadd.f32 %v10630, %v10735
    %v10742 = vld [vmem:[%s10] sm:$0x1]
    %v10744 = vlaneseq
    %v10745 = vshrl.u32 %v10744, 7
    %v10746 = vsub.s32 0, %v10745
    %v10747 = vrot.slane %v10742, %v10746
    %v10749 = vadd.f32 %v10738, %v10747
    %v10750 = vadd.f32 %v10739, %v10747
    %v10751 = vadd.f32 %v10740, %v10747
    %v10752 = vadd.f32 %v10741, %v10747
    %v10753 = vsel %vm10385, %v10749, 0.0
    %v10754 = vsel %vm10385, %v10750, 0.0
    %v10755 = vadd.f32 %v10753, %v10754
    %v10756 = vsel %vm10385, %v10751, 0.0
    %v10757 = vadd.f32 %v10755, %v10756
    %v10758 = vsel %vm10391, %v10752, 0.0
    %v10759 = vadd.f32 %v10757, %v10758
    %v10760 = vrot.slane %v10759, 4
    %v10761 = vadd.f32 %v10759, %v10760
    %v10762 = vrot.slane %v10761, 2
    %v10763 = vadd.f32 %v10761, %v10762
    %v10764 = vrot.slane %v10763, 1
    %v10765 = vadd.f32 %v10763, %v10764
    %v10766 = vadd.f32 %v10400, %v10765
    %v10767 = vmul.f32 %v10749, %v10749
    %v10768 = vmul.f32 %v10750, %v10750
    %v10769 = vmul.f32 %v10751, %v10751
    %v10770 = vmul.f32 %v10752, %v10752
    %v10771 = vsel %vm10385, %v10767, 0.0
    %v10772 = vsel %vm10385, %v10768, 0.0
    %v10773 = vadd.f32 %v10771, %v10772
    %v10774 = vsel %vm10385, %v10769, 0.0
    %v10775 = vadd.f32 %v10773, %v10774
    %v10776 = vsel %vm10391, %v10770, 0.0
    %v10777 = vadd.f32 %v10775, %v10776
    %v10778 = vrot.slane %v10777, 4
    %v10779 = vadd.f32 %v10777, %v10778
    %v10780 = vrot.slane %v10779, 2
    %v10781 = vadd.f32 %v10779, %v10780
    %v10782 = vrot.slane %v10781, 1
    %v10783 = vadd.f32 %v10781, %v10782
    %v10784 = vadd.f32 %v10418, %v10783
    %10785 = vst.msk [vmem:[#allocation4 + $0x1c] sm:$0xff] %vm10385, %v10749
    %10786 = vst.msk [vmem:[#allocation4 + $0x24] sm:$0xff] %vm10385, %v10750
    %10787 = vst.msk [vmem:[#allocation4 + $0x2c] sm:$0xff] %vm10385, %v10751
    %10788 = vst.msk [vmem:[#allocation4 + $0x34] sm:$0xf] %vm10391, %v10752
    %v10789 = vmul.f32 %v10766, 0.017857144
    %v10790 = vmul.f32 %v10784, 0.017857144
    %v10791 = vmul.f32 %v10789, %v10789
    %v10792 = vsub.f32 %v10790, %v10791
    %v10793 = vld [vmem:[%s11] sm:$0x1]
    %v10794 = vadd.f32 %v10792, 1e-05
    %v10795 = vrsqrt.pop %v10794
    %v10796 = vmul.f32 %v10793, %v10795
    %v10797 = vld [vmem:[%s12] sm:$0x1]
    %v10798 = vmul.f32 %v10789, %v10796
    %v10799 = vsub.f32 %v10797, %v10798
    %v10800 = vld [vmem:[#allocation4] ss:$4 sm:$0x7f]
    %v10802 = vlaneseq
    %v10803 = vshrl.u32 %v10802, 7
    %v10804 = vsub.s32 0, %v10803
    %v10805 = vrot.slane %v10796, %v10804
    %v10807 = vmul.f32 %v10800, %v10805
    %v10809 = vlaneseq
    %v10810 = vshrl.u32 %v10809, 7
    %v10811 = vsub.s32 0, %v10810
    %v10812 = vrot.slane %v10799, %v10811
    %v10814 = vadd.f32 %v10807, %v10812
    %s10815 = scalar_lea.vmem [#allocation4], 1
    %v10816 = vld [vmem:[%s10815] ss:$4 sm:$0x7f]
    %v10817 = vmul.f32 %v10816, %v10805
    %v10818 = vadd.f32 %v10817, %v10812
    %v10819 = vmax.f32 %v10814, %v10818
    %s10820 = scalar_lea.vmem [#allocation4], 2
    %v10821 = vld [vmem:[%s10820] ss:$4 sm:$0x7f]
    %v10822 = vmul.f32 %v10821, %v10805
    %v10823 = vadd.f32 %v10822, %v10812
    %v10824 = vmax.f32 %v10819, %v10823
    %s10825 = scalar_lea.vmem [#allocation4], 3
    %v10826 = vld [vmem:[%s10825] ss:$4 sm:$0x7f]
    %v10827 = vmul.f32 %v10826, %v10805
    %v10828 = vadd.f32 %v10827, %v10812
    %v10829 = vmax.f32 %v10824, %v10828
    %v10830 = vmax.f32 %v10829, 0.0
    %vm10831 = vcmask 522240
    %10832 = vst.msk [vmem:[#allocation8] sm:$0x7f] %vm10831, %v10830
    %s10833 = scalar_lea.vmem [#allocation4], 28
    %v10834 = vld [vmem:[%s10833] ss:$4 sm:$0x7f]
    %v10835 = vmul.f32 %v10834, %v10805
    %v10836 = vadd.f32 %v10835, %v10812
    %s10837 = scalar_lea.vmem [#allocation4], 29
    %v10838 = vld [vmem:[%s10837] ss:$4 sm:$0x7f]
    %v10839 = vmul.f32 %v10838, %v10805
    %v10840 = vadd.f32 %v10839, %v10812
    %v10841 = vmax.f32 %v10836, %v10840
    %s10842 = scalar_lea.vmem [#allocation4], 30
    %v10843 = vld [vmem:[%s10842] ss:$4 sm:$0x7f]
    %v10844 = vmul.f32 %v10843, %v10805
    %v10845 = vadd.f32 %v10844, %v10812
    %v10846 = vmax.f32 %v10841, %v10845
    %s10847 = scalar_lea.vmem [#allocation4], 31
    %v10848 = vld [vmem:[%s10847] ss:$4 sm:$0x7f]
    %v10849 = vmul.f32 %v10848, %v10805
    %v10850 = vadd.f32 %v10849, %v10812
    %v10851 = vmax.f32 %v10846, %v10850
    %v10852 = vmax.f32 %v10851, 0.0
    %s10853 = scalar_lea.vmem [#allocation8], 8
    %10854 = vst.msk [vmem:[%s10853] sm:$0x7f] %vm10831, %v10852
    %v10855 = vld [vmem:[#allocation8] sm:$0x1f]
    %v10856 = vld [vmem:[%s13] sm:$0xff]
    %v10857 = vld [vmem:[%s13 + $0x8] sm:$0xff]
    %v10858 = vld [vmem:[%s13 + $0x10] sm:$0xff]
    %v10859 = vld [vmem:[%s13 + $0x18] sm:$0xff]
    %v10860 = vld [vmem:[%s13 + $0x20] sm:$0xff]
    %v10861 = vld [vmem:[%s13 + $0x28] sm:$0xff]
    %v10862 = vld [vmem:[%s13 + $0x30] sm:$0xff]
    %v10863 = vld [vmem:[%s13 + $0x38] sm:$0xff]
    %v10864 = vld [vmem:[#allocation8 + $0x1] sm:$0x1f]
    %v10865 = vld [vmem:[%s13 + $0x40] sm:$0xff]
    %v10866 = vld [vmem:[%s13 + $0x48] sm:$0xff]
    %v10867 = vld [vmem:[%s13 + $0x50] sm:$0xff]
    %v10868 = vld [vmem:[%s13 + $0x58] sm:$0xff]
    %v10869 = vld [vmem:[%s13 + $0x60] sm:$0xff]
    %v10870 = vld [vmem:[%s13 + $0x68] sm:$0xff]
    %v10871 = vld [vmem:[%s13 + $0x70] sm:$0xff]
    %v10872 = vld [vmem:[%s13 + $0x78] sm:$0xff]
    %v10874 = vsel %vm10385, %v10864, 0
    %10876 = vmatprep.subr.mxu0 0.0
    %10877 = vmatpush1.msra.mxu0 %v10865
    %10878 = vmatprep.subr.mxu0 0.0
    %10879 = vmatpush1.msra.mxu0 %v10866
    %10880 = vmatprep.subr.mxu0 0.0
    %10881 = vmatpush1.msra.mxu0 %v10867
    %10882 = vmatprep.subr.mxu0 0.0
    %10883 = vmatpush1.msra.mxu0 %v10868
    %10884 = vmatprep.subr.mxu0 0.0
    %10885 = vmatpush1.msra.mxu0 %v10869
    %10886 = vmatprep.subr.mxu0 0.0
    %10887 = vmatpush1.msra.mxu0 %v10870
    %10888 = vmatprep.subr.mxu0 0.0
    %10889 = vmatpush1.msra.mxu0 %v10871
    %10890 = vmatprep.subr.mxu0 0.0
    %10891 = vmatpush1.msra.mxu0 %v10872
    %10892 = vmatprep.subr.mxu0 0.0
    %10893 = vmatpush1.msra.mxu0 0.0
    %10894 = vmatprep.subr.mxu0 0.0
    %10895 = vmatpush1.msra.mxu0 0.0
    %10896 = vmatprep.subr.mxu0 0.0
    %10897 = vmatpush1.msra.mxu0 0.0
    %10898 = vmatprep.subr.mxu0 0.0
    %10899 = vmatpush1.msra.mxu0 0.0
    %10900 = vmatprep.subr.mxu0 0.0
    %10901 = vmatpush1.msra.mxu0 0.0
    %10902 = vmatprep.subr.mxu0 0.0
    %10903 = vmatpush1.msra.mxu0 0.0
    %10904 = vmatprep.subr.mxu0 0.0
    %10905 = vmatpush1.msra.mxu0 0.0
    %10906 = vmatprep.subr.mxu0 0.0
    %10907 = vmatpush1.msra.mxu0 0.0
    %10908 = vmatprep.subr.mxu0 0.0
    %10909 = vmatpush1.msra.mxu0 0.0
    %10910 = vmatprep.subr.mxu0 0.0
    %10911 = vmatpush1.msra.mxu0 0.0
    %10912 = vmatprep.subr.mxu0 0.0
    %10913 = vmatpush1.msra.mxu0 0.0
    %10914 = vmatprep.subr.mxu0 0.0
    %10915 = vmatpush1.msra.mxu0 0.0
    %10916 = vmatprep.subr.mxu0 0.0
    %10917 = vmatpush1.msra.mxu0 0.0
    %10918 = vmatprep.subr.mxu0 0.0
    %10919 = vmatpush1.msra.mxu0 0.0
    %10920 = vmatprep.subr.mxu0 0.0
    %10921 = vmatpush1.msra.mxu0 0.0
    %10922 = vmatprep.subr.mxu0 0.0
    %10923 = vmatpush1.msra.mxu0 0.0
    %10924 = vmatprep.subr.mxu0 0.0
    %10925 = vmatpush1.msra.mxu0 0.0
    %10926 = vmatprep.subr.mxu0 0.0
    %10927 = vmatpush1.msra.mxu0 0.0
    %10928 = vmatprep.subr.mxu0 0.0
    %10929 = vmatpush1.msra.mxu0 0.0
    %10930 = vmatprep.subr.mxu0 0.0
    %10931 = vmatpush1.msra.mxu0 0.0
    %10932 = vmatprep.subr.mxu0 0.0
    %10933 = vmatpush1.msra.mxu0 0.0
    %10934 = vmatprep.subr.mxu0 0.0
    %10935 = vmatpush1.msra.mxu0 0.0
    %10936 = vmatprep.subr.mxu0 0.0
    %10937 = vmatpush1.msra.mxu0 0.0
    %10938 = vmatprep.subr.mxu0 0.0
    %10939 = vmatpush1.msra.mxu0 0.0
    %10940 = vmatprep.mubr.f32.mxu0 0.0
    %10941 = vmatmul.mubr.f32.gmra.mrb[0].mxu0 %v10874
    %v10942 = vpop.f32.mrb[0].mxu0
    %v10943 = vadd.f32 0.0, %v10942
    %v10944 = vpop.f32.mrb[0].mxu0
    %10945 = vdwg.mxu0
    %v10947 = vsel %vm10385, %v10855, 0
    %10949 = vmatprep.subr.mxu0 0.0
    %10950 = vmatpush1.msra.mxu0 %v10856
    %10951 = vmatprep.subr.mxu0 0.0
    %10952 = vmatpush1.msra.mxu0 %v10857
    %10953 = vmatprep.subr.mxu0 0.0
    %10954 = vmatpush1.msra.mxu0 %v10858
    %10955 = vmatprep.subr.mxu0 0.0
    %10956 = vmatpush1.msra.mxu0 %v10859
    %10957 = vmatprep.subr.mxu0 0.0
    %10958 = vmatpush1.msra.mxu0 %v10860
    %10959 = vmatprep.subr.mxu0 0.0
    %10960 = vmatpush1.msra.mxu0 %v10861
    %10961 = vmatprep.subr.mxu0 0.0
    %10962 = vmatpush1.msra.mxu0 %v10862
    %10963 = vmatprep.subr.mxu0 0.0
    %10964 = vmatpush1.msra.mxu0 %v10863
    %10965 = vmatprep.subr.mxu0 0.0
    %10966 = vmatpush1.msra.mxu0 0.0
    %10967 = vmatprep.subr.mxu0 0.0
    %10968 = vmatpush1.msra.mxu0 0.0
    %10969 = vmatprep.subr.mxu0 0.0
    %10970 = vmatpush1.msra.mxu0 0.0
    %10971 = vmatprep.subr.mxu0 0.0
    %10972 = vmatpush1.msra.mxu0 0.0
    %10973 = vmatprep.subr.mxu0 0.0
    %10974 = vmatpush1.msra.mxu0 0.0
    %10975 = vmatprep.subr.mxu0 0.0
    %10976 = vmatpush1.msra.mxu0 0.0
    %10977 = vmatprep.subr.mxu0 0.0
    %10978 = vmatpush1.msra.mxu0 0.0
    %10979 = vmatprep.subr.mxu0 0.0
    %10980 = vmatpush1.msra.mxu0 0.0
    %10981 = vmatprep.subr.mxu0 0.0
    %10982 = vmatpush1.msra.mxu0 0.0
    %10983 = vmatprep.subr.mxu0 0.0
    %10984 = vmatpush1.msra.mxu0 0.0
    %10985 = vmatprep.subr.mxu0 0.0
    %10986 = vmatpush1.msra.mxu0 0.0
    %10987 = vmatprep.subr.mxu0 0.0
    %10988 = vmatpush1.msra.mxu0 0.0
    %10989 = vmatprep.subr.mxu0 0.0
    %10990 = vmatpush1.msra.mxu0 0.0
    %10991 = vmatprep.subr.mxu0 0.0
    %10992 = vmatpush1.msra.mxu0 0.0
    %10993 = vmatprep.subr.mxu0 0.0
    %10994 = vmatpush1.msra.mxu0 0.0
    %10995 = vmatprep.subr.mxu0 0.0
    %10996 = vmatpush1.msra.mxu0 0.0
    %10997 = vmatprep.subr.mxu0 0.0
    %10998 = vmatpush1.msra.mxu0 0.0
    %10999 = vmatprep.subr.mxu0 0.0
    %11000 = vmatpush1.msra.mxu0 0.0
    %11001 = vmatprep.subr.mxu0 0.0
    %11002 = vmatpush1.msra.mxu0 0.0
    %11003 = vmatprep.subr.mxu0 0.0
    %11004 = vmatpush1.msra.mxu0 0.0
    %11005 = vmatprep.subr.mxu0 0.0
    %11006 = vmatpush1.msra.mxu0 0.0
    %11007 = vmatprep.subr.mxu0 0.0
    %11008 = vmatpush1.msra.mxu0 0.0
    %11009 = vmatprep.subr.mxu0 0.0
    %11010 = vmatpush1.msra.mxu0 0.0
    %11011 = vmatprep.subr.mxu0 0.0
    %11012 = vmatpush1.msra.mxu0 0.0
    %11013 = vmatprep.mubr.f32.mxu0 0.0
    %11014 = vmatmul.mubr.f32.gmra.mrb[0].mxu0 %v10947
    %v11015 = vpop.f32.mrb[0].mxu0
    %v11016 = vadd.f32 %v10943, %v11015
    %v11017 = vpop.f32.mrb[0].mxu0
    %11018 = vdwg.mxu0
    %v11019 = vld [vmem:[#allocation8 + $0x2] sm:$0x1f]
    %v11020 = vld [vmem:[%s13 + $0x80] sm:$0xff]
    %v11021 = vld [vmem:[%s13 + $0x88] sm:$0xff]
    %v11022 = vld [vmem:[%s13 + $0x90] sm:$0xff]
    %v11023 = vld [vmem:[%s13 + $0x98] sm:$0xff]
    %v11024 = vld [vmem:[%s13 + $0xa0] sm:$0xff]
    %v11025 = vld [vmem:[%s13 + $0xa8] sm:$0xff]
    %v11026 = vld [vmem:[%s13 + $0xb0] sm:$0xff]
    %v11027 = vld [vmem:[%s13 + $0xb8] sm:$0xff]
    %v11029 = vsel %vm10385, %v11019, 0
    %11031 = vmatprep.subr.mxu0 0.0
    %11032 = vmatpush1.msra.mxu0 %v11020
    %11033 = vmatprep.subr.mxu0 0.0
    %11034 = vmatpush1.msra.mxu0 %v11021
    %11035 = vmatprep.subr.mxu0 0.0
    %11036 = vmatpush1.msra.mxu0 %v11022
    %11037 = vmatprep.subr.mxu0 0.0
    %11038 = vmatpush1.msra.mxu0 %v11023
    %11039 = vmatprep.subr.mxu0 0.0
    %11040 = vmatpush1.msra.mxu0 %v11024
    %11041 = vmatprep.subr.mxu0 0.0
    %11042 = vmatpush1.msra.mxu0 %v11025
    %11043 = vmatprep.subr.mxu0 0.0
    %11044 = vmatpush1.msra.mxu0 %v11026
    %11045 = vmatprep.subr.mxu0 0.0
    %11046 = vmatpush1.msra.mxu0 %v11027
    %11047 = vmatprep.subr.mxu0 0.0
    %11048 = vmatpush1.msra.mxu0 0.0
    %11049 = vmatprep.subr.mxu0 0.0
    %11050 = vmatpush1.msra.mxu0 0.0
    %11051 = vmatprep.subr.mxu0 0.0
    %11052 = vmatpush1.msra.mxu0 0.0
    %11053 = vmatprep.subr.mxu0 0.0
    %11054 = vmatpush1.msra.mxu0 0.0
    %11055 = vmatprep.subr.mxu0 0.0
    %11056 = vmatpush1.msra.mxu0 0.0
    %11057 = vmatprep.subr.mxu0 0.0
    %11058 = vmatpush1.msra.mxu0 0.0
    %11059 = vmatprep.subr.mxu0 0.0
    %11060 = vmatpush1.msra.mxu0 0.0
    %11061 = vmatprep.subr.mxu0 0.0
    %11062 = vmatpush1.msra.mxu0 0.0
    %11063 = vmatprep.subr.mxu0 0.0
    %11064 = vmatpush1.msra.mxu0 0.0
    %11065 = vmatprep.subr.mxu0 0.0
    %11066 = vmatpush1.msra.mxu0 0.0
    %11067 = vmatprep.subr.mxu0 0.0
    %11068 = vmatpush1.msra.mxu0 0.0
    %11069 = vmatprep.subr.mxu0 0.0
    %11070 = vmatpush1.msra.mxu0 0.0
    %11071 = vmatprep.subr.mxu0 0.0
    %11072 = vmatpush1.msra.mxu0 0.0
    %11073 = vmatprep.subr.mxu0 0.0
    %11074 = vmatpush1.msra.mxu0 0.0
    %11075 = vmatprep.subr.mxu0 0.0
    %11076 = vmatpush1.msra.mxu0 0.0
    %11077 = vmatprep.subr.mxu0 0.0
    %11078 = vmatpush1.msra.mxu0 0.0
    %11079 = vmatprep.subr.mxu0 0.0
    %11080 = vmatpush1.msra.mxu0 0.0
    %11081 = vmatprep.subr.mxu0 0.0
    %11082 = vmatpush1.msra.mxu0 0.0
    %11083 = vmatprep.subr.mxu0 0.0
    %11084 = vmatpush1.msra.mxu0 0.0
    %11085 = vmatprep.subr.mxu0 0.0
    %11086 = vmatpush1.msra.mxu0 0.0
    %11087 = vmatprep.subr.mxu0 0.0
    %11088 = vmatpush1.msra.mxu0 0.0
    %11089 = vmatprep.subr.mxu0 0.0
    %11090 = vmatpush1.msra.mxu0 0.0
    %11091 = vmatprep.subr.mxu0 0.0
    %11092 = vmatpush1.msra.mxu0 0.0
    %11093 = vmatprep.subr.mxu0 0.0
    %11094 = vmatpush1.msra.mxu0 0.0
    %11095 = vmatprep.mubr.f32.mxu0 0.0
    %11096 = vmatmul.mubr.f32.gmra.mrb[0].mxu0 %v11029
    %v11097 = vpop.f32.mrb[0].mxu0
    %v11098 = vadd.f32 0.0, %v11097
    %v11099 = vpop.f32.mrb[0].mxu0
    %11100 = vdwg.mxu0
    %v11101 = vadd.f32 %v11016, %v11098
    %v11102 = vld [vmem:[%s14] sm:$0x1]
    %v11104 = vlaneseq
    %v11105 = vshrl.u32 %v11104, 7
    %v11106 = vsub.s32 0, %v11105
    %v11107 = vrot.slane %v11102, %v11106
    %v11109 = vadd.f32 %v11101, %v11107
    %vm11110 = vcmask 520192
    %v11111 = vsel %vm11110, %v11109, 0.0
    %v11112 = vrot.slane %v11111, 4
    %v11113 = vadd.f32 %v11111, %v11112
    %v11114 = vrot.slane %v11113, 2
    %v11115 = vadd.f32 %v11113, %v11114
    %v11116 = vrot.slane %v11115, 1
    %v11117 = vadd.f32 %v11115, %v11116
    %v11118 = vadd.f32 %v11117, 0.0
    %v11119 = vmul.f32 %v11109, %v11109
    %v11120 = vsel %vm11110, %v11119, 0.0
    %v11121 = vrot.slane %v11120, 4
    %v11122 = vadd.f32 %v11120, %v11121
    %v11123 = vrot.slane %v11122, 2
    %v11124 = vadd.f32 %v11122, %v11123
    %v11125 = vrot.slane %v11124, 1
    %v11126 = vadd.f32 %v11124, %v11125
    %v11127 = vadd.f32 %v11126, 0.0
    %11128 = vst.msk [vmem:[#allocation5] sm:$0x1f] %vm11110, %v11109
    %v11129 = vld [vmem:[%s10853] sm:$0x1f]
    %v11130 = vld [vmem:[%s13] sm:$0xff]
    %v11131 = vld [vmem:[%s13 + $0x8] sm:$0xff]
    %v11132 = vld [vmem:[%s13 + $0x10] sm:$0xff]
    %v11133 = vld [vmem:[%s13 + $0x18] sm:$0xff]
    %v11134 = vld [vmem:[%s13 + $0x20] sm:$0xff]
    %v11135 = vld [vmem:[%s13 + $0x28] sm:$0xff]
    %v11136 = vld [vmem:[%s13 + $0x30] sm:$0xff]
    %v11137 = vld [vmem:[%s13 + $0x38] sm:$0xff]
    %v11138 = vld [vmem:[%s10853 + $0x1] sm:$0x1f]
    %v11139 = vld [vmem:[%s13 + $0x40] sm:$0xff]
    %v11140 = vld [vmem:[%s13 + $0x48] sm:$0xff]
    %v11141 = vld [vmem:[%s13 + $0x50] sm:$0xff]
    %v11142 = vld [vmem:[%s13 + $0x58] sm:$0xff]
    %v11143 = vld [vmem:[%s13 + $0x60] sm:$0xff]
    %v11144 = vld [vmem:[%s13 + $0x68] sm:$0xff]
    %v11145 = vld [vmem:[%s13 + $0x70] sm:$0xff]
    %v11146 = vld [vmem:[%s13 + $0x78] sm:$0xff]
    %v11148 = vsel %vm10385, %v11138, 0
    %11150 = vmatprep.subr.mxu0 0.0
    %11151 = vmatpush1.msra.mxu0 %v11139
    %11152 = vmatprep.subr.mxu0 0.0
    %11153 = vmatpush1.msra.mxu0 %v11140
    %11154 = vmatprep.subr.mxu0 0.0
    %11155 = vmatpush1.msra.mxu0 %v11141
    %11156 = vmatprep.subr.mxu0 0.0
    %11157 = vmatpush1.msra.mxu0 %v11142
    %11158 = vmatprep.subr.mxu0 0.0
    %11159 = vmatpush1.msra.mxu0 %v11143
    %11160 = vmatprep.subr.mxu0 0.0
    %11161 = vmatpush1.msra.mxu0 %v11144
    %11162 = vmatprep.subr.mxu0 0.0
    %11163 = vmatpush1.msra.mxu0 %v11145
    %11164 = vmatprep.subr.mxu0 0.0
    %11165 = vmatpush1.msra.mxu0 %v11146
    %11166 = vmatprep.subr.mxu0 0.0
    %11167 = vmatpush1.msra.mxu0 0.0
    %11168 = vmatprep.subr.mxu0 0.0
    %11169 = vmatpush1.msra.mxu0 0.0
    %11170 = vmatprep.subr.mxu0 0.0
    %11171 = vmatpush1.msra.mxu0 0.0
    %11172 = vmatprep.subr.mxu0 0.0
    %11173 = vmatpush1.msra.mxu0 0.0
    %11174 = vmatprep.subr.mxu0 0.0
    %11175 = vmatpush1.msra.mxu0 0.0
    %11176 = vmatprep.subr.mxu0 0.0
    %11177 = vmatpush1.msra.mxu0 0.0
    %11178 = vmatprep.subr.mxu0 0.0
    %11179 = vmatpush1.msra.mxu0 0.0
    %11180 = vmatprep.subr.mxu0 0.0
    %11181 = vmatpush1.msra.mxu0 0.0
    %11182 = vmatprep.subr.mxu0 0.0
    %11183 = vmatpush1.msra.mxu0 0.0
    %11184 = vmatprep.subr.mxu0 0.0
    %11185 = vmatpush1.msra.mxu0 0.0
    %11186 = vmatprep.subr.mxu0 0.0
    %11187 = vmatpush1.msra.mxu0 0.0
    %11188 = vmatprep.subr.mxu0 0.0
    %11189 = vmatpush1.msra.mxu0 0.0
    %11190 = vmatprep.subr.mxu0 0.0
    %11191 = vmatpush1.msra.mxu0 0.0
    %11192 = vmatprep.subr.mxu0 0.0
    %11193 = vmatpush1.msra.mxu0 0.0
    %11194 = vmatprep.subr.mxu0 0.0
    %11195 = vmatpush1.msra.mxu0 0.0
    %11196 = vmatprep.subr.mxu0 0.0
    %11197 = vmatpush1.msra.mxu0 0.0
    %11198 = vmatprep.subr.mxu0 0.0
    %11199 = vmatpush1.msra.mxu0 0.0
    %11200 = vmatprep.subr.mxu0 0.0
    %11201 = vmatpush1.msra.mxu0 0.0
    %11202 = vmatprep.subr.mxu0 0.0
    %11203 = vmatpush1.msra.mxu0 0.0
    %11204 = vmatprep.subr.mxu0 0.0
    %11205 = vmatpush1.msra.mxu0 0.0
    %11206 = vmatprep.subr.mxu0 0.0
    %11207 = vmatpush1.msra.mxu0 0.0
    %11208 = vmatprep.subr.mxu0 0.0
    %11209 = vmatpush1.msra.mxu0 0.0
    %11210 = vmatprep.subr.mxu0 0.0
    %11211 = vmatpush1.msra.mxu0 0.0
    %11212 = vmatprep.subr.mxu0 0.0
    %11213 = vmatpush1.msra.mxu0 0.0
    %11214 = vmatprep.mubr.f32.mxu0 0.0
    %11215 = vmatmul.mubr.f32.gmra.mrb[0].mxu0 %v11148
    %v11216 = vpop.f32.mrb[0].mxu0
    %v11217 = vadd.f32 0.0, %v11216
    %v11218 = vpop.f32.mrb[0].mxu0
    %11219 = vdwg.mxu0
    %v11221 = vsel %vm10385, %v11129, 0
    %11223 = vmatprep.subr.mxu0 0.0
    %11224 = vmatpush1.msra.mxu0 %v11130
    %11225 = vmatprep.subr.mxu0 0.0
    %11226 = vmatpush1.msra.mxu0 %v11131
    %11227 = vmatprep.subr.mxu0 0.0
    %11228 = vmatpush1.msra.mxu0 %v11132
    %11229 = vmatprep.subr.mxu0 0.0
    %11230 = vmatpush1.msra.mxu0 %v11133
    %11231 = vmatprep.subr.mxu0 0.0
    %11232 = vmatpush1.msra.mxu0 %v11134
    %11233 = vmatprep.subr.mxu0 0.0
    %11234 = vmatpush1.msra.mxu0 %v11135
    %11235 = vmatprep.subr.mxu0 0.0
    %11236 = vmatpush1.msra.mxu0 %v11136
    %11237 = vmatprep.subr.mxu0 0.0
    %11238 = vmatpush1.msra.mxu0 %v11137
    %11239 = vmatprep.subr.mxu0 0.0
    %11240 = vmatpush1.msra.mxu0 0.0
    %11241 = vmatprep.subr.mxu0 0.0
    %11242 = vmatpush1.msra.mxu0 0.0
    %11243 = vmatprep.subr.mxu0 0.0
    %11244 = vmatpush1.msra.mxu0 0.0
    %11245 = vmatprep.subr.mxu0 0.0
    %11246 = vmatpush1.msra.mxu0 0.0
    %11247 = vmatprep.subr.mxu0 0.0
    %11248 = vmatpush1.msra.mxu0 0.0
    %11249 = vmatprep.subr.mxu0 0.0
    %11250 = vmatpush1.msra.mxu0 0.0
    %11251 = vmatprep.subr.mxu0 0.0
    %11252 = vmatpush1.msra.mxu0 0.0
    %11253 = vmatprep.subr.mxu0 0.0
    %11254 = vmatpush1.msra.mxu0 0.0
    %11255 = vmatprep.subr.mxu0 0.0
    %11256 = vmatpush1.msra.mxu0 0.0
    %11257 = vmatprep.subr.mxu0 0.0
    %11258 = vmatpush1.msra.mxu0 0.0
    %11259 = vmatprep.subr.mxu0 0.0
    %11260 = vmatpush1.msra.mxu0 0.0
    %11261 = vmatprep.subr.mxu0 0.0
    %11262 = vmatpush1.msra.mxu0 0.0
    %11263 = vmatprep.subr.mxu0 0.0
    %11264 = vmatpush1.msra.mxu0 0.0
    %11265 = vmatprep.subr.mxu0 0.0
    %11266 = vmatpush1.msra.mxu0 0.0
    %11267 = vmatprep.subr.mxu0 0.0
    %11268 = vmatpush1.msra.mxu0 0.0
    %11269 = vmatprep.subr.mxu0 0.0
    %11270 = vmatpush1.msra.mxu0 0.0
    %11271 = vmatprep.subr.mxu0 0.0
    %11272 = vmatpush1.msra.mxu0 0.0
    %11273 = vmatprep.subr.mxu0 0.0
    %11274 = vmatpush1.msra.mxu0 0.0
    %11275 = vmatprep.subr.mxu0 0.0
    %11276 = vmatpush1.msra.mxu0 0.0
    %11277 = vmatprep.subr.mxu0 0.0
    %11278 = vmatpush1.msra.mxu0 0.0
    %11279 = vmatprep.subr.mxu0 0.0
    %11280 = vmatpush1.msra.mxu0 0.0
    %11281 = vmatprep.subr.mxu0 0.0
    %11282 = vmatpush1.msra.mxu0 0.0
    %11283 = vmatprep.subr.mxu0 0.0
    %11284 = vmatpush1.msra.mxu0 0.0
    %11285 = vmatprep.subr.mxu0 0.0
    %11286 = vmatpush1.msra.mxu0 0.0
    %11287 = vmatprep.mubr.f32.mxu0 0.0
    %11288 = vmatmul.mubr.f32.gmra.mrb[0].mxu0 %v11221
    %v11289 = vpop.f32.mrb[0].mxu0
    %v11290 = vadd.f32 %v11217, %v11289
    %v11291 = vpop.f32.mrb[0].mxu0
    %11292 = vdwg.mxu0
    %v11293 = vld [vmem:[%s10853 + $0x2] sm:$0x1f]
    %v11294 = vld [vmem:[%s13 + $0x80] sm:$0xff]
    %v11295 = vld [vmem:[%s13 + $0x88] sm:$0xff]
    %v11296 = vld [vmem:[%s13 + $0x90] sm:$0xff]
    %v11297 = vld [vmem:[%s13 + $0x98] sm:$0xff]
    %v11298 = vld [vmem:[%s13 + $0xa0] sm:$0xff]
    %v11299 = vld [vmem:[%s13 + $0xa8] sm:$0xff]
    %v11300 = vld [vmem:[%s13 + $0xb0] sm:$0xff]
    %v11301 = vld [vmem:[%s13 + $0xb8] sm:$0xff]
    %v11303 = vsel %vm10385, %v11293, 0
    %11305 = vmatprep.subr.mxu0 0.0
    %11306 = vmatpush1.msra.mxu0 %v11294
    %11307 = vmatprep.subr.mxu0 0.0
    %11308 = vmatpush1.msra.mxu0 %v11295
    %11309 = vmatprep.subr.mxu0 0.0
    %11310 = vmatpush1.msra.mxu0 %v11296
    %11311 = vmatprep.subr.mxu0 0.0
    %11312 = vmatpush1.msra.mxu0 %v11297
    %11313 = vmatprep.subr.mxu0 0.0
    %11314 = vmatpush1.msra.mxu0 %v11298
    %11315 = vmatprep.subr.mxu0 0.0
    %11316 = vmatpush1.msra.mxu0 %v11299
    %11317 = vmatprep.subr.mxu0 0.0
    %11318 = vmatpush1.msra.mxu0 %v11300
    %11319 = vmatprep.subr.mxu0 0.0
    %11320 = vmatpush1.msra.mxu0 %v11301
    %11321 = vmatprep.subr.mxu0 0.0
    %11322 = vmatpush1.msra.mxu0 0.0
    %11323 = vmatprep.subr.mxu0 0.0
    %11324 = vmatpush1.msra.mxu0 0.0
    %11325 = vmatprep.subr.mxu0 0.0
    %11326 = vmatpush1.msra.mxu0 0.0
    %11327 = vmatprep.subr.mxu0 0.0
    %11328 = vmatpush1.msra.mxu0 0.0
    %11329 = vmatprep.subr.mxu0 0.0
    %11330 = vmatpush1.msra.mxu0 0.0
    %11331 = vmatprep.subr.mxu0 0.0
    %11332 = vmatpush1.msra.mxu0 0.0
    %11333 = vmatprep.subr.mxu0 0.0
    %11334 = vmatpush1.msra.mxu0 0.0
    %11335 = vmatprep.subr.mxu0 0.0
    %11336 = vmatpush1.msra.mxu0 0.0
    %11337 = vmatprep.subr.mxu0 0.0
    %11338 = vmatpush1.msra.mxu0 0.0
    %11339 = vmatprep.subr.mxu0 0.0
    %11340 = vmatpush1.msra.mxu0 0.0
    %11341 = vmatprep.subr.mxu0 0.0
    %11342 = vmatpush1.msra.mxu0 0.0
    %11343 = vmatprep.subr.mxu0 0.0
    %11344 = vmatpush1.msra.mxu0 0.0
    %11345 = vmatprep.subr.mxu0 0.0
    %11346 = vmatpush1.msra.mxu0 0.0
    %11347 = vmatprep.subr.mxu0 0.0
    %11348 = vmatpush1.msra.mxu0 0.0
    %11349 = vmatprep.subr.mxu0 0.0
    %11350 = vmatpush1.msra.mxu0 0.0
    %11351 = vmatprep.subr.mxu0 0.0
    %11352 = vmatpush1.msra.mxu0 0.0
    %11353 = vmatprep.subr.mxu0 0.0
    %11354 = vmatpush1.msra.mxu0 0.0
    %11355 = vmatprep.subr.mxu0 0.0
    %11356 = vmatpush1.msra.mxu0 0.0
    %11357 = vmatprep.subr.mxu0 0.0
    %11358 = vmatpush1.msra.mxu0 0.0
    %11359 = vmatprep.subr.mxu0 0.0
    %11360 = vmatpush1.msra.mxu0 0.0
    %11361 = vmatprep.subr.mxu0 0.0
    %11362 = vmatpush1.msra.mxu0 0.0
    %11363 = vmatprep.subr.mxu0 0.0
    %11364 = vmatpush1.msra.mxu0 0.0
    %11365 = vmatprep.subr.mxu0 0.0
    %11366 = vmatpush1.msra.mxu0 0.0
    %11367 = vmatprep.subr.mxu0 0.0
    %11368 = vmatpush1.msra.mxu0 0.0
    %11369 = vmatprep.mubr.f32.mxu0 0.0
    %11370 = vmatmul.mubr.f32.gmra.mrb[0].mxu0 %v11303
    %v11371 = vpop.f32.mrb[0].mxu0
    %v11372 = vadd.f32 0.0, %v11371
    %v11373 = vpop.f32.mrb[0].mxu0
    %11374 = vdwg.mxu0
    %v11375 = vadd.f32 %v11290, %v11372
    %v11376 = vld [vmem:[%s14] sm:$0x1]
    %v11378 = vlaneseq
    %v11379 = vshrl.u32 %v11378, 7
    %v11380 = vsub.s32 0, %v11379
    %v11381 = vrot.slane %v11376, %v11380
    %v11383 = vadd.f32 %v11375, %v11381
    %v11384 = vsel %vm11110, %v11383, 0.0
    %v11385 = vrot.slane %v11384, 4
    %v11386 = vadd.f32 %v11384, %v11385
    %v11387 = vrot.slane %v11386, 2
    %v11388 = vadd.f32 %v11386, %v11387
    %v11389 = vrot.slane %v11388, 1
    %v11390 = vadd.f32 %v11388, %v11389
    %v11391 = vadd.f32 %v11118, %v11390
    %v11392 = vmul.f32 %v11383, %v11383
    %v11393 = vsel %vm11110, %v11392, 0.0
    %v11394 = vrot.slane %v11393, 4
    %v11395 = vadd.f32 %v11393, %v11394
    %v11396 = vrot.slane %v11395, 2
    %v11397 = vadd.f32 %v11395, %v11396
    %v11398 = vrot.slane %v11397, 1
    %v11399 = vadd.f32 %v11397, %v11398
    %v11400 = vadd.f32 %v11127, %v11399
    %11401 = vst.msk [vmem:[#allocation5 + $0x5] sm:$0x1f] %vm11110, %v11383
    %v11402 = vmul.f32 %v11391, 0.1
    %v11403 = vmul.f32 %v11400, 0.1
    %v11404 = vmul.f32 %v11402, %v11402
    %v11405 = vsub.f32 %v11403, %v11404
    %v11406 = vld [vmem:[%s15] sm:$0x1]
    %v11407 = vadd.f32 %v11405, 1e-05
    %v11408 = vrsqrt.pop %v11407
    %v11409 = vmul.f32 %v11406, %v11408
    %v11410 = vld [vmem:[%s16] sm:$0x1]
    %v11411 = vmul.f32 %v11402, %v11409
    %v11412 = vsub.f32 %v11410, %v11411
    %v11413 = vld [vmem:[#allocation5] ss:$4 sm:$0x1]
    %v11414 = vmul.f32 %v11413, %v11409
    %v11415 = vadd.f32 %v11414, %v11412
    %s11416 = scalar_lea.vmem [#allocation5], 1
    %v11417 = vld [vmem:[%s11416] ss:$4 sm:$0x1]
    %v11418 = vmul.f32 %v11417, %v11409
    %v11419 = vadd.f32 %v11418, %v11412
    %v11420 = vmax.f32 %v11415, %v11419
    %s11421 = scalar_lea.vmem [#allocation5], 2
    %v11422 = vld [vmem:[%s11421] ss:$4 sm:$0x1]
    %v11423 = vmul.f32 %v11422, %v11409
    %v11424 = vadd.f32 %v11423, %v11412
    %v11425 = vmax.f32 %v11420, %v11424
    %s11426 = scalar_lea.vmem [#allocation5], 3
    %v11427 = vld [vmem:[%s11426] ss:$4 sm:$0x1]
    %v11428 = vmul.f32 %v11427, %v11409
    %v11429 = vadd.f32 %v11428, %v11412
    %v11430 = vmax.f32 %v11425, %v11429
    %v11431 = vmax.f32 %v11430, 0.0
    %vm11432 = vcmask 516096
    %11433 = vst.msk [vmem:[#allocation9] sm:$0x1] %vm11432, %v11431
    %s11434 = scalar_lea.vmem [#allocation5], 5
    %v11435 = vld [vmem:[%s11434] ss:$4 sm:$0x1]
    %v11436 = vmul.f32 %v11435, %v11409
    %v11437 = vadd.f32 %v11436, %v11412
    %s11438 = scalar_lea.vmem [#allocation5], 6
    %v11439 = vld [vmem:[%s11438] ss:$4 sm:$0x1]
    %v11440 = vmul.f32 %v11439, %v11409
    %v11441 = vadd.f32 %v11440, %v11412
    %v11442 = vmax.f32 %v11437, %v11441
    %s11443 = scalar_lea.vmem [#allocation5], 7
    %v11444 = vld [vmem:[%s11443] ss:$4 sm:$0x1]
    %v11445 = vmul.f32 %v11444, %v11409
    %v11446 = vadd.f32 %v11445, %v11412
    %v11447 = vmax.f32 %v11442, %v11446
    %s11448 = scalar_lea.vmem [#allocation5], 8
    %v11449 = vld [vmem:[%s11448] ss:$4 sm:$0x1]
    %v11450 = vmul.f32 %v11449, %v11409
    %v11451 = vadd.f32 %v11450, %v11412
    %v11452 = vmax.f32 %v11447, %v11451
    %v11453 = vmax.f32 %v11452, 0.0
    %s11454 = scalar_lea.vmem [#allocation9], 1
    %11455 = vst.msk [vmem:[%s11454] sm:$0x1] %vm11432, %v11453
    %v11456 = vld [vmem:[#allocation9] sm:$0x1]
    %v11457 = vld [vmem:[#allocation9 + $0x1] sm:$0x1]
    %v11458 = vadd.f32 %v11456, 0.0
    %v11459 = vadd.f32 %v11457, 0.0
    %v11460 = vld [vmem:[%s17] sm:$0xff]
    %v11461 = vld [vmem:[%s17 + $0x8] sm:$0xff]
    %v11462 = vld [vmem:[%s17 + $0x10] sm:$0xff]
    %v11463 = vld [vmem:[%s17 + $0x18] sm:$0xff]
    %v11464 = vld [vmem:[%s17 + $0x20] sm:$0xff]
    %v11465 = vld [vmem:[%s17 + $0x28] sm:$0xff]
    %v11466 = vld [vmem:[%s17 + $0x30] sm:$0xff]
    %v11467 = vld [vmem:[%s17 + $0x38] sm:$0xff]
    %v11468 = vld [vmem:[%s18] sm:$0x1]
    %v11470 = vlaneseq
    %v11471 = vshrl.u32 %v11470, 7
    %v11472 = vsub.s32 0, %v11471
    %v11473 = vrot.slane %v11468, %v11472
    %v11477 = vcombine.low %v11458, %v11459
    %v11479 = vunpack.c.l.s4 1966171168
    %v11480 = vunpack.c.0.s8 %v11479
    %v11481 = vlaneseq
    %v11482 = vshrl.u32 %v11481, 7
    %v11483 = vsub.s32 %v11480, %v11482
    %v11484 = vrot.slane %v11477, %v11483
    %v11486 = vunpack.c.l.s4 1966171168
    %v11487 = vunpack.c.0.s8 %v11486
    %v11488 = vlaneseq
    %v11489 = vshrl.u32 %v11488, 7
    %v11490 = vsub.s32 %v11487, %v11489
    %v11491 = vrot.slane %v11484, %v11490
    %v11492 = vsel %vm10385, %v11491, 0
    %11494 = vmatprep.subr.mxu0 0.0
    %11495 = vmatpush1.msra.mxu0 %v11460
    %11496 = vmatprep.subr.mxu0 0.0
    %11497 = vmatpush1.msra.mxu0 %v11461
    %11498 = vmatprep.subr.mxu0 0.0
    %11499 = vmatpush1.msra.mxu0 %v11462
    %11500 = vmatprep.subr.mxu0 0.0
    %11501 = vmatpush1.msra.mxu0 %v11463
    %11502 = vmatprep.subr.mxu0 0.0
    %11503 = vmatpush1.msra.mxu0 %v11464
    %11504 = vmatprep.subr.mxu0 0.0
    %11505 = vmatpush1.msra.mxu0 %v11465
    %11506 = vmatprep.subr.mxu0 0.0
    %11507 = vmatpush1.msra.mxu0 %v11466
    %11508 = vmatprep.subr.mxu0 0.0
    %11509 = vmatpush1.msra.mxu0 %v11467
    %11510 = vmatprep.subr.mxu0 0.0
    %11511 = vmatpush1.msra.mxu0 0.0
    %11512 = vmatprep.subr.mxu0 0.0
    %11513 = vmatpush1.msra.mxu0 0.0
    %11514 = vmatprep.subr.mxu0 0.0
    %11515 = vmatpush1.msra.mxu0 0.0
    %11516 = vmatprep.subr.mxu0 0.0
    %11517 = vmatpush1.msra.mxu0 0.0
    %11518 = vmatprep.subr.mxu0 0.0
    %11519 = vmatpush1.msra.mxu0 0.0
    %11520 = vmatprep.subr.mxu0 0.0
    %11521 = vmatpush1.msra.mxu0 0.0
    %11522 = vmatprep.subr.mxu0 0.0
    %11523 = vmatpush1.msra.mxu0 0.0
    %11524 = vmatprep.subr.mxu0 0.0
    %11525 = vmatpush1.msra.mxu0 0.0
    %11526 = vmatprep.subr.mxu0 0.0
    %11527 = vmatpush1.msra.mxu0 0.0
    %11528 = vmatprep.subr.mxu0 0.0
    %11529 = vmatpush1.msra.mxu0 0.0
    %11530 = vmatprep.subr.mxu0 0.0
    %11531 = vmatpush1.msra.mxu0 0.0
    %11532 = vmatprep.subr.mxu0 0.0
    %11533 = vmatpush1.msra.mxu0 0.0
    %11534 = vmatprep.subr.mxu0 0.0
    %11535 = vmatpush1.msra.mxu0 0.0
    %11536 = vmatprep.subr.mxu0 0.0
    %11537 = vmatpush1.msra.mxu0 0.0
    %11538 = vmatprep.subr.mxu0 0.0
    %11539 = vmatpush1.msra.mxu0 0.0
    %11540 = vmatprep.subr.mxu0 0.0
    %11541 = vmatpush1.msra.mxu0 0.0
    %11542 = vmatprep.subr.mxu0 0.0
    %11543 = vmatpush1.msra.mxu0 0.0
    %11544 = vmatprep.subr.mxu0 0.0
    %11545 = vmatpush1.msra.mxu0 0.0
    %11546 = vmatprep.subr.mxu0 0.0
    %11547 = vmatpush1.msra.mxu0 0.0
    %11548 = vmatprep.subr.mxu0 0.0
    %11549 = vmatpush1.msra.mxu0 0.0
    %11550 = vmatprep.subr.mxu0 0.0
    %11551 = vmatpush1.msra.mxu0 0.0
    %11552 = vmatprep.subr.mxu0 0.0
    %11553 = vmatpush1.msra.mxu0 0.0
    %11554 = vmatprep.subr.mxu0 0.0
    %11555 = vmatpush1.msra.mxu0 0.0
    %11556 = vmatprep.subr.mxu0 0.0
    %11557 = vmatpush1.msra.mxu0 0.0
    %11558 = vmatprep.mubr.f32.mxu0 0.0
    %11559 = vmatmul.mubr.f32.gmra.mrb[0].mxu0 %v11492
    %v11560 = vpop.f32.mrb[0].mxu0
    %v11561 = vadd.f32 %v11473, %v11560
    %v11562 = vpop.f32.mrb[0].mxu0
    %11563 = vdwg.mxu0
    %vm11564 = vcmask 74752
    %v11565 = vsel %vm11564, %v11561, -inf
    %11566 = vmax.xlane.f32.xlu0 %v11565
    %v11567 = vpop.xlane.xlu0 %11566
    %v11568 = vsub.f32 %v11561, %v11567
    %v11569 = vmul.f32 %v11568, 1.442695
    %v11570 = vpow.pop %v11569
    %v11571 = vsel %vm11564, %v11570, 0.0
    %11572 = vadd.xlane.f32.xlu0 %v11571
    %v11573 = vpop.xlane.xlu0 %11572
    %v11574 = vlog2.pop %v11573
    %v11575 = vmul.f32 %v11574, 0.6931472
    %v11576 = vadd.f32 %v11567, %v11575
    %v11577 = vsub.f32 %v11561, %v11576
    %11578 = vst.msk [vmem:[#allocation10] sm:$0x3] %vm11564, %v11577
    // Predicated region
    $region78: #{m5_pallas.1} parent=1 // pred_check
      _
    $region79: #{m5_pallas.1} parent=1 // pred_check_branch
      %11580 = sbr.rel (0) target = $region81
    $region80: #{m5_pallas.1} parent=1 // pred_region
      %s11582 = ssub.s32 32, 32
      %11583 = vsyncadd [#allocation11], %s11582
      %s11585 = sshll.u32 [#allocation10], 4
      %s11586 = int_to_ptr.vmem [resolvable:$true] %s11585
      %11588 = dma.vmem_to_hbm [thread:$0]  %s11586, 32, %s19, [#allocation11]
    $region81: #{m5_pallas.1} parent=1 // pred_fallthru
      _
    // Predicated region
    $region82: #{m5_pallas.1} parent=1 // pred_check
      _
    $region83: #{m5_pallas.1} parent=1 // pred_check_branch
      %11590 = sbr.rel (0) target = $region85
    $region84: #{m5_pallas.1} parent=1 // pred_region
      %11591 = dma.done [#allocation11], 32
    $region85: #{m5_pallas.1} parent=1 // pred_fallthru
      _
    %11592 = vsyncpa [#allocation11], 1

</llo_original>
